<compile_context>
chip_gen: v5e
topology: v5e:2x2
jax: 0.10.0
libtpu: 0.0.40
codegen_flags: <defaults>
</compile_context>

<pallas_src>
import numpy as np
import jax
import jax.numpy as jnp
from jax.experimental import pallas as pl
from jax.experimental.pallas import tpu as pltpu

# ----------------------------------------------------------------------------
# Configuration (small shapes consistent with the module)
# ----------------------------------------------------------------------------
BATCH = 2
IN_CHANNELS = 4
OUT_CHANNELS = 4
LAYERS = 2
RATIO = 1               # exponent -> actual ratio = 2**1 = 2
VBLKS = [1, 1]
SCALES = [-1, -1]       # exponents -> each layer halves the spatial dims
FACTORS = [1, 1]        # exponents -> each layer doubles the channels
SPATIAL = (16, 16)
EXTENSION = 1           # synthetic Basic block: extension=1, least_required_dim=1

_num_filters = int(IN_CHANNELS * (2.0 ** RATIO))
C0 = int(EXTENSION * _num_filters)
_scales = np.exp2(np.array(SCALES, dtype=np.float64).reshape(LAYERS, 1))
_factors = np.exp2(np.array(FACTORS + [0.0], dtype=np.float64))

SPATIALS = [np.array(SPATIAL, dtype=np.int64)]
CHANNELS = [C0]
for _ix in range(LAYERS):
    SPATIALS.append((SPATIALS[_ix] * _scales[_ix]).astype(np.int64))
    CHANNELS.append(int(CHANNELS[_ix] * _factors[_ix] // EXTENSION * EXTENSION))
SPATIALS = [tuple(int(v) for v in s) for s in SPATIALS]   # [(16,16),(8,8),(4,4)]
# CHANNELS = [8, 16, 32]


def _sigmoid(v):
    return 1.0 / (1.0 + jnp.exp(-v))


# ----------------------------------------------------------------------------
# Pallas kernels
# ----------------------------------------------------------------------------
def _band_conv(x, m0_ref, m1_ref, m2_ref, b_ref, NH, H):
    """3x3 depthwise-separable conv on a flattened (N*H, W*Cin) activation.

    Horizontal taps + pointwise conv are pre-folded into three bf16 banded
    matrices (one per vertical tap).  The vertical taps are realized with
    pltpu.roll along the sublane axis; rows that would cross a batch / image
    boundary are masked to zero (equivalent to the conv's zero padding).
    All three matmuls are full height, summed in registers.
    """
    row = jax.lax.broadcasted_iota(jnp.int32, x.shape, 0)
    if (H & (H - 1)) == 0:
        hpos = jnp.bitwise_and(row, H - 1)
    else:
        hpos = row % H
    x_dn = jnp.where(hpos > 0, pltpu.roll(x, 1, 0), 0.0)            # x[i-1]
    x_up = jnp.where(hpos < H - 1, pltpu.roll(x, NH - 1, 0), 0.0)   # x[i+1]
    acc = jnp.dot(x.astype(jnp.bfloat16), m1_ref[...],
                  preferred_element_type=jnp.float32)
    acc = acc + jnp.dot(x_dn.astype(jnp.bfloat16), m0_ref[...],
                        preferred_element_type=jnp.float32)
    acc = acc + jnp.dot(x_up.astype(jnp.bfloat16), m2_ref[...],
                        preferred_element_type=jnp.float32)
    return acc + b_ref[...]


def _make_dwsep_kernel(NH, H, pre_relu, post):
    """Standalone fused DepthwiseSeparableConv2d kernel (whole batch)."""

    def kernel(x_ref, m0_ref, m1_ref, m2_ref, b_ref, o_ref):
        x = x_ref[...]                                   # (N*H, W*Cin) f32
        if pre_relu:
            x = jnp.maximum(x, 0.0)
        acc = _band_conv(x, m0_ref, m1_ref, m2_ref, b_ref, NH, H)
        if post == 'relu6div6':
            acc = jnp.clip(acc, 0.0, 6.0) * (1.0 / 6.0)
        o_ref[...] = acc
    return kernel


def _make_basic_kernel(NH, H, step):
    """Fused residual basic block: x + step * conv2(relu(conv1(x)))."""

    def kernel(x_ref, a0, a1, a2, ab, c0, c1, c2, cb, o_ref):
        x = x_ref[...]                                   # (N*H, W*C) f32
        y = jnp.maximum(_band_conv(x, a0, a1, a2, ab, NH, H), 0.0)
        z = _band_conv(y, c0, c1, c2, cb, NH, H)
        o_ref[...] = x + step * z
    return kernel


def _make_cbam_bn_kernel(N, HW, C, eps=1e-5):
    """Fused BatchNorm2d (batch stats) + CBAM (channel gate + spatial gate)."""

    def kernel(x_ref, w1_ref, b1_ref, w2_ref, b2_ref, a_ref, o_ref):
        x = x_ref[...]                                   # (N, HW, C) f32
        # ---- BatchNorm2d (training statistics, gamma=1, beta=0) ----
        mean = jnp.mean(jnp.mean(x, axis=1, keepdims=True), axis=0, keepdims=True)
        xc = x - mean
        var = jnp.mean(jnp.mean(xc * xc, axis=1, keepdims=True), axis=0,
                       keepdims=True)
        x = xc * jax.lax.rsqrt(var + eps)

        # ---- channel gate: shared MLP on stacked (avg, max) stats ----
        avg = jnp.mean(x, axis=1)                        # (N, C)
        mx = jnp.max(x, axis=1)                          # (N, C)
        s = jnp.concatenate([avg, mx], axis=0)           # (2N, C)
        hid = jnp.maximum(
            jnp.dot(s, w1_ref[...], preferred_element_type=jnp.float32)
            + b1_ref[...], 0.0)
        lg = jnp.dot(hid, w2_ref[...],
                     preferred_element_type=jnp.float32) + b2_ref[...]
        att = _sigmoid(lg[:N] + lg[N:])                  # (N, C)
        xs = x * att[:, None, :]                         # (N, HW, C)

        # ---- spatial gate: 7x7 conv as ONE precomputed banded matmul ----
        mc = jnp.mean(xs, axis=2)                        # (N, HW)
        xm = jnp.max(xs, axis=2)                         # (N, HW)
        v = jnp.concatenate([mc, xm], axis=1).astype(jnp.bfloat16)   # (N, 2HW)
        gate = _sigmoid(jnp.dot(v, a_ref[...],
                                preferred_element_type=jnp.float32))  # (N, HW)
        o_ref[...] = xs * gate[:, :, None]
    return kernel


def _tube_kernel(x_ref, wt_ref, bt_ref, wp_ref, bp_ref, dw_ref, db_ref, o_ref):
    """HypTube: enc 1x1 -> theta * sigmoid(phi) -> dec 1x1 (theta/phi pre-split)."""
    xb = x_ref[...].astype(jnp.bfloat16)
    theta = jnp.dot(xb, wt_ref[...], preferred_element_type=jnp.float32) + bt_ref[...]
    phi = jnp.dot(xb, wp_ref[...], preferred_element_type=jnp.float32) + bp_ref[...]
    g = (theta * _sigmoid(phi)).astype(jnp.bfloat16)
    o_ref[...] = jnp.dot(g, dw_ref[...],
                         preferred_element_type=jnp.float32) + db_ref[...]


# ----------------------------------------------------------------------------
# Pallas wrappers (whole batch per invocation, no grid, everything in VMEM)
# ----------------------------------------------------------------------------
def dwsep_conv3x3(x, p, pre_relu=False, post=None):
    N, H, W, Cin = x.shape
    WCo = p['bias'].shape[1]
    assert p['m1'].shape == (W * Cin, WCo), (p['m1'].shape, (W * Cin, WCo))
    NH = N * H
    out = pl.pallas_call(
        _make_dwsep_kernel(NH, H, pre_relu, post),
        out_shape=jax.ShapeDtypeStruct((NH, WCo), jnp.float32),
    )(x.reshape(NH, W * Cin), p['m0'], p['m1'], p['m2'], p['bias'])
    return out.reshape(N, H, W, WCo // W)


def basic_block(x, p, step):
    # TODO(synk): Basic residual block source not provided; synthetic form kept:
    # x + step * conv2(relu(conv1(x))), fully fused into one kernel.
    N, H, W, C = x.shape
    NH, WC = N * H, W * C
    c1, c2 = p['conv1'], p['conv2']
    assert c1['m1'].shape == (WC, WC) and c2['m1'].shape == (WC, WC)
    out = pl.pallas_call(
        _make_basic_kernel(NH, H, float(step)),
        out_shape=jax.ShapeDtypeStruct((NH, WC), jnp.float32),
    )(x.reshape(NH, WC),
      c1['m0'], c1['m1'], c1['m2'], c1['bias'],
      c2['m0'], c2['m1'], c2['m2'], c2['bias'])
    return out.reshape(N, H, W, C)


def cbam_bn(x, p):
    N, H, W, C = x.shape
    HW = H * W
    assert p['amat'].shape == (2 * HW, HW), (p['amat'].shape, (2 * HW, HW))
    out = pl.pallas_call(
        _make_cbam_bn_kernel(N, HW, C),
        out_shape=jax.ShapeDtypeStruct((N, HW, C), jnp.float32),
    )(x.reshape(N, HW, C), p['w1'], p['b1'], p['w2'], p['b2'], p['amat'])
    return out.reshape(N, H, W, C)


def tube_forward(x, p):
    N, H, W, C = x.shape
    M = N * H * W
    Cout = p['db'].shape[1]
    out = pl.pallas_call(
        _tube_kernel,
        out_shape=jax.ShapeDtypeStruct((M, Cout), jnp.float32),
    )(x.reshape(M, C), p['wt'], p['bt'], p['wp'], p['bp'], p['dw'], p['db'])
    return out.reshape(N, H, W, Cout)


# ----------------------------------------------------------------------------
# Sub-module forward functions (compose the Pallas kernels)
# ----------------------------------------------------------------------------
def block_forward(xs, bp, size):
    """Block: cat -> ReLU -> Enconv/Deconv (conv + resize) -> BN+CBAM (fused)."""
    x = xs[0] if len(xs) == 1 else jnp.concatenate(xs, axis=-1)
    N, H, W, C = x.shape
    ratio = (H * W) / (size[0] * size[1])
    if ratio < 1.0:
        # upsample first: the pre-activation ReLU must precede the resize
        x = jnp.maximum(x, 0.0)
        x = jax.image.resize(x, (N, size[0], size[1], C),
                             method='bilinear', antialias=False)
        x = dwsep_conv3x3(x, bp['conv'])
    else:
        # conv first: pre-activation ReLU fused into the conv kernel
        x = dwsep_conv3x3(x, bp['conv'], pre_relu=True)
        x = jax.image.resize(x, (N, size[0], size[1], x.shape[-1]),
                             method='bilinear', antialias=False)
    # BatchNorm2d is fused into the CBAM kernel
    return cbam_bn(x, bp['cbam'])


def transform_forward(x, blocks, nblks):
    if nblks > 0 and blocks:
        y = x
        for i, bp in enumerate(blocks):
            y = basic_block(y, bp, 1.0 / nblks)
            if i < len(blocks) - 1:
                y = jnp.maximum(y, 0.0)
        return y, x
    return x, x


# ----------------------------------------------------------------------------
# HUNet forward
# ----------------------------------------------------------------------------
def hunet_forward(params, x_nchw):
    x = jnp.transpose(x_nchw, (0, 2, 3, 1)).astype(jnp.float32)   # NCHW -> NHWC
    dnt = dwsep_conv3x3(x, params['iconv'])                       # iconv
    hzts = []
    for ix in range(LAYERS):
        lp = params['layers'][ix]
        b = block_forward([dnt], lp['enconv'], SPATIALS[ix + 1])
        dnt, enc = transform_forward(b, lp['dnform'], VBLKS[ix])
        hzts.append(tube_forward(enc, lp['hzform']))
    upt = tube_forward(dnt, params['enhencer'])                   # enhencer
    for ix in range(LAYERS - 1, -1, -1):
        lp = params['layers'][ix]
        b = block_forward([upt, hzts[ix]], lp['deconv'], SPATIALS[ix])
        upt, _ = transform_forward(b, lp['upform'], VBLKS[ix])
    # oconv (bias=False) with fused ReLU6/6; Cout padded to 8 -> lane-dense store
    y = dwsep_conv3x3(upt, params['oconv'], post='relu6div6')
    y = y[..., :OUT_CHANNELS]
    return jnp.transpose(y, (0, 3, 1, 2))                         # NHWC -> NCHW


# ----------------------------------------------------------------------------
# Deterministic parameter construction (raw PyTorch-like params)
# ----------------------------------------------------------------------------
class ParamGen:
    def __init__(self, key):
        self._key = key

    def normal(self, shape, scale=0.1):
        self._key, sub = jax.random.split(self._key)
        return scale * jax.random.normal(sub, shape, dtype=jnp.float32)


def make_dwsep(pg, cin, cout, bias=True):
    return {
        'dw_w': pg.normal((3, 3, cin)),
        'dw_b': pg.normal((1, cin)) if bias else jnp.zeros((1, cin), jnp.float32),
        'pw_w': pg.normal((cin, cout)),
        'pw_b': pg.normal((1, cout)) if bias else jnp.zeros((1, cout), jnp.float32),
    }


def make_cbam(pg, c):
    hid = max(c // 4, 1)
    return {
        'mlp_w1': pg.normal((c, hid)), 'mlp_b1': pg.normal((1, hid)),
        'mlp_w2': pg.normal((hid, c)), 'mlp_b2': pg.normal((1, c)),
        'sp_w': pg.normal((7, 7, 2)),
    }


def make_tube(pg, cin, cout):
    hidden = cin + cout
    return {
        'enc_w': pg.normal((cin, 2 * hidden)), 'enc_b': pg.normal((1, 2 * hidden)),
        'dec_w': pg.normal((hidden, cout)), 'dec_b': pg.normal((1, cout)),
    }


def make_basic(pg, c):
    return {'conv1': make_dwsep(pg, c, c), 'conv2': make_dwsep(pg, c, c)}


def build_params(pg):
    params = {
        'iconv': make_dwsep(pg, IN_CHANNELS, C0, bias=True),
        'oconv': make_dwsep(pg, C0, OUT_CHANNELS, bias=False),
        'layers': [],
        'enhencer': make_tube(pg, CHANNELS[-1], CHANNELS[-1]),
    }
    for ix in range(LAYERS):
        ci, co = CHANNELS[ix], CHANNELS[ix + 1]
        layer = {
            'enconv': {'conv': make_dwsep(pg, ci, co), 'cbam': make_cbam(pg, co)},
            'dnform': [make_basic(pg, co) for _ in range(VBLKS[ix])],
            'hzform': make_tube(pg, co, co),
            'deconv': {'conv': make_dwsep(pg, 2 * co, ci), 'cbam': make_cbam(pg, ci)},
            'upform': [make_basic(pg, ci) for _ in range(VBLKS[ix])],
        }
        params['layers'].append(layer)
    return params


# ----------------------------------------------------------------------------
# Weights-only prep (runs ONCE, outside jit): banded matrices, fused biases,
# CBAM spatial-conv matrices, tube theta/phi split. bf16 for MXU operands.
# ----------------------------------------------------------------------------
def _round_up(v, m):
    return ((v + m - 1) // m) * m


def _prep_dwsep(raw, W, pad_cout_to=None):
    dw_w = np.asarray(raw['dw_w'], np.float32)   # (3, 3, cin)
    dw_b = np.asarray(raw['dw_b'], np.float32)   # (1, cin)
    pw_w = np.asarray(raw['pw_w'], np.float32)   # (cin, cout)
    pw_b = np.asarray(raw['pw_b'], np.float32)   # (1, cout)
    cin, cout = pw_w.shape
    if pad_cout_to is not None and pad_cout_to > cout:
        pw_w = np.concatenate(
            [pw_w, np.zeros((cin, pad_cout_to - cout), np.float32)], axis=1)
        pw_b = np.concatenate(
            [pw_b, np.zeros((1, pad_cout_to - cout), np.float32)], axis=1)
        cout = pad_cout_to
    idx = np.arange(W)
    mats = []
    for ky in range(3):
        m = np.zeros((W * cin, W * cout), np.float32)
        for kx in range(3):
            band = ((idx[:, None] - idx[None, :]) == (kx - 1)).astype(np.float32)
            m += np.kron(band, dw_w[ky, kx][:, None] * pw_w)
        mats.append(m)
    bias = np.tile(pw_b + dw_b @ pw_w, (1, W))   # fused bias row (1, W*cout)
    return {'m0': jnp.asarray(mats[0], jnp.bfloat16),
            'm1': jnp.asarray(mats[1], jnp.bfloat16),
            'm2': jnp.asarray(mats[2], jnp.bfloat16),
            'bias': jnp.asarray(bias, jnp.float32)}


def _prep_cbam(raw, H, W):
    # Fold the 7x7/2-channel spatial conv (zero padded) into a (2*HW, HW) matrix.
    w7 = np.asarray(raw['sp_w'], np.float32)     # (7, 7, 2) : [mean, max]
    HW = H * W
    A = np.zeros((2 * HW, HW), np.float32)
    hh = np.arange(H)
    ww = np.arange(W)
    dh = hh[:, None] - hh[None, :] + 3           # ky index
    dwx = ww[:, None] - ww[None, :] + 3          # kx index
    msk = ((dh >= 0) & (dh < 7))[:, None, :, None] & \
          ((dwx >= 0) & (dwx < 7))[None, :, None, :]
    dhc = np.clip(dh, 0, 6)
    dwc = np.clip(dwx, 0, 6)
    for c in range(2):
        k = np.where(msk, w7[dhc[:, None, :, None], dwc[None, :, None, :], c], 0.0)
        A[c * HW:(c + 1) * HW, :] = k.reshape(HW, HW)
    return {'w1': raw['mlp_w1'], 'b1': raw['mlp_b1'],
            'w2': raw['mlp_w2'], 'b2': raw['mlp_b2'],
            'amat': jnp.asarray(A, jnp.bfloat16)}


def _prep_tube(raw):
    enc_w = np.asarray(raw['enc_w'], np.float32)
    enc_b = np.asarray(raw['enc_b'], np.float32)
    hid = enc_w.shape[1] // 2
    return {'wt': jnp.asarray(enc_w[:, :hid], jnp.bfloat16),
            'wp': jnp.asarray(enc_w[:, hid:], jnp.bfloat16),
            'bt': jnp.asarray(enc_b[:, :hid], jnp.float32),
            'bp': jnp.asarray(enc_b[:, hid:], jnp.float32),
            'dw': jnp.asarray(np.asarray(raw['dec_w'], np.float32), jnp.bfloat16),
            'db': jnp.asarray(np.asarray(raw['dec_b'], np.float32), jnp.float32)}


def _prep_basic(raw, W):
    return {'conv1': _prep_dwsep(raw['conv1'], W),
            'conv2': _prep_dwsep(raw['conv2'], W)}


def prepare_params(raw):
    prep = {
        'iconv': _prep_dwsep(raw['iconv'], SPATIALS[0][1]),
        'oconv': _prep_dwsep(raw['oconv'], SPATIALS[0][1],
                             pad_cout_to=_round_up(OUT_CHANNELS, 8)),
        'enhencer': _prep_tube(raw['enhencer']),
        'layers': [],
    }
    for ix in range(LAYERS):
        rl = raw['layers'][ix]
        Ho, Wo = SPATIALS[ix]        # larger spatial of this layer
        Hi, Wi = SPATIALS[ix + 1]    # smaller spatial of this layer
        prep['layers'].append({
            # Enconv: conv runs at the input spatial (ratio >= 1), CBAM at inner
            'enconv': {'conv': _prep_dwsep(rl['enconv']['conv'], Wo),
                       'cbam': _prep_cbam(rl['enconv']['cbam'], Hi, Wi)},
            'dnform': [_prep_basic(b, Wi) for b in rl['dnform']],
            'hzform': _prep_tube(rl['hzform']),
            # Deconv: upsample first (ratio < 1), conv + CBAM at the outer spatial
            'deconv': {'conv': _prep_dwsep(rl['deconv']['conv'], Wo),
                       'cbam': _prep_cbam(rl['deconv']['cbam'], Ho, Wo)},
            'upform': [_prep_basic(b, Wo) for b in rl['upform']],
        })
    return prep


# ----------------------------------------------------------------------------
# Main
# ----------------------------------------------------------------------------
if __name__ == "__main__":
    key = jax.random.PRNGKey(0)
    pkey, xkey = jax.random.split(key)
    raw_params = build_params(ParamGen(pkey))
    params = prepare_params(raw_params)      # weights-only transform, outside jit
    x = jax.random.normal(xkey, (BATCH, IN_CHANNELS, SPATIAL[0], SPATIAL[1]),
                          dtype=jnp.float32)
    fwd = jax.jit(hunet_forward)
    y = jax.block_until_ready(fwd(params, x))
    assert y.shape == (BATCH, OUT_CHANNELS, SPATIAL[0], SPATIAL[1]), y.shape
    assert bool(jnp.all(jnp.isfinite(y)))
    print("KERNEL_OK")
</pallas_src>

<mosaic_0001>
module attributes {stable_mosaic.version = 11 : i64} {
  func.func @kernel(%arg0: memref<32x64xf32, #tpu.memory_space<vmem>>, %arg1: memref<64x128xbf16, #tpu.memory_space<vmem>>, %arg2: memref<64x128xbf16, #tpu.memory_space<vmem>>, %arg3: memref<64x128xbf16, #tpu.memory_space<vmem>>, %arg4: memref<1x128xf32, #tpu.memory_space<vmem>>, %arg5: memref<32x128xf32, #tpu.memory_space<vmem>>) attributes {dimension_semantics = [], scalar_prefetch = 0 : i64, scratch_operands = 0 : i64, tpu.core_type = #tpu.core_type<tc>} {
    %c0 = arith.constant 0 : index
    %c0_0 = arith.constant 0 : index
    %0 = vector.load %arg0[%c0, %c0_0] : memref<32x64xf32, #tpu.memory_space<vmem>>, vector<32x64xf32>
    %1 = tpu.iota {dimensions = array<i32: 0>} : vector<32x64xi32>
    %c15_i32 = arith.constant 15 : i32
    %2 = vector.broadcast %c15_i32 : i32 to vector<32x64xi32>
    %3 = arith.andi %1, %2 : vector<32x64xi32>
    %c0_i32 = arith.constant 0 : i32
    %4 = vector.broadcast %c0_i32 : i32 to vector<32x64xi32>
    %5 = arith.cmpi sgt, %3, %4 : vector<32x64xi32>
    %c1_i32 = arith.constant 1 : i32
    %6 = tpu.dynamic_rotate %0 by %c1_i32 dim 0 : vector<32x64xf32>, i32 -> vector<32x64xf32>
    %cst = arith.constant 0.000000e+00 : f32
    %7 = vector.broadcast %cst : f32 to vector<32x64xf32>
    %8 = arith.select %5, %6, %7 : vector<32x64xi1>, vector<32x64xf32>
    %c15_i32_1 = arith.constant 15 : i32
    %9 = vector.broadcast %c15_i32_1 : i32 to vector<32x64xi32>
    %10 = arith.cmpi slt, %3, %9 : vector<32x64xi32>
    %c31_i32 = arith.constant 31 : i32
    %11 = tpu.dynamic_rotate %0 by %c31_i32 dim 0 : vector<32x64xf32>, i32 -> vector<32x64xf32>
    %cst_2 = arith.constant 0.000000e+00 : f32
    %12 = vector.broadcast %cst_2 : f32 to vector<32x64xf32>
    %13 = arith.select %10, %11, %12 : vector<32x64xi1>, vector<32x64xf32>
    %14 = arith.truncf %0 : vector<32x64xf32> to vector<32x64xbf16>
    %c0_3 = arith.constant 0 : index
    %c0_4 = arith.constant 0 : index
    %15 = vector.load %arg2[%c0_3, %c0_4] : memref<64x128xbf16, #tpu.memory_space<vmem>>, vector<64x128xbf16>
    %cst_5 = arith.constant dense<0.000000e+00> : vector<32x128xf32>
    %16 = tpu.matmul %14, %15, %cst_5 {dimension_numbers = #tpu.dot_dimension_numbers<[1], [0], [0], [1], [0, 0, 1, 1], [], []>} : vector<32x64xbf16>, vector<64x128xbf16>, vector<32x128xf32> -> vector<32x128xf32>
    %17 = arith.truncf %8 : vector<32x64xf32> to vector<32x64xbf16>
    %c0_6 = arith.constant 0 : index
    %c0_7 = arith.constant 0 : index
    %18 = vector.load %arg1[%c0_6, %c0_7] : memref<64x128xbf16, #tpu.memory_space<vmem>>, vector<64x128xbf16>
    %cst_8 = arith.constant dense<0.000000e+00> : vector<32x128xf32>
    %19 = tpu.matmul %17, %18, %cst_8 {dimension_numbers = #tpu.dot_dimension_numbers<[1], [0], [0], [1], [0, 0, 1, 1], [], []>} : vector<32x64xbf16>, vector<64x128xbf16>, vector<32x128xf32> -> vector<32x128xf32>
    %20 = arith.addf %16, %19 : vector<32x128xf32>
    %21 = arith.truncf %13 : vector<32x64xf32> to vector<32x64xbf16>
    %c0_9 = arith.constant 0 : index
    %c0_10 = arith.constant 0 : index
    %22 = vector.load %arg3[%c0_9, %c0_10] : memref<64x128xbf16, #tpu.memory_space<vmem>>, vector<64x128xbf16>
    %cst_11 = arith.constant dense<0.000000e+00> : vector<32x128xf32>
    %23 = tpu.matmul %21, %22, %cst_11 {dimension_numbers = #tpu.dot_dimension_numbers<[1], [0], [0], [1], [0, 0, 1, 1], [], []>} : vector<32x64xbf16>, vector<64x128xbf16>, vector<32x128xf32> -> vector<32x128xf32>
    %24 = arith.addf %20, %23 : vector<32x128xf32>
    %c0_12 = arith.constant 0 : index
    %c0_13 = arith.constant 0 : index
    %25 = vector.load %arg4[%c0_12, %c0_13] : memref<1x128xf32, #tpu.memory_space<vmem>>, vector<1x128xf32>
    %26 = vector.broadcast %25 : vector<1x128xf32> to vector<32x128xf32>
    %27 = arith.addf %24, %26 : vector<32x128xf32>
    %c0_14 = arith.constant 0 : index
    %c0_15 = arith.constant 0 : index
    %28 = vector.load %arg5[%c0_14, %c0_15] : memref<32x128xf32, #tpu.memory_space<vmem>>, vector<32x128xf32>
    tpu.vector_store %arg5[%c0_14, %c0_15], %27 {strides = array<i32>} : memref<32x128xf32, #tpu.memory_space<vmem>>, vector<32x128xf32>,
    return
  }
}

module attributes {stable_mosaic.version = 11 : i64} {
  func.func @kernel(%arg0: memref<32x128xf32, #tpu.memory_space<vmem>>, %arg1: memref<128x256xbf16, #tpu.memory_space<vmem>>, %arg2: memref<128x256xbf16, #tpu.memory_space<vmem>>, %arg3: memref<128x256xbf16, #tpu.memory_space<vmem>>, %arg4: memref<1x256xf32, #tpu.memory_space<vmem>>, %arg5: memref<32x256xf32, #tpu.memory_space<vmem>>) attributes {dimension_semantics = [], scalar_prefetch = 0 : i64, scratch_operands = 0 : i64, tpu.core_type = #tpu.core_type<tc>} {
    %c0 = arith.constant 0 : index
    %c0_0 = arith.constant 0 : index
    %0 = vector.load %arg0[%c0, %c0_0] : memref<32x128xf32, #tpu.memory_space<vmem>>, vector<32x128xf32>
    %cst = arith.constant 0.000000e+00 : f32
    %1 = vector.broadcast %cst : f32 to vector<32x128xf32>
    %2 = arith.maximumf %0, %1 : vector<32x128xf32>
    %3 = tpu.iota {dimensions = array<i32: 0>} : vector<32x128xi32>
    %c15_i32 = arith.constant 15 : i32
    %4 = vector.broadcast %c15_i32 : i32 to vector<32x128xi32>
    %5 = arith.andi %3, %4 : vector<32x128xi32>
    %c0_i32 = arith.constant 0 : i32
    %6 = vector.broadcast %c0_i32 : i32 to vector<32x128xi32>
    %7 = arith.cmpi sgt, %5, %6 : vector<32x128xi32>
    %c1_i32 = arith.constant 1 : i32
    %8 = tpu.dynamic_rotate %2 by %c1_i32 dim 0 : vector<32x128xf32>, i32 -> vector<32x128xf32>
    %cst_1 = arith.constant 0.000000e+00 : f32
    %9 = vector.broadcast %cst_1 : f32 to vector<32x128xf32>
    %10 = arith.select %7, %8, %9 : vector<32x128xi1>, vector<32x128xf32>
    %c15_i32_2 = arith.constant 15 : i32
    %11 = vector.broadcast %c15_i32_2 : i32 to vector<32x128xi32>
    %12 = arith.cmpi slt, %5, %11 : vector<32x128xi32>
    %c31_i32 = arith.constant 31 : i32
    %13 = tpu.dynamic_rotate %2 by %c31_i32 dim 0 : vector<32x128xf32>, i32 -> vector<32x128xf32>
    %cst_3 = arith.constant 0.000000e+00 : f32
    %14 = vector.broadcast %cst_3 : f32 to vector<32x128xf32>
    %15 = arith.select %12, %13, %14 : vector<32x128xi1>, vector<32x128xf32>
    %16 = arith.truncf %2 : vector<32x128xf32> to vector<32x128xbf16>
    %c0_4 = arith.constant 0 : index
    %c0_5 = arith.constant 0 : index
    %17 = vector.load %arg2[%c0_4, %c0_5] : memref<128x256xbf16, #tpu.memory_space<vmem>>, vector<128x256xbf16>
    %cst_6 = arith.constant dense<0.000000e+00> : vector<32x256xf32>
    %18 = tpu.matmul %16, %17, %cst_6 {dimension_numbers = #tpu.dot_dimension_numbers<[1], [0], [0], [1], [0, 0, 1, 1], [], []>} : vector<32x128xbf16>, vector<128x256xbf16>, vector<32x256xf32> -> vector<32x256xf32>
    %19 = arith.truncf %10 : vector<32x128xf32> to vector<32x128xbf16>
    %c0_7 = arith.constant 0 : index
    %c0_8 = arith.constant 0 : index
    %20 = vector.load %arg1[%c0_7, %c0_8] : memref<128x256xbf16, #tpu.memory_space<vmem>>, vector<128x256xbf16>
    %cst_9 = arith.constant dense<0.000000e+00> : vector<32x256xf32>
    %21 = tpu.matmul %19, %20, %cst_9 {dimension_numbers = #tpu.dot_dimension_numbers<[1], [0], [0], [1], [0, 0, 1, 1], [], []>} : vector<32x128xbf16>, vector<128x256xbf16>, vector<32x256xf32> -> vector<32x256xf32>
    %22 = arith.addf %18, %21 : vector<32x256xf32>
    %23 = arith.truncf %15 : vector<32x128xf32> to vector<32x128xbf16>
    %c0_10 = arith.constant 0 : index
    %c0_11 = arith.constant 0 : index
    %24 = vector.load %arg3[%c0_10, %c0_11] : memref<128x256xbf16, #tpu.memory_space<vmem>>, vector<128x256xbf16>
    %cst_12 = arith.constant dense<0.000000e+00> : vector<32x256xf32>
    %25 = tpu.matmul %23, %24, %cst_12 {dimension_numbers = #tpu.dot_dimension_numbers<[1], [0], [0], [1], [0, 0, 1, 1], [], []>} : vector<32x128xbf16>, vector<128x256xbf16>, vector<32x256xf32> -> vector<32x256xf32>
    %26 = arith.addf %22, %25 : vector<32x256xf32>
    %c0_13 = arith.constant 0 : index
    %c0_14 = arith.constant 0 : index
    %27 = vector.load %arg4[%c0_13, %c0_14] : memref<1x256xf32, #tpu.memory_space<vmem>>, vector<1x256xf32>
    %28 = vector.broadcast %27 : vector<1x256xf32> to vector<32x256xf32>
    %29 = arith.addf %26, %28 : vector<32x256xf32>
    %c0_15 = arith.constant 0 : index
    %c0_16 = arith.constant 0 : index
    %30 = vector.load %arg5[%c0_15, %c0_16] : memref<32x256xf32, #tpu.memory_space<vmem>>, vector<32x256xf32>
    tpu.vector_store %arg5[%c0_15, %c0_16], %29 {strides = array<i32>} : memref<32x256xf32, #tpu.memory_space<vmem>>, vector<32x256xf32>,
    return
  }
}

module attributes {stable_mosaic.version = 11 : i64} {
  func.func @kernel(%arg0: memref<2x64x16xf32, #tpu.memory_space<vmem>>, %arg1: memref<16x4xf32, #tpu.memory_space<vmem>>, %arg2: memref<1x4xf32, #tpu.memory_space<vmem>>, %arg3: memref<4x16xf32, #tpu.memory_space<vmem>>, %arg4: memref<1x16xf32, #tpu.memory_space<vmem>>, %arg5: memref<128x64xbf16, #tpu.memory_space<vmem>>, %arg6: memref<2x64x16xf32, #tpu.memory_space<vmem>>) attributes {dimension_semantics = [], scalar_prefetch = 0 : i64, scratch_operands = 0 : i64, tpu.core_type = #tpu.core_type<tc>} {
    %c0 = arith.constant 0 : index
    %c0_0 = arith.constant 0 : index
    %c0_1 = arith.constant 0 : index
    %0 = vector.load %arg0[%c0, %c0_0, %c0_1] : memref<2x64x16xf32, #tpu.memory_space<vmem>>, vector<2x64x16xf32>
    %cst = arith.constant dense<0.000000e+00> : vector<2x16xf32>
    %1 = vector.multi_reduction <add>, %0, %cst [1] : vector<2x64x16xf32> to vector<2x16xf32>
    %2 = vector.shape_cast %1 : vector<2x16xf32> to vector<2x1x16xf32>
    %cst_2 = arith.constant 6.400000e+01 : f32
    %3 = vector.broadcast %cst_2 : f32 to vector<2x1x16xf32>
    %4 = arith.divf %2, %3 : vector<2x1x16xf32>
    %cst_3 = arith.constant dense<0.000000e+00> : vector<1x16xf32>
    %5 = vector.multi_reduction <add>, %4, %cst_3 [0] : vector<2x1x16xf32> to vector<1x16xf32>
    %6 = vector.shape_cast %5 : vector<1x16xf32> to vector<1x1x16xf32>
    %cst_4 = arith.constant 2.000000e+00 : f32
    %7 = vector.broadcast %cst_4 : f32 to vector<1x1x16xf32>
    %8 = arith.divf %6, %7 : vector<1x1x16xf32>
    %9 = vector.broadcast %8 : vector<1x1x16xf32> to vector<2x64x16xf32>
    %10 = arith.subf %0, %9 : vector<2x64x16xf32>
    %11 = arith.mulf %10, %10 : vector<2x64x16xf32>
    %cst_5 = arith.constant dense<0.000000e+00> : vector<2x16xf32>
    %12 = vector.multi_reduction <add>, %11, %cst_5 [1] : vector<2x64x16xf32> to vector<2x16xf32>
    %13 = vector.shape_cast %12 : vector<2x16xf32> to vector<2x1x16xf32>
    %cst_6 = arith.constant 6.400000e+01 : f32
    %14 = vector.broadcast %cst_6 : f32 to vector<2x1x16xf32>
    %15 = arith.divf %13, %14 : vector<2x1x16xf32>
    %cst_7 = arith.constant dense<0.000000e+00> : vector<1x16xf32>
    %16 = vector.multi_reduction <add>, %15, %cst_7 [0] : vector<2x1x16xf32> to vector<1x16xf32>
    %17 = vector.shape_cast %16 : vector<1x16xf32> to vector<1x1x16xf32>
    %cst_8 = arith.constant 2.000000e+00 : f32
    %18 = vector.broadcast %cst_8 : f32 to vector<1x1x16xf32>
    %19 = arith.divf %17, %18 : vector<1x1x16xf32>
    %cst_9 = arith.constant 9.99999974E-6 : f32
    %20 = vector.broadcast %cst_9 : f32 to vector<1x1x16xf32>
    %21 = arith.addf %19, %20 : vector<1x1x16xf32>
    %22 = math.rsqrt %21 : vector<1x1x16xf32>
    %23 = vector.broadcast %22 : vector<1x1x16xf32> to vector<2x64x16xf32>
    %24 = arith.mulf %10, %23 : vector<2x64x16xf32>
    %cst_10 = arith.constant dense<0.000000e+00> : vector<2x16xf32>
    %25 = vector.multi_reduction <add>, %24, %cst_10 [1] : vector<2x64x16xf32> to vector<2x16xf32>
    %cst_11 = arith.constant 6.400000e+01 : f32
    %26 = vector.broadcast %cst_11 : f32 to vector<2x16xf32>
    %27 = arith.divf %25, %26 : vector<2x16xf32>
    %cst_12 = arith.constant dense<0xFF800000> : vector<2x16xf32>
    %28 = vector.multi_reduction <maximumf>, %24, %cst_12 [1] : vector<2x64x16xf32> to vector<2x16xf32>
    %29 = tpu.concatenate %27, %28 in 0 : vector<2x16xf32>, vector<2x16xf32> -> vector<4x16xf32>
    %c0_13 = arith.constant 0 : index
    %c0_14 = arith.constant 0 : index
    %30 = vector.load %arg1[%c0_13, %c0_14] : memref<16x4xf32, #tpu.memory_space<vmem>>, vector<16x4xf32>
    %cst_15 = arith.constant dense<0.000000e+00> : vector<4x4xf32>
    %31 = tpu.matmul %29, %30, %cst_15 {dimension_numbers = #tpu.dot_dimension_numbers<[1], [0], [0], [1], [0, 0, 1, 1], [], []>} : vector<4x16xf32>, vector<16x4xf32>, vector<4x4xf32> -> vector<4x4xf32>
    %c0_16 = arith.constant 0 : index
    %c0_17 = arith.constant 0 : index
    %32 = vector.load %arg2[%c0_16, %c0_17] : memref<1x4xf32, #tpu.memory_space<vmem>>, vector<1x4xf32>
    %33 = vector.broadcast %32 : vector<1x4xf32> to vector<4x4xf32>
    %34 = arith.addf %31, %33 : vector<4x4xf32>
    %cst_18 = arith.constant 0.000000e+00 : f32
    %35 = vector.broadcast %cst_18 : f32 to vector<4x4xf32>
    %36 = arith.maximumf %34, %35 : vector<4x4xf32>
    %c0_19 = arith.constant 0 : index
    %c0_20 = arith.constant 0 : index
    %37 = vector.load %arg3[%c0_19, %c0_20] : memref<4x16xf32, #tpu.memory_space<vmem>>, vector<4x16xf32>
    %cst_21 = arith.constant dense<0.000000e+00> : vector<4x16xf32>
    %38 = tpu.matmul %36, %37, %cst_21 {dimension_numbers = #tpu.dot_dimension_numbers<[1], [0], [0], [1], [0, 0, 1, 1], [], []>} : vector<4x4xf32>, vector<4x16xf32>, vector<4x16xf32> -> vector<4x16xf32>
    %c0_22 = arith.constant 0 : index
    %c0_23 = arith.constant 0 : index
    %39 = vector.load %arg4[%c0_22, %c0_23] : memref<1x16xf32, #tpu.memory_space<vmem>>, vector<1x16xf32>
    %40 = vector.broadcast %39 : vector<1x16xf32> to vector<4x16xf32>
    %41 = arith.addf %38, %40 : vector<4x16xf32>
    %42 = vector.extract_strided_slice %41 {offsets = [0, 0], sizes = [2, 16], strides = [1, 1]} : vector<4x16xf32> to vector<2x16xf32>
    %43 = vector.extract_strided_slice %41 {offsets = [2, 0], sizes = [2, 16], strides = [1, 1]} : vector<4x16xf32> to vector<2x16xf32>
    %44 = arith.addf %42, %43 : vector<2x16xf32>
    %cst_24 = arith.constant 0.000000e+00 : f32
    %45 = vector.broadcast %cst_24 : f32 to vector<2x16xf32>
    %46 = arith.subf %45, %44 : vector<2x16xf32>
    %47 = math.exp %46 : vector<2x16xf32>
    %cst_25 = arith.constant 1.000000e+00 : f32
    %48 = vector.broadcast %cst_25 : f32 to vector<2x16xf32>
    %49 = arith.addf %48, %47 : vector<2x16xf32>
    %cst_26 = arith.constant 1.000000e+00 : f32
    %50 = vector.broadcast %cst_26 : f32 to vector<2x16xf32>
    %51 = arith.divf %50, %49 : vector<2x16xf32>
    %52 = vector.shape_cast %51 : vector<2x16xf32> to vector<2x1x16xf32>
    %53 = vector.broadcast %52 : vector<2x1x16xf32> to vector<2x64x16xf32>
    %54 = arith.mulf %24, %53 : vector<2x64x16xf32>
    %cst_27 = arith.constant dense<0.000000e+00> : vector<2x64xf32>
    %55 = vector.multi_reduction <add>, %54, %cst_27 [2] : vector<2x64x16xf32> to vector<2x64xf32>
    %cst_28 = arith.constant 1.600000e+01 : f32
    %56 = vector.broadcast %cst_28 : f32 to vector<2x64xf32>
    %57 = arith.divf %55, %56 : vector<2x64xf32>
    %cst_29 = arith.constant dense<0xFF800000> : vector<2x64xf32>
    %58 = vector.multi_reduction <maximumf>, %54, %cst_29 [2] : vector<2x64x16xf32> to vector<2x64xf32>
    %59 = tpu.concatenate %57, %58 in 1 : vector<2x64xf32>, vector<2x64xf32> -> vector<2x128xf32>
    %60 = arith.truncf %59 : vector<2x128xf32> to vector<2x128xbf16>
    %c0_30 = arith.constant 0 : index
    %c0_31 = arith.constant 0 : index
    %61 = vector.load %arg5[%c0_30, %c0_31] : memref<128x64xbf16, #tpu.memory_space<vmem>>, vector<128x64xbf16>
    %cst_32 = arith.constant dense<0.000000e+00> : vector<2x64xf32>
    %62 = tpu.matmul %60, %61, %cst_32 {dimension_numbers = #tpu.dot_dimension_numbers<[1], [0], [0], [1], [0, 0, 1, 1], [], []>} : vector<2x128xbf16>, vector<128x64xbf16>, vector<2x64xf32> -> vector<2x64xf32>
    %cst_33 = arith.constant 0.000000e+00 : f32
    %63 = vector.broadcast %cst_33 : f32 to vector<2x64xf32>
    %64 = arith.subf %63, %62 : vector<2x64xf32>
    %65 = math.exp %64 : vector<2x64xf32>
    %cst_34 = arith.constant 1.000000e+00 : f32
    %66 = vector.broadcast %cst_34 : f32 to vector<2x64xf32>
    %67 = arith.addf %66, %65 : vector<2x64xf32>
    %cst_35 = arith.constant 1.000000e+00 : f32
    %68 = vector.broadcast %cst_35 : f32 to vector<2x64xf32>
    %69 = arith.divf %68, %67 : vector<2x64xf32>
    %70 = vector.shape_cast %69 : vector<2x64xf32> to vector<2x64x1xf32>
    %71 = vector.broadcast %70 : vector<2x64x1xf32> to vector<2x64x16xf32>
    %72 = arith.mulf %54, %71 : vector<2x64x16xf32>
    %c0_36 = arith.constant 0 : index
    %c0_37 = arith.constant 0 : index
    %c0_38 = arith.constant 0 : index
    %73 = vector.load %arg6[%c0_36, %c0_37, %c0_38] : memref<2x64x16xf32, #tpu.memory_space<vmem>>, vector<2x64x16xf32>
    tpu.vector_store %arg6[%c0_36, %c0_37, %c0_38], %72 {strides = array<i32>} : memref<2x64x16xf32, #tpu.memory_space<vmem>>, vector<2x64x16xf32>,
    return
  }
}

module attributes {stable_mosaic.version = 11 : i64} {
  func.func @kernel(%arg0: memref<16x128xf32, #tpu.memory_space<vmem>>, %arg1: memref<128x128xbf16, #tpu.memory_space<vmem>>, %arg2: memref<128x128xbf16, #tpu.memory_space<vmem>>, %arg3: memref<128x128xbf16, #tpu.memory_space<vmem>>, %arg4: memref<1x128xf32, #tpu.memory_space<vmem>>, %arg5: memref<128x128xbf16, #tpu.memory_space<vmem>>, %arg6: memref<128x128xbf16, #tpu.memory_space<vmem>>, %arg7: memref<128x128xbf16, #tpu.memory_space<vmem>>, %arg8: memref<1x128xf32, #tpu.memory_space<vmem>>, %arg9: memref<16x128xf32, #tpu.memory_space<vmem>>) attributes {dimension_semantics = [], scalar_prefetch = 0 : i64, scratch_operands = 0 : i64, tpu.core_type = #tpu.core_type<tc>} {
    %c0 = arith.constant 0 : index
    %c0_0 = arith.constant 0 : index
    %0 = vector.load %arg0[%c0, %c0_0] : memref<16x128xf32, #tpu.memory_space<vmem>>, vector<16x128xf32>
    %1 = tpu.iota {dimensions = array<i32: 0>} : vector<16x128xi32>
    %c7_i32 = arith.constant 7 : i32
    %2 = vector.broadcast %c7_i32 : i32 to vector<16x128xi32>
    %3 = arith.andi %1, %2 : vector<16x128xi32>
    %c0_i32 = arith.constant 0 : i32
    %4 = vector.broadcast %c0_i32 : i32 to vector<16x128xi32>
    %5 = arith.cmpi sgt, %3, %4 : vector<16x128xi32>
    %c1_i32 = arith.constant 1 : i32
    %6 = tpu.dynamic_rotate %0 by %c1_i32 dim 0 : vector<16x128xf32>, i32 -> vector<16x128xf32>
    %cst = arith.constant 0.000000e+00 : f32
    %7 = vector.broadcast %cst : f32 to vector<16x128xf32>
    %8 = arith.select %5, %6, %7 : vector<16x128xi1>, vector<16x128xf32>
    %c7_i32_1 = arith.constant 7 : i32
    %9 = vector.broadcast %c7_i32_1 : i32 to vector<16x128xi32>
    %10 = arith.cmpi slt, %3, %9 : vector<16x128xi32>
    %c15_i32 = arith.constant 15 : i32
    %11 = tpu.dynamic_rotate %0 by %c15_i32 dim 0 : vector<16x128xf32>, i32 -> vector<16x128xf32>
    %cst_2 = arith.constant 0.000000e+00 : f32
    %12 = vector.broadcast %cst_2 : f32 to vector<16x128xf32>
    %13 = arith.select %10, %11, %12 : vector<16x128xi1>, vector<16x128xf32>
    %14 = arith.truncf %0 : vector<16x128xf32> to vector<16x128xbf16>
    %c0_3 = arith.constant 0 : index
    %c0_4 = arith.constant 0 : index
    %15 = vector.load %arg2[%c0_3, %c0_4] : memref<128x128xbf16, #tpu.memory_space<vmem>>, vector<128x128xbf16>
    %cst_5 = arith.constant dense<0.000000e+00> : vector<16x128xf32>
    %16 = tpu.matmul %14, %15, %cst_5 {dimension_numbers = #tpu.dot_dimension_numbers<[1], [0], [0], [1], [0, 0, 1, 1], [], []>} : vector<16x128xbf16>, vector<128x128xbf16>, vector<16x128xf32> -> vector<16x128xf32>
    %17 = arith.truncf %8 : vector<16x128xf32> to vector<16x128xbf16>
    %c0_6 = arith.constant 0 : index
    %c0_7 = arith.constant 0 : index
    %18 = vector.load %arg1[%c0_6, %c0_7] : memref<128x128xbf16, #tpu.memory_space<vmem>>, vector<128x128xbf16>
    %cst_8 = arith.constant dense<0.000000e+00> : vector<16x128xf32>
    %19 = tpu.matmul %17, %18, %cst_8 {dimension_numbers = #tpu.dot_dimension_numbers<[1], [0], [0], [1], [0, 0, 1, 1], [], []>} : vector<16x128xbf16>, vector<128x128xbf16>, vector<16x128xf32> -> vector<16x128xf32>
    %20 = arith.addf %16, %19 : vector<16x128xf32>
    %21 = arith.truncf %13 : vector<16x128xf32> to vector<16x128xbf16>
    %c0_9 = arith.constant 0 : index
    %c0_10 = arith.constant 0 : index
    %22 = vector.load %arg3[%c0_9, %c0_10] : memref<128x128xbf16, #tpu.memory_space<vmem>>, vector<128x128xbf16>
    %cst_11 = arith.constant dense<0.000000e+00> : vector<16x128xf32>
    %23 = tpu.matmul %21, %22, %cst_11 {dimension_numbers = #tpu.dot_dimension_numbers<[1], [0], [0], [1], [0, 0, 1, 1], [], []>} : vector<16x128xbf16>, vector<128x128xbf16>, vector<16x128xf32> -> vector<16x128xf32>
    %24 = arith.addf %20, %23 : vector<16x128xf32>
    %c0_12 = arith.constant 0 : index
    %c0_13 = arith.constant 0 : index
    %25 = vector.load %arg4[%c0_12, %c0_13] : memref<1x128xf32, #tpu.memory_space<vmem>>, vector<1x128xf32>
    %26 = vector.broadcast %25 : vector<1x128xf32> to vector<16x128xf32>
    %27 = arith.addf %24, %26 : vector<16x128xf32>
    %cst_14 = arith.constant 0.000000e+00 : f32
    %28 = vector.broadcast %cst_14 : f32 to vector<16x128xf32>
    %29 = arith.maximumf %27, %28 : vector<16x128xf32>
    %30 = tpu.iota {dimensions = array<i32: 0>} : vector<16x128xi32>
    %c7_i32_15 = arith.constant 7 : i32
    %31 = vector.broadcast %c7_i32_15 : i32 to vector<16x128xi32>
    %32 = arith.andi %30, %31 : vector<16x128xi32>
    %c0_i32_16 = arith.constant 0 : i32
    %33 = vector.broadcast %c0_i32_16 : i32 to vector<16x128xi32>
    %34 = arith.cmpi sgt, %32, %33 : vector<16x128xi32>
    %c1_i32_17 = arith.constant 1 : i32
    %35 = tpu.dynamic_rotate %29 by %c1_i32_17 dim 0 : vector<16x128xf32>, i32 -> vector<16x128xf32>
    %cst_18 = arith.constant 0.000000e+00 : f32
    %36 = vector.broadcast %cst_18 : f32 to vector<16x128xf32>
    %37 = arith.select %34, %35, %36 : vector<16x128xi1>, vector<16x128xf32>
    %c7_i32_19 = arith.constant 7 : i32
    %38 = vector.broadcast %c7_i32_19 : i32 to vector<16x128xi32>
    %39 = arith.cmpi slt, %32, %38 : vector<16x128xi32>
    %c15_i32_20 = arith.constant 15 : i32
    %40 = tpu.dynamic_rotate %29 by %c15_i32_20 dim 0 : vector<16x128xf32>, i32 -> vector<16x128xf32>
    %cst_21 = arith.constant 0.000000e+00 : f32
    %41 = vector.broadcast %cst_21 : f32 to vector<16x128xf32>
    %42 = arith.select %39, %40, %41 : vector<16x128xi1>, vector<16x128xf32>
    %43 = arith.truncf %29 : vector<16x128xf32> to vector<16x128xbf16>
    %c0_22 = arith.constant 0 : index
    %c0_23 = arith.constant 0 : index
    %44 = vector.load %arg6[%c0_22, %c0_23] : memref<128x128xbf16, #tpu.memory_space<vmem>>, vector<128x128xbf16>
    %cst_24 = arith.constant dense<0.000000e+00> : vector<16x128xf32>
    %45 = tpu.matmul %43, %44, %cst_24 {dimension_numbers = #tpu.dot_dimension_numbers<[1], [0], [0], [1], [0, 0, 1, 1], [], []>} : vector<16x128xbf16>, vector<128x128xbf16>, vector<16x128xf32> -> vector<16x128xf32>
    %46 = arith.truncf %37 : vector<16x128xf32> to vector<16x128xbf16>
    %c0_25 = arith.constant 0 : index
    %c0_26 = arith.constant 0 : index
    %47 = vector.load %arg5[%c0_25, %c0_26] : memref<128x128xbf16, #tpu.memory_space<vmem>>, vector<128x128xbf16>
    %cst_27 = arith.constant dense<0.000000e+00> : vector<16x128xf32>
    %48 = tpu.matmul %46, %47, %cst_27 {dimension_numbers = #tpu.dot_dimension_numbers<[1], [0], [0], [1], [0, 0, 1, 1], [], []>} : vector<16x128xbf16>, vector<128x128xbf16>, vector<16x128xf32> -> vector<16x128xf32>
    %49 = arith.addf %45, %48 : vector<16x128xf32>
    %50 = arith.truncf %42 : vector<16x128xf32> to vector<16x128xbf16>
    %c0_28 = arith.constant 0 : index
    %c0_29 = arith.constant 0 : index
    %51 = vector.load %arg7[%c0_28, %c0_29] : memref<128x128xbf16, #tpu.memory_space<vmem>>, vector<128x128xbf16>
    %cst_30 = arith.constant dense<0.000000e+00> : vector<16x128xf32>
    %52 = tpu.matmul %50, %51, %cst_30 {dimension_numbers = #tpu.dot_dimension_numbers<[1], [0], [0], [1], [0, 0, 1, 1], [], []>} : vector<16x128xbf16>, vector<128x128xbf16>, vector<16x128xf32> -> vector<16x128xf32>
    %53 = arith.addf %49, %52 : vector<16x128xf32>
    %c0_31 = arith.constant 0 : index
    %c0_32 = arith.constant 0 : index
    %54 = vector.load %arg8[%c0_31, %c0_32] : memref<1x128xf32, #tpu.memory_space<vmem>>, vector<1x128xf32>
    %55 = vector.broadcast %54 : vector<1x128xf32> to vector<16x128xf32>
    %56 = arith.addf %53, %55 : vector<16x128xf32>
    %cst_33 = arith.constant 1.000000e+00 : f32
    %57 = vector.broadcast %cst_33 : f32 to vector<16x128xf32>
    %58 = arith.mulf %57, %56 : vector<16x128xf32>
    %59 = arith.addf %0, %58 : vector<16x128xf32>
    %c0_34 = arith.constant 0 : index
    %c0_35 = arith.constant 0 : index
    %60 = vector.load %arg9[%c0_34, %c0_35] : memref<16x128xf32, #tpu.memory_space<vmem>>, vector<16x128xf32>
    tpu.vector_store %arg9[%c0_34, %c0_35], %59 {strides = array<i32>} : memref<16x128xf32, #tpu.memory_space<vmem>>, vector<16x128xf32>,
    return
  }
}

module attributes {stable_mosaic.version = 11 : i64} {
  func.func @kernel(%arg0: memref<16x128xf32, #tpu.memory_space<vmem>>, %arg1: memref<128x256xbf16, #tpu.memory_space<vmem>>, %arg2: memref<128x256xbf16, #tpu.memory_space<vmem>>, %arg3: memref<128x256xbf16, #tpu.memory_space<vmem>>, %arg4: memref<1x256xf32, #tpu.memory_space<vmem>>, %arg5: memref<16x256xf32, #tpu.memory_space<vmem>>) attributes {dimension_semantics = [], scalar_prefetch = 0 : i64, scratch_operands = 0 : i64, tpu.core_type = #tpu.core_type<tc>} {
    %c0 = arith.constant 0 : index
    %c0_0 = arith.constant 0 : index
    %0 = vector.load %arg0[%c0, %c0_0] : memref<16x128xf32, #tpu.memory_space<vmem>>, vector<16x128xf32>
    %cst = arith.constant 0.000000e+00 : f32
    %1 = vector.broadcast %cst : f32 to vector<16x128xf32>
    %2 = arith.maximumf %0, %1 : vector<16x128xf32>
    %3 = tpu.iota {dimensions = array<i32: 0>} : vector<16x128xi32>
    %c7_i32 = arith.constant 7 : i32
    %4 = vector.broadcast %c7_i32 : i32 to vector<16x128xi32>
    %5 = arith.andi %3, %4 : vector<16x128xi32>
    %c0_i32 = arith.constant 0 : i32
    %6 = vector.broadcast %c0_i32 : i32 to vector<16x128xi32>
    %7 = arith.cmpi sgt, %5, %6 : vector<16x128xi32>
    %c1_i32 = arith.constant 1 : i32
    %8 = tpu.dynamic_rotate %2 by %c1_i32 dim 0 : vector<16x128xf32>, i32 -> vector<16x128xf32>
    %cst_1 = arith.constant 0.000000e+00 : f32
    %9 = vector.broadcast %cst_1 : f32 to vector<16x128xf32>
    %10 = arith.select %7, %8, %9 : vector<16x128xi1>, vector<16x128xf32>
    %c7_i32_2 = arith.constant 7 : i32
    %11 = vector.broadcast %c7_i32_2 : i32 to vector<16x128xi32>
    %12 = arith.cmpi slt, %5, %11 : vector<16x128xi32>
    %c15_i32 = arith.constant 15 : i32
    %13 = tpu.dynamic_rotate %2 by %c15_i32 dim 0 : vector<16x128xf32>, i32 -> vector<16x128xf32>
    %cst_3 = arith.constant 0.000000e+00 : f32
    %14 = vector.broadcast %cst_3 : f32 to vector<16x128xf32>
    %15 = arith.select %12, %13, %14 : vector<16x128xi1>, vector<16x128xf32>
    %16 = arith.truncf %2 : vector<16x128xf32> to vector<16x128xbf16>
    %c0_4 = arith.constant 0 : index
    %c0_5 = arith.constant 0 : index
    %17 = vector.load %arg2[%c0_4, %c0_5] : memref<128x256xbf16, #tpu.memory_space<vmem>>, vector<128x256xbf16>
    %cst_6 = arith.constant dense<0.000000e+00> : vector<16x256xf32>
    %18 = tpu.matmul %16, %17, %cst_6 {dimension_numbers = #tpu.dot_dimension_numbers<[1], [0], [0], [1], [0, 0, 1, 1], [], []>} : vector<16x128xbf16>, vector<128x256xbf16>, vector<16x256xf32> -> vector<16x256xf32>
    %19 = arith.truncf %10 : vector<16x128xf32> to vector<16x128xbf16>
    %c0_7 = arith.constant 0 : index
    %c0_8 = arith.constant 0 : index
    %20 = vector.load %arg1[%c0_7, %c0_8] : memref<128x256xbf16, #tpu.memory_space<vmem>>, vector<128x256xbf16>
    %cst_9 = arith.constant dense<0.000000e+00> : vector<16x256xf32>
    %21 = tpu.matmul %19, %20, %cst_9 {dimension_numbers = #tpu.dot_dimension_numbers<[1], [0], [0], [1], [0, 0, 1, 1], [], []>} : vector<16x128xbf16>, vector<128x256xbf16>, vector<16x256xf32> -> vector<16x256xf32>
    %22 = arith.addf %18, %21 : vector<16x256xf32>
    %23 = arith.truncf %15 : vector<16x128xf32> to vector<16x128xbf16>
    %c0_10 = arith.constant 0 : index
    %c0_11 = arith.constant 0 : index
    %24 = vector.load %arg3[%c0_10, %c0_11] : memref<128x256xbf16, #tpu.memory_space<vmem>>, vector<128x256xbf16>
    %cst_12 = arith.constant dense<0.000000e+00> : vector<16x256xf32>
    %25 = tpu.matmul %23, %24, %cst_12 {dimension_numbers = #tpu.dot_dimension_numbers<[1], [0], [0], [1], [0, 0, 1, 1], [], []>} : vector<16x128xbf16>, vector<128x256xbf16>, vector<16x256xf32> -> vector<16x256xf32>
    %26 = arith.addf %22, %25 : vector<16x256xf32>
    %c0_13 = arith.constant 0 : index
    %c0_14 = arith.constant 0 : index
    %27 = vector.load %arg4[%c0_13, %c0_14] : memref<1x256xf32, #tpu.memory_space<vmem>>, vector<1x256xf32>
    %28 = vector.broadcast %27 : vector<1x256xf32> to vector<16x256xf32>
    %29 = arith.addf %26, %28 : vector<16x256xf32>
    %c0_15 = arith.constant 0 : index
    %c0_16 = arith.constant 0 : index
    %30 = vector.load %arg5[%c0_15, %c0_16] : memref<16x256xf32, #tpu.memory_space<vmem>>, vector<16x256xf32>
    tpu.vector_store %arg5[%c0_15, %c0_16], %29 {strides = array<i32>} : memref<16x256xf32, #tpu.memory_space<vmem>>, vector<16x256xf32>,
    return
  }
}

module attributes {stable_mosaic.version = 11 : i64} {
  func.func @kernel(%arg0: memref<2x16x32xf32, #tpu.memory_space<vmem>>, %arg1: memref<32x8xf32, #tpu.memory_space<vmem>>, %arg2: memref<1x8xf32, #tpu.memory_space<vmem>>, %arg3: memref<8x32xf32, #tpu.memory_space<vmem>>, %arg4: memref<1x32xf32, #tpu.memory_space<vmem>>, %arg5: memref<32x16xbf16, #tpu.memory_space<vmem>>, %arg6: memref<2x16x32xf32, #tpu.memory_space<vmem>>) attributes {dimension_semantics = [], scalar_prefetch = 0 : i64, scratch_operands = 0 : i64, tpu.core_type = #tpu.core_type<tc>} {
    %c0 = arith.constant 0 : index
    %c0_0 = arith.constant 0 : index
    %c0_1 = arith.constant 0 : index
    %0 = vector.load %arg0[%c0, %c0_0, %c0_1] : memref<2x16x32xf32, #tpu.memory_space<vmem>>, vector<2x16x32xf32>
    %cst = arith.constant dense<0.000000e+00> : vector<2x32xf32>
    %1 = vector.multi_reduction <add>, %0, %cst [1] : vector<2x16x32xf32> to vector<2x32xf32>
    %2 = vector.shape_cast %1 : vector<2x32xf32> to vector<2x1x32xf32>
    %cst_2 = arith.constant 1.600000e+01 : f32
    %3 = vector.broadcast %cst_2 : f32 to vector<2x1x32xf32>
    %4 = arith.divf %2, %3 : vector<2x1x32xf32>
    %cst_3 = arith.constant dense<0.000000e+00> : vector<1x32xf32>
    %5 = vector.multi_reduction <add>, %4, %cst_3 [0] : vector<2x1x32xf32> to vector<1x32xf32>
    %6 = vector.shape_cast %5 : vector<1x32xf32> to vector<1x1x32xf32>
    %cst_4 = arith.constant 2.000000e+00 : f32
    %7 = vector.broadcast %cst_4 : f32 to vector<1x1x32xf32>
    %8 = arith.divf %6, %7 : vector<1x1x32xf32>
    %9 = vector.broadcast %8 : vector<1x1x32xf32> to vector<2x16x32xf32>
    %10 = arith.subf %0, %9 : vector<2x16x32xf32>
    %11 = arith.mulf %10, %10 : vector<2x16x32xf32>
    %cst_5 = arith.constant dense<0.000000e+00> : vector<2x32xf32>
    %12 = vector.multi_reduction <add>, %11, %cst_5 [1] : vector<2x16x32xf32> to vector<2x32xf32>
    %13 = vector.shape_cast %12 : vector<2x32xf32> to vector<2x1x32xf32>
    %cst_6 = arith.constant 1.600000e+01 : f32
    %14 = vector.broadcast %cst_6 : f32 to vector<2x1x32xf32>
    %15 = arith.divf %13, %14 : vector<2x1x32xf32>
    %cst_7 = arith.constant dense<0.000000e+00> : vector<1x32xf32>
    %16 = vector.multi_reduction <add>, %15, %cst_7 [0] : vector<2x1x32xf32> to vector<1x32xf32>
    %17 = vector.shape_cast %16 : vector<1x32xf32> to vector<1x1x32xf32>
    %cst_8 = arith.constant 2.000000e+00 : f32
    %18 = vector.broadcast %cst_8 : f32 to vector<1x1x32xf32>
    %19 = arith.divf %17, %18 : vector<1x1x32xf32>
    %cst_9 = arith.constant 9.99999974E-6 : f32
    %20 = vector.broadcast %cst_9 : f32 to vector<1x1x32xf32>
    %21 = arith.addf %19, %20 : vector<1x1x32xf32>
    %22 = math.rsqrt %21 : vector<1x1x32xf32>
    %23 = vector.broadcast %22 : vector<1x1x32xf32> to vector<2x16x32xf32>
    %24 = arith.mulf %10, %23 : vector<2x16x32xf32>
    %cst_10 = arith.constant dense<0.000000e+00> : vector<2x32xf32>
    %25 = vector.multi_reduction <add>, %24, %cst_10 [1] : vector<2x16x32xf32> to vector<2x32xf32>
    %cst_11 = arith.constant 1.600000e+01 : f32
    %26 = vector.broadcast %cst_11 : f32 to vector<2x32xf32>
    %27 = arith.divf %25, %26 : vector<2x32xf32>
    %cst_12 = arith.constant dense<0xFF800000> : vector<2x32xf32>
    %28 = vector.multi_reduction <maximumf>, %24, %cst_12 [1] : vector<2x16x32xf32> to vector<2x32xf32>
    %29 = tpu.concatenate %27, %28 in 0 : vector<2x32xf32>, vector<2x32xf32> -> vector<4x32xf32>
    %c0_13 = arith.constant 0 : index
    %c0_14 = arith.constant 0 : index
    %30 = vector.load %arg1[%c0_13, %c0_14] : memref<32x8xf32, #tpu.memory_space<vmem>>, vector<32x8xf32>
    %cst_15 = arith.constant dense<0.000000e+00> : vector<4x8xf32>
    %31 = tpu.matmul %29, %30, %cst_15 {dimension_numbers = #tpu.dot_dimension_numbers<[1], [0], [0], [1], [0, 0, 1, 1], [], []>} : vector<4x32xf32>, vector<32x8xf32>, vector<4x8xf32> -> vector<4x8xf32>
    %c0_16 = arith.constant 0 : index
    %c0_17 = arith.constant 0 : index
    %32 = vector.load %arg2[%c0_16, %c0_17] : memref<1x8xf32, #tpu.memory_space<vmem>>, vector<1x8xf32>
    %33 = vector.broadcast %32 : vector<1x8xf32> to vector<4x8xf32>
    %34 = arith.addf %31, %33 : vector<4x8xf32>
    %cst_18 = arith.constant 0.000000e+00 : f32
    %35 = vector.broadcast %cst_18 : f32 to vector<4x8xf32>
    %36 = arith.maximumf %34, %35 : vector<4x8xf32>
    %c0_19 = arith.constant 0 : index
    %c0_20 = arith.constant 0 : index
    %37 = vector.load %arg3[%c0_19, %c0_20] : memref<8x32xf32, #tpu.memory_space<vmem>>, vector<8x32xf32>
    %cst_21 = arith.constant dense<0.000000e+00> : vector<4x32xf32>
    %38 = tpu.matmul %36, %37, %cst_21 {dimension_numbers = #tpu.dot_dimension_numbers<[1], [0], [0], [1], [0, 0, 1, 1], [], []>} : vector<4x8xf32>, vector<8x32xf32>, vector<4x32xf32> -> vector<4x32xf32>
    %c0_22 = arith.constant 0 : index
    %c0_23 = arith.constant 0 : index
    %39 = vector.load %arg4[%c0_22, %c0_23] : memref<1x32xf32, #tpu.memory_space<vmem>>, vector<1x32xf32>
    %40 = vector.broadcast %39 : vector<1x32xf32> to vector<4x32xf32>
    %41 = arith.addf %38, %40 : vector<4x32xf32>
    %42 = vector.extract_strided_slice %41 {offsets = [0, 0], sizes = [2, 32], strides = [1, 1]} : vector<4x32xf32> to vector<2x32xf32>
    %43 = vector.extract_strided_slice %41 {offsets = [2, 0], sizes = [2, 32], strides = [1, 1]} : vector<4x32xf32> to vector<2x32xf32>
    %44 = arith.addf %42, %43 : vector<2x32xf32>
    %cst_24 = arith.constant 0.000000e+00 : f32
    %45 = vector.broadcast %cst_24 : f32 to vector<2x32xf32>
    %46 = arith.subf %45, %44 : vector<2x32xf32>
    %47 = math.exp %46 : vector<2x32xf32>
    %cst_25 = arith.constant 1.000000e+00 : f32
    %48 = vector.broadcast %cst_25 : f32 to vector<2x32xf32>
    %49 = arith.addf %48, %47 : vector<2x32xf32>
    %cst_26 = arith.constant 1.000000e+00 : f32
    %50 = vector.broadcast %cst_26 : f32 to vector<2x32xf32>
    %51 = arith.divf %50, %49 : vector<2x32xf32>
    %52 = vector.shape_cast %51 : vector<2x32xf32> to vector<2x1x32xf32>
    %53 = vector.broadcast %52 : vector<2x1x32xf32> to vector<2x16x32xf32>
    %54 = arith.mulf %24, %53 : vector<2x16x32xf32>
    %cst_27 = arith.constant dense<0.000000e+00> : vector<2x16xf32>
    %55 = vector.multi_reduction <add>, %54, %cst_27 [2] : vector<2x16x32xf32> to vector<2x16xf32>
    %cst_28 = arith.constant 3.200000e+01 : f32
    %56 = vector.broadcast %cst_28 : f32 to vector<2x16xf32>
    %57 = arith.divf %55, %56 : vector<2x16xf32>
    %cst_29 = arith.constant dense<0xFF800000> : vector<2x16xf32>
    %58 = vector.multi_reduction <maximumf>, %54, %cst_29 [2] : vector<2x16x32xf32> to vector<2x16xf32>
    %59 = tpu.concatenate %57, %58 in 1 : vector<2x16xf32>, vector<2x16xf32> -> vector<2x32xf32>
    %60 = arith.truncf %59 : vector<2x32xf32> to vector<2x32xbf16>
    %c0_30 = arith.constant 0 : index
    %c0_31 = arith.constant 0 : index
    %61 = vector.load %arg5[%c0_30, %c0_31] : memref<32x16xbf16, #tpu.memory_space<vmem>>, vector<32x16xbf16>
    %cst_32 = arith.constant dense<0.000000e+00> : vector<2x16xf32>
    %62 = tpu.matmul %60, %61, %cst_32 {dimension_numbers = #tpu.dot_dimension_numbers<[1], [0], [0], [1], [0, 0, 1, 1], [], []>} : vector<2x32xbf16>, vector<32x16xbf16>, vector<2x16xf32> -> vector<2x16xf32>
    %cst_33 = arith.constant 0.000000e+00 : f32
    %63 = vector.broadcast %cst_33 : f32 to vector<2x16xf32>
    %64 = arith.subf %63, %62 : vector<2x16xf32>
    %65 = math.exp %64 : vector<2x16xf32>
    %cst_34 = arith.constant 1.000000e+00 : f32
    %66 = vector.broadcast %cst_34 : f32 to vector<2x16xf32>
    %67 = arith.addf %66, %65 : vector<2x16xf32>
    %cst_35 = arith.constant 1.000000e+00 : f32
    %68 = vector.broadcast %cst_35 : f32 to vector<2x16xf32>
    %69 = arith.divf %68, %67 : vector<2x16xf32>
    %70 = vector.shape_cast %69 : vector<2x16xf32> to vector<2x16x1xf32>
    %71 = vector.broadcast %70 : vector<2x16x1xf32> to vector<2x16x32xf32>
    %72 = arith.mulf %54, %71 : vector<2x16x32xf32>
    %c0_36 = arith.constant 0 : index
    %c0_37 = arith.constant 0 : index
    %c0_38 = arith.constant 0 : index
    %73 = vector.load %arg6[%c0_36, %c0_37, %c0_38] : memref<2x16x32xf32, #tpu.memory_space<vmem>>, vector<2x16x32xf32>
    tpu.vector_store %arg6[%c0_36, %c0_37, %c0_38], %72 {strides = array<i32>} : memref<2x16x32xf32, #tpu.memory_space<vmem>>, vector<2x16x32xf32>,
    return
  }
}

module attributes {stable_mosaic.version = 11 : i64} {
  func.func @_tube_kernel(%arg0: memref<32x32xf32, #tpu.memory_space<vmem>>, %arg1: memref<32x64xbf16, #tpu.memory_space<vmem>>, %arg2: memref<1x64xf32, #tpu.memory_space<vmem>>, %arg3: memref<32x64xbf16, #tpu.memory_space<vmem>>, %arg4: memref<1x64xf32, #tpu.memory_space<vmem>>, %arg5: memref<64x32xbf16, #tpu.memory_space<vmem>>, %arg6: memref<1x32xf32, #tpu.memory_space<vmem>>, %arg7: memref<32x32xf32, #tpu.memory_space<vmem>>) attributes {dimension_semantics = [], scalar_prefetch = 0 : i64, scratch_operands = 0 : i64, tpu.core_type = #tpu.core_type<tc>} {
    %c0 = arith.constant 0 : index
    %c0_0 = arith.constant 0 : index
    %0 = vector.load %arg0[%c0, %c0_0] : memref<32x32xf32, #tpu.memory_space<vmem>>, vector<32x32xf32>
    %1 = arith.truncf %0 : vector<32x32xf32> to vector<32x32xbf16>
    %c0_1 = arith.constant 0 : index
    %c0_2 = arith.constant 0 : index
    %2 = vector.load %arg1[%c0_1, %c0_2] : memref<32x64xbf16, #tpu.memory_space<vmem>>, vector<32x64xbf16>
    %cst = arith.constant dense<0.000000e+00> : vector<32x64xf32>
    %3 = tpu.matmul %1, %2, %cst {dimension_numbers = #tpu.dot_dimension_numbers<[1], [0], [0], [1], [0, 0, 1, 1], [], []>} : vector<32x32xbf16>, vector<32x64xbf16>, vector<32x64xf32> -> vector<32x64xf32>
    %c0_3 = arith.constant 0 : index
    %c0_4 = arith.constant 0 : index
    %4 = vector.load %arg2[%c0_3, %c0_4] : memref<1x64xf32, #tpu.memory_space<vmem>>, vector<1x64xf32>
    %5 = vector.broadcast %4 : vector<1x64xf32> to vector<32x64xf32>
    %6 = arith.addf %3, %5 : vector<32x64xf32>
    %c0_5 = arith.constant 0 : index
    %c0_6 = arith.constant 0 : index
    %7 = vector.load %arg3[%c0_5, %c0_6] : memref<32x64xbf16, #tpu.memory_space<vmem>>, vector<32x64xbf16>
    %cst_7 = arith.constant dense<0.000000e+00> : vector<32x64xf32>
    %8 = tpu.matmul %1, %7, %cst_7 {dimension_numbers = #tpu.dot_dimension_numbers<[1], [0], [0], [1], [0, 0, 1, 1], [], []>} : vector<32x32xbf16>, vector<32x64xbf16>, vector<32x64xf32> -> vector<32x64xf32>
    %c0_8 = arith.constant 0 : index
    %c0_9 = arith.constant 0 : index
    %9 = vector.load %arg4[%c0_8, %c0_9] : memref<1x64xf32, #tpu.memory_space<vmem>>, vector<1x64xf32>
    %10 = vector.broadcast %9 : vector<1x64xf32> to vector<32x64xf32>
    %11 = arith.addf %8, %10 : vector<32x64xf32>
    %cst_10 = arith.constant 0.000000e+00 : f32
    %12 = vector.broadcast %cst_10 : f32 to vector<32x64xf32>
    %13 = arith.subf %12, %11 : vector<32x64xf32>
    %14 = math.exp %13 : vector<32x64xf32>
    %cst_11 = arith.constant 1.000000e+00 : f32
    %15 = vector.broadcast %cst_11 : f32 to vector<32x64xf32>
    %16 = arith.addf %15, %14 : vector<32x64xf32>
    %cst_12 = arith.constant 1.000000e+00 : f32
    %17 = vector.broadcast %cst_12 : f32 to vector<32x64xf32>
    %18 = arith.divf %17, %16 : vector<32x64xf32>
    %19 = arith.mulf %6, %18 : vector<32x64xf32>
    %20 = arith.truncf %19 : vector<32x64xf32> to vector<32x64xbf16>
    %c0_13 = arith.constant 0 : index
    %c0_14 = arith.constant 0 : index
    %21 = vector.load %arg5[%c0_13, %c0_14] : memref<64x32xbf16, #tpu.memory_space<vmem>>, vector<64x32xbf16>
    %cst_15 = arith.constant dense<0.000000e+00> : vector<32x32xf32>
    %22 = tpu.matmul %20, %21, %cst_15 {dimension_numbers = #tpu.dot_dimension_numbers<[1], [0], [0], [1], [0, 0, 1, 1], [], []>} : vector<32x64xbf16>, vector<64x32xbf16>, vector<32x32xf32> -> vector<32x32xf32>
    %c0_16 = arith.constant 0 : index
    %c0_17 = arith.constant 0 : index
    %23 = vector.load %arg6[%c0_16, %c0_17] : memref<1x32xf32, #tpu.memory_space<vmem>>, vector<1x32xf32>
    %24 = vector.broadcast %23 : vector<1x32xf32> to vector<32x32xf32>
    %25 = arith.addf %22, %24 : vector<32x32xf32>
    %c0_18 = arith.constant 0 : index
    %c0_19 = arith.constant 0 : index
    %26 = vector.load %arg7[%c0_18, %c0_19] : memref<32x32xf32, #tpu.memory_space<vmem>>, vector<32x32xf32>
    tpu.vector_store %arg7[%c0_18, %c0_19], %25 {strides = array<i32>} : memref<32x32xf32, #tpu.memory_space<vmem>>, vector<32x32xf32>,
    return
  }
}

module attributes {stable_mosaic.version = 11 : i64} {
  func.func @kernel(%arg0: memref<8x128xf32, #tpu.memory_space<vmem>>, %arg1: memref<128x128xbf16, #tpu.memory_space<vmem>>, %arg2: memref<128x128xbf16, #tpu.memory_space<vmem>>, %arg3: memref<128x128xbf16, #tpu.memory_space<vmem>>, %arg4: memref<1x128xf32, #tpu.memory_space<vmem>>, %arg5: memref<128x128xbf16, #tpu.memory_space<vmem>>, %arg6: memref<128x128xbf16, #tpu.memory_space<vmem>>, %arg7: memref<128x128xbf16, #tpu.memory_space<vmem>>, %arg8: memref<1x128xf32, #tpu.memory_space<vmem>>, %arg9: memref<8x128xf32, #tpu.memory_space<vmem>>) attributes {dimension_semantics = [], scalar_prefetch = 0 : i64, scratch_operands = 0 : i64, tpu.core_type = #tpu.core_type<tc>} {
    %c0 = arith.constant 0 : index
    %c0_0 = arith.constant 0 : index
    %0 = vector.load %arg0[%c0, %c0_0] : memref<8x128xf32, #tpu.memory_space<vmem>>, vector<8x128xf32>
    %1 = tpu.iota {dimensions = array<i32: 0>} : vector<8x128xi32>
    %c3_i32 = arith.constant 3 : i32
    %2 = vector.broadcast %c3_i32 : i32 to vector<8x128xi32>
    %3 = arith.andi %1, %2 : vector<8x128xi32>
    %c0_i32 = arith.constant 0 : i32
    %4 = vector.broadcast %c0_i32 : i32 to vector<8x128xi32>
    %5 = arith.cmpi sgt, %3, %4 : vector<8x128xi32>
    %c1_i32 = arith.constant 1 : i32
    %6 = tpu.dynamic_rotate %0 by %c1_i32 dim 0 : vector<8x128xf32>, i32 -> vector<8x128xf32>
    %cst = arith.constant 0.000000e+00 : f32
    %7 = vector.broadcast %cst : f32 to vector<8x128xf32>
    %8 = arith.select %5, %6, %7 : vector<8x128xi1>, vector<8x128xf32>
    %c3_i32_1 = arith.constant 3 : i32
    %9 = vector.broadcast %c3_i32_1 : i32 to vector<8x128xi32>
    %10 = arith.cmpi slt, %3, %9 : vector<8x128xi32>
    %c7_i32 = arith.constant 7 : i32
    %11 = tpu.dynamic_rotate %0 by %c7_i32 dim 0 : vector<8x128xf32>, i32 -> vector<8x128xf32>
    %cst_2 = arith.constant 0.000000e+00 : f32
    %12 = vector.broadcast %cst_2 : f32 to vector<8x128xf32>
    %13 = arith.select %10, %11, %12 : vector<8x128xi1>, vector<8x128xf32>
    %14 = arith.truncf %0 : vector<8x128xf32> to vector<8x128xbf16>
    %c0_3 = arith.constant 0 : index
    %c0_4 = arith.constant 0 : index
    %15 = vector.load %arg2[%c0_3, %c0_4] : memref<128x128xbf16, #tpu.memory_space<vmem>>, vector<128x128xbf16>
    %cst_5 = arith.constant dense<0.000000e+00> : vector<8x128xf32>
    %16 = tpu.matmul %14, %15, %cst_5 {dimension_numbers = #tpu.dot_dimension_numbers<[1], [0], [0], [1], [0, 0, 1, 1], [], []>} : vector<8x128xbf16>, vector<128x128xbf16>, vector<8x128xf32> -> vector<8x128xf32>
    %17 = arith.truncf %8 : vector<8x128xf32> to vector<8x128xbf16>
    %c0_6 = arith.constant 0 : index
    %c0_7 = arith.constant 0 : index
    %18 = vector.load %arg1[%c0_6, %c0_7] : memref<128x128xbf16, #tpu.memory_space<vmem>>, vector<128x128xbf16>
    %cst_8 = arith.constant dense<0.000000e+00> : vector<8x128xf32>
    %19 = tpu.matmul %17, %18, %cst_8 {dimension_numbers = #tpu.dot_dimension_numbers<[1], [0], [0], [1], [0, 0, 1, 1], [], []>} : vector<8x128xbf16>, vector<128x128xbf16>, vector<8x128xf32> -> vector<8x128xf32>
    %20 = arith.addf %16, %19 : vector<8x128xf32>
    %21 = arith.truncf %13 : vector<8x128xf32> to vector<8x128xbf16>
    %c0_9 = arith.constant 0 : index
    %c0_10 = arith.constant 0 : index
    %22 = vector.load %arg3[%c0_9, %c0_10] : memref<128x128xbf16, #tpu.memory_space<vmem>>, vector<128x128xbf16>
    %cst_11 = arith.constant dense<0.000000e+00> : vector<8x128xf32>
    %23 = tpu.matmul %21, %22, %cst_11 {dimension_numbers = #tpu.dot_dimension_numbers<[1], [0], [0], [1], [0, 0, 1, 1], [], []>} : vector<8x128xbf16>, vector<128x128xbf16>, vector<8x128xf32> -> vector<8x128xf32>
    %24 = arith.addf %20, %23 : vector<8x128xf32>
    %c0_12 = arith.constant 0 : index
    %c0_13 = arith.constant 0 : index
    %25 = vector.load %arg4[%c0_12, %c0_13] : memref<1x128xf32, #tpu.memory_space<vmem>>, vector<1x128xf32>
    %26 = vector.broadcast %25 : vector<1x128xf32> to vector<8x128xf32>
    %27 = arith.addf %24, %26 : vector<8x128xf32>
    %cst_14 = arith.constant 0.000000e+00 : f32
    %28 = vector.broadcast %cst_14 : f32 to vector<8x128xf32>
    %29 = arith.maximumf %27, %28 : vector<8x128xf32>
    %30 = tpu.iota {dimensions = array<i32: 0>} : vector<8x128xi32>
    %c3_i32_15 = arith.constant 3 : i32
    %31 = vector.broadcast %c3_i32_15 : i32 to vector<8x128xi32>
    %32 = arith.andi %30, %31 : vector<8x128xi32>
    %c0_i32_16 = arith.constant 0 : i32
    %33 = vector.broadcast %c0_i32_16 : i32 to vector<8x128xi32>
    %34 = arith.cmpi sgt, %32, %33 : vector<8x128xi32>
    %c1_i32_17 = arith.constant 1 : i32
    %35 = tpu.dynamic_rotate %29 by %c1_i32_17 dim 0 : vector<8x128xf32>, i32 -> vector<8x128xf32>
    %cst_18 = arith.constant 0.000000e+00 : f32
    %36 = vector.broadcast %cst_18 : f32 to vector<8x128xf32>
    %37 = arith.select %34, %35, %36 : vector<8x128xi1>, vector<8x128xf32>
    %c3_i32_19 = arith.constant 3 : i32
    %38 = vector.broadcast %c3_i32_19 : i32 to vector<8x128xi32>
    %39 = arith.cmpi slt, %32, %38 : vector<8x128xi32>
    %c7_i32_20 = arith.constant 7 : i32
    %40 = tpu.dynamic_rotate %29 by %c7_i32_20 dim 0 : vector<8x128xf32>, i32 -> vector<8x128xf32>
    %cst_21 = arith.constant 0.000000e+00 : f32
    %41 = vector.broadcast %cst_21 : f32 to vector<8x128xf32>
    %42 = arith.select %39, %40, %41 : vector<8x128xi1>, vector<8x128xf32>
    %43 = arith.truncf %29 : vector<8x128xf32> to vector<8x128xbf16>
    %c0_22 = arith.constant 0 : index
    %c0_23 = arith.constant 0 : index
    %44 = vector.load %arg6[%c0_22, %c0_23] : memref<128x128xbf16, #tpu.memory_space<vmem>>, vector<128x128xbf16>
    %cst_24 = arith.constant dense<0.000000e+00> : vector<8x128xf32>
    %45 = tpu.matmul %43, %44, %cst_24 {dimension_numbers = #tpu.dot_dimension_numbers<[1], [0], [0], [1], [0, 0, 1, 1], [], []>} : vector<8x128xbf16>, vector<128x128xbf16>, vector<8x128xf32> -> vector<8x128xf32>
    %46 = arith.truncf %37 : vector<8x128xf32> to vector<8x128xbf16>
    %c0_25 = arith.constant 0 : index
    %c0_26 = arith.constant 0 : index
    %47 = vector.load %arg5[%c0_25, %c0_26] : memref<128x128xbf16, #tpu.memory_space<vmem>>, vector<128x128xbf16>
    %cst_27 = arith.constant dense<0.000000e+00> : vector<8x128xf32>
    %48 = tpu.matmul %46, %47, %cst_27 {dimension_numbers = #tpu.dot_dimension_numbers<[1], [0], [0], [1], [0, 0, 1, 1], [], []>} : vector<8x128xbf16>, vector<128x128xbf16>, vector<8x128xf32> -> vector<8x128xf32>
    %49 = arith.addf %45, %48 : vector<8x128xf32>
    %50 = arith.truncf %42 : vector<8x128xf32> to vector<8x128xbf16>
    %c0_28 = arith.constant 0 : index
    %c0_29 = arith.constant 0 : index
    %51 = vector.load %arg7[%c0_28, %c0_29] : memref<128x128xbf16, #tpu.memory_space<vmem>>, vector<128x128xbf16>
    %cst_30 = arith.constant dense<0.000000e+00> : vector<8x128xf32>
    %52 = tpu.matmul %50, %51, %cst_30 {dimension_numbers = #tpu.dot_dimension_numbers<[1], [0], [0], [1], [0, 0, 1, 1], [], []>} : vector<8x128xbf16>, vector<128x128xbf16>, vector<8x128xf32> -> vector<8x128xf32>
    %53 = arith.addf %49, %52 : vector<8x128xf32>
    %c0_31 = arith.constant 0 : index
    %c0_32 = arith.constant 0 : index
    %54 = vector.load %arg8[%c0_31, %c0_32] : memref<1x128xf32, #tpu.memory_space<vmem>>, vector<1x128xf32>
    %55 = vector.broadcast %54 : vector<1x128xf32> to vector<8x128xf32>
    %56 = arith.addf %53, %55 : vector<8x128xf32>
    %cst_33 = arith.constant 1.000000e+00 : f32
    %57 = vector.broadcast %cst_33 : f32 to vector<8x128xf32>
    %58 = arith.mulf %57, %56 : vector<8x128xf32>
    %59 = arith.addf %0, %58 : vector<8x128xf32>
    %c0_34 = arith.constant 0 : index
    %c0_35 = arith.constant 0 : index
    %60 = vector.load %arg9[%c0_34, %c0_35] : memref<8x128xf32, #tpu.memory_space<vmem>>, vector<8x128xf32>
    tpu.vector_store %arg9[%c0_34, %c0_35], %59 {strides = array<i32>} : memref<8x128xf32, #tpu.memory_space<vmem>>, vector<8x128xf32>,
    return
  }
}

module attributes {stable_mosaic.version = 11 : i64} {
  func.func @kernel(%arg0: memref<16x512xf32, #tpu.memory_space<vmem>>, %arg1: memref<512x128xbf16, #tpu.memory_space<vmem>>, %arg2: memref<512x128xbf16, #tpu.memory_space<vmem>>, %arg3: memref<512x128xbf16, #tpu.memory_space<vmem>>, %arg4: memref<1x128xf32, #tpu.memory_space<vmem>>, %arg5: memref<16x128xf32, #tpu.memory_space<vmem>>) attributes {dimension_semantics = [], scalar_prefetch = 0 : i64, scratch_operands = 0 : i64, tpu.core_type = #tpu.core_type<tc>} {
    %c0 = arith.constant 0 : index
    %c0_0 = arith.constant 0 : index
    %0 = vector.load %arg0[%c0, %c0_0] : memref<16x512xf32, #tpu.memory_space<vmem>>, vector<16x512xf32>
    %1 = tpu.iota {dimensions = array<i32: 0>} : vector<16x512xi32>
    %c7_i32 = arith.constant 7 : i32
    %2 = vector.broadcast %c7_i32 : i32 to vector<16x512xi32>
    %3 = arith.andi %1, %2 : vector<16x512xi32>
    %c0_i32 = arith.constant 0 : i32
    %4 = vector.broadcast %c0_i32 : i32 to vector<16x512xi32>
    %5 = arith.cmpi sgt, %3, %4 : vector<16x512xi32>
    %c1_i32 = arith.constant 1 : i32
    %6 = tpu.dynamic_rotate %0 by %c1_i32 dim 0 : vector<16x512xf32>, i32 -> vector<16x512xf32>
    %cst = arith.constant 0.000000e+00 : f32
    %7 = vector.broadcast %cst : f32 to vector<16x512xf32>
    %8 = arith.select %5, %6, %7 : vector<16x512xi1>, vector<16x512xf32>
    %c7_i32_1 = arith.constant 7 : i32
    %9 = vector.broadcast %c7_i32_1 : i32 to vector<16x512xi32>
    %10 = arith.cmpi slt, %3, %9 : vector<16x512xi32>
    %c15_i32 = arith.constant 15 : i32
    %11 = tpu.dynamic_rotate %0 by %c15_i32 dim 0 : vector<16x512xf32>, i32 -> vector<16x512xf32>
    %cst_2 = arith.constant 0.000000e+00 : f32
    %12 = vector.broadcast %cst_2 : f32 to vector<16x512xf32>
    %13 = arith.select %10, %11, %12 : vector<16x512xi1>, vector<16x512xf32>
    %14 = arith.truncf %0 : vector<16x512xf32> to vector<16x512xbf16>
    %c0_3 = arith.constant 0 : index
    %c0_4 = arith.constant 0 : index
    %15 = vector.load %arg2[%c0_3, %c0_4] : memref<512x128xbf16, #tpu.memory_space<vmem>>, vector<512x128xbf16>
    %cst_5 = arith.constant dense<0.000000e+00> : vector<16x128xf32>
    %16 = tpu.matmul %14, %15, %cst_5 {dimension_numbers = #tpu.dot_dimension_numbers<[1], [0], [0], [1], [0, 0, 1, 1], [], []>} : vector<16x512xbf16>, vector<512x128xbf16>, vector<16x128xf32> -> vector<16x128xf32>
    %17 = arith.truncf %8 : vector<16x512xf32> to vector<16x512xbf16>
    %c0_6 = arith.constant 0 : index
    %c0_7 = arith.constant 0 : index
    %18 = vector.load %arg1[%c0_6, %c0_7] : memref<512x128xbf16, #tpu.memory_space<vmem>>, vector<512x128xbf16>
    %cst_8 = arith.constant dense<0.000000e+00> : vector<16x128xf32>
    %19 = tpu.matmul %17, %18, %cst_8 {dimension_numbers = #tpu.dot_dimension_numbers<[1], [0], [0], [1], [0, 0, 1, 1], [], []>} : vector<16x512xbf16>, vector<512x128xbf16>, vector<16x128xf32> -> vector<16x128xf32>
    %20 = arith.addf %16, %19 : vector<16x128xf32>
    %21 = arith.truncf %13 : vector<16x512xf32> to vector<16x512xbf16>
    %c0_9 = arith.constant 0 : index
    %c0_10 = arith.constant 0 : index
    %22 = vector.load %arg3[%c0_9, %c0_10] : memref<512x128xbf16, #tpu.memory_space<vmem>>, vector<512x128xbf16>
    %cst_11 = arith.constant dense<0.000000e+00> : vector<16x128xf32>
    %23 = tpu.matmul %21, %22, %cst_11 {dimension_numbers = #tpu.dot_dimension_numbers<[1], [0], [0], [1], [0, 0, 1, 1], [], []>} : vector<16x512xbf16>, vector<512x128xbf16>, vector<16x128xf32> -> vector<16x128xf32>
    %24 = arith.addf %20, %23 : vector<16x128xf32>
    %c0_12 = arith.constant 0 : index
    %c0_13 = arith.constant 0 : index
    %25 = vector.load %arg4[%c0_12, %c0_13] : memref<1x128xf32, #tpu.memory_space<vmem>>, vector<1x128xf32>
    %26 = vector.broadcast %25 : vector<1x128xf32> to vector<16x128xf32>
    %27 = arith.addf %24, %26 : vector<16x128xf32>
    %c0_14 = arith.constant 0 : index
    %c0_15 = arith.constant 0 : index
    %28 = vector.load %arg5[%c0_14, %c0_15] : memref<16x128xf32, #tpu.memory_space<vmem>>, vector<16x128xf32>
    tpu.vector_store %arg5[%c0_14, %c0_15], %27 {strides = array<i32>} : memref<16x128xf32, #tpu.memory_space<vmem>>, vector<16x128xf32>,
    return
  }
}

module attributes {stable_mosaic.version = 11 : i64} {
  func.func @_tube_kernel(%arg0: memref<128x16xf32, #tpu.memory_space<vmem>>, %arg1: memref<16x32xbf16, #tpu.memory_space<vmem>>, %arg2: memref<1x32xf32, #tpu.memory_space<vmem>>, %arg3: memref<16x32xbf16, #tpu.memory_space<vmem>>, %arg4: memref<1x32xf32, #tpu.memory_space<vmem>>, %arg5: memref<32x16xbf16, #tpu.memory_space<vmem>>, %arg6: memref<1x16xf32, #tpu.memory_space<vmem>>, %arg7: memref<128x16xf32, #tpu.memory_space<vmem>>) attributes {dimension_semantics = [], scalar_prefetch = 0 : i64, scratch_operands = 0 : i64, tpu.core_type = #tpu.core_type<tc>} {
    %c0 = arith.constant 0 : index
    %c0_0 = arith.constant 0 : index
    %0 = vector.load %arg0[%c0, %c0_0] : memref<128x16xf32, #tpu.memory_space<vmem>>, vector<128x16xf32>
    %1 = arith.truncf %0 : vector<128x16xf32> to vector<128x16xbf16>
    %c0_1 = arith.constant 0 : index
    %c0_2 = arith.constant 0 : index
    %2 = vector.load %arg1[%c0_1, %c0_2] : memref<16x32xbf16, #tpu.memory_space<vmem>>, vector<16x32xbf16>
    %cst = arith.constant dense<0.000000e+00> : vector<128x32xf32>
    %3 = tpu.matmul %1, %2, %cst {dimension_numbers = #tpu.dot_dimension_numbers<[1], [0], [0], [1], [0, 0, 1, 1], [], []>} : vector<128x16xbf16>, vector<16x32xbf16>, vector<128x32xf32> -> vector<128x32xf32>
    %c0_3 = arith.constant 0 : index
    %c0_4 = arith.constant 0 : index
    %4 = vector.load %arg2[%c0_3, %c0_4] : memref<1x32xf32, #tpu.memory_space<vmem>>, vector<1x32xf32>
    %5 = vector.broadcast %4 : vector<1x32xf32> to vector<128x32xf32>
    %6 = arith.addf %3, %5 : vector<128x32xf32>
    %c0_5 = arith.constant 0 : index
    %c0_6 = arith.constant 0 : index
    %7 = vector.load %arg3[%c0_5, %c0_6] : memref<16x32xbf16, #tpu.memory_space<vmem>>, vector<16x32xbf16>
    %cst_7 = arith.constant dense<0.000000e+00> : vector<128x32xf32>
    %8 = tpu.matmul %1, %7, %cst_7 {dimension_numbers = #tpu.dot_dimension_numbers<[1], [0], [0], [1], [0, 0, 1, 1], [], []>} : vector<128x16xbf16>, vector<16x32xbf16>, vector<128x32xf32> -> vector<128x32xf32>
    %c0_8 = arith.constant 0 : index
    %c0_9 = arith.constant 0 : index
    %9 = vector.load %arg4[%c0_8, %c0_9] : memref<1x32xf32, #tpu.memory_space<vmem>>, vector<1x32xf32>
    %10 = vector.broadcast %9 : vector<1x32xf32> to vector<128x32xf32>
    %11 = arith.addf %8, %10 : vector<128x32xf32>
    %cst_10 = arith.constant 0.000000e+00 : f32
    %12 = vector.broadcast %cst_10 : f32 to vector<128x32xf32>
    %13 = arith.subf %12, %11 : vector<128x32xf32>
    %14 = math.exp %13 : vector<128x32xf32>
    %cst_11 = arith.constant 1.000000e+00 : f32
    %15 = vector.broadcast %cst_11 : f32 to vector<128x32xf32>
    %16 = arith.addf %15, %14 : vector<128x32xf32>
    %cst_12 = arith.constant 1.000000e+00 : f32
    %17 = vector.broadcast %cst_12 : f32 to vector<128x32xf32>
    %18 = arith.divf %17, %16 : vector<128x32xf32>
    %19 = arith.mulf %6, %18 : vector<128x32xf32>
    %20 = arith.truncf %19 : vector<128x32xf32> to vector<128x32xbf16>
    %c0_13 = arith.constant 0 : index
    %c0_14 = arith.constant 0 : index
    %21 = vector.load %arg5[%c0_13, %c0_14] : memref<32x16xbf16, #tpu.memory_space<vmem>>, vector<32x16xbf16>
    %cst_15 = arith.constant dense<0.000000e+00> : vector<128x16xf32>
    %22 = tpu.matmul %20, %21, %cst_15 {dimension_numbers = #tpu.dot_dimension_numbers<[1], [0], [0], [1], [0, 0, 1, 1], [], []>} : vector<128x32xbf16>, vector<32x16xbf16>, vector<128x16xf32> -> vector<128x16xf32>
    %c0_16 = arith.constant 0 : index
    %c0_17 = arith.constant 0 : index
    %23 = vector.load %arg6[%c0_16, %c0_17] : memref<1x16xf32, #tpu.memory_space<vmem>>, vector<1x16xf32>
    %24 = vector.broadcast %23 : vector<1x16xf32> to vector<128x16xf32>
    %25 = arith.addf %22, %24 : vector<128x16xf32>
    %c0_18 = arith.constant 0 : index
    %c0_19 = arith.constant 0 : index
    %26 = vector.load %arg7[%c0_18, %c0_19] : memref<128x16xf32, #tpu.memory_space<vmem>>, vector<128x16xf32>
    tpu.vector_store %arg7[%c0_18, %c0_19], %25 {strides = array<i32>} : memref<128x16xf32, #tpu.memory_space<vmem>>, vector<128x16xf32>,
    return
  }
}

module attributes {stable_mosaic.version = 11 : i64} {
  func.func @kernel(%arg0: memref<32x512xf32, #tpu.memory_space<vmem>>, %arg1: memref<512x128xbf16, #tpu.memory_space<vmem>>, %arg2: memref<512x128xbf16, #tpu.memory_space<vmem>>, %arg3: memref<512x128xbf16, #tpu.memory_space<vmem>>, %arg4: memref<1x128xf32, #tpu.memory_space<vmem>>, %arg5: memref<32x128xf32, #tpu.memory_space<vmem>>) attributes {dimension_semantics = [], scalar_prefetch = 0 : i64, scratch_operands = 0 : i64, tpu.core_type = #tpu.core_type<tc>} {
    %c0 = arith.constant 0 : index
    %c0_0 = arith.constant 0 : index
    %0 = vector.load %arg0[%c0, %c0_0] : memref<32x512xf32, #tpu.memory_space<vmem>>, vector<32x512xf32>
    %1 = tpu.iota {dimensions = array<i32: 0>} : vector<32x512xi32>
    %c15_i32 = arith.constant 15 : i32
    %2 = vector.broadcast %c15_i32 : i32 to vector<32x512xi32>
    %3 = arith.andi %1, %2 : vector<32x512xi32>
    %c0_i32 = arith.constant 0 : i32
    %4 = vector.broadcast %c0_i32 : i32 to vector<32x512xi32>
    %5 = arith.cmpi sgt, %3, %4 : vector<32x512xi32>
    %c1_i32 = arith.constant 1 : i32
    %6 = tpu.dynamic_rotate %0 by %c1_i32 dim 0 : vector<32x512xf32>, i32 -> vector<32x512xf32>
    %cst = arith.constant 0.000000e+00 : f32
    %7 = vector.broadcast %cst : f32 to vector<32x512xf32>
    %8 = arith.select %5, %6, %7 : vector<32x512xi1>, vector<32x512xf32>
    %c15_i32_1 = arith.constant 15 : i32
    %9 = vector.broadcast %c15_i32_1 : i32 to vector<32x512xi32>
    %10 = arith.cmpi slt, %3, %9 : vector<32x512xi32>
    %c31_i32 = arith.constant 31 : i32
    %11 = tpu.dynamic_rotate %0 by %c31_i32 dim 0 : vector<32x512xf32>, i32 -> vector<32x512xf32>
    %cst_2 = arith.constant 0.000000e+00 : f32
    %12 = vector.broadcast %cst_2 : f32 to vector<32x512xf32>
    %13 = arith.select %10, %11, %12 : vector<32x512xi1>, vector<32x512xf32>
    %14 = arith.truncf %0 : vector<32x512xf32> to vector<32x512xbf16>
    %c0_3 = arith.constant 0 : index
    %c0_4 = arith.constant 0 : index
    %15 = vector.load %arg2[%c0_3, %c0_4] : memref<512x128xbf16, #tpu.memory_space<vmem>>, vector<512x128xbf16>
    %cst_5 = arith.constant dense<0.000000e+00> : vector<32x128xf32>
    %16 = tpu.matmul %14, %15, %cst_5 {dimension_numbers = #tpu.dot_dimension_numbers<[1], [0], [0], [1], [0, 0, 1, 1], [], []>} : vector<32x512xbf16>, vector<512x128xbf16>, vector<32x128xf32> -> vector<32x128xf32>
    %17 = arith.truncf %8 : vector<32x512xf32> to vector<32x512xbf16>
    %c0_6 = arith.constant 0 : index
    %c0_7 = arith.constant 0 : index
    %18 = vector.load %arg1[%c0_6, %c0_7] : memref<512x128xbf16, #tpu.memory_space<vmem>>, vector<512x128xbf16>
    %cst_8 = arith.constant dense<0.000000e+00> : vector<32x128xf32>
    %19 = tpu.matmul %17, %18, %cst_8 {dimension_numbers = #tpu.dot_dimension_numbers<[1], [0], [0], [1], [0, 0, 1, 1], [], []>} : vector<32x512xbf16>, vector<512x128xbf16>, vector<32x128xf32> -> vector<32x128xf32>
    %20 = arith.addf %16, %19 : vector<32x128xf32>
    %21 = arith.truncf %13 : vector<32x512xf32> to vector<32x512xbf16>
    %c0_9 = arith.constant 0 : index
    %c0_10 = arith.constant 0 : index
    %22 = vector.load %arg3[%c0_9, %c0_10] : memref<512x128xbf16, #tpu.memory_space<vmem>>, vector<512x128xbf16>
    %cst_11 = arith.constant dense<0.000000e+00> : vector<32x128xf32>
    %23 = tpu.matmul %21, %22, %cst_11 {dimension_numbers = #tpu.dot_dimension_numbers<[1], [0], [0], [1], [0, 0, 1, 1], [], []>} : vector<32x512xbf16>, vector<512x128xbf16>, vector<32x128xf32> -> vector<32x128xf32>
    %24 = arith.addf %20, %23 : vector<32x128xf32>
    %c0_12 = arith.constant 0 : index
    %c0_13 = arith.constant 0 : index
    %25 = vector.load %arg4[%c0_12, %c0_13] : memref<1x128xf32, #tpu.memory_space<vmem>>, vector<1x128xf32>
    %26 = vector.broadcast %25 : vector<1x128xf32> to vector<32x128xf32>
    %27 = arith.addf %24, %26 : vector<32x128xf32>
    %c0_14 = arith.constant 0 : index
    %c0_15 = arith.constant 0 : index
    %28 = vector.load %arg5[%c0_14, %c0_15] : memref<32x128xf32, #tpu.memory_space<vmem>>, vector<32x128xf32>
    tpu.vector_store %arg5[%c0_14, %c0_15], %27 {strides = array<i32>} : memref<32x128xf32, #tpu.memory_space<vmem>>, vector<32x128xf32>,
    return
  }
}

module attributes {stable_mosaic.version = 11 : i64} {
  func.func @kernel(%arg0: memref<2x256x8xf32, #tpu.memory_space<vmem>>, %arg1: memref<8x2xf32, #tpu.memory_space<vmem>>, %arg2: memref<1x2xf32, #tpu.memory_space<vmem>>, %arg3: memref<2x8xf32, #tpu.memory_space<vmem>>, %arg4: memref<1x8xf32, #tpu.memory_space<vmem>>, %arg5: memref<512x256xbf16, #tpu.memory_space<vmem>>, %arg6: memref<2x256x8xf32, #tpu.memory_space<vmem>>) attributes {dimension_semantics = [], scalar_prefetch = 0 : i64, scratch_operands = 0 : i64, tpu.core_type = #tpu.core_type<tc>} {
    %c0 = arith.constant 0 : index
    %c0_0 = arith.constant 0 : index
    %c0_1 = arith.constant 0 : index
    %0 = vector.load %arg0[%c0, %c0_0, %c0_1] : memref<2x256x8xf32, #tpu.memory_space<vmem>>, vector<2x256x8xf32>
    %cst = arith.constant dense<0.000000e+00> : vector<2x8xf32>
    %1 = vector.multi_reduction <add>, %0, %cst [1] : vector<2x256x8xf32> to vector<2x8xf32>
    %2 = vector.shape_cast %1 : vector<2x8xf32> to vector<2x1x8xf32>
    %cst_2 = arith.constant 2.560000e+02 : f32
    %3 = vector.broadcast %cst_2 : f32 to vector<2x1x8xf32>
    %4 = arith.divf %2, %3 : vector<2x1x8xf32>
    %cst_3 = arith.constant dense<0.000000e+00> : vector<1x8xf32>
    %5 = vector.multi_reduction <add>, %4, %cst_3 [0] : vector<2x1x8xf32> to vector<1x8xf32>
    %6 = vector.shape_cast %5 : vector<1x8xf32> to vector<1x1x8xf32>
    %cst_4 = arith.constant 2.000000e+00 : f32
    %7 = vector.broadcast %cst_4 : f32 to vector<1x1x8xf32>
    %8 = arith.divf %6, %7 : vector<1x1x8xf32>
    %9 = vector.broadcast %8 : vector<1x1x8xf32> to vector<2x256x8xf32>
    %10 = arith.subf %0, %9 : vector<2x256x8xf32>
    %11 = arith.mulf %10, %10 : vector<2x256x8xf32>
    %cst_5 = arith.constant dense<0.000000e+00> : vector<2x8xf32>
    %12 = vector.multi_reduction <add>, %11, %cst_5 [1] : vector<2x256x8xf32> to vector<2x8xf32>
    %13 = vector.shape_cast %12 : vector<2x8xf32> to vector<2x1x8xf32>
    %cst_6 = arith.constant 2.560000e+02 : f32
    %14 = vector.broadcast %cst_6 : f32 to vector<2x1x8xf32>
    %15 = arith.divf %13, %14 : vector<2x1x8xf32>
    %cst_7 = arith.constant dense<0.000000e+00> : vector<1x8xf32>
    %16 = vector.multi_reduction <add>, %15, %cst_7 [0] : vector<2x1x8xf32> to vector<1x8xf32>
    %17 = vector.shape_cast %16 : vector<1x8xf32> to vector<1x1x8xf32>
    %cst_8 = arith.constant 2.000000e+00 : f32
    %18 = vector.broadcast %cst_8 : f32 to vector<1x1x8xf32>
    %19 = arith.divf %17, %18 : vector<1x1x8xf32>
    %cst_9 = arith.constant 9.99999974E-6 : f32
    %20 = vector.broadcast %cst_9 : f32 to vector<1x1x8xf32>
    %21 = arith.addf %19, %20 : vector<1x1x8xf32>
    %22 = math.rsqrt %21 : vector<1x1x8xf32>
    %23 = vector.broadcast %22 : vector<1x1x8xf32> to vector<2x256x8xf32>
    %24 = arith.mulf %10, %23 : vector<2x256x8xf32>
    %cst_10 = arith.constant dense<0.000000e+00> : vector<2x8xf32>
    %25 = vector.multi_reduction <add>, %24, %cst_10 [1] : vector<2x256x8xf32> to vector<2x8xf32>
    %cst_11 = arith.constant 2.560000e+02 : f32
    %26 = vector.broadcast %cst_11 : f32 to vector<2x8xf32>
    %27 = arith.divf %25, %26 : vector<2x8xf32>
    %cst_12 = arith.constant dense<0xFF800000> : vector<2x8xf32>
    %28 = vector.multi_reduction <maximumf>, %24, %cst_12 [1] : vector<2x256x8xf32> to vector<2x8xf32>
    %29 = tpu.concatenate %27, %28 in 0 : vector<2x8xf32>, vector<2x8xf32> -> vector<4x8xf32>
    %c0_13 = arith.constant 0 : index
    %c0_14 = arith.constant 0 : index
    %30 = vector.load %arg1[%c0_13, %c0_14] : memref<8x2xf32, #tpu.memory_space<vmem>>, vector<8x2xf32>
    %cst_15 = arith.constant dense<0.000000e+00> : vector<4x2xf32>
    %31 = tpu.matmul %29, %30, %cst_15 {dimension_numbers = #tpu.dot_dimension_numbers<[1], [0], [0], [1], [0, 0, 1, 1], [], []>} : vector<4x8xf32>, vector<8x2xf32>, vector<4x2xf32> -> vector<4x2xf32>
    %c0_16 = arith.constant 0 : index
    %c0_17 = arith.constant 0 : index
    %32 = vector.load %arg2[%c0_16, %c0_17] : memref<1x2xf32, #tpu.memory_space<vmem>>, vector<1x2xf32>
    %33 = vector.broadcast %32 : vector<1x2xf32> to vector<4x2xf32>
    %34 = arith.addf %31, %33 : vector<4x2xf32>
    %cst_18 = arith.constant 0.000000e+00 : f32
    %35 = vector.broadcast %cst_18 : f32 to vector<4x2xf32>
    %36 = arith.maximumf %34, %35 : vector<4x2xf32>
    %c0_19 = arith.constant 0 : index
    %c0_20 = arith.constant 0 : index
    %37 = vector.load %arg3[%c0_19, %c0_20] : memref<2x8xf32, #tpu.memory_space<vmem>>, vector<2x8xf32>
    %cst_21 = arith.constant dense<0.000000e+00> : vector<4x8xf32>
    %38 = tpu.matmul %36, %37, %cst_21 {dimension_numbers = #tpu.dot_dimension_numbers<[1], [0], [0], [1], [0, 0, 1, 1], [], []>} : vector<4x2xf32>, vector<2x8xf32>, vector<4x8xf32> -> vector<4x8xf32>
    %c0_22 = arith.constant 0 : index
    %c0_23 = arith.constant 0 : index
    %39 = vector.load %arg4[%c0_22, %c0_23] : memref<1x8xf32, #tpu.memory_space<vmem>>, vector<1x8xf32>
    %40 = vector.broadcast %39 : vector<1x8xf32> to vector<4x8xf32>
    %41 = arith.addf %38, %40 : vector<4x8xf32>
    %42 = vector.extract_strided_slice %41 {offsets = [0, 0], sizes = [2, 8], strides = [1, 1]} : vector<4x8xf32> to vector<2x8xf32>
    %43 = vector.extract_strided_slice %41 {offsets = [2, 0], sizes = [2, 8], strides = [1, 1]} : vector<4x8xf32> to vector<2x8xf32>
    %44 = arith.addf %42, %43 : vector<2x8xf32>
    %cst_24 = arith.constant 0.000000e+00 : f32
    %45 = vector.broadcast %cst_24 : f32 to vector<2x8xf32>
    %46 = arith.subf %45, %44 : vector<2x8xf32>
    %47 = math.exp %46 : vector<2x8xf32>
    %cst_25 = arith.constant 1.000000e+00 : f32
    %48 = vector.broadcast %cst_25 : f32 to vector<2x8xf32>
    %49 = arith.addf %48, %47 : vector<2x8xf32>
    %cst_26 = arith.constant 1.000000e+00 : f32
    %50 = vector.broadcast %cst_26 : f32 to vector<2x8xf32>
    %51 = arith.divf %50, %49 : vector<2x8xf32>
    %52 = vector.shape_cast %51 : vector<2x8xf32> to vector<2x1x8xf32>
    %53 = vector.broadcast %52 : vector<2x1x8xf32> to vector<2x256x8xf32>
    %54 = arith.mulf %24, %53 : vector<2x256x8xf32>
    %cst_27 = arith.constant dense<0.000000e+00> : vector<2x256xf32>
    %55 = vector.multi_reduction <add>, %54, %cst_27 [2] : vector<2x256x8xf32> to vector<2x256xf32>
    %cst_28 = arith.constant 8.000000e+00 : f32
    %56 = vector.broadcast %cst_28 : f32 to vector<2x256xf32>
    %57 = arith.divf %55, %56 : vector<2x256xf32>
    %cst_29 = arith.constant dense<0xFF800000> : vector<2x256xf32>
    %58 = vector.multi_reduction <maximumf>, %54, %cst_29 [2] : vector<2x256x8xf32> to vector<2x256xf32>
    %59 = tpu.concatenate %57, %58 in 1 : vector<2x256xf32>, vector<2x256xf32> -> vector<2x512xf32>
    %60 = arith.truncf %59 : vector<2x512xf32> to vector<2x512xbf16>
    %c0_30 = arith.constant 0 : index
    %c0_31 = arith.constant 0 : index
    %61 = vector.load %arg5[%c0_30, %c0_31] : memref<512x256xbf16, #tpu.memory_space<vmem>>, vector<512x256xbf16>
    %cst_32 = arith.constant dense<0.000000e+00> : vector<2x256xf32>
    %62 = tpu.matmul %60, %61, %cst_32 {dimension_numbers = #tpu.dot_dimension_numbers<[1], [0], [0], [1], [0, 0, 1, 1], [], []>} : vector<2x512xbf16>, vector<512x256xbf16>, vector<2x256xf32> -> vector<2x256xf32>
    %cst_33 = arith.constant 0.000000e+00 : f32
    %63 = vector.broadcast %cst_33 : f32 to vector<2x256xf32>
    %64 = arith.subf %63, %62 : vector<2x256xf32>
    %65 = math.exp %64 : vector<2x256xf32>
    %cst_34 = arith.constant 1.000000e+00 : f32
    %66 = vector.broadcast %cst_34 : f32 to vector<2x256xf32>
    %67 = arith.addf %66, %65 : vector<2x256xf32>
    %cst_35 = arith.constant 1.000000e+00 : f32
    %68 = vector.broadcast %cst_35 : f32 to vector<2x256xf32>
    %69 = arith.divf %68, %67 : vector<2x256xf32>
    %70 = vector.shape_cast %69 : vector<2x256xf32> to vector<2x256x1xf32>
    %71 = vector.broadcast %70 : vector<2x256x1xf32> to vector<2x256x8xf32>
    %72 = arith.mulf %54, %71 : vector<2x256x8xf32>
    %c0_36 = arith.constant 0 : index
    %c0_37 = arith.constant 0 : index
    %c0_38 = arith.constant 0 : index
    %73 = vector.load %arg6[%c0_36, %c0_37, %c0_38] : memref<2x256x8xf32, #tpu.memory_space<vmem>>, vector<2x256x8xf32>
    tpu.vector_store %arg6[%c0_36, %c0_37, %c0_38], %72 {strides = array<i32>} : memref<2x256x8xf32, #tpu.memory_space<vmem>>, vector<2x256x8xf32>,
    return
  }
}

module attributes {stable_mosaic.version = 11 : i64} {
  func.func @kernel(%arg0: memref<32x128xf32, #tpu.memory_space<vmem>>, %arg1: memref<128x128xbf16, #tpu.memory_space<vmem>>, %arg2: memref<128x128xbf16, #tpu.memory_space<vmem>>, %arg3: memref<128x128xbf16, #tpu.memory_space<vmem>>, %arg4: memref<1x128xf32, #tpu.memory_space<vmem>>, %arg5: memref<128x128xbf16, #tpu.memory_space<vmem>>, %arg6: memref<128x128xbf16, #tpu.memory_space<vmem>>, %arg7: memref<128x128xbf16, #tpu.memory_space<vmem>>, %arg8: memref<1x128xf32, #tpu.memory_space<vmem>>, %arg9: memref<32x128xf32, #tpu.memory_space<vmem>>) attributes {dimension_semantics = [], scalar_prefetch = 0 : i64, scratch_operands = 0 : i64, tpu.core_type = #tpu.core_type<tc>} {
    %c0 = arith.constant 0 : index
    %c0_0 = arith.constant 0 : index
    %0 = vector.load %arg0[%c0, %c0_0] : memref<32x128xf32, #tpu.memory_space<vmem>>, vector<32x128xf32>
    %1 = tpu.iota {dimensions = array<i32: 0>} : vector<32x128xi32>
    %c15_i32 = arith.constant 15 : i32
    %2 = vector.broadcast %c15_i32 : i32 to vector<32x128xi32>
    %3 = arith.andi %1, %2 : vector<32x128xi32>
    %c0_i32 = arith.constant 0 : i32
    %4 = vector.broadcast %c0_i32 : i32 to vector<32x128xi32>
    %5 = arith.cmpi sgt, %3, %4 : vector<32x128xi32>
    %c1_i32 = arith.constant 1 : i32
    %6 = tpu.dynamic_rotate %0 by %c1_i32 dim 0 : vector<32x128xf32>, i32 -> vector<32x128xf32>
    %cst = arith.constant 0.000000e+00 : f32
    %7 = vector.broadcast %cst : f32 to vector<32x128xf32>
    %8 = arith.select %5, %6, %7 : vector<32x128xi1>, vector<32x128xf32>
    %c15_i32_1 = arith.constant 15 : i32
    %9 = vector.broadcast %c15_i32_1 : i32 to vector<32x128xi32>
    %10 = arith.cmpi slt, %3, %9 : vector<32x128xi32>
    %c31_i32 = arith.constant 31 : i32
    %11 = tpu.dynamic_rotate %0 by %c31_i32 dim 0 : vector<32x128xf32>, i32 -> vector<32x128xf32>
    %cst_2 = arith.constant 0.000000e+00 : f32
    %12 = vector.broadcast %cst_2 : f32 to vector<32x128xf32>
    %13 = arith.select %10, %11, %12 : vector<32x128xi1>, vector<32x128xf32>
    %14 = arith.truncf %0 : vector<32x128xf32> to vector<32x128xbf16>
    %c0_3 = arith.constant 0 : index
    %c0_4 = arith.constant 0 : index
    %15 = vector.load %arg2[%c0_3, %c0_4] : memref<128x128xbf16, #tpu.memory_space<vmem>>, vector<128x128xbf16>
    %cst_5 = arith.constant dense<0.000000e+00> : vector<32x128xf32>
    %16 = tpu.matmul %14, %15, %cst_5 {dimension_numbers = #tpu.dot_dimension_numbers<[1], [0], [0], [1], [0, 0, 1, 1], [], []>} : vector<32x128xbf16>, vector<128x128xbf16>, vector<32x128xf32> -> vector<32x128xf32>
    %17 = arith.truncf %8 : vector<32x128xf32> to vector<32x128xbf16>
    %c0_6 = arith.constant 0 : index
    %c0_7 = arith.constant 0 : index
    %18 = vector.load %arg1[%c0_6, %c0_7] : memref<128x128xbf16, #tpu.memory_space<vmem>>, vector<128x128xbf16>
    %cst_8 = arith.constant dense<0.000000e+00> : vector<32x128xf32>
    %19 = tpu.matmul %17, %18, %cst_8 {dimension_numbers = #tpu.dot_dimension_numbers<[1], [0], [0], [1], [0, 0, 1, 1], [], []>} : vector<32x128xbf16>, vector<128x128xbf16>, vector<32x128xf32> -> vector<32x128xf32>
    %20 = arith.addf %16, %19 : vector<32x128xf32>
    %21 = arith.truncf %13 : vector<32x128xf32> to vector<32x128xbf16>
    %c0_9 = arith.constant 0 : index
    %c0_10 = arith.constant 0 : index
    %22 = vector.load %arg3[%c0_9, %c0_10] : memref<128x128xbf16, #tpu.memory_space<vmem>>, vector<128x128xbf16>
    %cst_11 = arith.constant dense<0.000000e+00> : vector<32x128xf32>
    %23 = tpu.matmul %21, %22, %cst_11 {dimension_numbers = #tpu.dot_dimension_numbers<[1], [0], [0], [1], [0, 0, 1, 1], [], []>} : vector<32x128xbf16>, vector<128x128xbf16>, vector<32x128xf32> -> vector<32x128xf32>
    %24 = arith.addf %20, %23 : vector<32x128xf32>
    %c0_12 = arith.constant 0 : index
    %c0_13 = arith.constant 0 : index
    %25 = vector.load %arg4[%c0_12, %c0_13] : memref<1x128xf32, #tpu.memory_space<vmem>>, vector<1x128xf32>
    %26 = vector.broadcast %25 : vector<1x128xf32> to vector<32x128xf32>
    %27 = arith.addf %24, %26 : vector<32x128xf32>
    %cst_14 = arith.constant 0.000000e+00 : f32
    %28 = vector.broadcast %cst_14 : f32 to vector<32x128xf32>
    %29 = arith.maximumf %27, %28 : vector<32x128xf32>
    %30 = tpu.iota {dimensions = array<i32: 0>} : vector<32x128xi32>
    %c15_i32_15 = arith.constant 15 : i32
    %31 = vector.broadcast %c15_i32_15 : i32 to vector<32x128xi32>
    %32 = arith.andi %30, %31 : vector<32x128xi32>
    %c0_i32_16 = arith.constant 0 : i32
    %33 = vector.broadcast %c0_i32_16 : i32 to vector<32x128xi32>
    %34 = arith.cmpi sgt, %32, %33 : vector<32x128xi32>
    %c1_i32_17 = arith.constant 1 : i32
    %35 = tpu.dynamic_rotate %29 by %c1_i32_17 dim 0 : vector<32x128xf32>, i32 -> vector<32x128xf32>
    %cst_18 = arith.constant 0.000000e+00 : f32
    %36 = vector.broadcast %cst_18 : f32 to vector<32x128xf32>
    %37 = arith.select %34, %35, %36 : vector<32x128xi1>, vector<32x128xf32>
    %c15_i32_19 = arith.constant 15 : i32
    %38 = vector.broadcast %c15_i32_19 : i32 to vector<32x128xi32>
    %39 = arith.cmpi slt, %32, %38 : vector<32x128xi32>
    %c31_i32_20 = arith.constant 31 : i32
    %40 = tpu.dynamic_rotate %29 by %c31_i32_20 dim 0 : vector<32x128xf32>, i32 -> vector<32x128xf32>
    %cst_21 = arith.constant 0.000000e+00 : f32
    %41 = vector.broadcast %cst_21 : f32 to vector<32x128xf32>
    %42 = arith.select %39, %40, %41 : vector<32x128xi1>, vector<32x128xf32>
    %43 = arith.truncf %29 : vector<32x128xf32> to vector<32x128xbf16>
    %c0_22 = arith.constant 0 : index
    %c0_23 = arith.constant 0 : index
    %44 = vector.load %arg6[%c0_22, %c0_23] : memref<128x128xbf16, #tpu.memory_space<vmem>>, vector<128x128xbf16>
    %cst_24 = arith.constant dense<0.000000e+00> : vector<32x128xf32>
    %45 = tpu.matmul %43, %44, %cst_24 {dimension_numbers = #tpu.dot_dimension_numbers<[1], [0], [0], [1], [0, 0, 1, 1], [], []>} : vector<32x128xbf16>, vector<128x128xbf16>, vector<32x128xf32> -> vector<32x128xf32>
    %46 = arith.truncf %37 : vector<32x128xf32> to vector<32x128xbf16>
    %c0_25 = arith.constant 0 : index
    %c0_26 = arith.constant 0 : index
    %47 = vector.load %arg5[%c0_25, %c0_26] : memref<128x128xbf16, #tpu.memory_space<vmem>>, vector<128x128xbf16>
    %cst_27 = arith.constant dense<0.000000e+00> : vector<32x128xf32>
    %48 = tpu.matmul %46, %47, %cst_27 {dimension_numbers = #tpu.dot_dimension_numbers<[1], [0], [0], [1], [0, 0, 1, 1], [], []>} : vector<32x128xbf16>, vector<128x128xbf16>, vector<32x128xf32> -> vector<32x128xf32>
    %49 = arith.addf %45, %48 : vector<32x128xf32>
    %50 = arith.truncf %42 : vector<32x128xf32> to vector<32x128xbf16>
    %c0_28 = arith.constant 0 : index
    %c0_29 = arith.constant 0 : index
    %51 = vector.load %arg7[%c0_28, %c0_29] : memref<128x128xbf16, #tpu.memory_space<vmem>>, vector<128x128xbf16>
    %cst_30 = arith.constant dense<0.000000e+00> : vector<32x128xf32>
    %52 = tpu.matmul %50, %51, %cst_30 {dimension_numbers = #tpu.dot_dimension_numbers<[1], [0], [0], [1], [0, 0, 1, 1], [], []>} : vector<32x128xbf16>, vector<128x128xbf16>, vector<32x128xf32> -> vector<32x128xf32>
    %53 = arith.addf %49, %52 : vector<32x128xf32>
    %c0_31 = arith.constant 0 : index
    %c0_32 = arith.constant 0 : index
    %54 = vector.load %arg8[%c0_31, %c0_32] : memref<1x128xf32, #tpu.memory_space<vmem>>, vector<1x128xf32>
    %55 = vector.broadcast %54 : vector<1x128xf32> to vector<32x128xf32>
    %56 = arith.addf %53, %55 : vector<32x128xf32>
    %cst_33 = arith.constant 1.000000e+00 : f32
    %57 = vector.broadcast %cst_33 : f32 to vector<32x128xf32>
    %58 = arith.mulf %57, %56 : vector<32x128xf32>
    %59 = arith.addf %0, %58 : vector<32x128xf32>
    %c0_34 = arith.constant 0 : index
    %c0_35 = arith.constant 0 : index
    %60 = vector.load %arg9[%c0_34, %c0_35] : memref<32x128xf32, #tpu.memory_space<vmem>>, vector<32x128xf32>
    tpu.vector_store %arg9[%c0_34, %c0_35], %59 {strides = array<i32>} : memref<32x128xf32, #tpu.memory_space<vmem>>, vector<32x128xf32>,
    return
  }
}

module attributes {stable_mosaic.version = 11 : i64} {
  func.func @kernel(%arg0: memref<32x128xf32, #tpu.memory_space<vmem>>, %arg1: memref<128x128xbf16, #tpu.memory_space<vmem>>, %arg2: memref<128x128xbf16, #tpu.memory_space<vmem>>, %arg3: memref<128x128xbf16, #tpu.memory_space<vmem>>, %arg4: memref<1x128xf32, #tpu.memory_space<vmem>>, %arg5: memref<32x128xf32, #tpu.memory_space<vmem>>) attributes {dimension_semantics = [], scalar_prefetch = 0 : i64, scratch_operands = 0 : i64, tpu.core_type = #tpu.core_type<tc>} {
    %c0 = arith.constant 0 : index
    %c0_0 = arith.constant 0 : index
    %0 = vector.load %arg0[%c0, %c0_0] : memref<32x128xf32, #tpu.memory_space<vmem>>, vector<32x128xf32>
    %1 = tpu.iota {dimensions = array<i32: 0>} : vector<32x128xi32>
    %c15_i32 = arith.constant 15 : i32
    %2 = vector.broadcast %c15_i32 : i32 to vector<32x128xi32>
    %3 = arith.andi %1, %2 : vector<32x128xi32>
    %c0_i32 = arith.constant 0 : i32
    %4 = vector.broadcast %c0_i32 : i32 to vector<32x128xi32>
    %5 = arith.cmpi sgt, %3, %4 : vector<32x128xi32>
    %c1_i32 = arith.constant 1 : i32
    %6 = tpu.dynamic_rotate %0 by %c1_i32 dim 0 : vector<32x128xf32>, i32 -> vector<32x128xf32>
    %cst = arith.constant 0.000000e+00 : f32
    %7 = vector.broadcast %cst : f32 to vector<32x128xf32>
    %8 = arith.select %5, %6, %7 : vector<32x128xi1>, vector<32x128xf32>
    %c15_i32_1 = arith.constant 15 : i32
    %9 = vector.broadcast %c15_i32_1 : i32 to vector<32x128xi32>
    %10 = arith.cmpi slt, %3, %9 : vector<32x128xi32>
    %c31_i32 = arith.constant 31 : i32
    %11 = tpu.dynamic_rotate %0 by %c31_i32 dim 0 : vector<32x128xf32>, i32 -> vector<32x128xf32>
    %cst_2 = arith.constant 0.000000e+00 : f32
    %12 = vector.broadcast %cst_2 : f32 to vector<32x128xf32>
    %13 = arith.select %10, %11, %12 : vector<32x128xi1>, vector<32x128xf32>
    %14 = arith.truncf %0 : vector<32x128xf32> to vector<32x128xbf16>
    %c0_3 = arith.constant 0 : index
    %c0_4 = arith.constant 0 : index
    %15 = vector.load %arg2[%c0_3, %c0_4] : memref<128x128xbf16, #tpu.memory_space<vmem>>, vector<128x128xbf16>
    %cst_5 = arith.constant dense<0.000000e+00> : vector<32x128xf32>
    %16 = tpu.matmul %14, %15, %cst_5 {dimension_numbers = #tpu.dot_dimension_numbers<[1], [0], [0], [1], [0, 0, 1, 1], [], []>} : vector<32x128xbf16>, vector<128x128xbf16>, vector<32x128xf32> -> vector<32x128xf32>
    %17 = arith.truncf %8 : vector<32x128xf32> to vector<32x128xbf16>
    %c0_6 = arith.constant 0 : index
    %c0_7 = arith.constant 0 : index
    %18 = vector.load %arg1[%c0_6, %c0_7] : memref<128x128xbf16, #tpu.memory_space<vmem>>, vector<128x128xbf16>
    %cst_8 = arith.constant dense<0.000000e+00> : vector<32x128xf32>
    %19 = tpu.matmul %17, %18, %cst_8 {dimension_numbers = #tpu.dot_dimension_numbers<[1], [0], [0], [1], [0, 0, 1, 1], [], []>} : vector<32x128xbf16>, vector<128x128xbf16>, vector<32x128xf32> -> vector<32x128xf32>
    %20 = arith.addf %16, %19 : vector<32x128xf32>
    %21 = arith.truncf %13 : vector<32x128xf32> to vector<32x128xbf16>
    %c0_9 = arith.constant 0 : index
    %c0_10 = arith.constant 0 : index
    %22 = vector.load %arg3[%c0_9, %c0_10] : memref<128x128xbf16, #tpu.memory_space<vmem>>, vector<128x128xbf16>
    %cst_11 = arith.constant dense<0.000000e+00> : vector<32x128xf32>
    %23 = tpu.matmul %21, %22, %cst_11 {dimension_numbers = #tpu.dot_dimension_numbers<[1], [0], [0], [1], [0, 0, 1, 1], [], []>} : vector<32x128xbf16>, vector<128x128xbf16>, vector<32x128xf32> -> vector<32x128xf32>
    %24 = arith.addf %20, %23 : vector<32x128xf32>
    %c0_12 = arith.constant 0 : index
    %c0_13 = arith.constant 0 : index
    %25 = vector.load %arg4[%c0_12, %c0_13] : memref<1x128xf32, #tpu.memory_space<vmem>>, vector<1x128xf32>
    %26 = vector.broadcast %25 : vector<1x128xf32> to vector<32x128xf32>
    %27 = arith.addf %24, %26 : vector<32x128xf32>
    %cst_14 = arith.constant 0.000000e+00 : f32
    %cst_15 = arith.constant 6.000000e+00 : f32
    %28 = vector.broadcast %cst_14 : f32 to vector<32x128xf32>
    %29 = arith.maximumf %28, %27 : vector<32x128xf32>
    %30 = vector.broadcast %cst_15 : f32 to vector<32x128xf32>
    %31 = arith.minimumf %30, %29 : vector<32x128xf32>
    %cst_16 = arith.constant 0.166666672 : f32
    %32 = vector.broadcast %cst_16 : f32 to vector<32x128xf32>
    %33 = arith.mulf %31, %32 : vector<32x128xf32>
    %c0_17 = arith.constant 0 : index
    %c0_18 = arith.constant 0 : index
    %34 = vector.load %arg5[%c0_17, %c0_18] : memref<32x128xf32, #tpu.memory_space<vmem>>, vector<32x128xf32>
    tpu.vector_store %arg5[%c0_17, %c0_18], %33 {strides = array<i32>} : memref<32x128xf32, #tpu.memory_space<vmem>>, vector<32x128xf32>,
    return
  }
}

</mosaic_0001>

<llo_original>
// kernel: hunet_forward.17
$region0: #{hunet_forward.17}
  #allocation0 [shape = 'u32[]', space=smem, size = 0x4, offset = 0x4, fixed_abs, tag = 'smem constant byte address 0x4 - core index']
  #allocation1 [shape = 'u32[72,128]{1,0:T(1,128)}', space=vmem, size = 0x9000, scoped, tag = 'internal scratch']
  %s0 = inlined_call_operand.vmem [shape: f32[32,64], index: 0, kind: input, shape index: {}]
  %s1 = inlined_call_operand.vmem [shape: bf16[64,128], index: 1, kind: input, shape index: {}]
  %s2 = inlined_call_operand.vmem [shape: bf16[64,128], index: 2, kind: input, shape index: {}]
  %s3 = inlined_call_operand.vmem [shape: bf16[64,128], index: 3, kind: input, shape index: {}]
  %s4 = inlined_call_operand.vmem [shape: f32[1,128], index: 4, kind: input, shape index: {}]
  %s5 = inlined_call_operand.vmem [shape: f32[32,128], index: 5, kind: output, shape index: {}]
  %s6 = sld [smem:[#allocation0]]
  $region30: #{hunet_forward.17} parent=0
    _
  %s8 = ssub.s32 1, %s6
  %s9 = scalar_select 0, %s8, %s6
  // Predicated region
  $region2: #{hunet_forward.17} parent=0 // pred_check
    _
  $region3: #{hunet_forward.17} parent=0 // pred_check_branch
    %11 = sbr.rel (0) target = $region5
  $region4: #{hunet_forward.17} parent=0 // pred_region
    _
  $region5: #{hunet_forward.17} parent=0 // pred_fallthru
    _
  // Predicated region
  $region6: #{hunet_forward.17} parent=0 // pred_check
    _
  $region7: #{hunet_forward.17} parent=0 // pred_check_branch
    %13 = sbr.rel (0) target = $region9
  $region8: #{hunet_forward.17} parent=0 // pred_region
    _
  $region9: #{hunet_forward.17} parent=0 // pred_fallthru
    _
  // Predicated region
  $region10: #{hunet_forward.17} parent=0 // pred_check
    _
  $region11: #{hunet_forward.17} parent=0 // pred_check_branch
    %15 = sbr.rel (0) target = $region13
  $region12: #{hunet_forward.17} parent=0 // pred_region
    _
  $region13: #{hunet_forward.17} parent=0 // pred_fallthru
    _
  // Predicated region
  $region14: #{hunet_forward.17} parent=0 // pred_check
    _
  $region15: #{hunet_forward.17} parent=0 // pred_check_branch
    %17 = sbr.rel (0) target = $region17
  $region16: #{hunet_forward.17} parent=0 // pred_region
    _
  $region17: #{hunet_forward.17} parent=0 // pred_fallthru
    _
  // Predicated region
  $region18: #{hunet_forward.17} parent=0 // pred_check
    _
  $region19: #{hunet_forward.17} parent=0 // pred_check_branch
    %19 = sbr.rel (0) target = $region21
  $region20: #{hunet_forward.17} parent=0 // pred_region
    _
  $region21: #{hunet_forward.17} parent=0 // pred_fallthru
    _
  %v21 = vld [vmem:[%s0] sm:$0xff]
  %v22 = vld [vmem:[%s0 + $0x8] sm:$0xff]
  %v23 = vld [vmem:[%s0 + $0x10] sm:$0xff]
  %v24 = vld [vmem:[%s0 + $0x18] sm:$0xff]
  %v25 = vlaneseq
  %v26 = vshrl.u32 %v25, 7
  %v27 = vadd.s32 %v26, 8
  %v28 = vadd.s32 %v26, 16
  %v29 = vadd.s32 %v26, 24
  %v30 = vand.u32 %v26, 15
  %v31 = vand.u32 %v27, 15
  %v32 = vand.u32 %v28, 15
  %v33 = vand.u32 %v29, 15
  %vm34 = vcmp.gt.s32.totalorder %v30, 0
  %vm35 = vcmp.gt.s32.totalorder %v31, 0
  %vm36 = vcmp.gt.s32.totalorder %v32, 0
  %vm37 = vcmp.gt.s32.totalorder %v33, 0
  %v38 = vrot.slane %v21, 7
  %v39 = vrot.slane %v22, 7
  %v40 = vrot.slane %v23, 7
  %v41 = vrot.slane %v24, 7
  %vm42 = vcmp.lt.s32.totalorder %v26, 1
  %v43 = vsel %vm42, %v40, %v41
  %v44 = vsel %vm42, %v39, %v40
  %v45 = vsel %vm42, %v38, %v39
  %v46 = vsel %vm42, %v41, %v38
  %v47 = vsel %vm34, %v46, 0.0
  %v48 = vsel %vm35, %v45, 0.0
  %v49 = vsel %vm36, %v44, 0.0
  %v50 = vsel %vm37, %v43, 0.0
  %vm51 = vcmp.lt.s32.totalorder %v30, 15
  %vm52 = vcmp.lt.s32.totalorder %v31, 15
  %vm53 = vcmp.lt.s32.totalorder %v32, 15
  %vm54 = vcmp.lt.s32.totalorder %v33, 15
  %v55 = vrot.slane %v21, 1
  %v56 = vrot.slane %v22, 1
  %v57 = vrot.slane %v23, 1
  %v58 = vrot.slane %v24, 1
  %vm59 = vcmp.lt.s32.totalorder %v26, 7
  %v60 = vsel %vm59, %v57, %v58
  %v61 = vsel %vm59, %v56, %v57
  %v62 = vsel %vm59, %v55, %v56
  %v63 = vsel %vm59, %v58, %v55
  %v64 = vsel %vm51, %v62, 0.0
  %v65 = vsel %vm52, %v61, 0.0
  %v66 = vsel %vm53, %v60, 0.0
  %v67 = vsel %vm54, %v63, 0.0
  %v68 = vpack.c.bf16 %v22, %v21
  %v69 = vpack.c.bf16 %v24, %v23
  %v70 = vld [vmem:[%s2] sm:$0xf]
  %v71 = vld [vmem:[%s2 + $0x4] sm:$0xf]
  %v72 = vld [vmem:[%s2 + $0x8] sm:$0xf]
  %v73 = vld [vmem:[%s2 + $0xc] sm:$0xf]
  %v74 = vld [vmem:[%s2 + $0x10] sm:$0xf]
  %v75 = vld [vmem:[%s2 + $0x14] sm:$0xf]
  %v76 = vld [vmem:[%s2 + $0x18] sm:$0xf]
  %v77 = vld [vmem:[%s2 + $0x1c] sm:$0xf]
  %v78 = vpack.c.bf16 %v48, %v47
  %v79 = vpack.c.bf16 %v50, %v49
  %v80 = vld [vmem:[%s1] sm:$0xf]
  %v81 = vld [vmem:[%s1 + $0x4] sm:$0xf]
  %v82 = vld [vmem:[%s1 + $0x8] sm:$0xf]
  %v83 = vld [vmem:[%s1 + $0xc] sm:$0xf]
  %v84 = vld [vmem:[%s1 + $0x10] sm:$0xf]
  %v85 = vld [vmem:[%s1 + $0x14] sm:$0xf]
  %v86 = vld [vmem:[%s1 + $0x18] sm:$0xf]
  %v87 = vld [vmem:[%s1 + $0x1c] sm:$0xf]
  %v96 = vunpack.c.l.b16 %v80
  %v97 = vunpack.c.l.b16 %v81
  %v98 = vunpack.c.l.b16 %v82
  %v99 = vunpack.c.l.b16 %v83
  %v100 = vunpack.c.l.b16 %v84
  %v101 = vunpack.c.l.b16 %v85
  %v102 = vunpack.c.l.b16 %v86
  %v103 = vunpack.c.l.b16 %v87
  %v104 = vpack.c.b16 %v97, %v96
  %v105 = vpack.c.b16 %v99, %v98
  %v106 = vpack.c.b16 %v101, %v100
  %v107 = vpack.c.b16 %v103, %v102
  %vm112 = vcmask 523264
  %v114 = vsel %vm112, %v78, 0
  %v117 = vsel %vm112, %v79, 0
  %119 = vmatpush.bf16.msra.mxu0 0
  %120 = vmatpush.bf16.msra.mxu0 0
  %121 = vmatpush.bf16.msra.mxu0 0
  %122 = vmatpush.bf16.msra.mxu0 0
  %123 = vmatpush.bf16.msra.mxu0 %v107
  %124 = vmatpush.bf16.msra.mxu0 %v106
  %125 = vmatpush.bf16.msra.mxu0 %v105
  %126 = vmatpush.bf16.msra.mxu0 %v104
  %127 = vmatmul.bf16.gmra.mxu0 %v114
  %v128 = vpop.f32.mrf.mxu0
  %v129 = vadd.f32 0.0, %v128
  %v130 = vpop.f32.mrf.mxu0
  %v131 = vadd.f32 0.0, %v130
  %132 = vmatmul.bf16.gmra.mxu0 %v117
  %v133 = vpop.f32.mrf.mxu0
  %v134 = vadd.f32 0.0, %v133
  %v135 = vpop.f32.mrf.mxu0
  %v136 = vadd.f32 0.0, %v135
  %137 = vdwg.mxu0
  %v146 = vunpack.c.l.b16 %v70
  %v147 = vunpack.c.l.b16 %v71
  %v148 = vunpack.c.l.b16 %v72
  %v149 = vunpack.c.l.b16 %v73
  %v150 = vunpack.c.l.b16 %v74
  %v151 = vunpack.c.l.b16 %v75
  %v152 = vunpack.c.l.b16 %v76
  %v153 = vunpack.c.l.b16 %v77
  %v154 = vpack.c.b16 %v147, %v146
  %v155 = vpack.c.b16 %v149, %v148
  %v156 = vpack.c.b16 %v151, %v150
  %v157 = vpack.c.b16 %v153, %v152
  %v163 = vsel %vm112, %v68, 0
  %v166 = vsel %vm112, %v69, 0
  %168 = vmatpush.bf16.msra.mxu0 0
  %169 = vmatpush.bf16.msra.mxu0 0
  %170 = vmatpush.bf16.msra.mxu0 0
  %171 = vmatpush.bf16.msra.mxu0 0
  %172 = vmatpush.bf16.msra.mxu0 %v157
  %173 = vmatpush.bf16.msra.mxu0 %v156
  %174 = vmatpush.bf16.msra.mxu0 %v155
  %175 = vmatpush.bf16.msra.mxu0 %v154
  %176 = vmatmul.bf16.gmra.mxu0 %v163
  %v177 = vpop.f32.mrf.mxu0
  %v178 = vadd.f32 %v129, %v177
  %v179 = vpop.f32.mrf.mxu0
  %v180 = vadd.f32 %v131, %v179
  %181 = vmatmul.bf16.gmra.mxu0 %v166
  %v182 = vpop.f32.mrf.mxu0
  %v183 = vadd.f32 %v134, %v182
  %v184 = vpop.f32.mrf.mxu0
  %v185 = vadd.f32 %v136, %v184
  %186 = vdwg.mxu0
  %v187 = vpack.c.bf16 %v65, %v64
  %v188 = vpack.c.bf16 %v67, %v66
  %v189 = vld [vmem:[%s3] sm:$0xf]
  %v190 = vld [vmem:[%s3 + $0x4] sm:$0xf]
  %v191 = vld [vmem:[%s3 + $0x8] sm:$0xf]
  %v192 = vld [vmem:[%s3 + $0xc] sm:$0xf]
  %v193 = vld [vmem:[%s3 + $0x10] sm:$0xf]
  %v194 = vld [vmem:[%s3 + $0x14] sm:$0xf]
  %v195 = vld [vmem:[%s3 + $0x18] sm:$0xf]
  %v196 = vld [vmem:[%s3 + $0x1c] sm:$0xf]
  %v205 = vunpack.c.l.b16 %v189
  %v206 = vunpack.c.l.b16 %v190
  %v207 = vunpack.c.l.b16 %v191
  %v208 = vunpack.c.l.b16 %v192
  %v209 = vunpack.c.l.b16 %v193
  %v210 = vunpack.c.l.b16 %v194
  %v211 = vunpack.c.l.b16 %v195
  %v212 = vunpack.c.l.b16 %v196
  %v213 = vpack.c.b16 %v206, %v205
  %v214 = vpack.c.b16 %v208, %v207
  %v215 = vpack.c.b16 %v210, %v209
  %v216 = vpack.c.b16 %v212, %v211
  %v222 = vsel %vm112, %v187, 0
  %v225 = vsel %vm112, %v188, 0
  %227 = vmatpush.bf16.msra.mxu0 0
  %228 = vmatpush.bf16.msra.mxu0 0
  %229 = vmatpush.bf16.msra.mxu0 0
  %230 = vmatpush.bf16.msra.mxu0 0
  %231 = vmatpush.bf16.msra.mxu0 %v216
  %232 = vmatpush.bf16.msra.mxu0 %v215
  %233 = vmatpush.bf16.msra.mxu0 %v214
  %234 = vmatpush.bf16.msra.mxu0 %v213
  %235 = vmatmul.bf16.gmra.mxu0 %v222
  %v236 = vpop.f32.mrf.mxu0
  %v237 = vadd.f32 0.0, %v236
  %v238 = vpop.f32.mrf.mxu0
  %v239 = vadd.f32 0.0, %v238
  %240 = vmatmul.bf16.gmra.mxu0 %v225
  %v241 = vpop.f32.mrf.mxu0
  %v242 = vadd.f32 0.0, %v241
  %v243 = vpop.f32.mrf.mxu0
  %v244 = vadd.f32 0.0, %v243
  %245 = vdwg.mxu0
  %v246 = vadd.f32 %v178, %v237
  %v247 = vadd.f32 %v180, %v239
  %v248 = vadd.f32 %v183, %v242
  %v249 = vadd.f32 %v185, %v244
  %v250 = vld [vmem:[%s4] sm:$0x1]
  %v252 = vperm.slane %v250, 0
  %v254 = vadd.f32 %v246, %v252
  %v255 = vadd.f32 %v247, %v252
  %v256 = vadd.f32 %v248, %v252
  %v257 = vadd.f32 %v249, %v252
  %258 = vst [vmem:[%s5] sm:$0xff] %v254
  %259 = vst [vmem:[%s5 + $0x8] sm:$0xff] %v255
  %260 = vst [vmem:[%s5 + $0x10] sm:$0xff] %v256
  %261 = vst [vmem:[%s5 + $0x18] sm:$0xff] %v257
  // Predicated region
  $region22: #{hunet_forward.17} parent=0 // pred_check
    _
  $region23: #{hunet_forward.17} parent=0 // pred_check_branch
    %263 = sbr.rel (0) target = $region25
  $region24: #{hunet_forward.17} parent=0 // pred_region
    _
  $region25: #{hunet_forward.17} parent=0 // pred_fallthru
    _
  // Predicated region
  $region26: #{hunet_forward.17} parent=0 // pred_check
    _
  $region27: #{hunet_forward.17} parent=0 // pred_check_branch
    %265 = sbr.rel (0) target = $region29
  $region28: #{hunet_forward.17} parent=0 // pred_region
    _
  $region29: #{hunet_forward.17} parent=0 // pred_fallthru
    _

// kernel: hunet_forward.18
$region0: #{hunet_forward.18}
  #allocation0 [shape = 'u32[]', space=smem, size = 0x4, offset = 0x4, fixed_abs, tag = 'smem constant byte address 0x4 - core index']
  #allocation1 [shape = 'u32[72,128]{1,0:T(1,128)}', space=vmem, size = 0x9000, scoped, tag = 'internal scratch']
  %s0 = inlined_call_operand.vmem [shape: f32[32,128], index: 0, kind: input, shape index: {}]
  %s1 = inlined_call_operand.vmem [shape: bf16[128,256], index: 1, kind: input, shape index: {}]
  %s2 = inlined_call_operand.vmem [shape: bf16[128,256], index: 2, kind: input, shape index: {}]
  %s3 = inlined_call_operand.vmem [shape: bf16[128,256], index: 3, kind: input, shape index: {}]
  %s4 = inlined_call_operand.vmem [shape: f32[1,256], index: 4, kind: input, shape index: {}]
  %s5 = inlined_call_operand.vmem [shape: f32[32,256], index: 5, kind: output, shape index: {}]
  %s6 = sld [smem:[#allocation0]]
  $region30: #{hunet_forward.18} parent=0
    _
  %s8 = ssub.s32 1, %s6
  %s9 = scalar_select 0, %s8, %s6
  // Predicated region
  $region2: #{hunet_forward.18} parent=0 // pred_check
    _
  $region3: #{hunet_forward.18} parent=0 // pred_check_branch
    %11 = sbr.rel (0) target = $region5
  $region4: #{hunet_forward.18} parent=0 // pred_region
    _
  $region5: #{hunet_forward.18} parent=0 // pred_fallthru
    _
  // Predicated region
  $region6: #{hunet_forward.18} parent=0 // pred_check
    _
  $region7: #{hunet_forward.18} parent=0 // pred_check_branch
    %13 = sbr.rel (0) target = $region9
  $region8: #{hunet_forward.18} parent=0 // pred_region
    _
  $region9: #{hunet_forward.18} parent=0 // pred_fallthru
    _
  // Predicated region
  $region10: #{hunet_forward.18} parent=0 // pred_check
    _
  $region11: #{hunet_forward.18} parent=0 // pred_check_branch
    %15 = sbr.rel (0) target = $region13
  $region12: #{hunet_forward.18} parent=0 // pred_region
    _
  $region13: #{hunet_forward.18} parent=0 // pred_fallthru
    _
  // Predicated region
  $region14: #{hunet_forward.18} parent=0 // pred_check
    _
  $region15: #{hunet_forward.18} parent=0 // pred_check_branch
    %17 = sbr.rel (0) target = $region17
  $region16: #{hunet_forward.18} parent=0 // pred_region
    _
  $region17: #{hunet_forward.18} parent=0 // pred_fallthru
    _
  // Predicated region
  $region18: #{hunet_forward.18} parent=0 // pred_check
    _
  $region19: #{hunet_forward.18} parent=0 // pred_check_branch
    %19 = sbr.rel (0) target = $region21
  $region20: #{hunet_forward.18} parent=0 // pred_region
    _
  $region21: #{hunet_forward.18} parent=0 // pred_fallthru
    _
  %v20 = vld [vmem:[%s0] sm:$0xff]
  %v21 = vld [vmem:[%s0 + $0x8] sm:$0xff]
  %v22 = vld [vmem:[%s0 + $0x10] sm:$0xff]
  %v23 = vld [vmem:[%s0 + $0x18] sm:$0xff]
  %v24 = vmax.f32 %v20, 0.0
  %v25 = vmax.f32 %v21, 0.0
  %v26 = vmax.f32 %v22, 0.0
  %v27 = vmax.f32 %v23, 0.0
  %v28 = vlaneseq
  %v29 = vshrl.u32 %v28, 7
  %v30 = vadd.s32 %v29, 8
  %v31 = vadd.s32 %v29, 16
  %v32 = vadd.s32 %v29, 24
  %v33 = vand.u32 %v29, 15
  %v34 = vand.u32 %v30, 15
  %v35 = vand.u32 %v31, 15
  %v36 = vand.u32 %v32, 15
  %vm37 = vcmp.gt.s32.totalorder %v33, 0
  %vm38 = vcmp.gt.s32.totalorder %v34, 0
  %vm39 = vcmp.gt.s32.totalorder %v35, 0
  %vm40 = vcmp.gt.s32.totalorder %v36, 0
  %v41 = vrot.slane %v24, 7
  %v42 = vrot.slane %v25, 7
  %v43 = vrot.slane %v26, 7
  %v44 = vrot.slane %v27, 7
  %vm45 = vcmp.lt.s32.totalorder %v29, 1
  %v46 = vsel %vm45, %v43, %v44
  %v47 = vsel %vm45, %v42, %v43
  %v48 = vsel %vm45, %v41, %v42
  %v49 = vsel %vm45, %v44, %v41
  %v50 = vsel %vm37, %v49, 0.0
  %v51 = vsel %vm38, %v48, 0.0
  %v52 = vsel %vm39, %v47, 0.0
  %v53 = vsel %vm40, %v46, 0.0
  %vm54 = vcmp.lt.s32.totalorder %v33, 15
  %vm55 = vcmp.lt.s32.totalorder %v34, 15
  %vm56 = vcmp.lt.s32.totalorder %v35, 15
  %vm57 = vcmp.lt.s32.totalorder %v36, 15
  %v58 = vrot.slane %v24, 1
  %v59 = vrot.slane %v25, 1
  %v60 = vrot.slane %v26, 1
  %v61 = vrot.slane %v27, 1
  %vm62 = vcmp.lt.s32.totalorder %v29, 7
  %v63 = vsel %vm62, %v60, %v61
  %v64 = vsel %vm62, %v59, %v60
  %v65 = vsel %vm62, %v58, %v59
  %v66 = vsel %vm62, %v61, %v58
  %v67 = vsel %vm54, %v65, 0.0
  %v68 = vsel %vm55, %v64, 0.0
  %v69 = vsel %vm56, %v63, 0.0
  %v70 = vsel %vm57, %v66, 0.0
  %v71 = vpack.c.bf16 %v25, %v24
  %v72 = vpack.c.bf16 %v27, %v26
  %v73 = vld [vmem:[%s2] sm:$0xff]
  %v74 = vld [vmem:[%s2 + $0x8] sm:$0xff]
  %v75 = vld [vmem:[%s2 + $0x10] sm:$0xff]
  %v76 = vld [vmem:[%s2 + $0x18] sm:$0xff]
  %v77 = vld [vmem:[%s2 + $0x20] sm:$0xff]
  %v78 = vld [vmem:[%s2 + $0x28] sm:$0xff]
  %v79 = vld [vmem:[%s2 + $0x30] sm:$0xff]
  %v80 = vld [vmem:[%s2 + $0x38] sm:$0xff]
  %v81 = vld [vmem:[%s2 + $0x40] sm:$0xff]
  %v82 = vld [vmem:[%s2 + $0x48] sm:$0xff]
  %v83 = vld [vmem:[%s2 + $0x50] sm:$0xff]
  %v84 = vld [vmem:[%s2 + $0x58] sm:$0xff]
  %v85 = vld [vmem:[%s2 + $0x60] sm:$0xff]
  %v86 = vld [vmem:[%s2 + $0x68] sm:$0xff]
  %v87 = vld [vmem:[%s2 + $0x70] sm:$0xff]
  %v88 = vld [vmem:[%s2 + $0x78] sm:$0xff]
  %v89 = vpack.c.bf16 %v51, %v50
  %v90 = vpack.c.bf16 %v53, %v52
  %v91 = vld [vmem:[%s1] sm:$0xff]
  %v92 = vld [vmem:[%s1 + $0x8] sm:$0xff]
  %v93 = vld [vmem:[%s1 + $0x10] sm:$0xff]
  %v94 = vld [vmem:[%s1 + $0x18] sm:$0xff]
  %v95 = vld [vmem:[%s1 + $0x20] sm:$0xff]
  %v96 = vld [vmem:[%s1 + $0x28] sm:$0xff]
  %v97 = vld [vmem:[%s1 + $0x30] sm:$0xff]
  %v98 = vld [vmem:[%s1 + $0x38] sm:$0xff]
  %v99 = vld [vmem:[%s1 + $0x40] sm:$0xff]
  %v100 = vld [vmem:[%s1 + $0x48] sm:$0xff]
  %v101 = vld [vmem:[%s1 + $0x50] sm:$0xff]
  %v102 = vld [vmem:[%s1 + $0x58] sm:$0xff]
  %v103 = vld [vmem:[%s1 + $0x60] sm:$0xff]
  %v104 = vld [vmem:[%s1 + $0x68] sm:$0xff]
  %v105 = vld [vmem:[%s1 + $0x70] sm:$0xff]
  %v106 = vld [vmem:[%s1 + $0x78] sm:$0xff]
  %v123 = vunpack.c.l.b16 %v91
  %v124 = vunpack.c.h.b16 %v91
  %v125 = vunpack.c.l.b16 %v92
  %v126 = vunpack.c.h.b16 %v92
  %v127 = vunpack.c.l.b16 %v93
  %v128 = vunpack.c.h.b16 %v93
  %v129 = vunpack.c.l.b16 %v94
  %v130 = vunpack.c.h.b16 %v94
  %v131 = vunpack.c.l.b16 %v95
  %v132 = vunpack.c.h.b16 %v95
  %v133 = vunpack.c.l.b16 %v96
  %v134 = vunpack.c.h.b16 %v96
  %v135 = vunpack.c.l.b16 %v97
  %v136 = vunpack.c.h.b16 %v97
  %v137 = vunpack.c.l.b16 %v98
  %v138 = vunpack.c.h.b16 %v98
  %v139 = vunpack.c.l.b16 %v99
  %v140 = vunpack.c.h.b16 %v99
  %v141 = vunpack.c.l.b16 %v100
  %v142 = vunpack.c.h.b16 %v100
  %v143 = vunpack.c.l.b16 %v101
  %v144 = vunpack.c.h.b16 %v101
  %v145 = vunpack.c.l.b16 %v102
  %v146 = vunpack.c.h.b16 %v102
  %v147 = vunpack.c.l.b16 %v103
  %v148 = vunpack.c.h.b16 %v103
  %v149 = vunpack.c.l.b16 %v104
  %v150 = vunpack.c.h.b16 %v104
  %v151 = vunpack.c.l.b16 %v105
  %v152 = vunpack.c.h.b16 %v105
  %v153 = vunpack.c.l.b16 %v106
  %v154 = vunpack.c.h.b16 %v106
  %v155 = vpack.c.b16 %v125, %v123
  %v156 = vpack.c.b16 %v126, %v124
  %v157 = vpack.c.b16 %v129, %v127
  %v158 = vpack.c.b16 %v130, %v128
  %v159 = vpack.c.b16 %v133, %v131
  %v160 = vpack.c.b16 %v134, %v132
  %v161 = vpack.c.b16 %v137, %v135
  %v162 = vpack.c.b16 %v138, %v136
  %v163 = vpack.c.b16 %v141, %v139
  %v164 = vpack.c.b16 %v142, %v140
  %v165 = vpack.c.b16 %v145, %v143
  %v166 = vpack.c.b16 %v146, %v144
  %v167 = vpack.c.b16 %v149, %v147
  %v168 = vpack.c.b16 %v150, %v148
  %v169 = vpack.c.b16 %v153, %v151
  %v170 = vpack.c.b16 %v154, %v152
  %187 = vmatpush.bf16.msra.mxu0 %v169
  %188 = vmatpush.bf16.msra.mxu0 %v167
  %189 = vmatpush.bf16.msra.mxu0 %v165
  %190 = vmatpush.bf16.msra.mxu0 %v163
  %191 = vmatpush.bf16.msra.mxu0 %v161
  %192 = vmatpush.bf16.msra.mxu0 %v159
  %193 = vmatpush.bf16.msra.mxu0 %v157
  %194 = vmatpush.bf16.msra.mxu0 %v155
  %195 = vmatmul.bf16.gmra.mxu0 %v89
  %v196 = vpop.f32.mrf.mxu0
  %v197 = vadd.f32 0.0, %v196
  %v198 = vpop.f32.mrf.mxu0
  %v199 = vadd.f32 0.0, %v198
  %200 = vmatmul.bf16.gmra.mxu0 %v90
  %v201 = vpop.f32.mrf.mxu0
  %v202 = vadd.f32 0.0, %v201
  %v203 = vpop.f32.mrf.mxu0
  %v204 = vadd.f32 0.0, %v203
  %205 = vdwg.mxu0
  %206 = vmatpush.bf16.msra.mxu0 %v170
  %207 = vmatpush.bf16.msra.mxu0 %v168
  %208 = vmatpush.bf16.msra.mxu0 %v166
  %209 = vmatpush.bf16.msra.mxu0 %v164
  %210 = vmatpush.bf16.msra.mxu0 %v162
  %211 = vmatpush.bf16.msra.mxu0 %v160
  %212 = vmatpush.bf16.msra.mxu0 %v158
  %213 = vmatpush.bf16.msra.mxu0 %v156
  %214 = vmatmul.bf16.gmra.mxu0 %v89
  %v215 = vpop.f32.mrf.mxu0
  %v216 = vadd.f32 0.0, %v215
  %v217 = vpop.f32.mrf.mxu0
  %v218 = vadd.f32 0.0, %v217
  %219 = vmatmul.bf16.gmra.mxu0 %v90
  %v220 = vpop.f32.mrf.mxu0
  %v221 = vadd.f32 0.0, %v220
  %v222 = vpop.f32.mrf.mxu0
  %v223 = vadd.f32 0.0, %v222
  %224 = vdwg.mxu0
  %v241 = vunpack.c.l.b16 %v73
  %v242 = vunpack.c.h.b16 %v73
  %v243 = vunpack.c.l.b16 %v74
  %v244 = vunpack.c.h.b16 %v74
  %v245 = vunpack.c.l.b16 %v75
  %v246 = vunpack.c.h.b16 %v75
  %v247 = vunpack.c.l.b16 %v76
  %v248 = vunpack.c.h.b16 %v76
  %v249 = vunpack.c.l.b16 %v77
  %v250 = vunpack.c.h.b16 %v77
  %v251 = vunpack.c.l.b16 %v78
  %v252 = vunpack.c.h.b16 %v78
  %v253 = vunpack.c.l.b16 %v79
  %v254 = vunpack.c.h.b16 %v79
  %v255 = vunpack.c.l.b16 %v80
  %v256 = vunpack.c.h.b16 %v80
  %v257 = vunpack.c.l.b16 %v81
  %v258 = vunpack.c.h.b16 %v81
  %v259 = vunpack.c.l.b16 %v82
  %v260 = vunpack.c.h.b16 %v82
  %v261 = vunpack.c.l.b16 %v83
  %v262 = vunpack.c.h.b16 %v83
  %v263 = vunpack.c.l.b16 %v84
  %v264 = vunpack.c.h.b16 %v84
  %v265 = vunpack.c.l.b16 %v85
  %v266 = vunpack.c.h.b16 %v85
  %v267 = vunpack.c.l.b16 %v86
  %v268 = vunpack.c.h.b16 %v86
  %v269 = vunpack.c.l.b16 %v87
  %v270 = vunpack.c.h.b16 %v87
  %v271 = vunpack.c.l.b16 %v88
  %v272 = vunpack.c.h.b16 %v88
  %v273 = vpack.c.b16 %v243, %v241
  %v274 = vpack.c.b16 %v244, %v242
  %v275 = vpack.c.b16 %v247, %v245
  %v276 = vpack.c.b16 %v248, %v246
  %v277 = vpack.c.b16 %v251, %v249
  %v278 = vpack.c.b16 %v252, %v250
  %v279 = vpack.c.b16 %v255, %v253
  %v280 = vpack.c.b16 %v256, %v254
  %v281 = vpack.c.b16 %v259, %v257
  %v282 = vpack.c.b16 %v260, %v258
  %v283 = vpack.c.b16 %v263, %v261
  %v284 = vpack.c.b16 %v264, %v262
  %v285 = vpack.c.b16 %v267, %v265
  %v286 = vpack.c.b16 %v268, %v266
  %v287 = vpack.c.b16 %v271, %v269
  %v288 = vpack.c.b16 %v272, %v270
  %305 = vmatpush.bf16.msra.mxu0 %v287
  %306 = vmatpush.bf16.msra.mxu0 %v285
  %307 = vmatpush.bf16.msra.mxu0 %v283
  %308 = vmatpush.bf16.msra.mxu0 %v281
  %309 = vmatpush.bf16.msra.mxu0 %v279
  %310 = vmatpush.bf16.msra.mxu0 %v277
  %311 = vmatpush.bf16.msra.mxu0 %v275
  %312 = vmatpush.bf16.msra.mxu0 %v273
  %313 = vmatmul.bf16.gmra.mxu0 %v71
  %v314 = vpop.f32.mrf.mxu0
  %v315 = vadd.f32 %v197, %v314
  %v316 = vpop.f32.mrf.mxu0
  %v317 = vadd.f32 %v199, %v316
  %318 = vmatmul.bf16.gmra.mxu0 %v72
  %v319 = vpop.f32.mrf.mxu0
  %v320 = vadd.f32 %v202, %v319
  %v321 = vpop.f32.mrf.mxu0
  %v322 = vadd.f32 %v204, %v321
  %323 = vdwg.mxu0
  %324 = vmatpush.bf16.msra.mxu0 %v288
  %325 = vmatpush.bf16.msra.mxu0 %v286
  %326 = vmatpush.bf16.msra.mxu0 %v284
  %327 = vmatpush.bf16.msra.mxu0 %v282
  %328 = vmatpush.bf16.msra.mxu0 %v280
  %329 = vmatpush.bf16.msra.mxu0 %v278
  %330 = vmatpush.bf16.msra.mxu0 %v276
  %331 = vmatpush.bf16.msra.mxu0 %v274
  %332 = vmatmul.bf16.gmra.mxu0 %v71
  %v333 = vpop.f32.mrf.mxu0
  %v334 = vadd.f32 %v216, %v333
  %v335 = vpop.f32.mrf.mxu0
  %v336 = vadd.f32 %v218, %v335
  %337 = vmatmul.bf16.gmra.mxu0 %v72
  %v338 = vpop.f32.mrf.mxu0
  %v339 = vadd.f32 %v221, %v338
  %v340 = vpop.f32.mrf.mxu0
  %v341 = vadd.f32 %v223, %v340
  %342 = vdwg.mxu0
  %v343 = vpack.c.bf16 %v68, %v67
  %v344 = vpack.c.bf16 %v70, %v69
  %v345 = vld [vmem:[%s3] sm:$0xff]
  %v346 = vld [vmem:[%s3 + $0x8] sm:$0xff]
  %v347 = vld [vmem:[%s3 + $0x10] sm:$0xff]
  %v348 = vld [vmem:[%s3 + $0x18] sm:$0xff]
  %v349 = vld [vmem:[%s3 + $0x20] sm:$0xff]
  %v350 = vld [vmem:[%s3 + $0x28] sm:$0xff]
  %v351 = vld [vmem:[%s3 + $0x30] sm:$0xff]
  %v352 = vld [vmem:[%s3 + $0x38] sm:$0xff]
  %v353 = vld [vmem:[%s3 + $0x40] sm:$0xff]
  %v354 = vld [vmem:[%s3 + $0x48] sm:$0xff]
  %v355 = vld [vmem:[%s3 + $0x50] sm:$0xff]
  %v356 = vld [vmem:[%s3 + $0x58] sm:$0xff]
  %v357 = vld [vmem:[%s3 + $0x60] sm:$0xff]
  %v358 = vld [vmem:[%s3 + $0x68] sm:$0xff]
  %v359 = vld [vmem:[%s3 + $0x70] sm:$0xff]
  %v360 = vld [vmem:[%s3 + $0x78] sm:$0xff]
  %v377 = vunpack.c.l.b16 %v345
  %v378 = vunpack.c.h.b16 %v345
  %v379 = vunpack.c.l.b16 %v346
  %v380 = vunpack.c.h.b16 %v346
  %v381 = vunpack.c.l.b16 %v347
  %v382 = vunpack.c.h.b16 %v347
  %v383 = vunpack.c.l.b16 %v348
  %v384 = vunpack.c.h.b16 %v348
  %v385 = vunpack.c.l.b16 %v349
  %v386 = vunpack.c.h.b16 %v349
  %v387 = vunpack.c.l.b16 %v350
  %v388 = vunpack.c.h.b16 %v350
  %v389 = vunpack.c.l.b16 %v351
  %v390 = vunpack.c.h.b16 %v351
  %v391 = vunpack.c.l.b16 %v352
  %v392 = vunpack.c.h.b16 %v352
  %v393 = vunpack.c.l.b16 %v353
  %v394 = vunpack.c.h.b16 %v353
  %v395 = vunpack.c.l.b16 %v354
  %v396 = vunpack.c.h.b16 %v354
  %v397 = vunpack.c.l.b16 %v355
  %v398 = vunpack.c.h.b16 %v355
  %v399 = vunpack.c.l.b16 %v356
  %v400 = vunpack.c.h.b16 %v356
  %v401 = vunpack.c.l.b16 %v357
  %v402 = vunpack.c.h.b16 %v357
  %v403 = vunpack.c.l.b16 %v358
  %v404 = vunpack.c.h.b16 %v358
  %v405 = vunpack.c.l.b16 %v359
  %v406 = vunpack.c.h.b16 %v359
  %v407 = vunpack.c.l.b16 %v360
  %v408 = vunpack.c.h.b16 %v360
  %v409 = vpack.c.b16 %v379, %v377
  %v410 = vpack.c.b16 %v380, %v378
  %v411 = vpack.c.b16 %v383, %v381
  %v412 = vpack.c.b16 %v384, %v382
  %v413 = vpack.c.b16 %v387, %v385
  %v414 = vpack.c.b16 %v388, %v386
  %v415 = vpack.c.b16 %v391, %v389
  %v416 = vpack.c.b16 %v392, %v390
  %v417 = vpack.c.b16 %v395, %v393
  %v418 = vpack.c.b16 %v396, %v394
  %v419 = vpack.c.b16 %v399, %v397
  %v420 = vpack.c.b16 %v400, %v398
  %v421 = vpack.c.b16 %v403, %v401
  %v422 = vpack.c.b16 %v404, %v402
  %v423 = vpack.c.b16 %v407, %v405
  %v424 = vpack.c.b16 %v408, %v406
  %441 = vmatpush.bf16.msra.mxu0 %v423
  %442 = vmatpush.bf16.msra.mxu0 %v421
  %443 = vmatpush.bf16.msra.mxu0 %v419
  %444 = vmatpush.bf16.msra.mxu0 %v417
  %445 = vmatpush.bf16.msra.mxu0 %v415
  %446 = vmatpush.bf16.msra.mxu0 %v413
  %447 = vmatpush.bf16.msra.mxu0 %v411
  %448 = vmatpush.bf16.msra.mxu0 %v409
  %449 = vmatmul.bf16.gmra.mxu0 %v343
  %v450 = vpop.f32.mrf.mxu0
  %v451 = vadd.f32 0.0, %v450
  %v452 = vpop.f32.mrf.mxu0
  %v453 = vadd.f32 0.0, %v452
  %454 = vmatmul.bf16.gmra.mxu0 %v344
  %v455 = vpop.f32.mrf.mxu0
  %v456 = vadd.f32 0.0, %v455
  %v457 = vpop.f32.mrf.mxu0
  %v458 = vadd.f32 0.0, %v457
  %459 = vdwg.mxu0
  %460 = vmatpush.bf16.msra.mxu0 %v424
  %461 = vmatpush.bf16.msra.mxu0 %v422
  %462 = vmatpush.bf16.msra.mxu0 %v420
  %463 = vmatpush.bf16.msra.mxu0 %v418
  %464 = vmatpush.bf16.msra.mxu0 %v416
  %465 = vmatpush.bf16.msra.mxu0 %v414
  %466 = vmatpush.bf16.msra.mxu0 %v412
  %467 = vmatpush.bf16.msra.mxu0 %v410
  %468 = vmatmul.bf16.gmra.mxu0 %v343
  %v469 = vpop.f32.mrf.mxu0
  %v470 = vadd.f32 0.0, %v469
  %v471 = vpop.f32.mrf.mxu0
  %v472 = vadd.f32 0.0, %v471
  %473 = vmatmul.bf16.gmra.mxu0 %v344
  %v474 = vpop.f32.mrf.mxu0
  %v475 = vadd.f32 0.0, %v474
  %v476 = vpop.f32.mrf.mxu0
  %v477 = vadd.f32 0.0, %v476
  %478 = vdwg.mxu0
  %v479 = vadd.f32 %v315, %v451
  %v480 = vadd.f32 %v334, %v470
  %v481 = vadd.f32 %v317, %v453
  %v482 = vadd.f32 %v336, %v472
  %v483 = vadd.f32 %v320, %v456
  %v484 = vadd.f32 %v339, %v475
  %v485 = vadd.f32 %v322, %v458
  %v486 = vadd.f32 %v341, %v477
  %v487 = vld [vmem:[%s4] sm:$0x3]
  %v489 = vperm.slane %v487, 0
  %v490 = vperm.slane %v487, 1
  %v493 = vadd.f32 %v479, %v489
  %v494 = vadd.f32 %v480, %v490
  %v495 = vadd.f32 %v481, %v489
  %v496 = vadd.f32 %v482, %v490
  %v497 = vadd.f32 %v483, %v489
  %v498 = vadd.f32 %v484, %v490
  %v499 = vadd.f32 %v485, %v489
  %v500 = vadd.f32 %v486, %v490
  %501 = vst [vmem:[%s5] sm:$0xff] %v493
  %502 = vst [vmem:[%s5 + $0x8] sm:$0xff] %v494
  %503 = vst [vmem:[%s5 + $0x10] sm:$0xff] %v495
  %504 = vst [vmem:[%s5 + $0x18] sm:$0xff] %v496
  %505 = vst [vmem:[%s5 + $0x20] sm:$0xff] %v497
  %506 = vst [vmem:[%s5 + $0x28] sm:$0xff] %v498
  %507 = vst [vmem:[%s5 + $0x30] sm:$0xff] %v499
  %508 = vst [vmem:[%s5 + $0x38] sm:$0xff] %v500
  // Predicated region
  $region22: #{hunet_forward.18} parent=0 // pred_check
    _
  $region23: #{hunet_forward.18} parent=0 // pred_check_branch
    %510 = sbr.rel (0) target = $region25
  $region24: #{hunet_forward.18} parent=0 // pred_region
    _
  $region25: #{hunet_forward.18} parent=0 // pred_fallthru
    _
  // Predicated region
  $region26: #{hunet_forward.18} parent=0 // pred_check
    _
  $region27: #{hunet_forward.18} parent=0 // pred_check_branch
    %512 = sbr.rel (0) target = $region29
  $region28: #{hunet_forward.18} parent=0 // pred_region
    _
  $region29: #{hunet_forward.18} parent=0 // pred_fallthru
    _

// kernel: hunet_forward.22
$region0: #{hunet_forward.22}
  #allocation0 [shape = 'u32[]', space=smem, size = 0x4, offset = 0x4, fixed_abs, tag = 'smem constant byte address 0x4 - core index']
  #allocation1 [shape = 'u32[72,128]{1,0:T(1,128)}', space=vmem, size = 0x9000, scoped, tag = 'internal scratch']
  %s0 = inlined_call_operand.vmem [shape: f32[16,128], index: 0, kind: input, shape index: {}]
  %s1 = inlined_call_operand.vmem [shape: bf16[128,256], index: 1, kind: input, shape index: {}]
  %s2 = inlined_call_operand.vmem [shape: bf16[128,256], index: 2, kind: input, shape index: {}]
  %s3 = inlined_call_operand.vmem [shape: bf16[128,256], index: 3, kind: input, shape index: {}]
  %s4 = inlined_call_operand.vmem [shape: f32[1,256], index: 4, kind: input, shape index: {}]
  %s5 = inlined_call_operand.vmem [shape: f32[16,256], index: 5, kind: output, shape index: {}]
  %s6 = sld [smem:[#allocation0]]
  $region30: #{hunet_forward.22} parent=0
    _
  %s8 = ssub.s32 1, %s6
  %s9 = scalar_select 0, %s8, %s6
  // Predicated region
  $region2: #{hunet_forward.22} parent=0 // pred_check
    _
  $region3: #{hunet_forward.22} parent=0 // pred_check_branch
    %11 = sbr.rel (0) target = $region5
  $region4: #{hunet_forward.22} parent=0 // pred_region
    _
  $region5: #{hunet_forward.22} parent=0 // pred_fallthru
    _
  // Predicated region
  $region6: #{hunet_forward.22} parent=0 // pred_check
    _
  $region7: #{hunet_forward.22} parent=0 // pred_check_branch
    %13 = sbr.rel (0) target = $region9
  $region8: #{hunet_forward.22} parent=0 // pred_region
    _
  $region9: #{hunet_forward.22} parent=0 // pred_fallthru
    _
  // Predicated region
  $region10: #{hunet_forward.22} parent=0 // pred_check
    _
  $region11: #{hunet_forward.22} parent=0 // pred_check_branch
    %15 = sbr.rel (0) target = $region13
  $region12: #{hunet_forward.22} parent=0 // pred_region
    _
  $region13: #{hunet_forward.22} parent=0 // pred_fallthru
    _
  // Predicated region
  $region14: #{hunet_forward.22} parent=0 // pred_check
    _
  $region15: #{hunet_forward.22} parent=0 // pred_check_branch
    %17 = sbr.rel (0) target = $region17
  $region16: #{hunet_forward.22} parent=0 // pred_region
    _
  $region17: #{hunet_forward.22} parent=0 // pred_fallthru
    _
  // Predicated region
  $region18: #{hunet_forward.22} parent=0 // pred_check
    _
  $region19: #{hunet_forward.22} parent=0 // pred_check_branch
    %19 = sbr.rel (0) target = $region21
  $region20: #{hunet_forward.22} parent=0 // pred_region
    _
  $region21: #{hunet_forward.22} parent=0 // pred_fallthru
    _
  %v20 = vld [vmem:[%s0] sm:$0xff]
  %v21 = vld [vmem:[%s0 + $0x8] sm:$0xff]
  %v22 = vmax.f32 %v20, 0.0
  %v23 = vmax.f32 %v21, 0.0
  %v24 = vlaneseq
  %v25 = vshrl.u32 %v24, 7
  %v26 = vadd.s32 %v25, 8
  %v27 = vand.u32 %v25, 7
  %v28 = vand.u32 %v26, 7
  %vm29 = vcmp.gt.s32.totalorder %v27, 0
  %vm30 = vcmp.gt.s32.totalorder %v28, 0
  %v31 = vrot.slane %v22, 7
  %v32 = vrot.slane %v23, 7
  %vm33 = vcmp.lt.s32.totalorder %v25, 1
  %v34 = vsel %vm33, %v31, %v32
  %v35 = vsel %vm33, %v32, %v31
  %v36 = vsel %vm29, %v35, 0.0
  %v37 = vsel %vm30, %v34, 0.0
  %vm38 = vcmp.lt.s32.totalorder %v27, 7
  %vm39 = vcmp.lt.s32.totalorder %v28, 7
  %v40 = vrot.slane %v22, 1
  %v41 = vrot.slane %v23, 1
  %vm42 = vcmp.lt.s32.totalorder %v25, 7
  %v43 = vsel %vm42, %v40, %v41
  %v44 = vsel %vm42, %v41, %v40
  %v45 = vsel %vm38, %v43, 0.0
  %v46 = vsel %vm39, %v44, 0.0
  %v47 = vpack.c.bf16 %v23, %v22
  %v48 = vld [vmem:[%s2] sm:$0xff]
  %v49 = vld [vmem:[%s2 + $0x8] sm:$0xff]
  %v50 = vld [vmem:[%s2 + $0x10] sm:$0xff]
  %v51 = vld [vmem:[%s2 + $0x18] sm:$0xff]
  %v52 = vld [vmem:[%s2 + $0x20] sm:$0xff]
  %v53 = vld [vmem:[%s2 + $0x28] sm:$0xff]
  %v54 = vld [vmem:[%s2 + $0x30] sm:$0xff]
  %v55 = vld [vmem:[%s2 + $0x38] sm:$0xff]
  %v56 = vld [vmem:[%s2 + $0x40] sm:$0xff]
  %v57 = vld [vmem:[%s2 + $0x48] sm:$0xff]
  %v58 = vld [vmem:[%s2 + $0x50] sm:$0xff]
  %v59 = vld [vmem:[%s2 + $0x58] sm:$0xff]
  %v60 = vld [vmem:[%s2 + $0x60] sm:$0xff]
  %v61 = vld [vmem:[%s2 + $0x68] sm:$0xff]
  %v62 = vld [vmem:[%s2 + $0x70] sm:$0xff]
  %v63 = vld [vmem:[%s2 + $0x78] sm:$0xff]
  %v64 = vpack.c.bf16 %v37, %v36
  %v65 = vld [vmem:[%s1] sm:$0xff]
  %v66 = vld [vmem:[%s1 + $0x8] sm:$0xff]
  %v67 = vld [vmem:[%s1 + $0x10] sm:$0xff]
  %v68 = vld [vmem:[%s1 + $0x18] sm:$0xff]
  %v69 = vld [vmem:[%s1 + $0x20] sm:$0xff]
  %v70 = vld [vmem:[%s1 + $0x28] sm:$0xff]
  %v71 = vld [vmem:[%s1 + $0x30] sm:$0xff]
  %v72 = vld [vmem:[%s1 + $0x38] sm:$0xff]
  %v73 = vld [vmem:[%s1 + $0x40] sm:$0xff]
  %v74 = vld [vmem:[%s1 + $0x48] sm:$0xff]
  %v75 = vld [vmem:[%s1 + $0x50] sm:$0xff]
  %v76 = vld [vmem:[%s1 + $0x58] sm:$0xff]
  %v77 = vld [vmem:[%s1 + $0x60] sm:$0xff]
  %v78 = vld [vmem:[%s1 + $0x68] sm:$0xff]
  %v79 = vld [vmem:[%s1 + $0x70] sm:$0xff]
  %v80 = vld [vmem:[%s1 + $0x78] sm:$0xff]
  %v97 = vunpack.c.l.b16 %v65
  %v98 = vunpack.c.h.b16 %v65
  %v99 = vunpack.c.l.b16 %v66
  %v100 = vunpack.c.h.b16 %v66
  %v101 = vunpack.c.l.b16 %v67
  %v102 = vunpack.c.h.b16 %v67
  %v103 = vunpack.c.l.b16 %v68
  %v104 = vunpack.c.h.b16 %v68
  %v105 = vunpack.c.l.b16 %v69
  %v106 = vunpack.c.h.b16 %v69
  %v107 = vunpack.c.l.b16 %v70
  %v108 = vunpack.c.h.b16 %v70
  %v109 = vunpack.c.l.b16 %v71
  %v110 = vunpack.c.h.b16 %v71
  %v111 = vunpack.c.l.b16 %v72
  %v112 = vunpack.c.h.b16 %v72
  %v113 = vunpack.c.l.b16 %v73
  %v114 = vunpack.c.h.b16 %v73
  %v115 = vunpack.c.l.b16 %v74
  %v116 = vunpack.c.h.b16 %v74
  %v117 = vunpack.c.l.b16 %v75
  %v118 = vunpack.c.h.b16 %v75
  %v119 = vunpack.c.l.b16 %v76
  %v120 = vunpack.c.h.b16 %v76
  %v121 = vunpack.c.l.b16 %v77
  %v122 = vunpack.c.h.b16 %v77
  %v123 = vunpack.c.l.b16 %v78
  %v124 = vunpack.c.h.b16 %v78
  %v125 = vunpack.c.l.b16 %v79
  %v126 = vunpack.c.h.b16 %v79
  %v127 = vunpack.c.l.b16 %v80
  %v128 = vunpack.c.h.b16 %v80
  %v129 = vpack.c.b16 %v99, %v97
  %v130 = vpack.c.b16 %v100, %v98
  %v131 = vpack.c.b16 %v103, %v101
  %v132 = vpack.c.b16 %v104, %v102
  %v133 = vpack.c.b16 %v107, %v105
  %v134 = vpack.c.b16 %v108, %v106
  %v135 = vpack.c.b16 %v111, %v109
  %v136 = vpack.c.b16 %v112, %v110
  %v137 = vpack.c.b16 %v115, %v113
  %v138 = vpack.c.b16 %v116, %v114
  %v139 = vpack.c.b16 %v119, %v117
  %v140 = vpack.c.b16 %v120, %v118
  %v141 = vpack.c.b16 %v123, %v121
  %v142 = vpack.c.b16 %v124, %v122
  %v143 = vpack.c.b16 %v127, %v125
  %v144 = vpack.c.b16 %v128, %v126
  %161 = vmatpush.bf16.msra.mxu0 %v143
  %162 = vmatpush.bf16.msra.mxu0 %v141
  %163 = vmatpush.bf16.msra.mxu0 %v139
  %164 = vmatpush.bf16.msra.mxu0 %v137
  %165 = vmatpush.bf16.msra.mxu0 %v135
  %166 = vmatpush.bf16.msra.mxu0 %v133
  %167 = vmatpush.bf16.msra.mxu0 %v131
  %168 = vmatpush.bf16.msra.mxu0 %v129
  %169 = vmatmul.bf16.gmra.mxu0 %v64
  %v170 = vpop.f32.mrf.mxu0
  %v171 = vadd.f32 0.0, %v170
  %v172 = vpop.f32.mrf.mxu0
  %v173 = vadd.f32 0.0, %v172
  %174 = vdwg.mxu0
  %175 = vmatpush.bf16.msra.mxu0 %v144
  %176 = vmatpush.bf16.msra.mxu0 %v142
  %177 = vmatpush.bf16.msra.mxu0 %v140
  %178 = vmatpush.bf16.msra.mxu0 %v138
  %179 = vmatpush.bf16.msra.mxu0 %v136
  %180 = vmatpush.bf16.msra.mxu0 %v134
  %181 = vmatpush.bf16.msra.mxu0 %v132
  %182 = vmatpush.bf16.msra.mxu0 %v130
  %183 = vmatmul.bf16.gmra.mxu0 %v64
  %v184 = vpop.f32.mrf.mxu0
  %v185 = vadd.f32 0.0, %v184
  %v186 = vpop.f32.mrf.mxu0
  %v187 = vadd.f32 0.0, %v186
  %188 = vdwg.mxu0
  %v205 = vunpack.c.l.b16 %v48
  %v206 = vunpack.c.h.b16 %v48
  %v207 = vunpack.c.l.b16 %v49
  %v208 = vunpack.c.h.b16 %v49
  %v209 = vunpack.c.l.b16 %v50
  %v210 = vunpack.c.h.b16 %v50
  %v211 = vunpack.c.l.b16 %v51
  %v212 = vunpack.c.h.b16 %v51
  %v213 = vunpack.c.l.b16 %v52
  %v214 = vunpack.c.h.b16 %v52
  %v215 = vunpack.c.l.b16 %v53
  %v216 = vunpack.c.h.b16 %v53
  %v217 = vunpack.c.l.b16 %v54
  %v218 = vunpack.c.h.b16 %v54
  %v219 = vunpack.c.l.b16 %v55
  %v220 = vunpack.c.h.b16 %v55
  %v221 = vunpack.c.l.b16 %v56
  %v222 = vunpack.c.h.b16 %v56
  %v223 = vunpack.c.l.b16 %v57
  %v224 = vunpack.c.h.b16 %v57
  %v225 = vunpack.c.l.b16 %v58
  %v226 = vunpack.c.h.b16 %v58
  %v227 = vunpack.c.l.b16 %v59
  %v228 = vunpack.c.h.b16 %v59
  %v229 = vunpack.c.l.b16 %v60
  %v230 = vunpack.c.h.b16 %v60
  %v231 = vunpack.c.l.b16 %v61
  %v232 = vunpack.c.h.b16 %v61
  %v233 = vunpack.c.l.b16 %v62
  %v234 = vunpack.c.h.b16 %v62
  %v235 = vunpack.c.l.b16 %v63
  %v236 = vunpack.c.h.b16 %v63
  %v237 = vpack.c.b16 %v207, %v205
  %v238 = vpack.c.b16 %v208, %v206
  %v239 = vpack.c.b16 %v211, %v209
  %v240 = vpack.c.b16 %v212, %v210
  %v241 = vpack.c.b16 %v215, %v213
  %v242 = vpack.c.b16 %v216, %v214
  %v243 = vpack.c.b16 %v219, %v217
  %v244 = vpack.c.b16 %v220, %v218
  %v245 = vpack.c.b16 %v223, %v221
  %v246 = vpack.c.b16 %v224, %v222
  %v247 = vpack.c.b16 %v227, %v225
  %v248 = vpack.c.b16 %v228, %v226
  %v249 = vpack.c.b16 %v231, %v229
  %v250 = vpack.c.b16 %v232, %v230
  %v251 = vpack.c.b16 %v235, %v233
  %v252 = vpack.c.b16 %v236, %v234
  %269 = vmatpush.bf16.msra.mxu0 %v251
  %270 = vmatpush.bf16.msra.mxu0 %v249
  %271 = vmatpush.bf16.msra.mxu0 %v247
  %272 = vmatpush.bf16.msra.mxu0 %v245
  %273 = vmatpush.bf16.msra.mxu0 %v243
  %274 = vmatpush.bf16.msra.mxu0 %v241
  %275 = vmatpush.bf16.msra.mxu0 %v239
  %276 = vmatpush.bf16.msra.mxu0 %v237
  %277 = vmatmul.bf16.gmra.mxu0 %v47
  %v278 = vpop.f32.mrf.mxu0
  %v279 = vadd.f32 %v171, %v278
  %v280 = vpop.f32.mrf.mxu0
  %v281 = vadd.f32 %v173, %v280
  %282 = vdwg.mxu0
  %283 = vmatpush.bf16.msra.mxu0 %v252
  %284 = vmatpush.bf16.msra.mxu0 %v250
  %285 = vmatpush.bf16.msra.mxu0 %v248
  %286 = vmatpush.bf16.msra.mxu0 %v246
  %287 = vmatpush.bf16.msra.mxu0 %v244
  %288 = vmatpush.bf16.msra.mxu0 %v242
  %289 = vmatpush.bf16.msra.mxu0 %v240
  %290 = vmatpush.bf16.msra.mxu0 %v238
  %291 = vmatmul.bf16.gmra.mxu0 %v47
  %v292 = vpop.f32.mrf.mxu0
  %v293 = vadd.f32 %v185, %v292
  %v294 = vpop.f32.mrf.mxu0
  %v295 = vadd.f32 %v187, %v294
  %296 = vdwg.mxu0
  %v297 = vpack.c.bf16 %v46, %v45
  %v298 = vld [vmem:[%s3] sm:$0xff]
  %v299 = vld [vmem:[%s3 + $0x8] sm:$0xff]
  %v300 = vld [vmem:[%s3 + $0x10] sm:$0xff]
  %v301 = vld [vmem:[%s3 + $0x18] sm:$0xff]
  %v302 = vld [vmem:[%s3 + $0x20] sm:$0xff]
  %v303 = vld [vmem:[%s3 + $0x28] sm:$0xff]
  %v304 = vld [vmem:[%s3 + $0x30] sm:$0xff]
  %v305 = vld [vmem:[%s3 + $0x38] sm:$0xff]
  %v306 = vld [vmem:[%s3 + $0x40] sm:$0xff]
  %v307 = vld [vmem:[%s3 + $0x48] sm:$0xff]
  %v308 = vld [vmem:[%s3 + $0x50] sm:$0xff]
  %v309 = vld [vmem:[%s3 + $0x58] sm:$0xff]
  %v310 = vld [vmem:[%s3 + $0x60] sm:$0xff]
  %v311 = vld [vmem:[%s3 + $0x68] sm:$0xff]
  %v312 = vld [vmem:[%s3 + $0x70] sm:$0xff]
  %v313 = vld [vmem:[%s3 + $0x78] sm:$0xff]
  %v330 = vunpack.c.l.b16 %v298
  %v331 = vunpack.c.h.b16 %v298
  %v332 = vunpack.c.l.b16 %v299
  %v333 = vunpack.c.h.b16 %v299
  %v334 = vunpack.c.l.b16 %v300
  %v335 = vunpack.c.h.b16 %v300
  %v336 = vunpack.c.l.b16 %v301
  %v337 = vunpack.c.h.b16 %v301
  %v338 = vunpack.c.l.b16 %v302
  %v339 = vunpack.c.h.b16 %v302
  %v340 = vunpack.c.l.b16 %v303
  %v341 = vunpack.c.h.b16 %v303
  %v342 = vunpack.c.l.b16 %v304
  %v343 = vunpack.c.h.b16 %v304
  %v344 = vunpack.c.l.b16 %v305
  %v345 = vunpack.c.h.b16 %v305
  %v346 = vunpack.c.l.b16 %v306
  %v347 = vunpack.c.h.b16 %v306
  %v348 = vunpack.c.l.b16 %v307
  %v349 = vunpack.c.h.b16 %v307
  %v350 = vunpack.c.l.b16 %v308
  %v351 = vunpack.c.h.b16 %v308
  %v352 = vunpack.c.l.b16 %v309
  %v353 = vunpack.c.h.b16 %v309
  %v354 = vunpack.c.l.b16 %v310
  %v355 = vunpack.c.h.b16 %v310
  %v356 = vunpack.c.l.b16 %v311
  %v357 = vunpack.c.h.b16 %v311
  %v358 = vunpack.c.l.b16 %v312
  %v359 = vunpack.c.h.b16 %v312
  %v360 = vunpack.c.l.b16 %v313
  %v361 = vunpack.c.h.b16 %v313
  %v362 = vpack.c.b16 %v332, %v330
  %v363 = vpack.c.b16 %v333, %v331
  %v364 = vpack.c.b16 %v336, %v334
  %v365 = vpack.c.b16 %v337, %v335
  %v366 = vpack.c.b16 %v340, %v338
  %v367 = vpack.c.b16 %v341, %v339
  %v368 = vpack.c.b16 %v344, %v342
  %v369 = vpack.c.b16 %v345, %v343
  %v370 = vpack.c.b16 %v348, %v346
  %v371 = vpack.c.b16 %v349, %v347
  %v372 = vpack.c.b16 %v352, %v350
  %v373 = vpack.c.b16 %v353, %v351
  %v374 = vpack.c.b16 %v356, %v354
  %v375 = vpack.c.b16 %v357, %v355
  %v376 = vpack.c.b16 %v360, %v358
  %v377 = vpack.c.b16 %v361, %v359
  %394 = vmatpush.bf16.msra.mxu0 %v376
  %395 = vmatpush.bf16.msra.mxu0 %v374
  %396 = vmatpush.bf16.msra.mxu0 %v372
  %397 = vmatpush.bf16.msra.mxu0 %v370
  %398 = vmatpush.bf16.msra.mxu0 %v368
  %399 = vmatpush.bf16.msra.mxu0 %v366
  %400 = vmatpush.bf16.msra.mxu0 %v364
  %401 = vmatpush.bf16.msra.mxu0 %v362
  %402 = vmatmul.bf16.gmra.mxu0 %v297
  %v403 = vpop.f32.mrf.mxu0
  %v404 = vadd.f32 0.0, %v403
  %v405 = vpop.f32.mrf.mxu0
  %v406 = vadd.f32 0.0, %v405
  %407 = vdwg.mxu0
  %408 = vmatpush.bf16.msra.mxu0 %v377
  %409 = vmatpush.bf16.msra.mxu0 %v375
  %410 = vmatpush.bf16.msra.mxu0 %v373
  %411 = vmatpush.bf16.msra.mxu0 %v371
  %412 = vmatpush.bf16.msra.mxu0 %v369
  %413 = vmatpush.bf16.msra.mxu0 %v367
  %414 = vmatpush.bf16.msra.mxu0 %v365
  %415 = vmatpush.bf16.msra.mxu0 %v363
  %416 = vmatmul.bf16.gmra.mxu0 %v297
  %v417 = vpop.f32.mrf.mxu0
  %v418 = vadd.f32 0.0, %v417
  %v419 = vpop.f32.mrf.mxu0
  %v420 = vadd.f32 0.0, %v419
  %421 = vdwg.mxu0
  %v422 = vadd.f32 %v279, %v404
  %v423 = vadd.f32 %v293, %v418
  %v424 = vadd.f32 %v281, %v406
  %v425 = vadd.f32 %v295, %v420
  %v426 = vld [vmem:[%s4] sm:$0x3]
  %v428 = vperm.slane %v426, 0
  %v429 = vperm.slane %v426, 1
  %v432 = vadd.f32 %v422, %v428
  %v433 = vadd.f32 %v423, %v429
  %v434 = vadd.f32 %v424, %v428
  %v435 = vadd.f32 %v425, %v429
  %436 = vst [vmem:[%s5] sm:$0xff] %v432
  %437 = vst [vmem:[%s5 + $0x8] sm:$0xff] %v433
  %438 = vst [vmem:[%s5 + $0x10] sm:$0xff] %v434
  %439 = vst [vmem:[%s5 + $0x18] sm:$0xff] %v435
  // Predicated region
  $region22: #{hunet_forward.22} parent=0 // pred_check
    _
  $region23: #{hunet_forward.22} parent=0 // pred_check_branch
    %441 = sbr.rel (0) target = $region25
  $region24: #{hunet_forward.22} parent=0 // pred_region
    _
  $region25: #{hunet_forward.22} parent=0 // pred_fallthru
    _
  // Predicated region
  $region26: #{hunet_forward.22} parent=0 // pred_check
    _
  $region27: #{hunet_forward.22} parent=0 // pred_check_branch
    %443 = sbr.rel (0) target = $region29
  $region28: #{hunet_forward.22} parent=0 // pred_region
    _
  $region29: #{hunet_forward.22} parent=0 // pred_fallthru
    _

// kernel: hunet_forward.20
$region0: #{hunet_forward.20}
  #allocation0 [shape = 'u32[]', space=smem, size = 0x4, offset = 0x4, fixed_abs, tag = 'smem constant byte address 0x4 - core index']
  #allocation1 [shape = 'u32[72,128]{1,0:T(1,128)}', space=vmem, size = 0x9000, scoped, tag = 'internal scratch']
  %s0 = inlined_call_operand.vmem [shape: f32[16,128], index: 0, kind: input, shape index: {}]
  %s1 = inlined_call_operand.vmem [shape: bf16[128,128], index: 1, kind: input, shape index: {}]
  %s2 = inlined_call_operand.vmem [shape: bf16[128,128], index: 2, kind: input, shape index: {}]
  %s3 = inlined_call_operand.vmem [shape: bf16[128,128], index: 3, kind: input, shape index: {}]
  %s4 = inlined_call_operand.vmem [shape: f32[1,128], index: 4, kind: input, shape index: {}]
  %s5 = inlined_call_operand.vmem [shape: bf16[128,128], index: 5, kind: input, shape index: {}]
  %s6 = inlined_call_operand.vmem [shape: bf16[128,128], index: 6, kind: input, shape index: {}]
  %s7 = inlined_call_operand.vmem [shape: bf16[128,128], index: 7, kind: input, shape index: {}]
  %s8 = inlined_call_operand.vmem [shape: f32[1,128], index: 8, kind: input, shape index: {}]
  %s9 = inlined_call_operand.vmem [shape: f32[16,128], index: 9, kind: output, shape index: {}]
  %s10 = sld [smem:[#allocation0]]
  $region46: #{hunet_forward.20} parent=0
    _
  %s12 = ssub.s32 1, %s10
  %s13 = scalar_select 0, %s12, %s10
  // Predicated region
  $region2: #{hunet_forward.20} parent=0 // pred_check
    _
  $region3: #{hunet_forward.20} parent=0 // pred_check_branch
    %15 = sbr.rel (0) target = $region5
  $region4: #{hunet_forward.20} parent=0 // pred_region
    _
  $region5: #{hunet_forward.20} parent=0 // pred_fallthru
    _
  // Predicated region
  $region6: #{hunet_forward.20} parent=0 // pred_check
    _
  $region7: #{hunet_forward.20} parent=0 // pred_check_branch
    %17 = sbr.rel (0) target = $region9
  $region8: #{hunet_forward.20} parent=0 // pred_region
    _
  $region9: #{hunet_forward.20} parent=0 // pred_fallthru
    _
  // Predicated region
  $region10: #{hunet_forward.20} parent=0 // pred_check
    _
  $region11: #{hunet_forward.20} parent=0 // pred_check_branch
    %19 = sbr.rel (0) target = $region13
  $region12: #{hunet_forward.20} parent=0 // pred_region
    _
  $region13: #{hunet_forward.20} parent=0 // pred_fallthru
    _
  // Predicated region
  $region14: #{hunet_forward.20} parent=0 // pred_check
    _
  $region15: #{hunet_forward.20} parent=0 // pred_check_branch
    %21 = sbr.rel (0) target = $region17
  $region16: #{hunet_forward.20} parent=0 // pred_region
    _
  $region17: #{hunet_forward.20} parent=0 // pred_fallthru
    _
  // Predicated region
  $region18: #{hunet_forward.20} parent=0 // pred_check
    _
  $region19: #{hunet_forward.20} parent=0 // pred_check_branch
    %23 = sbr.rel (0) target = $region21
  $region20: #{hunet_forward.20} parent=0 // pred_region
    _
  $region21: #{hunet_forward.20} parent=0 // pred_fallthru
    _
  // Predicated region
  $region22: #{hunet_forward.20} parent=0 // pred_check
    _
  $region23: #{hunet_forward.20} parent=0 // pred_check_branch
    %25 = sbr.rel (0) target = $region25
  $region24: #{hunet_forward.20} parent=0 // pred_region
    _
  $region25: #{hunet_forward.20} parent=0 // pred_fallthru
    _
  // Predicated region
  $region26: #{hunet_forward.20} parent=0 // pred_check
    _
  $region27: #{hunet_forward.20} parent=0 // pred_check_branch
    %27 = sbr.rel (0) target = $region29
  $region28: #{hunet_forward.20} parent=0 // pred_region
    _
  $region29: #{hunet_forward.20} parent=0 // pred_fallthru
    _
  // Predicated region
  $region30: #{hunet_forward.20} parent=0 // pred_check
    _
  $region31: #{hunet_forward.20} parent=0 // pred_check_branch
    %29 = sbr.rel (0) target = $region33
  $region32: #{hunet_forward.20} parent=0 // pred_region
    _
  $region33: #{hunet_forward.20} parent=0 // pred_fallthru
    _
  // Predicated region
  $region34: #{hunet_forward.20} parent=0 // pred_check
    _
  $region35: #{hunet_forward.20} parent=0 // pred_check_branch
    %31 = sbr.rel (0) target = $region37
  $region36: #{hunet_forward.20} parent=0 // pred_region
    _
  $region37: #{hunet_forward.20} parent=0 // pred_fallthru
    _
  %v32 = vld [vmem:[%s0] sm:$0xff]
  %v33 = vld [vmem:[%s0 + $0x8] sm:$0xff]
  %v34 = vlaneseq
  %v35 = vshrl.u32 %v34, 7
  %v36 = vadd.s32 %v35, 8
  %v37 = vand.u32 %v35, 7
  %v38 = vand.u32 %v36, 7
  %vm39 = vcmp.gt.s32.totalorder %v37, 0
  %vm40 = vcmp.gt.s32.totalorder %v38, 0
  %v41 = vrot.slane %v32, 7
  %v42 = vrot.slane %v33, 7
  %vm43 = vcmp.lt.s32.totalorder %v35, 1
  %v44 = vsel %vm43, %v41, %v42
  %v45 = vsel %vm43, %v42, %v41
  %v46 = vsel %vm39, %v45, 0.0
  %v47 = vsel %vm40, %v44, 0.0
  %vm48 = vcmp.lt.s32.totalorder %v37, 7
  %vm49 = vcmp.lt.s32.totalorder %v38, 7
  %v50 = vrot.slane %v32, 1
  %v51 = vrot.slane %v33, 1
  %vm52 = vcmp.lt.s32.totalorder %v35, 7
  %v53 = vsel %vm52, %v50, %v51
  %v54 = vsel %vm52, %v51, %v50
  %v55 = vsel %vm48, %v53, 0.0
  %v56 = vsel %vm49, %v54, 0.0
  %v57 = vpack.c.bf16 %v33, %v32
  %v58 = vld [vmem:[%s2] sm:$0xf]
  %v59 = vld [vmem:[%s2 + $0x4] sm:$0xf]
  %v60 = vld [vmem:[%s2 + $0x8] sm:$0xf]
  %v61 = vld [vmem:[%s2 + $0xc] sm:$0xf]
  %v62 = vld [vmem:[%s2 + $0x10] sm:$0xf]
  %v63 = vld [vmem:[%s2 + $0x14] sm:$0xf]
  %v64 = vld [vmem:[%s2 + $0x18] sm:$0xf]
  %v65 = vld [vmem:[%s2 + $0x1c] sm:$0xf]
  %v66 = vld [vmem:[%s2 + $0x20] sm:$0xf]
  %v67 = vld [vmem:[%s2 + $0x24] sm:$0xf]
  %v68 = vld [vmem:[%s2 + $0x28] sm:$0xf]
  %v69 = vld [vmem:[%s2 + $0x2c] sm:$0xf]
  %v70 = vld [vmem:[%s2 + $0x30] sm:$0xf]
  %v71 = vld [vmem:[%s2 + $0x34] sm:$0xf]
  %v72 = vld [vmem:[%s2 + $0x38] sm:$0xf]
  %v73 = vld [vmem:[%s2 + $0x3c] sm:$0xf]
  %v74 = vpack.c.bf16 %v47, %v46
  %v75 = vld [vmem:[%s1] sm:$0xf]
  %v76 = vld [vmem:[%s1 + $0x4] sm:$0xf]
  %v77 = vld [vmem:[%s1 + $0x8] sm:$0xf]
  %v78 = vld [vmem:[%s1 + $0xc] sm:$0xf]
  %v79 = vld [vmem:[%s1 + $0x10] sm:$0xf]
  %v80 = vld [vmem:[%s1 + $0x14] sm:$0xf]
  %v81 = vld [vmem:[%s1 + $0x18] sm:$0xf]
  %v82 = vld [vmem:[%s1 + $0x1c] sm:$0xf]
  %v83 = vld [vmem:[%s1 + $0x20] sm:$0xf]
  %v84 = vld [vmem:[%s1 + $0x24] sm:$0xf]
  %v85 = vld [vmem:[%s1 + $0x28] sm:$0xf]
  %v86 = vld [vmem:[%s1 + $0x2c] sm:$0xf]
  %v87 = vld [vmem:[%s1 + $0x30] sm:$0xf]
  %v88 = vld [vmem:[%s1 + $0x34] sm:$0xf]
  %v89 = vld [vmem:[%s1 + $0x38] sm:$0xf]
  %v90 = vld [vmem:[%s1 + $0x3c] sm:$0xf]
  %v107 = vunpack.c.l.b16 %v75
  %v108 = vunpack.c.l.b16 %v76
  %v109 = vunpack.c.l.b16 %v77
  %v110 = vunpack.c.l.b16 %v78
  %v111 = vunpack.c.l.b16 %v79
  %v112 = vunpack.c.l.b16 %v80
  %v113 = vunpack.c.l.b16 %v81
  %v114 = vunpack.c.l.b16 %v82
  %v115 = vunpack.c.l.b16 %v83
  %v116 = vunpack.c.l.b16 %v84
  %v117 = vunpack.c.l.b16 %v85
  %v118 = vunpack.c.l.b16 %v86
  %v119 = vunpack.c.l.b16 %v87
  %v120 = vunpack.c.l.b16 %v88
  %v121 = vunpack.c.l.b16 %v89
  %v122 = vunpack.c.l.b16 %v90
  %v123 = vpack.c.b16 %v108, %v107
  %v124 = vpack.c.b16 %v110, %v109
  %v125 = vpack.c.b16 %v112, %v111
  %v126 = vpack.c.b16 %v114, %v113
  %v127 = vpack.c.b16 %v116, %v115
  %v128 = vpack.c.b16 %v118, %v117
  %v129 = vpack.c.b16 %v120, %v119
  %v130 = vpack.c.b16 %v122, %v121
  %139 = vmatpush.bf16.msra.mxu0 %v130
  %140 = vmatpush.bf16.msra.mxu0 %v129
  %141 = vmatpush.bf16.msra.mxu0 %v128
  %142 = vmatpush.bf16.msra.mxu0 %v127
  %143 = vmatpush.bf16.msra.mxu0 %v126
  %144 = vmatpush.bf16.msra.mxu0 %v125
  %145 = vmatpush.bf16.msra.mxu0 %v124
  %146 = vmatpush.bf16.msra.mxu0 %v123
  %147 = vmatmul.bf16.gmra.mxu0 %v74
  %v148 = vpop.f32.mrf.mxu0
  %v149 = vadd.f32 0.0, %v148
  %v150 = vpop.f32.mrf.mxu0
  %v151 = vadd.f32 0.0, %v150
  %152 = vdwg.mxu0
  %v169 = vunpack.c.l.b16 %v58
  %v170 = vunpack.c.l.b16 %v59
  %v171 = vunpack.c.l.b16 %v60
  %v172 = vunpack.c.l.b16 %v61
  %v173 = vunpack.c.l.b16 %v62
  %v174 = vunpack.c.l.b16 %v63
  %v175 = vunpack.c.l.b16 %v64
  %v176 = vunpack.c.l.b16 %v65
  %v177 = vunpack.c.l.b16 %v66
  %v178 = vunpack.c.l.b16 %v67
  %v179 = vunpack.c.l.b16 %v68
  %v180 = vunpack.c.l.b16 %v69
  %v181 = vunpack.c.l.b16 %v70
  %v182 = vunpack.c.l.b16 %v71
  %v183 = vunpack.c.l.b16 %v72
  %v184 = vunpack.c.l.b16 %v73
  %v185 = vpack.c.b16 %v170, %v169
  %v186 = vpack.c.b16 %v172, %v171
  %v187 = vpack.c.b16 %v174, %v173
  %v188 = vpack.c.b16 %v176, %v175
  %v189 = vpack.c.b16 %v178, %v177
  %v190 = vpack.c.b16 %v180, %v179
  %v191 = vpack.c.b16 %v182, %v181
  %v192 = vpack.c.b16 %v184, %v183
  %201 = vmatpush.bf16.msra.mxu0 %v192
  %202 = vmatpush.bf16.msra.mxu0 %v191
  %203 = vmatpush.bf16.msra.mxu0 %v190
  %204 = vmatpush.bf16.msra.mxu0 %v189
  %205 = vmatpush.bf16.msra.mxu0 %v188
  %206 = vmatpush.bf16.msra.mxu0 %v187
  %207 = vmatpush.bf16.msra.mxu0 %v186
  %208 = vmatpush.bf16.msra.mxu0 %v185
  %209 = vmatmul.bf16.gmra.mxu0 %v57
  %v210 = vpop.f32.mrf.mxu0
  %v211 = vadd.f32 %v149, %v210
  %v212 = vpop.f32.mrf.mxu0
  %v213 = vadd.f32 %v151, %v212
  %214 = vdwg.mxu0
  %v215 = vpack.c.bf16 %v56, %v55
  %v216 = vld [vmem:[%s3] sm:$0xf]
  %v217 = vld [vmem:[%s3 + $0x4] sm:$0xf]
  %v218 = vld [vmem:[%s3 + $0x8] sm:$0xf]
  %v219 = vld [vmem:[%s3 + $0xc] sm:$0xf]
  %v220 = vld [vmem:[%s3 + $0x10] sm:$0xf]
  %v221 = vld [vmem:[%s3 + $0x14] sm:$0xf]
  %v222 = vld [vmem:[%s3 + $0x18] sm:$0xf]
  %v223 = vld [vmem:[%s3 + $0x1c] sm:$0xf]
  %v224 = vld [vmem:[%s3 + $0x20] sm:$0xf]
  %v225 = vld [vmem:[%s3 + $0x24] sm:$0xf]
  %v226 = vld [vmem:[%s3 + $0x28] sm:$0xf]
  %v227 = vld [vmem:[%s3 + $0x2c] sm:$0xf]
  %v228 = vld [vmem:[%s3 + $0x30] sm:$0xf]
  %v229 = vld [vmem:[%s3 + $0x34] sm:$0xf]
  %v230 = vld [vmem:[%s3 + $0x38] sm:$0xf]
  %v231 = vld [vmem:[%s3 + $0x3c] sm:$0xf]
  %v248 = vunpack.c.l.b16 %v216
  %v249 = vunpack.c.l.b16 %v217
  %v250 = vunpack.c.l.b16 %v218
  %v251 = vunpack.c.l.b16 %v219
  %v252 = vunpack.c.l.b16 %v220
  %v253 = vunpack.c.l.b16 %v221
  %v254 = vunpack.c.l.b16 %v222
  %v255 = vunpack.c.l.b16 %v223
  %v256 = vunpack.c.l.b16 %v224
  %v257 = vunpack.c.l.b16 %v225
  %v258 = vunpack.c.l.b16 %v226
  %v259 = vunpack.c.l.b16 %v227
  %v260 = vunpack.c.l.b16 %v228
  %v261 = vunpack.c.l.b16 %v229
  %v262 = vunpack.c.l.b16 %v230
  %v263 = vunpack.c.l.b16 %v231
  %v264 = vpack.c.b16 %v249, %v248
  %v265 = vpack.c.b16 %v251, %v250
  %v266 = vpack.c.b16 %v253, %v252
  %v267 = vpack.c.b16 %v255, %v254
  %v268 = vpack.c.b16 %v257, %v256
  %v269 = vpack.c.b16 %v259, %v258
  %v270 = vpack.c.b16 %v261, %v260
  %v271 = vpack.c.b16 %v263, %v262
  %280 = vmatpush.bf16.msra.mxu0 %v271
  %281 = vmatpush.bf16.msra.mxu0 %v270
  %282 = vmatpush.bf16.msra.mxu0 %v269
  %283 = vmatpush.bf16.msra.mxu0 %v268
  %284 = vmatpush.bf16.msra.mxu0 %v267
  %285 = vmatpush.bf16.msra.mxu0 %v266
  %286 = vmatpush.bf16.msra.mxu0 %v265
  %287 = vmatpush.bf16.msra.mxu0 %v264
  %288 = vmatmul.bf16.gmra.mxu0 %v215
  %v289 = vpop.f32.mrf.mxu0
  %v290 = vadd.f32 0.0, %v289
  %v291 = vpop.f32.mrf.mxu0
  %v292 = vadd.f32 0.0, %v291
  %293 = vdwg.mxu0
  %v294 = vadd.f32 %v211, %v290
  %v295 = vadd.f32 %v213, %v292
  %v296 = vld [vmem:[%s4] sm:$0x1]
  %v298 = vperm.slane %v296, 0
  %v300 = vadd.f32 %v294, %v298
  %v301 = vadd.f32 %v295, %v298
  %v302 = vmax.f32 %v300, 0.0
  %v303 = vmax.f32 %v301, 0.0
  %v304 = vrot.slane %v302, 7
  %v305 = vrot.slane %v303, 7
  %v306 = vsel %vm43, %v304, %v305
  %v307 = vsel %vm43, %v305, %v304
  %v308 = vsel %vm39, %v307, 0.0
  %v309 = vsel %vm40, %v306, 0.0
  %v310 = vrot.slane %v302, 1
  %v311 = vrot.slane %v303, 1
  %v312 = vsel %vm52, %v310, %v311
  %v313 = vsel %vm52, %v311, %v310
  %v314 = vsel %vm48, %v312, 0.0
  %v315 = vsel %vm49, %v313, 0.0
  %v316 = vpack.c.bf16 %v303, %v302
  %v317 = vld [vmem:[%s6] sm:$0xf]
  %v318 = vld [vmem:[%s6 + $0x4] sm:$0xf]
  %v319 = vld [vmem:[%s6 + $0x8] sm:$0xf]
  %v320 = vld [vmem:[%s6 + $0xc] sm:$0xf]
  %v321 = vld [vmem:[%s6 + $0x10] sm:$0xf]
  %v322 = vld [vmem:[%s6 + $0x14] sm:$0xf]
  %v323 = vld [vmem:[%s6 + $0x18] sm:$0xf]
  %v324 = vld [vmem:[%s6 + $0x1c] sm:$0xf]
  %v325 = vld [vmem:[%s6 + $0x20] sm:$0xf]
  %v326 = vld [vmem:[%s6 + $0x24] sm:$0xf]
  %v327 = vld [vmem:[%s6 + $0x28] sm:$0xf]
  %v328 = vld [vmem:[%s6 + $0x2c] sm:$0xf]
  %v329 = vld [vmem:[%s6 + $0x30] sm:$0xf]
  %v330 = vld [vmem:[%s6 + $0x34] sm:$0xf]
  %v331 = vld [vmem:[%s6 + $0x38] sm:$0xf]
  %v332 = vld [vmem:[%s6 + $0x3c] sm:$0xf]
  %v333 = vpack.c.bf16 %v309, %v308
  %v334 = vld [vmem:[%s5] sm:$0xf]
  %v335 = vld [vmem:[%s5 + $0x4] sm:$0xf]
  %v336 = vld [vmem:[%s5 + $0x8] sm:$0xf]
  %v337 = vld [vmem:[%s5 + $0xc] sm:$0xf]
  %v338 = vld [vmem:[%s5 + $0x10] sm:$0xf]
  %v339 = vld [vmem:[%s5 + $0x14] sm:$0xf]
  %v340 = vld [vmem:[%s5 + $0x18] sm:$0xf]
  %v341 = vld [vmem:[%s5 + $0x1c] sm:$0xf]
  %v342 = vld [vmem:[%s5 + $0x20] sm:$0xf]
  %v343 = vld [vmem:[%s5 + $0x24] sm:$0xf]
  %v344 = vld [vmem:[%s5 + $0x28] sm:$0xf]
  %v345 = vld [vmem:[%s5 + $0x2c] sm:$0xf]
  %v346 = vld [vmem:[%s5 + $0x30] sm:$0xf]
  %v347 = vld [vmem:[%s5 + $0x34] sm:$0xf]
  %v348 = vld [vmem:[%s5 + $0x38] sm:$0xf]
  %v349 = vld [vmem:[%s5 + $0x3c] sm:$0xf]
  %v366 = vunpack.c.l.b16 %v334
  %v367 = vunpack.c.l.b16 %v335
  %v368 = vunpack.c.l.b16 %v336
  %v369 = vunpack.c.l.b16 %v337
  %v370 = vunpack.c.l.b16 %v338
  %v371 = vunpack.c.l.b16 %v339
  %v372 = vunpack.c.l.b16 %v340
  %v373 = vunpack.c.l.b16 %v341
  %v374 = vunpack.c.l.b16 %v342
  %v375 = vunpack.c.l.b16 %v343
  %v376 = vunpack.c.l.b16 %v344
  %v377 = vunpack.c.l.b16 %v345
  %v378 = vunpack.c.l.b16 %v346
  %v379 = vunpack.c.l.b16 %v347
  %v380 = vunpack.c.l.b16 %v348
  %v381 = vunpack.c.l.b16 %v349
  %v382 = vpack.c.b16 %v367, %v366
  %v383 = vpack.c.b16 %v369, %v368
  %v384 = vpack.c.b16 %v371, %v370
  %v385 = vpack.c.b16 %v373, %v372
  %v386 = vpack.c.b16 %v375, %v374
  %v387 = vpack.c.b16 %v377, %v376
  %v388 = vpack.c.b16 %v379, %v378
  %v389 = vpack.c.b16 %v381, %v380
  %398 = vmatpush.bf16.msra.mxu0 %v389
  %399 = vmatpush.bf16.msra.mxu0 %v388
  %400 = vmatpush.bf16.msra.mxu0 %v387
  %401 = vmatpush.bf16.msra.mxu0 %v386
  %402 = vmatpush.bf16.msra.mxu0 %v385
  %403 = vmatpush.bf16.msra.mxu0 %v384
  %404 = vmatpush.bf16.msra.mxu0 %v383
  %405 = vmatpush.bf16.msra.mxu0 %v382
  %406 = vmatmul.bf16.gmra.mxu0 %v333
  %v407 = vpop.f32.mrf.mxu0
  %v408 = vadd.f32 0.0, %v407
  %v409 = vpop.f32.mrf.mxu0
  %v410 = vadd.f32 0.0, %v409
  %411 = vdwg.mxu0
  %v428 = vunpack.c.l.b16 %v317
  %v429 = vunpack.c.l.b16 %v318
  %v430 = vunpack.c.l.b16 %v319
  %v431 = vunpack.c.l.b16 %v320
  %v432 = vunpack.c.l.b16 %v321
  %v433 = vunpack.c.l.b16 %v322
  %v434 = vunpack.c.l.b16 %v323
  %v435 = vunpack.c.l.b16 %v324
  %v436 = vunpack.c.l.b16 %v325
  %v437 = vunpack.c.l.b16 %v326
  %v438 = vunpack.c.l.b16 %v327
  %v439 = vunpack.c.l.b16 %v328
  %v440 = vunpack.c.l.b16 %v329
  %v441 = vunpack.c.l.b16 %v330
  %v442 = vunpack.c.l.b16 %v331
  %v443 = vunpack.c.l.b16 %v332
  %v444 = vpack.c.b16 %v429, %v428
  %v445 = vpack.c.b16 %v431, %v430
  %v446 = vpack.c.b16 %v433, %v432
  %v447 = vpack.c.b16 %v435, %v434
  %v448 = vpack.c.b16 %v437, %v436
  %v449 = vpack.c.b16 %v439, %v438
  %v450 = vpack.c.b16 %v441, %v440
  %v451 = vpack.c.b16 %v443, %v442
  %460 = vmatpush.bf16.msra.mxu0 %v451
  %461 = vmatpush.bf16.msra.mxu0 %v450
  %462 = vmatpush.bf16.msra.mxu0 %v449
  %463 = vmatpush.bf16.msra.mxu0 %v448
  %464 = vmatpush.bf16.msra.mxu0 %v447
  %465 = vmatpush.bf16.msra.mxu0 %v446
  %466 = vmatpush.bf16.msra.mxu0 %v445
  %467 = vmatpush.bf16.msra.mxu0 %v444
  %468 = vmatmul.bf16.gmra.mxu0 %v316
  %v469 = vpop.f32.mrf.mxu0
  %v470 = vadd.f32 %v408, %v469
  %v471 = vpop.f32.mrf.mxu0
  %v472 = vadd.f32 %v410, %v471
  %473 = vdwg.mxu0
  %v474 = vpack.c.bf16 %v315, %v314
  %v475 = vld [vmem:[%s7] sm:$0xf]
  %v476 = vld [vmem:[%s7 + $0x4] sm:$0xf]
  %v477 = vld [vmem:[%s7 + $0x8] sm:$0xf]
  %v478 = vld [vmem:[%s7 + $0xc] sm:$0xf]
  %v479 = vld [vmem:[%s7 + $0x10] sm:$0xf]
  %v480 = vld [vmem:[%s7 + $0x14] sm:$0xf]
  %v481 = vld [vmem:[%s7 + $0x18] sm:$0xf]
  %v482 = vld [vmem:[%s7 + $0x1c] sm:$0xf]
  %v483 = vld [vmem:[%s7 + $0x20] sm:$0xf]
  %v484 = vld [vmem:[%s7 + $0x24] sm:$0xf]
  %v485 = vld [vmem:[%s7 + $0x28] sm:$0xf]
  %v486 = vld [vmem:[%s7 + $0x2c] sm:$0xf]
  %v487 = vld [vmem:[%s7 + $0x30] sm:$0xf]
  %v488 = vld [vmem:[%s7 + $0x34] sm:$0xf]
  %v489 = vld [vmem:[%s7 + $0x38] sm:$0xf]
  %v490 = vld [vmem:[%s7 + $0x3c] sm:$0xf]
  %v507 = vunpack.c.l.b16 %v475
  %v508 = vunpack.c.l.b16 %v476
  %v509 = vunpack.c.l.b16 %v477
  %v510 = vunpack.c.l.b16 %v478
  %v511 = vunpack.c.l.b16 %v479
  %v512 = vunpack.c.l.b16 %v480
  %v513 = vunpack.c.l.b16 %v481
  %v514 = vunpack.c.l.b16 %v482
  %v515 = vunpack.c.l.b16 %v483
  %v516 = vunpack.c.l.b16 %v484
  %v517 = vunpack.c.l.b16 %v485
  %v518 = vunpack.c.l.b16 %v486
  %v519 = vunpack.c.l.b16 %v487
  %v520 = vunpack.c.l.b16 %v488
  %v521 = vunpack.c.l.b16 %v489
  %v522 = vunpack.c.l.b16 %v490
  %v523 = vpack.c.b16 %v508, %v507
  %v524 = vpack.c.b16 %v510, %v509
  %v525 = vpack.c.b16 %v512, %v511
  %v526 = vpack.c.b16 %v514, %v513
  %v527 = vpack.c.b16 %v516, %v515
  %v528 = vpack.c.b16 %v518, %v517
  %v529 = vpack.c.b16 %v520, %v519
  %v530 = vpack.c.b16 %v522, %v521
  %539 = vmatpush.bf16.msra.mxu0 %v530
  %540 = vmatpush.bf16.msra.mxu0 %v529
  %541 = vmatpush.bf16.msra.mxu0 %v528
  %542 = vmatpush.bf16.msra.mxu0 %v527
  %543 = vmatpush.bf16.msra.mxu0 %v526
  %544 = vmatpush.bf16.msra.mxu0 %v525
  %545 = vmatpush.bf16.msra.mxu0 %v524
  %546 = vmatpush.bf16.msra.mxu0 %v523
  %547 = vmatmul.bf16.gmra.mxu0 %v474
  %v548 = vpop.f32.mrf.mxu0
  %v549 = vadd.f32 0.0, %v548
  %v550 = vpop.f32.mrf.mxu0
  %v551 = vadd.f32 0.0, %v550
  %552 = vdwg.mxu0
  %v553 = vadd.f32 %v470, %v549
  %v554 = vadd.f32 %v472, %v551
  %v555 = vld [vmem:[%s8] sm:$0x1]
  %v557 = vperm.slane %v555, 0
  %v559 = vadd.f32 %v553, %v557
  %v560 = vadd.f32 %v554, %v557
  %v561 = vadd.f32 %v32, %v559
  %v562 = vadd.f32 %v33, %v560
  %563 = vst [vmem:[%s9] sm:$0xff] %v561
  %564 = vst [vmem:[%s9 + $0x8] sm:$0xff] %v562
  // Predicated region
  $region38: #{hunet_forward.20} parent=0 // pred_check
    _
  $region39: #{hunet_forward.20} parent=0 // pred_check_branch
    %566 = sbr.rel (0) target = $region41
  $region40: #{hunet_forward.20} parent=0 // pred_region
    _
  $region41: #{hunet_forward.20} parent=0 // pred_fallthru
    _
  // Predicated region
  $region42: #{hunet_forward.20} parent=0 // pred_check
    _
  $region43: #{hunet_forward.20} parent=0 // pred_check_branch
    %568 = sbr.rel (0) target = $region45
  $region44: #{hunet_forward.20} parent=0 // pred_region
    _
  $region45: #{hunet_forward.20} parent=0 // pred_fallthru
    _

// kernel: hunet_forward.19
$region0: #{hunet_forward.19}
  #allocation0 [shape = 'u32[]', space=smem, size = 0x4, offset = 0x4, fixed_abs, tag = 'smem constant byte address 0x4 - core index']
  #allocation1 [shape = 'u32[72,128]{1,0:T(1,128)}', space=vmem, size = 0x9000, scoped, tag = 'internal scratch']
  %s0 = inlined_call_operand.vmem [shape: f32[2,64,16], index: 0, kind: input, shape index: {}]
  %s1 = inlined_call_operand.vmem [shape: f32[16,4], index: 1, kind: input, shape index: {}]
  %s2 = inlined_call_operand.vmem [shape: f32[1,4], index: 2, kind: input, shape index: {}]
  %s3 = inlined_call_operand.vmem [shape: f32[4,16], index: 3, kind: input, shape index: {}]
  %s4 = inlined_call_operand.vmem [shape: f32[1,16], index: 4, kind: input, shape index: {}]
  %s5 = inlined_call_operand.vmem [shape: bf16[128,64], index: 5, kind: input, shape index: {}]
  %s6 = inlined_call_operand.vmem [shape: f32[2,64,16], index: 6, kind: output, shape index: {}]
  %s7 = sld [smem:[#allocation0]]
  $region34: #{hunet_forward.19} parent=0
    _
  %s9 = ssub.s32 1, %s7
  %s10 = scalar_select 0, %s9, %s7
  // Predicated region
  $region2: #{hunet_forward.19} parent=0 // pred_check
    _
  $region3: #{hunet_forward.19} parent=0 // pred_check_branch
    %12 = sbr.rel (0) target = $region5
  $region4: #{hunet_forward.19} parent=0 // pred_region
    _
  $region5: #{hunet_forward.19} parent=0 // pred_fallthru
    _
  // Predicated region
  $region6: #{hunet_forward.19} parent=0 // pred_check
    _
  $region7: #{hunet_forward.19} parent=0 // pred_check_branch
    %14 = sbr.rel (0) target = $region9
  $region8: #{hunet_forward.19} parent=0 // pred_region
    _
  $region9: #{hunet_forward.19} parent=0 // pred_fallthru
    _
  // Predicated region
  $region10: #{hunet_forward.19} parent=0 // pred_check
    _
  $region11: #{hunet_forward.19} parent=0 // pred_check_branch
    %16 = sbr.rel (0) target = $region13
  $region12: #{hunet_forward.19} parent=0 // pred_region
    _
  $region13: #{hunet_forward.19} parent=0 // pred_fallthru
    _
  // Predicated region
  $region14: #{hunet_forward.19} parent=0 // pred_check
    _
  $region15: #{hunet_forward.19} parent=0 // pred_check_branch
    %18 = sbr.rel (0) target = $region17
  $region16: #{hunet_forward.19} parent=0 // pred_region
    _
  $region17: #{hunet_forward.19} parent=0 // pred_fallthru
    _
  // Predicated region
  $region18: #{hunet_forward.19} parent=0 // pred_check
    _
  $region19: #{hunet_forward.19} parent=0 // pred_check_branch
    %20 = sbr.rel (0) target = $region21
  $region20: #{hunet_forward.19} parent=0 // pred_region
    _
  $region21: #{hunet_forward.19} parent=0 // pred_fallthru
    _
  // Predicated region
  $region22: #{hunet_forward.19} parent=0 // pred_check
    _
  $region23: #{hunet_forward.19} parent=0 // pred_check_branch
    %22 = sbr.rel (0) target = $region25
  $region24: #{hunet_forward.19} parent=0 // pred_region
    _
  $region25: #{hunet_forward.19} parent=0 // pred_fallthru
    _
  %v23 = vld [vmem:[%s0] sm:$0xff]
  %v24 = vld [vmem:[%s0 + $0x8] sm:$0xff]
  %v25 = vld [vmem:[%s0 + $0x10] sm:$0xff]
  %v26 = vld [vmem:[%s0 + $0x18] sm:$0xff]
  %v27 = vld [vmem:[%s0 + $0x20] sm:$0xff]
  %v28 = vld [vmem:[%s0 + $0x28] sm:$0xff]
  %v29 = vld [vmem:[%s0 + $0x30] sm:$0xff]
  %v30 = vld [vmem:[%s0 + $0x38] sm:$0xff]
  %v31 = vld [vmem:[%s0 + $0x40] sm:$0xff]
  %v32 = vld [vmem:[%s0 + $0x48] sm:$0xff]
  %v33 = vld [vmem:[%s0 + $0x50] sm:$0xff]
  %v34 = vld [vmem:[%s0 + $0x58] sm:$0xff]
  %v35 = vld [vmem:[%s0 + $0x60] sm:$0xff]
  %v36 = vld [vmem:[%s0 + $0x68] sm:$0xff]
  %v37 = vld [vmem:[%s0 + $0x70] sm:$0xff]
  %v38 = vld [vmem:[%s0 + $0x78] sm:$0xff]
  %vm39 = vcmask 130048
  %v40 = vsel %vm39, %v23, 0.0
  %v41 = vsel %vm39, %v24, 0.0
  %v42 = vadd.f32 %v40, %v41
  %v43 = vsel %vm39, %v25, 0.0
  %v44 = vadd.f32 %v42, %v43
  %v45 = vsel %vm39, %v26, 0.0
  %v46 = vadd.f32 %v44, %v45
  %v47 = vsel %vm39, %v27, 0.0
  %v48 = vadd.f32 %v46, %v47
  %v49 = vsel %vm39, %v28, 0.0
  %v50 = vadd.f32 %v48, %v49
  %v51 = vsel %vm39, %v29, 0.0
  %v52 = vadd.f32 %v50, %v51
  %v53 = vsel %vm39, %v30, 0.0
  %v54 = vadd.f32 %v52, %v53
  %v55 = vrot.slane %v54, 4
  %v56 = vadd.f32 %v54, %v55
  %v57 = vrot.slane %v56, 2
  %v58 = vadd.f32 %v56, %v57
  %v59 = vrot.slane %v58, 1
  %v60 = vadd.f32 %v58, %v59
  %v61 = vsel %vm39, %v31, 0.0
  %v62 = vsel %vm39, %v32, 0.0
  %v63 = vadd.f32 %v61, %v62
  %v64 = vsel %vm39, %v33, 0.0
  %v65 = vadd.f32 %v63, %v64
  %v66 = vsel %vm39, %v34, 0.0
  %v67 = vadd.f32 %v65, %v66
  %v68 = vsel %vm39, %v35, 0.0
  %v69 = vadd.f32 %v67, %v68
  %v70 = vsel %vm39, %v36, 0.0
  %v71 = vadd.f32 %v69, %v70
  %v72 = vsel %vm39, %v37, 0.0
  %v73 = vadd.f32 %v71, %v72
  %v74 = vsel %vm39, %v38, 0.0
  %v75 = vadd.f32 %v73, %v74
  %v76 = vrot.slane %v75, 4
  %v77 = vadd.f32 %v75, %v76
  %v78 = vrot.slane %v77, 2
  %v79 = vadd.f32 %v77, %v78
  %v80 = vrot.slane %v79, 1
  %v81 = vadd.f32 %v79, %v80
  %v82 = vrcp.pop 64.0
  %v83 = vmul.f32 64.0, %v82
  %v84 = vsub.f32 1.0, %v83
  %v85 = vmul.f32 %v82, %v84
  %v86 = vadd.f32 %v82, %v85
  %vm87 = vweird.f32 %v82
  %v88 = vsel %vm87, %v82, %v86
  %v89 = vmul.f32 %v60, %v88
  %v90 = vmul.f32 %v81, %v88
  %v91 = vsel %vm39, %v89, 0.0
  %v92 = vsel %vm39, %v90, 0.0
  %v93 = vadd.f32 %v91, %v92
  %v94 = vrcp.pop 2.0
  %v95 = vmul.f32 2.0, %v94
  %v96 = vsub.f32 1.0, %v95
  %v97 = vmul.f32 %v94, %v96
  %v98 = vadd.f32 %v94, %v97
  %vm99 = vweird.f32 %v94
  %v100 = vsel %vm99, %v94, %v98
  %v101 = vmul.f32 %v93, %v100
  %v102 = vsub.f32 %v23, %v101
  %v103 = vsub.f32 %v24, %v101
  %v104 = vsub.f32 %v25, %v101
  %v105 = vsub.f32 %v26, %v101
  %v106 = vsub.f32 %v27, %v101
  %v107 = vsub.f32 %v28, %v101
  %v108 = vsub.f32 %v29, %v101
  %v109 = vsub.f32 %v30, %v101
  %v110 = vsub.f32 %v31, %v101
  %v111 = vsub.f32 %v32, %v101
  %v112 = vsub.f32 %v33, %v101
  %v113 = vsub.f32 %v34, %v101
  %v114 = vsub.f32 %v35, %v101
  %v115 = vsub.f32 %v36, %v101
  %v116 = vsub.f32 %v37, %v101
  %v117 = vsub.f32 %v38, %v101
  %v118 = vmul.f32 %v102, %v102
  %v119 = vmul.f32 %v103, %v103
  %v120 = vmul.f32 %v104, %v104
  %v121 = vmul.f32 %v105, %v105
  %v122 = vmul.f32 %v106, %v106
  %v123 = vmul.f32 %v107, %v107
  %v124 = vmul.f32 %v108, %v108
  %v125 = vmul.f32 %v109, %v109
  %v126 = vmul.f32 %v110, %v110
  %v127 = vmul.f32 %v111, %v111
  %v128 = vmul.f32 %v112, %v112
  %v129 = vmul.f32 %v113, %v113
  %v130 = vmul.f32 %v114, %v114
  %v131 = vmul.f32 %v115, %v115
  %v132 = vmul.f32 %v116, %v116
  %v133 = vmul.f32 %v117, %v117
  %v134 = vsel %vm39, %v118, 0.0
  %v135 = vsel %vm39, %v119, 0.0
  %v136 = vadd.f32 %v134, %v135
  %v137 = vsel %vm39, %v120, 0.0
  %v138 = vadd.f32 %v136, %v137
  %v139 = vsel %vm39, %v121, 0.0
  %v140 = vadd.f32 %v138, %v139
  %v141 = vsel %vm39, %v122, 0.0
  %v142 = vadd.f32 %v140, %v141
  %v143 = vsel %vm39, %v123, 0.0
  %v144 = vadd.f32 %v142, %v143
  %v145 = vsel %vm39, %v124, 0.0
  %v146 = vadd.f32 %v144, %v145
  %v147 = vsel %vm39, %v125, 0.0
  %v148 = vadd.f32 %v146, %v147
  %v149 = vrot.slane %v148, 4
  %v150 = vadd.f32 %v148, %v149
  %v151 = vrot.slane %v150, 2
  %v152 = vadd.f32 %v150, %v151
  %v153 = vrot.slane %v152, 1
  %v154 = vadd.f32 %v152, %v153
  %v155 = vsel %vm39, %v126, 0.0
  %v156 = vsel %vm39, %v127, 0.0
  %v157 = vadd.f32 %v155, %v156
  %v158 = vsel %vm39, %v128, 0.0
  %v159 = vadd.f32 %v157, %v158
  %v160 = vsel %vm39, %v129, 0.0
  %v161 = vadd.f32 %v159, %v160
  %v162 = vsel %vm39, %v130, 0.0
  %v163 = vadd.f32 %v161, %v162
  %v164 = vsel %vm39, %v131, 0.0
  %v165 = vadd.f32 %v163, %v164
  %v166 = vsel %vm39, %v132, 0.0
  %v167 = vadd.f32 %v165, %v166
  %v168 = vsel %vm39, %v133, 0.0
  %v169 = vadd.f32 %v167, %v168
  %v170 = vrot.slane %v169, 4
  %v171 = vadd.f32 %v169, %v170
  %v172 = vrot.slane %v171, 2
  %v173 = vadd.f32 %v171, %v172
  %v174 = vrot.slane %v173, 1
  %v175 = vadd.f32 %v173, %v174
  %v176 = vmul.f32 %v154, %v88
  %v177 = vmul.f32 %v175, %v88
  %v178 = vsel %vm39, %v176, 0.0
  %v179 = vsel %vm39, %v177, 0.0
  %v180 = vadd.f32 %v178, %v179
  %v181 = vmul.f32 %v180, %v100
  %v182 = vadd.f32 %v181, 1e-05
  %v183 = vrsqrt.pop %v182
  %v184 = vmul.f32 %v183, %v182
  %v185 = vmul.f32 %v184, %v183
  %v186 = vmul.f32 0.5, %v185
  %v187 = vsub.f32 1.5, %v186
  %v188 = vmul.f32 %v183, %v187
  %vm189 = vweird.f32 %v182
  %vm190 = vweird.f32 %v183
  %vm191 = vmor %vm189, %vm190
  %v192 = vsel %vm191, %v183, %v188
  %v193 = vmul.f32 %v102, %v192
  %v194 = vmul.f32 %v103, %v192
  %v195 = vmul.f32 %v104, %v192
  %v196 = vmul.f32 %v105, %v192
  %v197 = vmul.f32 %v106, %v192
  %v198 = vmul.f32 %v107, %v192
  %v199 = vmul.f32 %v108, %v192
  %v200 = vmul.f32 %v109, %v192
  %v201 = vmul.f32 %v110, %v192
  %v202 = vmul.f32 %v111, %v192
  %v203 = vmul.f32 %v112, %v192
  %v204 = vmul.f32 %v113, %v192
  %v205 = vmul.f32 %v114, %v192
  %v206 = vmul.f32 %v115, %v192
  %v207 = vmul.f32 %v116, %v192
  %v208 = vmul.f32 %v117, %v192
  %v209 = vsel %vm39, %v193, 0.0
  %v210 = vsel %vm39, %v194, 0.0
  %v211 = vadd.f32 %v209, %v210
  %v212 = vsel %vm39, %v195, 0.0
  %v213 = vadd.f32 %v211, %v212
  %v214 = vsel %vm39, %v196, 0.0
  %v215 = vadd.f32 %v213, %v214
  %v216 = vsel %vm39, %v197, 0.0
  %v217 = vadd.f32 %v215, %v216
  %v218 = vsel %vm39, %v198, 0.0
  %v219 = vadd.f32 %v217, %v218
  %v220 = vsel %vm39, %v199, 0.0
  %v221 = vadd.f32 %v219, %v220
  %v222 = vsel %vm39, %v200, 0.0
  %v223 = vadd.f32 %v221, %v222
  %v224 = vrot.slane %v223, 4
  %v225 = vadd.f32 %v223, %v224
  %v226 = vrot.slane %v225, 2
  %v227 = vadd.f32 %v225, %v226
  %v228 = vrot.slane %v227, 1
  %v229 = vadd.f32 %v227, %v228
  %v230 = vsel %vm39, %v201, 0.0
  %v231 = vsel %vm39, %v202, 0.0
  %v232 = vadd.f32 %v230, %v231
  %v233 = vsel %vm39, %v203, 0.0
  %v234 = vadd.f32 %v232, %v233
  %v235 = vsel %vm39, %v204, 0.0
  %v236 = vadd.f32 %v234, %v235
  %v237 = vsel %vm39, %v205, 0.0
  %v238 = vadd.f32 %v236, %v237
  %v239 = vsel %vm39, %v206, 0.0
  %v240 = vadd.f32 %v238, %v239
  %v241 = vsel %vm39, %v207, 0.0
  %v242 = vadd.f32 %v240, %v241
  %v243 = vsel %vm39, %v208, 0.0
  %v244 = vadd.f32 %v242, %v243
  %v245 = vrot.slane %v244, 4
  %v246 = vadd.f32 %v244, %v245
  %v247 = vrot.slane %v246, 2
  %v248 = vadd.f32 %v246, %v247
  %v249 = vrot.slane %v248, 1
  %v250 = vadd.f32 %v248, %v249
  %v251 = vmul.f32 %v229, %v88
  %v252 = vmul.f32 %v250, %v88
  %v253 = vsel %vm39, %v193, -inf
  %v254 = vsel %vm39, %v194, -inf
  %v255 = vsel %vm39, %v195, -inf
  %v256 = vmax.f32 %v253, %v255
  %v257 = vsel %vm39, %v196, -inf
  %v258 = vmax.f32 %v254, %v257
  %v259 = vsel %vm39, %v197, -inf
  %v260 = vmax.f32 %v256, %v259
  %v261 = vsel %vm39, %v198, -inf
  %v262 = vmax.f32 %v258, %v261
  %v263 = vsel %vm39, %v199, -inf
  %v264 = vmax.f32 %v260, %v263
  %v265 = vsel %vm39, %v200, -inf
  %v266 = vmax.f32 %v262, %v265
  %v267 = vmax.f32 %v264, %v266
  %v268 = vrot.slane %v267, 4
  %v269 = vmax.f32 %v267, %v268
  %v270 = vrot.slane %v269, 2
  %v271 = vmax.f32 %v269, %v270
  %v272 = vrot.slane %v271, 1
  %v273 = vmax.f32 %v271, %v272
  %v274 = vsel %vm39, %v201, -inf
  %v275 = vsel %vm39, %v202, -inf
  %v276 = vsel %vm39, %v203, -inf
  %v277 = vmax.f32 %v274, %v276
  %v278 = vsel %vm39, %v204, -inf
  %v279 = vmax.f32 %v275, %v278
  %v280 = vsel %vm39, %v205, -inf
  %v281 = vmax.f32 %v277, %v280
  %v282 = vsel %vm39, %v206, -inf
  %v283 = vmax.f32 %v279, %v282
  %v284 = vsel %vm39, %v207, -inf
  %v285 = vmax.f32 %v281, %v284
  %v286 = vsel %vm39, %v208, -inf
  %v287 = vmax.f32 %v283, %v286
  %v288 = vmax.f32 %v285, %v287
  %v289 = vrot.slane %v288, 4
  %v290 = vmax.f32 %v288, %v289
  %v291 = vrot.slane %v290, 2
  %v292 = vmax.f32 %v290, %v291
  %v293 = vrot.slane %v292, 1
  %v294 = vmax.f32 %v292, %v293
  %vm297 = vcmask 1041409
  %v298 = vsel %vm297, %v252, %v251
  %vm302 = vcmask 1043459
  %v303 = vsel %vm302, %v294, %v273
  %vm305 = vcmask 1041408
  %v306 = vsel %vm305, %v298, %v303
  %v307 = vld [vmem:[%s1] sm:$0xff]
  %v308 = vld [vmem:[%s1 + $0x8] sm:$0xff]
  %v309 = vld [vmem:[%s2] sm:$0x1]
  %v311 = vperm.slane %v309, 0
  %v314 = vsel %vm39, %v306, 0
  %316 = vmatpush.msra.mxu0 0.0
  %317 = vmatpush.msra.mxu0 0.0
  %318 = vmatpush.msra.mxu0 0.0
  %319 = vmatpush.msra.mxu0 0.0
  %320 = vmatpush.msra.mxu0 0.0
  %321 = vmatpush.msra.mxu0 0.0
  %322 = vmatpush.msra.mxu0 0.0
  %323 = vmatpush.msra.mxu0 0.0
  %324 = vmatpush.msra.mxu0 0.0
  %325 = vmatpush.msra.mxu0 0.0
  %326 = vmatpush.msra.mxu0 0.0
  %327 = vmatpush.msra.mxu0 0.0
  %328 = vmatpush.msra.mxu0 0.0
  %329 = vmatpush.msra.mxu0 0.0
  %330 = vmatpush.msra.mxu0 %v308
  %331 = vmatpush.msra.mxu0 %v307
  %332 = vmatmul.f32.gmra.mxu0 %v314
  %v333 = vpop.f32.mrf.mxu0
  %v334 = vadd.f32 %v311, %v333
  %335 = vdwg.mxu0
  %v336 = vmax.f32 %v334, 0.0
  %v337 = vld [vmem:[%s3] sm:$0xf]
  %v338 = vld [vmem:[%s4] sm:$0x1]
  %v340 = vperm.slane %v338, 0
  %vm342 = vcmask 31744
  %v344 = vsel %vm342, %v336, 0
  %vm346 = vcmask 1043456
  %v348 = vsel %vm346, %v337, 0
  %350 = vmatpush.msra.mxu0 0.0
  %351 = vmatpush.msra.mxu0 0.0
  %352 = vmatpush.msra.mxu0 0.0
  %353 = vmatpush.msra.mxu0 0.0
  %354 = vmatpush.msra.mxu0 0.0
  %355 = vmatpush.msra.mxu0 0.0
  %356 = vmatpush.msra.mxu0 0.0
  %357 = vmatpush.msra.mxu0 0.0
  %358 = vmatpush.msra.mxu0 0.0
  %359 = vmatpush.msra.mxu0 0.0
  %360 = vmatpush.msra.mxu0 0.0
  %361 = vmatpush.msra.mxu0 0.0
  %362 = vmatpush.msra.mxu0 0.0
  %363 = vmatpush.msra.mxu0 0.0
  %364 = vmatpush.msra.mxu0 0.0
  %365 = vmatpush.msra.mxu0 %v348
  %366 = vmatmul.f32.gmra.mxu0 %v344
  %v367 = vpop.f32.mrf.mxu0
  %v368 = vadd.f32 %v340, %v367
  %369 = vdwg.mxu0
  %v371 = vrot.slane %v368, 2
  %v373 = vadd.f32 %v368, %v371
  %v374 = vsub.f32 0.0, %v373
  %v375 = vmul.f32 %v374, 1.442695
  %v376 = vpow.pop %v375
  %v377 = vadd.f32 %v376, 1.0
  %v378 = vrcp.pop %v377
  %v379 = vmul.f32 %v377, %v378
  %v380 = vsub.f32 1.0, %v379
  %v381 = vmul.f32 %v378, %v380
  %v382 = vadd.f32 %v378, %v381
  %vm383 = vweird.f32 %v377
  %vm384 = vweird.f32 %v378
  %vm385 = vmor %vm383, %vm384
  %v386 = vsel %vm385, %v378, %v382
  %v387 = vand.u32 2147483647, %v377
  %vm388 = vcmp.eq.f32.partialorder %v387, 8.507059e+37
  %v389 = vand.u32 %v377, 2147483648
  %v390 = vor.u32 1.1754944e-38, %v389
  %v391 = vsel %vm388, %v390, %v386
  %v392 = vmul.f32 1.0, %v391
  %v394 = vrot.slane %v392, 1
  %v395 = vperm.slane %v392, 0
  %v396 = vperm.slane %v394, 0
  %v399 = vmul.f32 %v193, %v395
  %v400 = vmul.f32 %v194, %v395
  %v401 = vmul.f32 %v195, %v395
  %v402 = vmul.f32 %v196, %v395
  %v403 = vmul.f32 %v197, %v395
  %v404 = vmul.f32 %v198, %v395
  %v405 = vmul.f32 %v199, %v395
  %v406 = vmul.f32 %v200, %v395
  %v407 = vmul.f32 %v201, %v396
  %v408 = vmul.f32 %v202, %v396
  %v409 = vmul.f32 %v203, %v396
  %v410 = vmul.f32 %v204, %v396
  %v411 = vmul.f32 %v205, %v396
  %v412 = vmul.f32 %v206, %v396
  %v413 = vmul.f32 %v207, %v396
  %v414 = vmul.f32 %v208, %v396
  %v415 = vsel %vm39, %v399, 0.0
  %416 = vadd.xlane.f32.xlu0 %v415
  %v417 = vpop.xlane.xlu0 %416
  %v418 = vsel %vm39, %v400, 0.0
  %419 = vadd.xlane.f32.xlu0 %v418
  %v420 = vpop.xlane.xlu0 %419
  %v421 = vsel %vm39, %v401, 0.0
  %422 = vadd.xlane.f32.xlu0 %v421
  %v423 = vpop.xlane.xlu0 %422
  %v424 = vsel %vm39, %v402, 0.0
  %425 = vadd.xlane.f32.xlu0 %v424
  %v426 = vpop.xlane.xlu0 %425
  %v427 = vsel %vm39, %v403, 0.0
  %428 = vadd.xlane.f32.xlu0 %v427
  %v429 = vpop.xlane.xlu0 %428
  %v430 = vsel %vm39, %v404, 0.0
  %431 = vadd.xlane.f32.xlu0 %v430
  %v432 = vpop.xlane.xlu0 %431
  %v433 = vsel %vm39, %v405, 0.0
  %434 = vadd.xlane.f32.xlu0 %v433
  %v435 = vpop.xlane.xlu0 %434
  %v436 = vsel %vm39, %v406, 0.0
  %437 = vadd.xlane.f32.xlu0 %v436
  %v438 = vpop.xlane.xlu0 %437
  %v439 = vsel %vm39, %v407, 0.0
  %440 = vadd.xlane.f32.xlu0 %v439
  %v441 = vpop.xlane.xlu0 %440
  %v442 = vsel %vm39, %v408, 0.0
  %443 = vadd.xlane.f32.xlu0 %v442
  %v444 = vpop.xlane.xlu0 %443
  %v445 = vsel %vm39, %v409, 0.0
  %446 = vadd.xlane.f32.xlu0 %v445
  %v447 = vpop.xlane.xlu0 %446
  %v448 = vsel %vm39, %v410, 0.0
  %449 = vadd.xlane.f32.xlu0 %v448
  %v450 = vpop.xlane.xlu0 %449
  %v451 = vsel %vm39, %v411, 0.0
  %452 = vadd.xlane.f32.xlu0 %v451
  %v453 = vpop.xlane.xlu0 %452
  %v454 = vsel %vm39, %v412, 0.0
  %455 = vadd.xlane.f32.xlu0 %v454
  %v456 = vpop.xlane.xlu0 %455
  %v457 = vsel %vm39, %v413, 0.0
  %458 = vadd.xlane.f32.xlu0 %v457
  %v459 = vpop.xlane.xlu0 %458
  %v460 = vsel %vm39, %v414, 0.0
  %461 = vadd.xlane.f32.xlu0 %v460
  %v462 = vpop.xlane.xlu0 %461
  %v463 = vrcp.pop 16.0
  %v464 = vmul.f32 16.0, %v463
  %v465 = vsub.f32 1.0, %v464
  %v466 = vmul.f32 %v463, %v465
  %v467 = vadd.f32 %v463, %v466
  %vm468 = vweird.f32 %v463
  %v469 = vsel %vm468, %v463, %v467
  %v470 = vmul.f32 %v417, %v469
  %v471 = vmul.f32 %v420, %v469
  %v472 = vmul.f32 %v423, %v469
  %v473 = vmul.f32 %v426, %v469
  %v474 = vmul.f32 %v429, %v469
  %v475 = vmul.f32 %v432, %v469
  %v476 = vmul.f32 %v435, %v469
  %v477 = vmul.f32 %v438, %v469
  %v478 = vmul.f32 %v441, %v469
  %v479 = vmul.f32 %v444, %v469
  %v480 = vmul.f32 %v447, %v469
  %v481 = vmul.f32 %v450, %v469
  %v482 = vmul.f32 %v453, %v469
  %v483 = vmul.f32 %v456, %v469
  %v484 = vmul.f32 %v459, %v469
  %v485 = vmul.f32 %v462, %v469
  %v486 = vsel %vm39, %v399, -inf
  %487 = vmax.xlane.f32.xlu0 %v486
  %v488 = vpop.xlane.xlu0 %487
  %v489 = vsel %vm39, %v400, -inf
  %490 = vmax.xlane.f32.xlu0 %v489
  %v491 = vpop.xlane.xlu0 %490
  %v492 = vsel %vm39, %v401, -inf
  %493 = vmax.xlane.f32.xlu0 %v492
  %v494 = vpop.xlane.xlu0 %493
  %v495 = vsel %vm39, %v402, -inf
  %496 = vmax.xlane.f32.xlu0 %v495
  %v497 = vpop.xlane.xlu0 %496
  %v498 = vsel %vm39, %v403, -inf
  %499 = vmax.xlane.f32.xlu0 %v498
  %v500 = vpop.xlane.xlu0 %499
  %v501 = vsel %vm39, %v404, -inf
  %502 = vmax.xlane.f32.xlu0 %v501
  %v503 = vpop.xlane.xlu0 %502
  %v504 = vsel %vm39, %v405, -inf
  %505 = vmax.xlane.f32.xlu0 %v504
  %v506 = vpop.xlane.xlu0 %505
  %v507 = vsel %vm39, %v406, -inf
  %508 = vmax.xlane.f32.xlu0 %v507
  %v509 = vpop.xlane.xlu0 %508
  %v510 = vsel %vm39, %v407, -inf
  %511 = vmax.xlane.f32.xlu0 %v510
  %v512 = vpop.xlane.xlu0 %511
  %v513 = vsel %vm39, %v408, -inf
  %514 = vmax.xlane.f32.xlu0 %v513
  %v515 = vpop.xlane.xlu0 %514
  %v516 = vsel %vm39, %v409, -inf
  %517 = vmax.xlane.f32.xlu0 %v516
  %v518 = vpop.xlane.xlu0 %517
  %v519 = vsel %vm39, %v410, -inf
  %520 = vmax.xlane.f32.xlu0 %v519
  %v521 = vpop.xlane.xlu0 %520
  %v522 = vsel %vm39, %v411, -inf
  %523 = vmax.xlane.f32.xlu0 %v522
  %v524 = vpop.xlane.xlu0 %523
  %v525 = vsel %vm39, %v412, -inf
  %526 = vmax.xlane.f32.xlu0 %v525
  %v527 = vpop.xlane.xlu0 %526
  %v528 = vsel %vm39, %v413, -inf
  %529 = vmax.xlane.f32.xlu0 %v528
  %v530 = vpop.xlane.xlu0 %529
  %v531 = vsel %vm39, %v414, -inf
  %532 = vmax.xlane.f32.xlu0 %v531
  %v533 = vpop.xlane.xlu0 %532
  %v550 = vlaneseq
  %v551 = vand.u32 %v550, 127
  %v552 = vperm.slane %v470, %v551
  %v553 = vadd.s32 %v551, 4294967288
  %v554 = vperm.slane %v471, %v553
  %vm555 = vcmask 130112
  %v556 = vsel %vm555, %v554, %v552
  %v557 = vadd.s32 %v551, 4294967280
  %v558 = vperm.slane %v472, %v557
  %vm559 = vcmask 195712
  %v560 = vsel %vm559, %v558, %v556
  %v561 = vadd.s32 %v551, 4294967272
  %v562 = vperm.slane %v473, %v561
  %vm563 = vcmask 261312
  %v564 = vsel %vm563, %v562, %v560
  %v565 = vadd.s32 %v551, 4294967264
  %v566 = vperm.slane %v474, %v565
  %vm567 = vcmask 326912
  %v568 = vsel %vm567, %v566, %v564
  %v569 = vadd.s32 %v551, 4294967256
  %v570 = vperm.slane %v475, %v569
  %vm571 = vcmask 392512
  %v572 = vsel %vm571, %v570, %v568
  %v573 = vadd.s32 %v551, 4294967248
  %v574 = vperm.slane %v476, %v573
  %vm575 = vcmask 458112
  %v576 = vsel %vm575, %v574, %v572
  %v577 = vadd.s32 %v551, 4294967240
  %v578 = vperm.slane %v477, %v577
  %vm579 = vcmask 523712
  %v580 = vsel %vm579, %v578, %v576
  %v581 = vperm.slane %v478, %v551
  %v582 = vperm.slane %v479, %v553
  %v583 = vsel %vm555, %v582, %v581
  %v584 = vperm.slane %v480, %v557
  %v585 = vsel %vm559, %v584, %v583
  %v586 = vperm.slane %v481, %v561
  %v587 = vsel %vm563, %v586, %v585
  %v588 = vperm.slane %v482, %v565
  %v589 = vsel %vm567, %v588, %v587
  %v590 = vperm.slane %v483, %v569
  %v591 = vsel %vm571, %v590, %v589
  %v592 = vperm.slane %v484, %v573
  %v593 = vsel %vm575, %v592, %v591
  %v594 = vperm.slane %v485, %v577
  %v595 = vsel %vm579, %v594, %v593
  %v596 = vsel %vm297, %v595, %v580
  %v614 = vadd.s32 %v551, 4294967232
  %v615 = vperm.slane %v488, %v614
  %v616 = vadd.s32 %v551, 4294967224
  %v617 = vperm.slane %v491, %v616
  %vm618 = vcmask 654912
  %v619 = vsel %vm618, %v617, %v615
  %v620 = vadd.s32 %v551, 4294967216
  %v621 = vperm.slane %v494, %v620
  %vm622 = vcmask 720512
  %v623 = vsel %vm622, %v621, %v619
  %v624 = vadd.s32 %v551, 4294967208
  %v625 = vperm.slane %v497, %v624
  %vm626 = vcmask 786112
  %v627 = vsel %vm626, %v625, %v623
  %v628 = vadd.s32 %v551, 4294967200
  %v629 = vperm.slane %v500, %v628
  %vm630 = vcmask 851712
  %v631 = vsel %vm630, %v629, %v627
  %v632 = vadd.s32 %v551, 4294967192
  %v633 = vperm.slane %v503, %v632
  %vm634 = vcmask 917312
  %v635 = vsel %vm634, %v633, %v631
  %v636 = vadd.s32 %v551, 4294967184
  %v637 = vperm.slane %v506, %v636
  %vm638 = vcmask 982912
  %v639 = vsel %vm638, %v637, %v635
  %v640 = vadd.s32 %v551, 4294967176
  %v641 = vperm.slane %v509, %v640
  %vm642 = vcmask 1048512
  %v643 = vsel %vm642, %v641, %v639
  %v644 = vperm.slane %v512, %v614
  %v645 = vperm.slane %v515, %v616
  %v646 = vsel %vm618, %v645, %v644
  %v647 = vperm.slane %v518, %v620
  %v648 = vsel %vm622, %v647, %v646
  %v649 = vperm.slane %v521, %v624
  %v650 = vsel %vm626, %v649, %v648
  %v651 = vperm.slane %v524, %v628
  %v652 = vsel %vm630, %v651, %v650
  %v653 = vperm.slane %v527, %v632
  %v654 = vsel %vm634, %v653, %v652
  %v655 = vperm.slane %v530, %v636
  %v656 = vsel %vm638, %v655, %v654
  %v657 = vperm.slane %v533, %v640
  %v658 = vsel %vm642, %v657, %v656
  %v659 = vsel %vm297, %v658, %v643
  %vm661 = vcmask 523264
  %v662 = vsel %vm661, %v596, %v659
  %v663 = vpack.c.bf16 %v662, %v662
  %v664 = vld [vmem:[%s5] sm:$0xf]
  %v665 = vld [vmem:[%s5 + $0x4] sm:$0xf]
  %v666 = vld [vmem:[%s5 + $0x8] sm:$0xf]
  %v667 = vld [vmem:[%s5 + $0xc] sm:$0xf]
  %v668 = vld [vmem:[%s5 + $0x10] sm:$0xf]
  %v669 = vld [vmem:[%s5 + $0x14] sm:$0xf]
  %v670 = vld [vmem:[%s5 + $0x18] sm:$0xf]
  %v671 = vld [vmem:[%s5 + $0x1c] sm:$0xf]
  %v672 = vld [vmem:[%s5 + $0x20] sm:$0xf]
  %v673 = vld [vmem:[%s5 + $0x24] sm:$0xf]
  %v674 = vld [vmem:[%s5 + $0x28] sm:$0xf]
  %v675 = vld [vmem:[%s5 + $0x2c] sm:$0xf]
  %v676 = vld [vmem:[%s5 + $0x30] sm:$0xf]
  %v677 = vld [vmem:[%s5 + $0x34] sm:$0xf]
  %v678 = vld [vmem:[%s5 + $0x38] sm:$0xf]
  %v679 = vld [vmem:[%s5 + $0x3c] sm:$0xf]
  %v696 = vunpack.c.l.b16 %v664
  %v697 = vunpack.c.l.b16 %v665
  %v698 = vunpack.c.l.b16 %v666
  %v699 = vunpack.c.l.b16 %v667
  %v700 = vunpack.c.l.b16 %v668
  %v701 = vunpack.c.l.b16 %v669
  %v702 = vunpack.c.l.b16 %v670
  %v703 = vunpack.c.l.b16 %v671
  %v704 = vunpack.c.l.b16 %v672
  %v705 = vunpack.c.l.b16 %v673
  %v706 = vunpack.c.l.b16 %v674
  %v707 = vunpack.c.l.b16 %v675
  %v708 = vunpack.c.l.b16 %v676
  %v709 = vunpack.c.l.b16 %v677
  %v710 = vunpack.c.l.b16 %v678
  %v711 = vunpack.c.l.b16 %v679
  %v712 = vpack.c.b16 %v697, %v696
  %v713 = vpack.c.b16 %v699, %v698
  %v714 = vpack.c.b16 %v701, %v700
  %v715 = vpack.c.b16 %v703, %v702
  %v716 = vpack.c.b16 %v705, %v704
  %v717 = vpack.c.b16 %v707, %v706
  %v718 = vpack.c.b16 %v709, %v708
  %v719 = vpack.c.b16 %v711, %v710
  %728 = vmatpush.bf16.msra.mxu0 %v719
  %729 = vmatpush.bf16.msra.mxu0 %v718
  %730 = vmatpush.bf16.msra.mxu0 %v717
  %731 = vmatpush.bf16.msra.mxu0 %v716
  %732 = vmatpush.bf16.msra.mxu0 %v715
  %733 = vmatpush.bf16.msra.mxu0 %v714
  %734 = vmatpush.bf16.msra.mxu0 %v713
  %735 = vmatpush.bf16.msra.mxu0 %v712
  %736 = vmatmul.bf16.gmra.mxu0 %v663
  %v737 = vpop.f32.mrf.mxu0
  %v738 = vadd.f32 0.0, %v737
  %v739 = vpop.f32.mrf.mxu0
  %740 = vdwg.mxu0
  %v741 = vsub.f32 0.0, %v738
  %v742 = vmul.f32 %v741, 1.442695
  %v743 = vpow.pop %v742
  %v744 = vadd.f32 %v743, 1.0
  %v745 = vrcp.pop %v744
  %v746 = vmul.f32 %v744, %v745
  %v747 = vsub.f32 1.0, %v746
  %v748 = vmul.f32 %v745, %v747
  %v749 = vadd.f32 %v745, %v748
  %vm750 = vweird.f32 %v744
  %vm751 = vweird.f32 %v745
  %vm752 = vmor %vm750, %vm751
  %v753 = vsel %vm752, %v745, %v749
  %v754 = vand.u32 2147483647, %v744
  %vm755 = vcmp.eq.f32.partialorder %v754, 8.507059e+37
  %v756 = vand.u32 %v744, 2147483648
  %v757 = vor.u32 1.1754944e-38, %v756
  %v758 = vsel %vm755, %v757, %v753
  %v759 = vmul.f32 1.0, %v758
  %v760 = vperm.slane %v759, 0
  %v761 = vlaneseq
  %v762 = vshrl.u32 %v761, 7
  %764 = vset.pattern.permute.xlu0 %v762
  %765 = vperm.xlu0 %764, %v760
  %v766 = vpop.permute.xlu0 %765
  %v767 = vlaneseq
  %v768 = vshrl.u32 %v767, 7
  %v769 = vadd.s32 %v768, 8
  %770 = vset.pattern.permute.xlu0 %v769
  %771 = vperm.xlu0 %770, %v760
  %v772 = vpop.permute.xlu0 %771
  %v773 = vlaneseq
  %v774 = vshrl.u32 %v773, 7
  %v775 = vadd.s32 %v774, 16
  %776 = vset.pattern.permute.xlu0 %v775
  %777 = vperm.xlu0 %776, %v760
  %v778 = vpop.permute.xlu0 %777
  %v779 = vlaneseq
  %v780 = vshrl.u32 %v779, 7
  %v781 = vadd.s32 %v780, 24
  %782 = vset.pattern.permute.xlu0 %v781
  %783 = vperm.xlu0 %782, %v760
  %v784 = vpop.permute.xlu0 %783
  %v785 = vlaneseq
  %v786 = vshrl.u32 %v785, 7
  %v787 = vadd.s32 %v786, 32
  %788 = vset.pattern.permute.xlu0 %v787
  %789 = vperm.xlu0 %788, %v760
  %v790 = vpop.permute.xlu0 %789
  %v791 = vlaneseq
  %v792 = vshrl.u32 %v791, 7
  %v793 = vadd.s32 %v792, 40
  %794 = vset.pattern.permute.xlu0 %v793
  %795 = vperm.xlu0 %794, %v760
  %v796 = vpop.permute.xlu0 %795
  %v797 = vlaneseq
  %v798 = vshrl.u32 %v797, 7
  %v799 = vadd.s32 %v798, 48
  %800 = vset.pattern.permute.xlu0 %v799
  %801 = vperm.xlu0 %800, %v760
  %v802 = vpop.permute.xlu0 %801
  %v803 = vlaneseq
  %v804 = vshrl.u32 %v803, 7
  %v805 = vadd.s32 %v804, 56
  %806 = vset.pattern.permute.xlu0 %v805
  %807 = vperm.xlu0 %806, %v760
  %v808 = vpop.permute.xlu0 %807
  %v809 = vperm.slane %v759, 1
  %v810 = vlaneseq
  %v811 = vshrl.u32 %v810, 7
  %813 = vset.pattern.permute.xlu0 %v811
  %814 = vperm.xlu0 %813, %v809
  %v815 = vpop.permute.xlu0 %814
  %v816 = vlaneseq
  %v817 = vshrl.u32 %v816, 7
  %v818 = vadd.s32 %v817, 8
  %819 = vset.pattern.permute.xlu0 %v818
  %820 = vperm.xlu0 %819, %v809
  %v821 = vpop.permute.xlu0 %820
  %v822 = vlaneseq
  %v823 = vshrl.u32 %v822, 7
  %v824 = vadd.s32 %v823, 16
  %825 = vset.pattern.permute.xlu0 %v824
  %826 = vperm.xlu0 %825, %v809
  %v827 = vpop.permute.xlu0 %826
  %v828 = vlaneseq
  %v829 = vshrl.u32 %v828, 7
  %v830 = vadd.s32 %v829, 24
  %831 = vset.pattern.permute.xlu0 %v830
  %832 = vperm.xlu0 %831, %v809
  %v833 = vpop.permute.xlu0 %832
  %v834 = vlaneseq
  %v835 = vshrl.u32 %v834, 7
  %v836 = vadd.s32 %v835, 32
  %837 = vset.pattern.permute.xlu0 %v836
  %838 = vperm.xlu0 %837, %v809
  %v839 = vpop.permute.xlu0 %838
  %v840 = vlaneseq
  %v841 = vshrl.u32 %v840, 7
  %v842 = vadd.s32 %v841, 40
  %843 = vset.pattern.permute.xlu0 %v842
  %844 = vperm.xlu0 %843, %v809
  %v845 = vpop.permute.xlu0 %844
  %v846 = vlaneseq
  %v847 = vshrl.u32 %v846, 7
  %v848 = vadd.s32 %v847, 48
  %849 = vset.pattern.permute.xlu0 %v848
  %850 = vperm.xlu0 %849, %v809
  %v851 = vpop.permute.xlu0 %850
  %v852 = vlaneseq
  %v853 = vshrl.u32 %v852, 7
  %v854 = vadd.s32 %v853, 56
  %855 = vset.pattern.permute.xlu0 %v854
  %856 = vperm.xlu0 %855, %v809
  %v857 = vpop.permute.xlu0 %856
  %v858 = vmul.f32 %v399, %v766
  %v859 = vmul.f32 %v400, %v772
  %v860 = vmul.f32 %v401, %v778
  %v861 = vmul.f32 %v402, %v784
  %v862 = vmul.f32 %v403, %v790
  %v863 = vmul.f32 %v404, %v796
  %v864 = vmul.f32 %v405, %v802
  %v865 = vmul.f32 %v406, %v808
  %v866 = vmul.f32 %v407, %v815
  %v867 = vmul.f32 %v408, %v821
  %v868 = vmul.f32 %v409, %v827
  %v869 = vmul.f32 %v410, %v833
  %v870 = vmul.f32 %v411, %v839
  %v871 = vmul.f32 %v412, %v845
  %v872 = vmul.f32 %v413, %v851
  %v873 = vmul.f32 %v414, %v857
  %874 = vst.msk [vmem:[%s6] sm:$0xff] %vm39, %v858
  %875 = vst.msk [vmem:[%s6 + $0x8] sm:$0xff] %vm39, %v859
  %876 = vst.msk [vmem:[%s6 + $0x10] sm:$0xff] %vm39, %v860
  %877 = vst.msk [vmem:[%s6 + $0x18] sm:$0xff] %vm39, %v861
  %878 = vst.msk [vmem:[%s6 + $0x20] sm:$0xff] %vm39, %v862
  %879 = vst.msk [vmem:[%s6 + $0x28] sm:$0xff] %vm39, %v863
  %880 = vst.msk [vmem:[%s6 + $0x30] sm:$0xff] %vm39, %v864
  %881 = vst.msk [vmem:[%s6 + $0x38] sm:$0xff] %vm39, %v865
  %882 = vst.msk [vmem:[%s6 + $0x40] sm:$0xff] %vm39, %v866
  %883 = vst.msk [vmem:[%s6 + $0x48] sm:$0xff] %vm39, %v867
  %884 = vst.msk [vmem:[%s6 + $0x50] sm:$0xff] %vm39, %v868
  %885 = vst.msk [vmem:[%s6 + $0x58] sm:$0xff] %vm39, %v869
  %886 = vst.msk [vmem:[%s6 + $0x60] sm:$0xff] %vm39, %v870
  %887 = vst.msk [vmem:[%s6 + $0x68] sm:$0xff] %vm39, %v871
  %888 = vst.msk [vmem:[%s6 + $0x70] sm:$0xff] %vm39, %v872
  %889 = vst.msk [vmem:[%s6 + $0x78] sm:$0xff] %vm39, %v873
  // Predicated region
  $region26: #{hunet_forward.19} parent=0 // pred_check
    _
  $region27: #{hunet_forward.19} parent=0 // pred_check_branch
    %891 = sbr.rel (0) target = $region29
  $region28: #{hunet_forward.19} parent=0 // pred_region
    _
  $region29: #{hunet_forward.19} parent=0 // pred_fallthru
    _
  // Predicated region
  $region30: #{hunet_forward.19} parent=0 // pred_check
    _
  $region31: #{hunet_forward.19} parent=0 // pred_check_branch
    %893 = sbr.rel (0) target = $region33
  $region32: #{hunet_forward.19} parent=0 // pred_region
    _
  $region33: #{hunet_forward.19} parent=0 // pred_fallthru
    _

// kernel: hunet_forward.23
$region0: #{hunet_forward.23}
  #allocation0 [shape = 'u32[]', space=smem, size = 0x4, offset = 0x4, fixed_abs, tag = 'smem constant byte address 0x4 - core index']
  #allocation1 [shape = 'u32[72,128]{1,0:T(1,128)}', space=vmem, size = 0x9000, scoped, tag = 'internal scratch']
  %s0 = inlined_call_operand.vmem [shape: f32[2,16,32], index: 0, kind: input, shape index: {}]
  %s1 = inlined_call_operand.vmem [shape: f32[32,8], index: 1, kind: input, shape index: {}]
  %s2 = inlined_call_operand.vmem [shape: f32[1,8], index: 2, kind: input, shape index: {}]
  %s3 = inlined_call_operand.vmem [shape: f32[8,32], index: 3, kind: input, shape index: {}]
  %s4 = inlined_call_operand.vmem [shape: f32[1,32], index: 4, kind: input, shape index: {}]
  %s5 = inlined_call_operand.vmem [shape: bf16[32,16], index: 5, kind: input, shape index: {}]
  %s6 = inlined_call_operand.vmem [shape: f32[2,16,32], index: 6, kind: output, shape index: {}]
  %s7 = sld [smem:[#allocation0]]
  $region34: #{hunet_forward.23} parent=0
    _
  %s9 = ssub.s32 1, %s7
  %s10 = scalar_select 0, %s9, %s7
  // Predicated region
  $region2: #{hunet_forward.23} parent=0 // pred_check
    _
  $region3: #{hunet_forward.23} parent=0 // pred_check_branch
    %12 = sbr.rel (0) target = $region5
  $region4: #{hunet_forward.23} parent=0 // pred_region
    _
  $region5: #{hunet_forward.23} parent=0 // pred_fallthru
    _
  // Predicated region
  $region6: #{hunet_forward.23} parent=0 // pred_check
    _
  $region7: #{hunet_forward.23} parent=0 // pred_check_branch
    %14 = sbr.rel (0) target = $region9
  $region8: #{hunet_forward.23} parent=0 // pred_region
    _
  $region9: #{hunet_forward.23} parent=0 // pred_fallthru
    _
  // Predicated region
  $region10: #{hunet_forward.23} parent=0 // pred_check
    _
  $region11: #{hunet_forward.23} parent=0 // pred_check_branch
    %16 = sbr.rel (0) target = $region13
  $region12: #{hunet_forward.23} parent=0 // pred_region
    _
  $region13: #{hunet_forward.23} parent=0 // pred_fallthru
    _
  // Predicated region
  $region14: #{hunet_forward.23} parent=0 // pred_check
    _
  $region15: #{hunet_forward.23} parent=0 // pred_check_branch
    %18 = sbr.rel (0) target = $region17
  $region16: #{hunet_forward.23} parent=0 // pred_region
    _
  $region17: #{hunet_forward.23} parent=0 // pred_fallthru
    _
  // Predicated region
  $region18: #{hunet_forward.23} parent=0 // pred_check
    _
  $region19: #{hunet_forward.23} parent=0 // pred_check_branch
    %20 = sbr.rel (0) target = $region21
  $region20: #{hunet_forward.23} parent=0 // pred_region
    _
  $region21: #{hunet_forward.23} parent=0 // pred_fallthru
    _
  // Predicated region
  $region22: #{hunet_forward.23} parent=0 // pred_check
    _
  $region23: #{hunet_forward.23} parent=0 // pred_check_branch
    %22 = sbr.rel (0) target = $region25
  $region24: #{hunet_forward.23} parent=0 // pred_region
    _
  $region25: #{hunet_forward.23} parent=0 // pred_fallthru
    _
  %v24 = vld [vmem:[%s0] sm:$0xff]
  %v25 = vld [vmem:[%s0 + $0x8] sm:$0xff]
  %v26 = vld [vmem:[%s0 + $0x10] sm:$0xff]
  %v27 = vld [vmem:[%s0 + $0x18] sm:$0xff]
  %vm28 = vcmask 261120
  %v29 = vsel %vm28, %v24, 0.0
  %v30 = vsel %vm28, %v25, 0.0
  %v31 = vadd.f32 %v29, %v30
  %v32 = vrot.slane %v31, 4
  %v33 = vadd.f32 %v31, %v32
  %v34 = vrot.slane %v33, 2
  %v35 = vadd.f32 %v33, %v34
  %v36 = vrot.slane %v35, 1
  %v37 = vadd.f32 %v35, %v36
  %v38 = vsel %vm28, %v26, 0.0
  %v39 = vsel %vm28, %v27, 0.0
  %v40 = vadd.f32 %v38, %v39
  %v41 = vrot.slane %v40, 4
  %v42 = vadd.f32 %v40, %v41
  %v43 = vrot.slane %v42, 2
  %v44 = vadd.f32 %v42, %v43
  %v45 = vrot.slane %v44, 1
  %v46 = vadd.f32 %v44, %v45
  %v47 = vrcp.pop 16.0
  %v48 = vmul.f32 16.0, %v47
  %v49 = vsub.f32 1.0, %v48
  %v50 = vmul.f32 %v47, %v49
  %v51 = vadd.f32 %v47, %v50
  %vm52 = vweird.f32 %v47
  %v53 = vsel %vm52, %v47, %v51
  %v54 = vmul.f32 %v37, %v53
  %v55 = vmul.f32 %v46, %v53
  %v56 = vsel %vm28, %v54, 0.0
  %v57 = vsel %vm28, %v55, 0.0
  %v58 = vadd.f32 %v56, %v57
  %v59 = vrcp.pop 2.0
  %v60 = vmul.f32 2.0, %v59
  %v61 = vsub.f32 1.0, %v60
  %v62 = vmul.f32 %v59, %v61
  %v63 = vadd.f32 %v59, %v62
  %vm64 = vweird.f32 %v59
  %v65 = vsel %vm64, %v59, %v63
  %v66 = vmul.f32 %v58, %v65
  %v67 = vsub.f32 %v24, %v66
  %v68 = vsub.f32 %v25, %v66
  %v69 = vsub.f32 %v26, %v66
  %v70 = vsub.f32 %v27, %v66
  %v71 = vmul.f32 %v67, %v67
  %v72 = vmul.f32 %v68, %v68
  %v73 = vmul.f32 %v69, %v69
  %v74 = vmul.f32 %v70, %v70
  %v75 = vsel %vm28, %v71, 0.0
  %v76 = vsel %vm28, %v72, 0.0
  %v77 = vadd.f32 %v75, %v76
  %v78 = vrot.slane %v77, 4
  %v79 = vadd.f32 %v77, %v78
  %v80 = vrot.slane %v79, 2
  %v81 = vadd.f32 %v79, %v80
  %v82 = vrot.slane %v81, 1
  %v83 = vadd.f32 %v81, %v82
  %v84 = vsel %vm28, %v73, 0.0
  %v85 = vsel %vm28, %v74, 0.0
  %v86 = vadd.f32 %v84, %v85
  %v87 = vrot.slane %v86, 4
  %v88 = vadd.f32 %v86, %v87
  %v89 = vrot.slane %v88, 2
  %v90 = vadd.f32 %v88, %v89
  %v91 = vrot.slane %v90, 1
  %v92 = vadd.f32 %v90, %v91
  %v93 = vmul.f32 %v83, %v53
  %v94 = vmul.f32 %v92, %v53
  %v95 = vsel %vm28, %v93, 0.0
  %v96 = vsel %vm28, %v94, 0.0
  %v97 = vadd.f32 %v95, %v96
  %v98 = vmul.f32 %v97, %v65
  %v99 = vadd.f32 %v98, 1e-05
  %v100 = vrsqrt.pop %v99
  %v101 = vmul.f32 %v100, %v99
  %v102 = vmul.f32 %v101, %v100
  %v103 = vmul.f32 0.5, %v102
  %v104 = vsub.f32 1.5, %v103
  %v105 = vmul.f32 %v100, %v104
  %vm106 = vweird.f32 %v99
  %vm107 = vweird.f32 %v100
  %vm108 = vmor %vm106, %vm107
  %v109 = vsel %vm108, %v100, %v105
  %v110 = vmul.f32 %v67, %v109
  %v111 = vmul.f32 %v68, %v109
  %v112 = vmul.f32 %v69, %v109
  %v113 = vmul.f32 %v70, %v109
  %v114 = vsel %vm28, %v110, 0.0
  %v115 = vsel %vm28, %v111, 0.0
  %v116 = vadd.f32 %v114, %v115
  %v117 = vrot.slane %v116, 4
  %v118 = vadd.f32 %v116, %v117
  %v119 = vrot.slane %v118, 2
  %v120 = vadd.f32 %v118, %v119
  %v121 = vrot.slane %v120, 1
  %v122 = vadd.f32 %v120, %v121
  %v123 = vsel %vm28, %v112, 0.0
  %v124 = vsel %vm28, %v113, 0.0
  %v125 = vadd.f32 %v123, %v124
  %v126 = vrot.slane %v125, 4
  %v127 = vadd.f32 %v125, %v126
  %v128 = vrot.slane %v127, 2
  %v129 = vadd.f32 %v127, %v128
  %v130 = vrot.slane %v129, 1
  %v131 = vadd.f32 %v129, %v130
  %v132 = vmul.f32 %v122, %v53
  %v133 = vmul.f32 %v131, %v53
  %v134 = vsel %vm28, %v110, -inf
  %v135 = vsel %vm28, %v111, -inf
  %v136 = vmax.f32 %v134, %v135
  %v137 = vrot.slane %v136, 4
  %v138 = vmax.f32 %v136, %v137
  %v139 = vrot.slane %v138, 2
  %v140 = vmax.f32 %v138, %v139
  %v141 = vrot.slane %v140, 1
  %v142 = vmax.f32 %v140, %v141
  %v143 = vsel %vm28, %v112, -inf
  %v144 = vsel %vm28, %v113, -inf
  %v145 = vmax.f32 %v143, %v144
  %v146 = vrot.slane %v145, 4
  %v147 = vmax.f32 %v145, %v146
  %v148 = vrot.slane %v147, 2
  %v149 = vmax.f32 %v147, %v148
  %v150 = vrot.slane %v149, 1
  %v151 = vmax.f32 %v149, %v150
  %vm154 = vcmask 1041409
  %v155 = vsel %vm154, %v133, %v132
  %vm159 = vcmask 1043459
  %v160 = vsel %vm159, %v151, %v142
  %vm162 = vcmask 1041408
  %v163 = vsel %vm162, %v155, %v160
  %v164 = vld [vmem:[%s1] sm:$0xff]
  %v165 = vld [vmem:[%s1 + $0x8] sm:$0xff]
  %v166 = vld [vmem:[%s1 + $0x10] sm:$0xff]
  %v167 = vld [vmem:[%s1 + $0x18] sm:$0xff]
  %v168 = vld [vmem:[%s2] sm:$0x1]
  %v170 = vperm.slane %v168, 0
  %v173 = vsel %vm28, %v163, 0
  %175 = vmatpush.msra.mxu0 0.0
  %176 = vmatpush.msra.mxu0 0.0
  %177 = vmatpush.msra.mxu0 0.0
  %178 = vmatpush.msra.mxu0 0.0
  %179 = vmatpush.msra.mxu0 0.0
  %180 = vmatpush.msra.mxu0 0.0
  %181 = vmatpush.msra.mxu0 0.0
  %182 = vmatpush.msra.mxu0 0.0
  %183 = vmatpush.msra.mxu0 0.0
  %184 = vmatpush.msra.mxu0 0.0
  %185 = vmatpush.msra.mxu0 0.0
  %186 = vmatpush.msra.mxu0 0.0
  %187 = vmatpush.msra.mxu0 %v167
  %188 = vmatpush.msra.mxu0 %v166
  %189 = vmatpush.msra.mxu0 %v165
  %190 = vmatpush.msra.mxu0 %v164
  %191 = vmatmul.f32.gmra.mxu0 %v173
  %v192 = vpop.f32.mrf.mxu0
  %v193 = vadd.f32 %v170, %v192
  %194 = vdwg.mxu0
  %v195 = vmax.f32 %v193, 0.0
  %v196 = vld [vmem:[%s3] sm:$0xff]
  %v197 = vld [vmem:[%s4] sm:$0x1]
  %v199 = vperm.slane %v197, 0
  %vm201 = vcmask 64512
  %v203 = vsel %vm201, %v195, 0
  %205 = vmatpush.msra.mxu0 0.0
  %206 = vmatpush.msra.mxu0 0.0
  %207 = vmatpush.msra.mxu0 0.0
  %208 = vmatpush.msra.mxu0 0.0
  %209 = vmatpush.msra.mxu0 0.0
  %210 = vmatpush.msra.mxu0 0.0
  %211 = vmatpush.msra.mxu0 0.0
  %212 = vmatpush.msra.mxu0 0.0
  %213 = vmatpush.msra.mxu0 0.0
  %214 = vmatpush.msra.mxu0 0.0
  %215 = vmatpush.msra.mxu0 0.0
  %216 = vmatpush.msra.mxu0 0.0
  %217 = vmatpush.msra.mxu0 0.0
  %218 = vmatpush.msra.mxu0 0.0
  %219 = vmatpush.msra.mxu0 0.0
  %220 = vmatpush.msra.mxu0 %v196
  %221 = vmatmul.f32.gmra.mxu0 %v203
  %v222 = vpop.f32.mrf.mxu0
  %v223 = vadd.f32 %v199, %v222
  %224 = vdwg.mxu0
  %v226 = vrot.slane %v223, 2
  %v228 = vadd.f32 %v223, %v226
  %v229 = vsub.f32 0.0, %v228
  %v230 = vmul.f32 %v229, 1.442695
  %v231 = vpow.pop %v230
  %v232 = vadd.f32 %v231, 1.0
  %v233 = vrcp.pop %v232
  %v234 = vmul.f32 %v232, %v233
  %v235 = vsub.f32 1.0, %v234
  %v236 = vmul.f32 %v233, %v235
  %v237 = vadd.f32 %v233, %v236
  %vm238 = vweird.f32 %v232
  %vm239 = vweird.f32 %v233
  %vm240 = vmor %vm238, %vm239
  %v241 = vsel %vm240, %v233, %v237
  %v242 = vand.u32 2147483647, %v232
  %vm243 = vcmp.eq.f32.partialorder %v242, 8.507059e+37
  %v244 = vand.u32 %v232, 2147483648
  %v245 = vor.u32 1.1754944e-38, %v244
  %v246 = vsel %vm243, %v245, %v241
  %v247 = vmul.f32 1.0, %v246
  %v249 = vrot.slane %v247, 1
  %v250 = vperm.slane %v247, 0
  %v251 = vperm.slane %v249, 0
  %v254 = vmul.f32 %v110, %v250
  %v255 = vmul.f32 %v111, %v250
  %v256 = vmul.f32 %v112, %v251
  %v257 = vmul.f32 %v113, %v251
  %v258 = vsel %vm28, %v254, 0.0
  %259 = vadd.xlane.f32.xlu0 %v258
  %v260 = vpop.xlane.xlu0 %259
  %v261 = vsel %vm28, %v255, 0.0
  %262 = vadd.xlane.f32.xlu0 %v261
  %v263 = vpop.xlane.xlu0 %262
  %v264 = vsel %vm28, %v256, 0.0
  %265 = vadd.xlane.f32.xlu0 %v264
  %v266 = vpop.xlane.xlu0 %265
  %v267 = vsel %vm28, %v257, 0.0
  %268 = vadd.xlane.f32.xlu0 %v267
  %v269 = vpop.xlane.xlu0 %268
  %v270 = vrcp.pop 32.0
  %v271 = vmul.f32 32.0, %v270
  %v272 = vsub.f32 1.0, %v271
  %v273 = vmul.f32 %v270, %v272
  %v274 = vadd.f32 %v270, %v273
  %vm275 = vweird.f32 %v270
  %v276 = vsel %vm275, %v270, %v274
  %v277 = vmul.f32 %v260, %v276
  %v278 = vmul.f32 %v263, %v276
  %v279 = vmul.f32 %v266, %v276
  %v280 = vmul.f32 %v269, %v276
  %v281 = vsel %vm28, %v254, -inf
  %282 = vmax.xlane.f32.xlu0 %v281
  %v283 = vpop.xlane.xlu0 %282
  %v284 = vsel %vm28, %v255, -inf
  %285 = vmax.xlane.f32.xlu0 %v284
  %v286 = vpop.xlane.xlu0 %285
  %v287 = vsel %vm28, %v256, -inf
  %288 = vmax.xlane.f32.xlu0 %v287
  %v289 = vpop.xlane.xlu0 %288
  %v290 = vsel %vm28, %v257, -inf
  %291 = vmax.xlane.f32.xlu0 %v290
  %v292 = vpop.xlane.xlu0 %291
  %v297 = vlaneseq
  %v298 = vand.u32 %v297, 127
  %v299 = vperm.slane %v277, %v298
  %v300 = vadd.s32 %v298, 4294967288
  %v301 = vperm.slane %v278, %v300
  %vm302 = vcmask 130112
  %v303 = vsel %vm302, %v301, %v299
  %v304 = vperm.slane %v279, %v298
  %v305 = vperm.slane %v280, %v300
  %v306 = vsel %vm302, %v305, %v304
  %v307 = vsel %vm154, %v306, %v303
  %v313 = vadd.s32 %v298, 4294967280
  %v314 = vperm.slane %v283, %v313
  %v315 = vadd.s32 %v298, 4294967272
  %v316 = vperm.slane %v286, %v315
  %vm317 = vcmask 261312
  %v318 = vsel %vm317, %v316, %v314
  %v319 = vperm.slane %v289, %v313
  %v320 = vperm.slane %v292, %v315
  %v321 = vsel %vm317, %v320, %v319
  %v322 = vsel %vm154, %v321, %v318
  %vm324 = vcmask 130048
  %v325 = vsel %vm324, %v307, %v322
  %v326 = vpack.c.bf16 %v325, %v325
  %v327 = vld [vmem:[%s5] sm:$0xf]
  %v328 = vld [vmem:[%s5 + $0x4] sm:$0xf]
  %v329 = vld [vmem:[%s5 + $0x8] sm:$0xf]
  %v330 = vld [vmem:[%s5 + $0xc] sm:$0xf]
  %v335 = vunpack.c.l.b16 %v327
  %v336 = vunpack.c.l.b16 %v328
  %v337 = vunpack.c.l.b16 %v329
  %v338 = vunpack.c.l.b16 %v330
  %v339 = vpack.c.b16 %v336, %v335
  %v340 = vpack.c.b16 %v338, %v337
  %v344 = vsel %vm28, %v326, 0
  %346 = vmatpush.bf16.msra.mxu0 0
  %347 = vmatpush.bf16.msra.mxu0 0
  %348 = vmatpush.bf16.msra.mxu0 0
  %349 = vmatpush.bf16.msra.mxu0 0
  %350 = vmatpush.bf16.msra.mxu0 0
  %351 = vmatpush.bf16.msra.mxu0 0
  %352 = vmatpush.bf16.msra.mxu0 %v340
  %353 = vmatpush.bf16.msra.mxu0 %v339
  %354 = vmatmul.bf16.gmra.mxu0 %v344
  %v355 = vpop.f32.mrf.mxu0
  %v356 = vadd.f32 0.0, %v355
  %v357 = vpop.f32.mrf.mxu0
  %358 = vdwg.mxu0
  %v359 = vsub.f32 0.0, %v356
  %v360 = vmul.f32 %v359, 1.442695
  %v361 = vpow.pop %v360
  %v362 = vadd.f32 %v361, 1.0
  %v363 = vrcp.pop %v362
  %v364 = vmul.f32 %v362, %v363
  %v365 = vsub.f32 1.0, %v364
  %v366 = vmul.f32 %v363, %v365
  %v367 = vadd.f32 %v363, %v366
  %vm368 = vweird.f32 %v362
  %vm369 = vweird.f32 %v363
  %vm370 = vmor %vm368, %vm369
  %v371 = vsel %vm370, %v363, %v367
  %v372 = vand.u32 2147483647, %v362
  %vm373 = vcmp.eq.f32.partialorder %v372, 8.507059e+37
  %v374 = vand.u32 %v362, 2147483648
  %v375 = vor.u32 1.1754944e-38, %v374
  %v376 = vsel %vm373, %v375, %v371
  %v377 = vmul.f32 1.0, %v376
  %v378 = vperm.slane %v377, 0
  %v379 = vlaneseq
  %v380 = vshrl.u32 %v379, 7
  %382 = vset.pattern.permute.xlu0 %v380
  %383 = vperm.xlu0 %382, %v378
  %v384 = vpop.permute.xlu0 %383
  %v385 = vlaneseq
  %v386 = vshrl.u32 %v385, 7
  %v387 = vadd.s32 %v386, 8
  %388 = vset.pattern.permute.xlu0 %v387
  %389 = vperm.xlu0 %388, %v378
  %v390 = vpop.permute.xlu0 %389
  %v391 = vperm.slane %v377, 1
  %v392 = vlaneseq
  %v393 = vshrl.u32 %v392, 7
  %395 = vset.pattern.permute.xlu0 %v393
  %396 = vperm.xlu0 %395, %v391
  %v397 = vpop.permute.xlu0 %396
  %v398 = vlaneseq
  %v399 = vshrl.u32 %v398, 7
  %v400 = vadd.s32 %v399, 8
  %401 = vset.pattern.permute.xlu0 %v400
  %402 = vperm.xlu0 %401, %v391
  %v403 = vpop.permute.xlu0 %402
  %v404 = vmul.f32 %v254, %v384
  %v405 = vmul.f32 %v255, %v390
  %v406 = vmul.f32 %v256, %v397
  %v407 = vmul.f32 %v257, %v403
  %408 = vst.msk [vmem:[%s6] sm:$0xff] %vm28, %v404
  %409 = vst.msk [vmem:[%s6 + $0x8] sm:$0xff] %vm28, %v405
  %410 = vst.msk [vmem:[%s6 + $0x10] sm:$0xff] %vm28, %v406
  %411 = vst.msk [vmem:[%s6 + $0x18] sm:$0xff] %vm28, %v407
  // Predicated region
  $region26: #{hunet_forward.23} parent=0 // pred_check
    _
  $region27: #{hunet_forward.23} parent=0 // pred_check_branch
    %413 = sbr.rel (0) target = $region29
  $region28: #{hunet_forward.23} parent=0 // pred_region
    _
  $region29: #{hunet_forward.23} parent=0 // pred_fallthru
    _
  // Predicated region
  $region30: #{hunet_forward.23} parent=0 // pred_check
    _
  $region31: #{hunet_forward.23} parent=0 // pred_check_branch
    %415 = sbr.rel (0) target = $region33
  $region32: #{hunet_forward.23} parent=0 // pred_region
    _
  $region33: #{hunet_forward.23} parent=0 // pred_fallthru
    _

// kernel: hunet_forward.26
$region0: #{hunet_forward.26}
  #allocation0 [shape = 'u32[]', space=smem, size = 0x4, offset = 0x4, fixed_abs, tag = 'smem constant byte address 0x4 - core index']
  #allocation1 [shape = 'u32[72,128]{1,0:T(1,128)}', space=vmem, size = 0x9000, scoped, tag = 'internal scratch']
  %s0 = inlined_call_operand.vmem [shape: f32[32,32], index: 0, kind: input, shape index: {}]
  %s1 = inlined_call_operand.vmem [shape: bf16[32,64], index: 1, kind: input, shape index: {}]
  %s2 = inlined_call_operand.vmem [shape: f32[1,64], index: 2, kind: input, shape index: {}]
  %s3 = inlined_call_operand.vmem [shape: bf16[32,64], index: 3, kind: input, shape index: {}]
  %s4 = inlined_call_operand.vmem [shape: f32[1,64], index: 4, kind: input, shape index: {}]
  %s5 = inlined_call_operand.vmem [shape: bf16[64,32], index: 5, kind: input, shape index: {}]
  %s6 = inlined_call_operand.vmem [shape: f32[1,32], index: 6, kind: input, shape index: {}]
  %s7 = inlined_call_operand.vmem [shape: f32[32,32], index: 7, kind: output, shape index: {}]
  %s8 = sld [smem:[#allocation0]]
  $region38: #{hunet_forward.26} parent=0
    _
  %s10 = ssub.s32 1, %s8
  %s11 = scalar_select 0, %s10, %s8
  // Predicated region
  $region2: #{hunet_forward.26} parent=0 // pred_check
    _
  $region3: #{hunet_forward.26} parent=0 // pred_check_branch
    %13 = sbr.rel (0) target = $region5
  $region4: #{hunet_forward.26} parent=0 // pred_region
    _
  $region5: #{hunet_forward.26} parent=0 // pred_fallthru
    _
  // Predicated region
  $region6: #{hunet_forward.26} parent=0 // pred_check
    _
  $region7: #{hunet_forward.26} parent=0 // pred_check_branch
    %15 = sbr.rel (0) target = $region9
  $region8: #{hunet_forward.26} parent=0 // pred_region
    _
  $region9: #{hunet_forward.26} parent=0 // pred_fallthru
    _
  // Predicated region
  $region10: #{hunet_forward.26} parent=0 // pred_check
    _
  $region11: #{hunet_forward.26} parent=0 // pred_check_branch
    %17 = sbr.rel (0) target = $region13
  $region12: #{hunet_forward.26} parent=0 // pred_region
    _
  $region13: #{hunet_forward.26} parent=0 // pred_fallthru
    _
  // Predicated region
  $region14: #{hunet_forward.26} parent=0 // pred_check
    _
  $region15: #{hunet_forward.26} parent=0 // pred_check_branch
    %19 = sbr.rel (0) target = $region17
  $region16: #{hunet_forward.26} parent=0 // pred_region
    _
  $region17: #{hunet_forward.26} parent=0 // pred_fallthru
    _
  // Predicated region
  $region18: #{hunet_forward.26} parent=0 // pred_check
    _
  $region19: #{hunet_forward.26} parent=0 // pred_check_branch
    %21 = sbr.rel (0) target = $region21
  $region20: #{hunet_forward.26} parent=0 // pred_region
    _
  $region21: #{hunet_forward.26} parent=0 // pred_fallthru
    _
  // Predicated region
  $region22: #{hunet_forward.26} parent=0 // pred_check
    _
  $region23: #{hunet_forward.26} parent=0 // pred_check_branch
    %23 = sbr.rel (0) target = $region25
  $region24: #{hunet_forward.26} parent=0 // pred_region
    _
  $region25: #{hunet_forward.26} parent=0 // pred_fallthru
    _
  // Predicated region
  $region26: #{hunet_forward.26} parent=0 // pred_check
    _
  $region27: #{hunet_forward.26} parent=0 // pred_check_branch
    %25 = sbr.rel (0) target = $region29
  $region28: #{hunet_forward.26} parent=0 // pred_region
    _
  $region29: #{hunet_forward.26} parent=0 // pred_fallthru
    _
  %v27 = vld [vmem:[%s0] sm:$0xff]
  %v28 = vld [vmem:[%s0 + $0x8] sm:$0xff]
  %v29 = vld [vmem:[%s0 + $0x10] sm:$0xff]
  %v30 = vld [vmem:[%s0 + $0x18] sm:$0xff]
  %v31 = vpack.c.bf16 %v28, %v27
  %v32 = vpack.c.bf16 %v30, %v29
  %v33 = vld [vmem:[%s1] sm:$0xf]
  %v34 = vld [vmem:[%s1 + $0x4] sm:$0xf]
  %v35 = vld [vmem:[%s1 + $0x8] sm:$0xf]
  %v36 = vld [vmem:[%s1 + $0xc] sm:$0xf]
  %v37 = vld [vmem:[%s2] sm:$0x1]
  %v39 = vperm.slane %v37, 0
  %v45 = vunpack.c.l.b16 %v33
  %v46 = vunpack.c.l.b16 %v34
  %v47 = vunpack.c.l.b16 %v35
  %v48 = vunpack.c.l.b16 %v36
  %v49 = vpack.c.b16 %v46, %v45
  %v50 = vpack.c.b16 %v48, %v47
  %vm53 = vcmask 261120
  %v55 = vsel %vm53, %v31, 0
  %v58 = vsel %vm53, %v32, 0
  %60 = vmatpush.bf16.msra.mxu0 0
  %61 = vmatpush.bf16.msra.mxu0 0
  %62 = vmatpush.bf16.msra.mxu0 0
  %63 = vmatpush.bf16.msra.mxu0 0
  %64 = vmatpush.bf16.msra.mxu0 0
  %65 = vmatpush.bf16.msra.mxu0 0
  %66 = vmatpush.bf16.msra.mxu0 %v50
  %67 = vmatpush.bf16.msra.mxu0 %v49
  %68 = vmatmul.bf16.gmra.mxu0 %v55
  %v69 = vpop.f32.mrf.mxu0
  %v70 = vadd.f32 %v39, %v69
  %v71 = vpop.f32.mrf.mxu0
  %v72 = vadd.f32 %v39, %v71
  %73 = vmatmul.bf16.gmra.mxu0 %v58
  %v74 = vpop.f32.mrf.mxu0
  %v75 = vadd.f32 %v39, %v74
  %v76 = vpop.f32.mrf.mxu0
  %v77 = vadd.f32 %v39, %v76
  %78 = vdwg.mxu0
  %v79 = vld [vmem:[%s3] sm:$0xf]
  %v80 = vld [vmem:[%s3 + $0x4] sm:$0xf]
  %v81 = vld [vmem:[%s3 + $0x8] sm:$0xf]
  %v82 = vld [vmem:[%s3 + $0xc] sm:$0xf]
  %v83 = vld [vmem:[%s4] sm:$0x1]
  %v85 = vperm.slane %v83, 0
  %v91 = vunpack.c.l.b16 %v79
  %v92 = vunpack.c.l.b16 %v80
  %v93 = vunpack.c.l.b16 %v81
  %v94 = vunpack.c.l.b16 %v82
  %v95 = vpack.c.b16 %v92, %v91
  %v96 = vpack.c.b16 %v94, %v93
  %99 = vmatpush.bf16.msra.mxu0 0
  %100 = vmatpush.bf16.msra.mxu0 0
  %101 = vmatpush.bf16.msra.mxu0 0
  %102 = vmatpush.bf16.msra.mxu0 0
  %103 = vmatpush.bf16.msra.mxu0 0
  %104 = vmatpush.bf16.msra.mxu0 0
  %105 = vmatpush.bf16.msra.mxu0 %v96
  %106 = vmatpush.bf16.msra.mxu0 %v95
  %107 = vmatmul.bf16.gmra.mxu0 %v55
  %v108 = vpop.f32.mrf.mxu0
  %v109 = vadd.f32 %v85, %v108
  %v110 = vpop.f32.mrf.mxu0
  %v111 = vadd.f32 %v85, %v110
  %112 = vmatmul.bf16.gmra.mxu0 %v58
  %v113 = vpop.f32.mrf.mxu0
  %v114 = vadd.f32 %v85, %v113
  %v115 = vpop.f32.mrf.mxu0
  %v116 = vadd.f32 %v85, %v115
  %117 = vdwg.mxu0
  %v118 = vsub.f32 0.0, %v109
  %v119 = vsub.f32 0.0, %v111
  %v120 = vsub.f32 0.0, %v114
  %v121 = vsub.f32 0.0, %v116
  %v122 = vmul.f32 %v118, 1.442695
  %v123 = vpow.pop %v122
  %v124 = vmul.f32 %v119, 1.442695
  %v125 = vpow.pop %v124
  %v126 = vmul.f32 %v120, 1.442695
  %v127 = vpow.pop %v126
  %v128 = vmul.f32 %v121, 1.442695
  %v129 = vpow.pop %v128
  %v130 = vadd.f32 %v123, 1.0
  %v131 = vadd.f32 %v125, 1.0
  %v132 = vadd.f32 %v127, 1.0
  %v133 = vadd.f32 %v129, 1.0
  %v134 = vrcp.pop %v130
  %v135 = vmul.f32 %v130, %v134
  %v136 = vsub.f32 1.0, %v135
  %v137 = vmul.f32 %v134, %v136
  %v138 = vadd.f32 %v134, %v137
  %vm139 = vweird.f32 %v130
  %vm140 = vweird.f32 %v134
  %vm141 = vmor %vm139, %vm140
  %v142 = vsel %vm141, %v134, %v138
  %v143 = vand.u32 2147483647, %v130
  %vm144 = vcmp.eq.f32.partialorder %v143, 8.507059e+37
  %v145 = vand.u32 %v130, 2147483648
  %v146 = vor.u32 1.1754944e-38, %v145
  %v147 = vsel %vm144, %v146, %v142
  %v148 = vmul.f32 1.0, %v147
  %v149 = vrcp.pop %v131
  %v150 = vmul.f32 %v131, %v149
  %v151 = vsub.f32 1.0, %v150
  %v152 = vmul.f32 %v149, %v151
  %v153 = vadd.f32 %v149, %v152
  %vm154 = vweird.f32 %v131
  %vm155 = vweird.f32 %v149
  %vm156 = vmor %vm154, %vm155
  %v157 = vsel %vm156, %v149, %v153
  %v158 = vand.u32 2147483647, %v131
  %vm159 = vcmp.eq.f32.partialorder %v158, 8.507059e+37
  %v160 = vand.u32 %v131, 2147483648
  %v161 = vor.u32 1.1754944e-38, %v160
  %v162 = vsel %vm159, %v161, %v157
  %v163 = vmul.f32 1.0, %v162
  %v164 = vrcp.pop %v132
  %v165 = vmul.f32 %v132, %v164
  %v166 = vsub.f32 1.0, %v165
  %v167 = vmul.f32 %v164, %v166
  %v168 = vadd.f32 %v164, %v167
  %vm169 = vweird.f32 %v132
  %vm170 = vweird.f32 %v164
  %vm171 = vmor %vm169, %vm170
  %v172 = vsel %vm171, %v164, %v168
  %v173 = vand.u32 2147483647, %v132
  %vm174 = vcmp.eq.f32.partialorder %v173, 8.507059e+37
  %v175 = vand.u32 %v132, 2147483648
  %v176 = vor.u32 1.1754944e-38, %v175
  %v177 = vsel %vm174, %v176, %v172
  %v178 = vmul.f32 1.0, %v177
  %v179 = vrcp.pop %v133
  %v180 = vmul.f32 %v133, %v179
  %v181 = vsub.f32 1.0, %v180
  %v182 = vmul.f32 %v179, %v181
  %v183 = vadd.f32 %v179, %v182
  %vm184 = vweird.f32 %v133
  %vm185 = vweird.f32 %v179
  %vm186 = vmor %vm184, %vm185
  %v187 = vsel %vm186, %v179, %v183
  %v188 = vand.u32 2147483647, %v133
  %vm189 = vcmp.eq.f32.partialorder %v188, 8.507059e+37
  %v190 = vand.u32 %v133, 2147483648
  %v191 = vor.u32 1.1754944e-38, %v190
  %v192 = vsel %vm189, %v191, %v187
  %v193 = vmul.f32 1.0, %v192
  %v194 = vmul.f32 %v70, %v148
  %v195 = vmul.f32 %v72, %v163
  %v196 = vmul.f32 %v75, %v178
  %v197 = vmul.f32 %v77, %v193
  %v198 = vpack.c.bf16 %v195, %v194
  %v199 = vpack.c.bf16 %v197, %v196
  %v200 = vld [vmem:[%s5] sm:$0xf]
  %v201 = vld [vmem:[%s5 + $0x4] sm:$0xf]
  %v202 = vld [vmem:[%s5 + $0x8] sm:$0xf]
  %v203 = vld [vmem:[%s5 + $0xc] sm:$0xf]
  %v204 = vld [vmem:[%s5 + $0x10] sm:$0xf]
  %v205 = vld [vmem:[%s5 + $0x14] sm:$0xf]
  %v206 = vld [vmem:[%s5 + $0x18] sm:$0xf]
  %v207 = vld [vmem:[%s5 + $0x1c] sm:$0xf]
  %v208 = vld [vmem:[%s6] sm:$0x1]
  %v210 = vperm.slane %v208, 0
  %v220 = vunpack.c.l.b16 %v200
  %v221 = vunpack.c.l.b16 %v201
  %v222 = vunpack.c.l.b16 %v202
  %v223 = vunpack.c.l.b16 %v203
  %v224 = vunpack.c.l.b16 %v204
  %v225 = vunpack.c.l.b16 %v205
  %v226 = vunpack.c.l.b16 %v206
  %v227 = vunpack.c.l.b16 %v207
  %v228 = vpack.c.b16 %v221, %v220
  %v229 = vpack.c.b16 %v223, %v222
  %v230 = vpack.c.b16 %v225, %v224
  %v231 = vpack.c.b16 %v227, %v226
  %vm236 = vcmask 523264
  %v238 = vsel %vm236, %v198, 0
  %v241 = vsel %vm236, %v199, 0
  %243 = vmatpush.bf16.msra.mxu0 0
  %244 = vmatpush.bf16.msra.mxu0 0
  %245 = vmatpush.bf16.msra.mxu0 0
  %246 = vmatpush.bf16.msra.mxu0 0
  %247 = vmatpush.bf16.msra.mxu0 %v231
  %248 = vmatpush.bf16.msra.mxu0 %v230
  %249 = vmatpush.bf16.msra.mxu0 %v229
  %250 = vmatpush.bf16.msra.mxu0 %v228
  %251 = vmatmul.bf16.gmra.mxu0 %v238
  %v252 = vpop.f32.mrf.mxu0
  %v253 = vadd.f32 %v210, %v252
  %v254 = vpop.f32.mrf.mxu0
  %v255 = vadd.f32 %v210, %v254
  %256 = vmatmul.bf16.gmra.mxu0 %v241
  %v257 = vpop.f32.mrf.mxu0
  %v258 = vadd.f32 %v210, %v257
  %v259 = vpop.f32.mrf.mxu0
  %v260 = vadd.f32 %v210, %v259
  %261 = vdwg.mxu0
  %262 = vst.msk [vmem:[%s7] sm:$0xff] %vm53, %v253
  %263 = vst.msk [vmem:[%s7 + $0x8] sm:$0xff] %vm53, %v255
  %264 = vst.msk [vmem:[%s7 + $0x10] sm:$0xff] %vm53, %v258
  %265 = vst.msk [vmem:[%s7 + $0x18] sm:$0xff] %vm53, %v260
  // Predicated region
  $region30: #{hunet_forward.26} parent=0 // pred_check
    _
  $region31: #{hunet_forward.26} parent=0 // pred_check_branch
    %267 = sbr.rel (0) target = $region33
  $region32: #{hunet_forward.26} parent=0 // pred_region
    _
  $region33: #{hunet_forward.26} parent=0 // pred_fallthru
    _
  // Predicated region
  $region34: #{hunet_forward.26} parent=0 // pred_check
    _
  $region35: #{hunet_forward.26} parent=0 // pred_check_branch
    %269 = sbr.rel (0) target = $region37
  $region36: #{hunet_forward.26} parent=0 // pred_region
    _
  $region37: #{hunet_forward.26} parent=0 // pred_fallthru
    _

// kernel: hunet_forward.24
$region0: #{hunet_forward.24}
  #allocation0 [shape = 'u32[]', space=smem, size = 0x4, offset = 0x4, fixed_abs, tag = 'smem constant byte address 0x4 - core index']
  #allocation1 [shape = 'u32[72,128]{1,0:T(1,128)}', space=vmem, size = 0x9000, scoped, tag = 'internal scratch']
  %s0 = inlined_call_operand.vmem [shape: f32[8,128], index: 0, kind: input, shape index: {}]
  %s1 = inlined_call_operand.vmem [shape: bf16[128,128], index: 1, kind: input, shape index: {}]
  %s2 = inlined_call_operand.vmem [shape: bf16[128,128], index: 2, kind: input, shape index: {}]
  %s3 = inlined_call_operand.vmem [shape: bf16[128,128], index: 3, kind: input, shape index: {}]
  %s4 = inlined_call_operand.vmem [shape: f32[1,128], index: 4, kind: input, shape index: {}]
  %s5 = inlined_call_operand.vmem [shape: bf16[128,128], index: 5, kind: input, shape index: {}]
  %s6 = inlined_call_operand.vmem [shape: bf16[128,128], index: 6, kind: input, shape index: {}]
  %s7 = inlined_call_operand.vmem [shape: bf16[128,128], index: 7, kind: input, shape index: {}]
  %s8 = inlined_call_operand.vmem [shape: f32[1,128], index: 8, kind: input, shape index: {}]
  %s9 = inlined_call_operand.vmem [shape: f32[8,128], index: 9, kind: output, shape index: {}]
  %s10 = sld [smem:[#allocation0]]
  $region46: #{hunet_forward.24} parent=0
    _
  %s12 = ssub.s32 1, %s10
  %s13 = scalar_select 0, %s12, %s10
  // Predicated region
  $region2: #{hunet_forward.24} parent=0 // pred_check
    _
  $region3: #{hunet_forward.24} parent=0 // pred_check_branch
    %15 = sbr.rel (0) target = $region5
  $region4: #{hunet_forward.24} parent=0 // pred_region
    _
  $region5: #{hunet_forward.24} parent=0 // pred_fallthru
    _
  // Predicated region
  $region6: #{hunet_forward.24} parent=0 // pred_check
    _
  $region7: #{hunet_forward.24} parent=0 // pred_check_branch
    %17 = sbr.rel (0) target = $region9
  $region8: #{hunet_forward.24} parent=0 // pred_region
    _
  $region9: #{hunet_forward.24} parent=0 // pred_fallthru
    _
  // Predicated region
  $region10: #{hunet_forward.24} parent=0 // pred_check
    _
  $region11: #{hunet_forward.24} parent=0 // pred_check_branch
    %19 = sbr.rel (0) target = $region13
  $region12: #{hunet_forward.24} parent=0 // pred_region
    _
  $region13: #{hunet_forward.24} parent=0 // pred_fallthru
    _
  // Predicated region
  $region14: #{hunet_forward.24} parent=0 // pred_check
    _
  $region15: #{hunet_forward.24} parent=0 // pred_check_branch
    %21 = sbr.rel (0) target = $region17
  $region16: #{hunet_forward.24} parent=0 // pred_region
    _
  $region17: #{hunet_forward.24} parent=0 // pred_fallthru
    _
  // Predicated region
  $region18: #{hunet_forward.24} parent=0 // pred_check
    _
  $region19: #{hunet_forward.24} parent=0 // pred_check_branch
    %23 = sbr.rel (0) target = $region21
  $region20: #{hunet_forward.24} parent=0 // pred_region
    _
  $region21: #{hunet_forward.24} parent=0 // pred_fallthru
    _
  // Predicated region
  $region22: #{hunet_forward.24} parent=0 // pred_check
    _
  $region23: #{hunet_forward.24} parent=0 // pred_check_branch
    %25 = sbr.rel (0) target = $region25
  $region24: #{hunet_forward.24} parent=0 // pred_region
    _
  $region25: #{hunet_forward.24} parent=0 // pred_fallthru
    _
  // Predicated region
  $region26: #{hunet_forward.24} parent=0 // pred_check
    _
  $region27: #{hunet_forward.24} parent=0 // pred_check_branch
    %27 = sbr.rel (0) target = $region29
  $region28: #{hunet_forward.24} parent=0 // pred_region
    _
  $region29: #{hunet_forward.24} parent=0 // pred_fallthru
    _
  // Predicated region
  $region30: #{hunet_forward.24} parent=0 // pred_check
    _
  $region31: #{hunet_forward.24} parent=0 // pred_check_branch
    %29 = sbr.rel (0) target = $region33
  $region32: #{hunet_forward.24} parent=0 // pred_region
    _
  $region33: #{hunet_forward.24} parent=0 // pred_fallthru
    _
  // Predicated region
  $region34: #{hunet_forward.24} parent=0 // pred_check
    _
  $region35: #{hunet_forward.24} parent=0 // pred_check_branch
    %31 = sbr.rel (0) target = $region37
  $region36: #{hunet_forward.24} parent=0 // pred_region
    _
  $region37: #{hunet_forward.24} parent=0 // pred_fallthru
    _
  %v32 = vld [vmem:[%s0] sm:$0xff]
  %v33 = vlaneseq
  %v34 = vshrl.u32 %v33, 7
  %v35 = vand.u32 %v34, 3
  %vm36 = vcmp.gt.s32.totalorder %v35, 0
  %v37 = vrot.slane %v32, 7
  %v38 = vsel %vm36, %v37, 0.0
  %vm39 = vcmp.lt.s32.totalorder %v35, 3
  %v40 = vrot.slane %v32, 1
  %v41 = vsel %vm39, %v40, 0.0
  %v42 = vpack.c.bf16 %v32, %v32
  %v43 = vld [vmem:[%s2] sm:$0xf]
  %v44 = vld [vmem:[%s2 + $0x4] sm:$0xf]
  %v45 = vld [vmem:[%s2 + $0x8] sm:$0xf]
  %v46 = vld [vmem:[%s2 + $0xc] sm:$0xf]
  %v47 = vld [vmem:[%s2 + $0x10] sm:$0xf]
  %v48 = vld [vmem:[%s2 + $0x14] sm:$0xf]
  %v49 = vld [vmem:[%s2 + $0x18] sm:$0xf]
  %v50 = vld [vmem:[%s2 + $0x1c] sm:$0xf]
  %v51 = vld [vmem:[%s2 + $0x20] sm:$0xf]
  %v52 = vld [vmem:[%s2 + $0x24] sm:$0xf]
  %v53 = vld [vmem:[%s2 + $0x28] sm:$0xf]
  %v54 = vld [vmem:[%s2 + $0x2c] sm:$0xf]
  %v55 = vld [vmem:[%s2 + $0x30] sm:$0xf]
  %v56 = vld [vmem:[%s2 + $0x34] sm:$0xf]
  %v57 = vld [vmem:[%s2 + $0x38] sm:$0xf]
  %v58 = vld [vmem:[%s2 + $0x3c] sm:$0xf]
  %v59 = vpack.c.bf16 %v38, %v38
  %v60 = vld [vmem:[%s1] sm:$0xf]
  %v61 = vld [vmem:[%s1 + $0x4] sm:$0xf]
  %v62 = vld [vmem:[%s1 + $0x8] sm:$0xf]
  %v63 = vld [vmem:[%s1 + $0xc] sm:$0xf]
  %v64 = vld [vmem:[%s1 + $0x10] sm:$0xf]
  %v65 = vld [vmem:[%s1 + $0x14] sm:$0xf]
  %v66 = vld [vmem:[%s1 + $0x18] sm:$0xf]
  %v67 = vld [vmem:[%s1 + $0x1c] sm:$0xf]
  %v68 = vld [vmem:[%s1 + $0x20] sm:$0xf]
  %v69 = vld [vmem:[%s1 + $0x24] sm:$0xf]
  %v70 = vld [vmem:[%s1 + $0x28] sm:$0xf]
  %v71 = vld [vmem:[%s1 + $0x2c] sm:$0xf]
  %v72 = vld [vmem:[%s1 + $0x30] sm:$0xf]
  %v73 = vld [vmem:[%s1 + $0x34] sm:$0xf]
  %v74 = vld [vmem:[%s1 + $0x38] sm:$0xf]
  %v75 = vld [vmem:[%s1 + $0x3c] sm:$0xf]
  %v92 = vunpack.c.l.b16 %v60
  %v93 = vunpack.c.l.b16 %v61
  %v94 = vunpack.c.l.b16 %v62
  %v95 = vunpack.c.l.b16 %v63
  %v96 = vunpack.c.l.b16 %v64
  %v97 = vunpack.c.l.b16 %v65
  %v98 = vunpack.c.l.b16 %v66
  %v99 = vunpack.c.l.b16 %v67
  %v100 = vunpack.c.l.b16 %v68
  %v101 = vunpack.c.l.b16 %v69
  %v102 = vunpack.c.l.b16 %v70
  %v103 = vunpack.c.l.b16 %v71
  %v104 = vunpack.c.l.b16 %v72
  %v105 = vunpack.c.l.b16 %v73
  %v106 = vunpack.c.l.b16 %v74
  %v107 = vunpack.c.l.b16 %v75
  %v108 = vpack.c.b16 %v93, %v92
  %v109 = vpack.c.b16 %v95, %v94
  %v110 = vpack.c.b16 %v97, %v96
  %v111 = vpack.c.b16 %v99, %v98
  %v112 = vpack.c.b16 %v101, %v100
  %v113 = vpack.c.b16 %v103, %v102
  %v114 = vpack.c.b16 %v105, %v104
  %v115 = vpack.c.b16 %v107, %v106
  %124 = vmatpush.bf16.msra.mxu0 %v115
  %125 = vmatpush.bf16.msra.mxu0 %v114
  %126 = vmatpush.bf16.msra.mxu0 %v113
  %127 = vmatpush.bf16.msra.mxu0 %v112
  %128 = vmatpush.bf16.msra.mxu0 %v111
  %129 = vmatpush.bf16.msra.mxu0 %v110
  %130 = vmatpush.bf16.msra.mxu0 %v109
  %131 = vmatpush.bf16.msra.mxu0 %v108
  %132 = vmatmul.bf16.gmra.mxu0 %v59
  %v133 = vpop.f32.mrf.mxu0
  %v134 = vadd.f32 0.0, %v133
  %v135 = vpop.f32.mrf.mxu0
  %136 = vdwg.mxu0
  %v153 = vunpack.c.l.b16 %v43
  %v154 = vunpack.c.l.b16 %v44
  %v155 = vunpack.c.l.b16 %v45
  %v156 = vunpack.c.l.b16 %v46
  %v157 = vunpack.c.l.b16 %v47
  %v158 = vunpack.c.l.b16 %v48
  %v159 = vunpack.c.l.b16 %v49
  %v160 = vunpack.c.l.b16 %v50
  %v161 = vunpack.c.l.b16 %v51
  %v162 = vunpack.c.l.b16 %v52
  %v163 = vunpack.c.l.b16 %v53
  %v164 = vunpack.c.l.b16 %v54
  %v165 = vunpack.c.l.b16 %v55
  %v166 = vunpack.c.l.b16 %v56
  %v167 = vunpack.c.l.b16 %v57
  %v168 = vunpack.c.l.b16 %v58
  %v169 = vpack.c.b16 %v154, %v153
  %v170 = vpack.c.b16 %v156, %v155
  %v171 = vpack.c.b16 %v158, %v157
  %v172 = vpack.c.b16 %v160, %v159
  %v173 = vpack.c.b16 %v162, %v161
  %v174 = vpack.c.b16 %v164, %v163
  %v175 = vpack.c.b16 %v166, %v165
  %v176 = vpack.c.b16 %v168, %v167
  %185 = vmatpush.bf16.msra.mxu0 %v176
  %186 = vmatpush.bf16.msra.mxu0 %v175
  %187 = vmatpush.bf16.msra.mxu0 %v174
  %188 = vmatpush.bf16.msra.mxu0 %v173
  %189 = vmatpush.bf16.msra.mxu0 %v172
  %190 = vmatpush.bf16.msra.mxu0 %v171
  %191 = vmatpush.bf16.msra.mxu0 %v170
  %192 = vmatpush.bf16.msra.mxu0 %v169
  %193 = vmatmul.bf16.gmra.mxu0 %v42
  %v194 = vpop.f32.mrf.mxu0
  %v195 = vadd.f32 %v134, %v194
  %v196 = vpop.f32.mrf.mxu0
  %197 = vdwg.mxu0
  %v198 = vpack.c.bf16 %v41, %v41
  %v199 = vld [vmem:[%s3] sm:$0xf]
  %v200 = vld [vmem:[%s3 + $0x4] sm:$0xf]
  %v201 = vld [vmem:[%s3 + $0x8] sm:$0xf]
  %v202 = vld [vmem:[%s3 + $0xc] sm:$0xf]
  %v203 = vld [vmem:[%s3 + $0x10] sm:$0xf]
  %v204 = vld [vmem:[%s3 + $0x14] sm:$0xf]
  %v205 = vld [vmem:[%s3 + $0x18] sm:$0xf]
  %v206 = vld [vmem:[%s3 + $0x1c] sm:$0xf]
  %v207 = vld [vmem:[%s3 + $0x20] sm:$0xf]
  %v208 = vld [vmem:[%s3 + $0x24] sm:$0xf]
  %v209 = vld [vmem:[%s3 + $0x28] sm:$0xf]
  %v210 = vld [vmem:[%s3 + $0x2c] sm:$0xf]
  %v211 = vld [vmem:[%s3 + $0x30] sm:$0xf]
  %v212 = vld [vmem:[%s3 + $0x34] sm:$0xf]
  %v213 = vld [vmem:[%s3 + $0x38] sm:$0xf]
  %v214 = vld [vmem:[%s3 + $0x3c] sm:$0xf]
  %v231 = vunpack.c.l.b16 %v199
  %v232 = vunpack.c.l.b16 %v200
  %v233 = vunpack.c.l.b16 %v201
  %v234 = vunpack.c.l.b16 %v202
  %v235 = vunpack.c.l.b16 %v203
  %v236 = vunpack.c.l.b16 %v204
  %v237 = vunpack.c.l.b16 %v205
  %v238 = vunpack.c.l.b16 %v206
  %v239 = vunpack.c.l.b16 %v207
  %v240 = vunpack.c.l.b16 %v208
  %v241 = vunpack.c.l.b16 %v209
  %v242 = vunpack.c.l.b16 %v210
  %v243 = vunpack.c.l.b16 %v211
  %v244 = vunpack.c.l.b16 %v212
  %v245 = vunpack.c.l.b16 %v213
  %v246 = vunpack.c.l.b16 %v214
  %v247 = vpack.c.b16 %v232, %v231
  %v248 = vpack.c.b16 %v234, %v233
  %v249 = vpack.c.b16 %v236, %v235
  %v250 = vpack.c.b16 %v238, %v237
  %v251 = vpack.c.b16 %v240, %v239
  %v252 = vpack.c.b16 %v242, %v241
  %v253 = vpack.c.b16 %v244, %v243
  %v254 = vpack.c.b16 %v246, %v245
  %263 = vmatpush.bf16.msra.mxu0 %v254
  %264 = vmatpush.bf16.msra.mxu0 %v253
  %265 = vmatpush.bf16.msra.mxu0 %v252
  %266 = vmatpush.bf16.msra.mxu0 %v251
  %267 = vmatpush.bf16.msra.mxu0 %v250
  %268 = vmatpush.bf16.msra.mxu0 %v249
  %269 = vmatpush.bf16.msra.mxu0 %v248
  %270 = vmatpush.bf16.msra.mxu0 %v247
  %271 = vmatmul.bf16.gmra.mxu0 %v198
  %v272 = vpop.f32.mrf.mxu0
  %v273 = vadd.f32 0.0, %v272
  %v274 = vpop.f32.mrf.mxu0
  %275 = vdwg.mxu0
  %v276 = vadd.f32 %v195, %v273
  %v277 = vld [vmem:[%s4] sm:$0x1]
  %v279 = vperm.slane %v277, 0
  %v281 = vadd.f32 %v276, %v279
  %v282 = vmax.f32 %v281, 0.0
  %v283 = vrot.slane %v282, 7
  %v284 = vsel %vm36, %v283, 0.0
  %v285 = vrot.slane %v282, 1
  %v286 = vsel %vm39, %v285, 0.0
  %v287 = vpack.c.bf16 %v282, %v282
  %v288 = vld [vmem:[%s6] sm:$0xf]
  %v289 = vld [vmem:[%s6 + $0x4] sm:$0xf]
  %v290 = vld [vmem:[%s6 + $0x8] sm:$0xf]
  %v291 = vld [vmem:[%s6 + $0xc] sm:$0xf]
  %v292 = vld [vmem:[%s6 + $0x10] sm:$0xf]
  %v293 = vld [vmem:[%s6 + $0x14] sm:$0xf]
  %v294 = vld [vmem:[%s6 + $0x18] sm:$0xf]
  %v295 = vld [vmem:[%s6 + $0x1c] sm:$0xf]
  %v296 = vld [vmem:[%s6 + $0x20] sm:$0xf]
  %v297 = vld [vmem:[%s6 + $0x24] sm:$0xf]
  %v298 = vld [vmem:[%s6 + $0x28] sm:$0xf]
  %v299 = vld [vmem:[%s6 + $0x2c] sm:$0xf]
  %v300 = vld [vmem:[%s6 + $0x30] sm:$0xf]
  %v301 = vld [vmem:[%s6 + $0x34] sm:$0xf]
  %v302 = vld [vmem:[%s6 + $0x38] sm:$0xf]
  %v303 = vld [vmem:[%s6 + $0x3c] sm:$0xf]
  %v304 = vpack.c.bf16 %v284, %v284
  %v305 = vld [vmem:[%s5] sm:$0xf]
  %v306 = vld [vmem:[%s5 + $0x4] sm:$0xf]
  %v307 = vld [vmem:[%s5 + $0x8] sm:$0xf]
  %v308 = vld [vmem:[%s5 + $0xc] sm:$0xf]
  %v309 = vld [vmem:[%s5 + $0x10] sm:$0xf]
  %v310 = vld [vmem:[%s5 + $0x14] sm:$0xf]
  %v311 = vld [vmem:[%s5 + $0x18] sm:$0xf]
  %v312 = vld [vmem:[%s5 + $0x1c] sm:$0xf]
  %v313 = vld [vmem:[%s5 + $0x20] sm:$0xf]
  %v314 = vld [vmem:[%s5 + $0x24] sm:$0xf]
  %v315 = vld [vmem:[%s5 + $0x28] sm:$0xf]
  %v316 = vld [vmem:[%s5 + $0x2c] sm:$0xf]
  %v317 = vld [vmem:[%s5 + $0x30] sm:$0xf]
  %v318 = vld [vmem:[%s5 + $0x34] sm:$0xf]
  %v319 = vld [vmem:[%s5 + $0x38] sm:$0xf]
  %v320 = vld [vmem:[%s5 + $0x3c] sm:$0xf]
  %v337 = vunpack.c.l.b16 %v305
  %v338 = vunpack.c.l.b16 %v306
  %v339 = vunpack.c.l.b16 %v307
  %v340 = vunpack.c.l.b16 %v308
  %v341 = vunpack.c.l.b16 %v309
  %v342 = vunpack.c.l.b16 %v310
  %v343 = vunpack.c.l.b16 %v311
  %v344 = vunpack.c.l.b16 %v312
  %v345 = vunpack.c.l.b16 %v313
  %v346 = vunpack.c.l.b16 %v314
  %v347 = vunpack.c.l.b16 %v315
  %v348 = vunpack.c.l.b16 %v316
  %v349 = vunpack.c.l.b16 %v317
  %v350 = vunpack.c.l.b16 %v318
  %v351 = vunpack.c.l.b16 %v319
  %v352 = vunpack.c.l.b16 %v320
  %v353 = vpack.c.b16 %v338, %v337
  %v354 = vpack.c.b16 %v340, %v339
  %v355 = vpack.c.b16 %v342, %v341
  %v356 = vpack.c.b16 %v344, %v343
  %v357 = vpack.c.b16 %v346, %v345
  %v358 = vpack.c.b16 %v348, %v347
  %v359 = vpack.c.b16 %v350, %v349
  %v360 = vpack.c.b16 %v352, %v351
  %369 = vmatpush.bf16.msra.mxu0 %v360
  %370 = vmatpush.bf16.msra.mxu0 %v359
  %371 = vmatpush.bf16.msra.mxu0 %v358
  %372 = vmatpush.bf16.msra.mxu0 %v357
  %373 = vmatpush.bf16.msra.mxu0 %v356
  %374 = vmatpush.bf16.msra.mxu0 %v355
  %375 = vmatpush.bf16.msra.mxu0 %v354
  %376 = vmatpush.bf16.msra.mxu0 %v353
  %377 = vmatmul.bf16.gmra.mxu0 %v304
  %v378 = vpop.f32.mrf.mxu0
  %v379 = vadd.f32 0.0, %v378
  %v380 = vpop.f32.mrf.mxu0
  %381 = vdwg.mxu0
  %v398 = vunpack.c.l.b16 %v288
  %v399 = vunpack.c.l.b16 %v289
  %v400 = vunpack.c.l.b16 %v290
  %v401 = vunpack.c.l.b16 %v291
  %v402 = vunpack.c.l.b16 %v292
  %v403 = vunpack.c.l.b16 %v293
  %v404 = vunpack.c.l.b16 %v294
  %v405 = vunpack.c.l.b16 %v295
  %v406 = vunpack.c.l.b16 %v296
  %v407 = vunpack.c.l.b16 %v297
  %v408 = vunpack.c.l.b16 %v298
  %v409 = vunpack.c.l.b16 %v299
  %v410 = vunpack.c.l.b16 %v300
  %v411 = vunpack.c.l.b16 %v301
  %v412 = vunpack.c.l.b16 %v302
  %v413 = vunpack.c.l.b16 %v303
  %v414 = vpack.c.b16 %v399, %v398
  %v415 = vpack.c.b16 %v401, %v400
  %v416 = vpack.c.b16 %v403, %v402
  %v417 = vpack.c.b16 %v405, %v404
  %v418 = vpack.c.b16 %v407, %v406
  %v419 = vpack.c.b16 %v409, %v408
  %v420 = vpack.c.b16 %v411, %v410
  %v421 = vpack.c.b16 %v413, %v412
  %430 = vmatpush.bf16.msra.mxu0 %v421
  %431 = vmatpush.bf16.msra.mxu0 %v420
  %432 = vmatpush.bf16.msra.mxu0 %v419
  %433 = vmatpush.bf16.msra.mxu0 %v418
  %434 = vmatpush.bf16.msra.mxu0 %v417
  %435 = vmatpush.bf16.msra.mxu0 %v416
  %436 = vmatpush.bf16.msra.mxu0 %v415
  %437 = vmatpush.bf16.msra.mxu0 %v414
  %438 = vmatmul.bf16.gmra.mxu0 %v287
  %v439 = vpop.f32.mrf.mxu0
  %v440 = vadd.f32 %v379, %v439
  %v441 = vpop.f32.mrf.mxu0
  %442 = vdwg.mxu0
  %v443 = vpack.c.bf16 %v286, %v286
  %v444 = vld [vmem:[%s7] sm:$0xf]
  %v445 = vld [vmem:[%s7 + $0x4] sm:$0xf]
  %v446 = vld [vmem:[%s7 + $0x8] sm:$0xf]
  %v447 = vld [vmem:[%s7 + $0xc] sm:$0xf]
  %v448 = vld [vmem:[%s7 + $0x10] sm:$0xf]
  %v449 = vld [vmem:[%s7 + $0x14] sm:$0xf]
  %v450 = vld [vmem:[%s7 + $0x18] sm:$0xf]
  %v451 = vld [vmem:[%s7 + $0x1c] sm:$0xf]
  %v452 = vld [vmem:[%s7 + $0x20] sm:$0xf]
  %v453 = vld [vmem:[%s7 + $0x24] sm:$0xf]
  %v454 = vld [vmem:[%s7 + $0x28] sm:$0xf]
  %v455 = vld [vmem:[%s7 + $0x2c] sm:$0xf]
  %v456 = vld [vmem:[%s7 + $0x30] sm:$0xf]
  %v457 = vld [vmem:[%s7 + $0x34] sm:$0xf]
  %v458 = vld [vmem:[%s7 + $0x38] sm:$0xf]
  %v459 = vld [vmem:[%s7 + $0x3c] sm:$0xf]
  %v476 = vunpack.c.l.b16 %v444
  %v477 = vunpack.c.l.b16 %v445
  %v478 = vunpack.c.l.b16 %v446
  %v479 = vunpack.c.l.b16 %v447
  %v480 = vunpack.c.l.b16 %v448
  %v481 = vunpack.c.l.b16 %v449
  %v482 = vunpack.c.l.b16 %v450
  %v483 = vunpack.c.l.b16 %v451
  %v484 = vunpack.c.l.b16 %v452
  %v485 = vunpack.c.l.b16 %v453
  %v486 = vunpack.c.l.b16 %v454
  %v487 = vunpack.c.l.b16 %v455
  %v488 = vunpack.c.l.b16 %v456
  %v489 = vunpack.c.l.b16 %v457
  %v490 = vunpack.c.l.b16 %v458
  %v491 = vunpack.c.l.b16 %v459
  %v492 = vpack.c.b16 %v477, %v476
  %v493 = vpack.c.b16 %v479, %v478
  %v494 = vpack.c.b16 %v481, %v480
  %v495 = vpack.c.b16 %v483, %v482
  %v496 = vpack.c.b16 %v485, %v484
  %v497 = vpack.c.b16 %v487, %v486
  %v498 = vpack.c.b16 %v489, %v488
  %v499 = vpack.c.b16 %v491, %v490
  %508 = vmatpush.bf16.msra.mxu0 %v499
  %509 = vmatpush.bf16.msra.mxu0 %v498
  %510 = vmatpush.bf16.msra.mxu0 %v497
  %511 = vmatpush.bf16.msra.mxu0 %v496
  %512 = vmatpush.bf16.msra.mxu0 %v495
  %513 = vmatpush.bf16.msra.mxu0 %v494
  %514 = vmatpush.bf16.msra.mxu0 %v493
  %515 = vmatpush.bf16.msra.mxu0 %v492
  %516 = vmatmul.bf16.gmra.mxu0 %v443
  %v517 = vpop.f32.mrf.mxu0
  %v518 = vadd.f32 0.0, %v517
  %v519 = vpop.f32.mrf.mxu0
  %520 = vdwg.mxu0
  %v521 = vadd.f32 %v440, %v518
  %v522 = vld [vmem:[%s8] sm:$0x1]
  %v524 = vperm.slane %v522, 0
  %v526 = vadd.f32 %v521, %v524
  %v527 = vadd.f32 %v32, %v526
  %528 = vst [vmem:[%s9] sm:$0xff] %v527
  // Predicated region
  $region38: #{hunet_forward.24} parent=0 // pred_check
    _
  $region39: #{hunet_forward.24} parent=0 // pred_check_branch
    %530 = sbr.rel (0) target = $region41
  $region40: #{hunet_forward.24} parent=0 // pred_region
    _
  $region41: #{hunet_forward.24} parent=0 // pred_fallthru
    _
  // Predicated region
  $region42: #{hunet_forward.24} parent=0 // pred_check
    _
  $region43: #{hunet_forward.24} parent=0 // pred_check_branch
    %532 = sbr.rel (0) target = $region45
  $region44: #{hunet_forward.24} parent=0 // pred_region
    _
  $region45: #{hunet_forward.24} parent=0 // pred_fallthru
    _

// kernel: hunet_forward.21
$region0: #{hunet_forward.21}
  #allocation0 [shape = 'u32[]', space=smem, size = 0x4, offset = 0x4, fixed_abs, tag = 'smem constant byte address 0x4 - core index']
  #allocation1 [shape = 'u32[72,128]{1,0:T(1,128)}', space=vmem, size = 0x9000, scoped, tag = 'internal scratch']
  %s0 = inlined_call_operand.vmem [shape: f32[128,16], index: 0, kind: input, shape index: {}]
  %s1 = inlined_call_operand.vmem [shape: bf16[16,32], index: 1, kind: input, shape index: {}]
  %s2 = inlined_call_operand.vmem [shape: f32[1,32], index: 2, kind: input, shape index: {}]
  %s3 = inlined_call_operand.vmem [shape: bf16[16,32], index: 3, kind: input, shape index: {}]
  %s4 = inlined_call_operand.vmem [shape: f32[1,32], index: 4, kind: input, shape index: {}]
  %s5 = inlined_call_operand.vmem [shape: bf16[32,16], index: 5, kind: input, shape index: {}]
  %s6 = inlined_call_operand.vmem [shape: f32[1,16], index: 6, kind: input, shape index: {}]
  %s7 = inlined_call_operand.vmem [shape: f32[128,16], index: 7, kind: output, shape index: {}]
  %s8 = sld [smem:[#allocation0]]
  $region38: #{hunet_forward.21} parent=0
    _
  %s10 = ssub.s32 1, %s8
  %s11 = scalar_select 0, %s10, %s8
  // Predicated region
  $region2: #{hunet_forward.21} parent=0 // pred_check
    _
  $region3: #{hunet_forward.21} parent=0 // pred_check_branch
    %13 = sbr.rel (0) target = $region5
  $region4: #{hunet_forward.21} parent=0 // pred_region
    _
  $region5: #{hunet_forward.21} parent=0 // pred_fallthru
    _
  // Predicated region
  $region6: #{hunet_forward.21} parent=0 // pred_check
    _
  $region7: #{hunet_forward.21} parent=0 // pred_check_branch
    %15 = sbr.rel (0) target = $region9
  $region8: #{hunet_forward.21} parent=0 // pred_region
    _
  $region9: #{hunet_forward.21} parent=0 // pred_fallthru
    _
  // Predicated region
  $region10: #{hunet_forward.21} parent=0 // pred_check
    _
  $region11: #{hunet_forward.21} parent=0 // pred_check_branch
    %17 = sbr.rel (0) target = $region13
  $region12: #{hunet_forward.21} parent=0 // pred_region
    _
  $region13: #{hunet_forward.21} parent=0 // pred_fallthru
    _
  // Predicated region
  $region14: #{hunet_forward.21} parent=0 // pred_check
    _
  $region15: #{hunet_forward.21} parent=0 // pred_check_branch
    %19 = sbr.rel (0) target = $region17
  $region16: #{hunet_forward.21} parent=0 // pred_region
    _
  $region17: #{hunet_forward.21} parent=0 // pred_fallthru
    _
  // Predicated region
  $region18: #{hunet_forward.21} parent=0 // pred_check
    _
  $region19: #{hunet_forward.21} parent=0 // pred_check_branch
    %21 = sbr.rel (0) target = $region21
  $region20: #{hunet_forward.21} parent=0 // pred_region
    _
  $region21: #{hunet_forward.21} parent=0 // pred_fallthru
    _
  // Predicated region
  $region22: #{hunet_forward.21} parent=0 // pred_check
    _
  $region23: #{hunet_forward.21} parent=0 // pred_check_branch
    %23 = sbr.rel (0) target = $region25
  $region24: #{hunet_forward.21} parent=0 // pred_region
    _
  $region25: #{hunet_forward.21} parent=0 // pred_fallthru
    _
  // Predicated region
  $region26: #{hunet_forward.21} parent=0 // pred_check
    _
  $region27: #{hunet_forward.21} parent=0 // pred_check_branch
    %25 = sbr.rel (0) target = $region29
  $region28: #{hunet_forward.21} parent=0 // pred_region
    _
  $region29: #{hunet_forward.21} parent=0 // pred_fallthru
    _
  %v27 = vld [vmem:[%s0] sm:$0xff]
  %v28 = vld [vmem:[%s0 + $0x8] sm:$0xff]
  %v29 = vld [vmem:[%s0 + $0x10] sm:$0xff]
  %v30 = vld [vmem:[%s0 + $0x18] sm:$0xff]
  %v31 = vld [vmem:[%s0 + $0x20] sm:$0xff]
  %v32 = vld [vmem:[%s0 + $0x28] sm:$0xff]
  %v33 = vld [vmem:[%s0 + $0x30] sm:$0xff]
  %v34 = vld [vmem:[%s0 + $0x38] sm:$0xff]
  %v35 = vld [vmem:[%s0 + $0x40] sm:$0xff]
  %v36 = vld [vmem:[%s0 + $0x48] sm:$0xff]
  %v37 = vld [vmem:[%s0 + $0x50] sm:$0xff]
  %v38 = vld [vmem:[%s0 + $0x58] sm:$0xff]
  %v39 = vld [vmem:[%s0 + $0x60] sm:$0xff]
  %v40 = vld [vmem:[%s0 + $0x68] sm:$0xff]
  %v41 = vld [vmem:[%s0 + $0x70] sm:$0xff]
  %v42 = vld [vmem:[%s0 + $0x78] sm:$0xff]
  %v43 = vpack.c.bf16 %v28, %v27
  %v44 = vpack.c.bf16 %v30, %v29
  %v45 = vpack.c.bf16 %v32, %v31
  %v46 = vpack.c.bf16 %v34, %v33
  %v47 = vpack.c.bf16 %v36, %v35
  %v48 = vpack.c.bf16 %v38, %v37
  %v49 = vpack.c.bf16 %v40, %v39
  %v50 = vpack.c.bf16 %v42, %v41
  %v51 = vld [vmem:[%s1] sm:$0xf]
  %v52 = vld [vmem:[%s1 + $0x4] sm:$0xf]
  %v53 = vld [vmem:[%s2] sm:$0x1]
  %v55 = vperm.slane %v53, 0
  %v59 = vunpack.c.l.b16 %v51
  %v60 = vunpack.c.l.b16 %v52
  %v61 = vpack.c.b16 %v60, %v59
  %vm63 = vcmask 130048
  %v65 = vsel %vm63, %v43, 0
  %v68 = vsel %vm63, %v44, 0
  %v71 = vsel %vm63, %v45, 0
  %v74 = vsel %vm63, %v46, 0
  %v77 = vsel %vm63, %v47, 0
  %v80 = vsel %vm63, %v48, 0
  %v83 = vsel %vm63, %v49, 0
  %v86 = vsel %vm63, %v50, 0
  %88 = vmatpush.bf16.msra.mxu0 0
  %89 = vmatpush.bf16.msra.mxu0 0
  %90 = vmatpush.bf16.msra.mxu0 0
  %91 = vmatpush.bf16.msra.mxu0 0
  %92 = vmatpush.bf16.msra.mxu0 0
  %93 = vmatpush.bf16.msra.mxu0 0
  %94 = vmatpush.bf16.msra.mxu0 0
  %95 = vmatpush.bf16.msra.mxu0 %v61
  %96 = vmatmul.bf16.gmra.mxu0 %v65
  %v97 = vpop.f32.mrf.mxu0
  %v98 = vadd.f32 %v55, %v97
  %v99 = vpop.f32.mrf.mxu0
  %v100 = vadd.f32 %v55, %v99
  %101 = vmatmul.bf16.gmra.mxu0 %v68
  %v102 = vpop.f32.mrf.mxu0
  %v103 = vadd.f32 %v55, %v102
  %v104 = vpop.f32.mrf.mxu0
  %v105 = vadd.f32 %v55, %v104
  %106 = vmatmul.bf16.gmra.mxu0 %v71
  %v107 = vpop.f32.mrf.mxu0
  %v108 = vadd.f32 %v55, %v107
  %v109 = vpop.f32.mrf.mxu0
  %v110 = vadd.f32 %v55, %v109
  %111 = vmatmul.bf16.gmra.mxu0 %v74
  %v112 = vpop.f32.mrf.mxu0
  %v113 = vadd.f32 %v55, %v112
  %v114 = vpop.f32.mrf.mxu0
  %v115 = vadd.f32 %v55, %v114
  %116 = vmatmul.bf16.gmra.mxu0 %v77
  %v117 = vpop.f32.mrf.mxu0
  %v118 = vadd.f32 %v55, %v117
  %v119 = vpop.f32.mrf.mxu0
  %v120 = vadd.f32 %v55, %v119
  %121 = vmatmul.bf16.gmra.mxu0 %v80
  %v122 = vpop.f32.mrf.mxu0
  %v123 = vadd.f32 %v55, %v122
  %v124 = vpop.f32.mrf.mxu0
  %v125 = vadd.f32 %v55, %v124
  %126 = vmatmul.bf16.gmra.mxu0 %v83
  %v127 = vpop.f32.mrf.mxu0
  %v128 = vadd.f32 %v55, %v127
  %v129 = vpop.f32.mrf.mxu0
  %v130 = vadd.f32 %v55, %v129
  %131 = vmatmul.bf16.gmra.mxu0 %v86
  %v132 = vpop.f32.mrf.mxu0
  %v133 = vadd.f32 %v55, %v132
  %v134 = vpop.f32.mrf.mxu0
  %v135 = vadd.f32 %v55, %v134
  %136 = vdwg.mxu0
  %v137 = vld [vmem:[%s3] sm:$0xf]
  %v138 = vld [vmem:[%s3 + $0x4] sm:$0xf]
  %v139 = vld [vmem:[%s4] sm:$0x1]
  %v141 = vperm.slane %v139, 0
  %v145 = vunpack.c.l.b16 %v137
  %v146 = vunpack.c.l.b16 %v138
  %v147 = vpack.c.b16 %v146, %v145
  %149 = vmatpush.bf16.msra.mxu0 0
  %150 = vmatpush.bf16.msra.mxu0 0
  %151 = vmatpush.bf16.msra.mxu0 0
  %152 = vmatpush.bf16.msra.mxu0 0
  %153 = vmatpush.bf16.msra.mxu0 0
  %154 = vmatpush.bf16.msra.mxu0 0
  %155 = vmatpush.bf16.msra.mxu0 0
  %156 = vmatpush.bf16.msra.mxu0 %v147
  %157 = vmatmul.bf16.gmra.mxu0 %v65
  %v158 = vpop.f32.mrf.mxu0
  %v159 = vadd.f32 %v141, %v158
  %v160 = vpop.f32.mrf.mxu0
  %v161 = vadd.f32 %v141, %v160
  %162 = vmatmul.bf16.gmra.mxu0 %v68
  %v163 = vpop.f32.mrf.mxu0
  %v164 = vadd.f32 %v141, %v163
  %v165 = vpop.f32.mrf.mxu0
  %v166 = vadd.f32 %v141, %v165
  %167 = vmatmul.bf16.gmra.mxu0 %v71
  %v168 = vpop.f32.mrf.mxu0
  %v169 = vadd.f32 %v141, %v168
  %v170 = vpop.f32.mrf.mxu0
  %v171 = vadd.f32 %v141, %v170
  %172 = vmatmul.bf16.gmra.mxu0 %v74
  %v173 = vpop.f32.mrf.mxu0
  %v174 = vadd.f32 %v141, %v173
  %v175 = vpop.f32.mrf.mxu0
  %v176 = vadd.f32 %v141, %v175
  %177 = vmatmul.bf16.gmra.mxu0 %v77
  %v178 = vpop.f32.mrf.mxu0
  %v179 = vadd.f32 %v141, %v178
  %v180 = vpop.f32.mrf.mxu0
  %v181 = vadd.f32 %v141, %v180
  %182 = vmatmul.bf16.gmra.mxu0 %v80
  %v183 = vpop.f32.mrf.mxu0
  %v184 = vadd.f32 %v141, %v183
  %v185 = vpop.f32.mrf.mxu0
  %v186 = vadd.f32 %v141, %v185
  %187 = vmatmul.bf16.gmra.mxu0 %v83
  %v188 = vpop.f32.mrf.mxu0
  %v189 = vadd.f32 %v141, %v188
  %v190 = vpop.f32.mrf.mxu0
  %v191 = vadd.f32 %v141, %v190
  %192 = vmatmul.bf16.gmra.mxu0 %v86
  %v193 = vpop.f32.mrf.mxu0
  %v194 = vadd.f32 %v141, %v193
  %v195 = vpop.f32.mrf.mxu0
  %v196 = vadd.f32 %v141, %v195
  %197 = vdwg.mxu0
  %v198 = vsub.f32 0.0, %v159
  %v199 = vsub.f32 0.0, %v161
  %v200 = vsub.f32 0.0, %v164
  %v201 = vsub.f32 0.0, %v166
  %v202 = vsub.f32 0.0, %v169
  %v203 = vsub.f32 0.0, %v171
  %v204 = vsub.f32 0.0, %v174
  %v205 = vsub.f32 0.0, %v176
  %v206 = vsub.f32 0.0, %v179
  %v207 = vsub.f32 0.0, %v181
  %v208 = vsub.f32 0.0, %v184
  %v209 = vsub.f32 0.0, %v186
  %v210 = vsub.f32 0.0, %v189
  %v211 = vsub.f32 0.0, %v191
  %v212 = vsub.f32 0.0, %v194
  %v213 = vsub.f32 0.0, %v196
  %v214 = vmul.f32 %v198, 1.442695
  %v215 = vpow.pop %v214
  %v216 = vmul.f32 %v199, 1.442695
  %v217 = vpow.pop %v216
  %v218 = vmul.f32 %v200, 1.442695
  %v219 = vpow.pop %v218
  %v220 = vmul.f32 %v201, 1.442695
  %v221 = vpow.pop %v220
  %v222 = vmul.f32 %v202, 1.442695
  %v223 = vpow.pop %v222
  %v224 = vmul.f32 %v203, 1.442695
  %v225 = vpow.pop %v224
  %v226 = vmul.f32 %v204, 1.442695
  %v227 = vpow.pop %v226
  %v228 = vmul.f32 %v205, 1.442695
  %v229 = vpow.pop %v228
  %v230 = vmul.f32 %v206, 1.442695
  %v231 = vpow.pop %v230
  %v232 = vmul.f32 %v207, 1.442695
  %v233 = vpow.pop %v232
  %v234 = vmul.f32 %v208, 1.442695
  %v235 = vpow.pop %v234
  %v236 = vmul.f32 %v209, 1.442695
  %v237 = vpow.pop %v236
  %v238 = vmul.f32 %v210, 1.442695
  %v239 = vpow.pop %v238
  %v240 = vmul.f32 %v211, 1.442695
  %v241 = vpow.pop %v240
  %v242 = vmul.f32 %v212, 1.442695
  %v243 = vpow.pop %v242
  %v244 = vmul.f32 %v213, 1.442695
  %v245 = vpow.pop %v244
  %v246 = vadd.f32 %v215, 1.0
  %v247 = vadd.f32 %v217, 1.0
  %v248 = vadd.f32 %v219, 1.0
  %v249 = vadd.f32 %v221, 1.0
  %v250 = vadd.f32 %v223, 1.0
  %v251 = vadd.f32 %v225, 1.0
  %v252 = vadd.f32 %v227, 1.0
  %v253 = vadd.f32 %v229, 1.0
  %v254 = vadd.f32 %v231, 1.0
  %v255 = vadd.f32 %v233, 1.0
  %v256 = vadd.f32 %v235, 1.0
  %v257 = vadd.f32 %v237, 1.0
  %v258 = vadd.f32 %v239, 1.0
  %v259 = vadd.f32 %v241, 1.0
  %v260 = vadd.f32 %v243, 1.0
  %v261 = vadd.f32 %v245, 1.0
  %v262 = vrcp.pop %v246
  %v263 = vmul.f32 %v246, %v262
  %v264 = vsub.f32 1.0, %v263
  %v265 = vmul.f32 %v262, %v264
  %v266 = vadd.f32 %v262, %v265
  %vm267 = vweird.f32 %v246
  %vm268 = vweird.f32 %v262
  %vm269 = vmor %vm267, %vm268
  %v270 = vsel %vm269, %v262, %v266
  %v271 = vand.u32 2147483647, %v246
  %vm272 = vcmp.eq.f32.partialorder %v271, 8.507059e+37
  %v273 = vand.u32 %v246, 2147483648
  %v274 = vor.u32 1.1754944e-38, %v273
  %v275 = vsel %vm272, %v274, %v270
  %v276 = vmul.f32 1.0, %v275
  %v277 = vrcp.pop %v247
  %v278 = vmul.f32 %v247, %v277
  %v279 = vsub.f32 1.0, %v278
  %v280 = vmul.f32 %v277, %v279
  %v281 = vadd.f32 %v277, %v280
  %vm282 = vweird.f32 %v247
  %vm283 = vweird.f32 %v277
  %vm284 = vmor %vm282, %vm283
  %v285 = vsel %vm284, %v277, %v281
  %v286 = vand.u32 2147483647, %v247
  %vm287 = vcmp.eq.f32.partialorder %v286, 8.507059e+37
  %v288 = vand.u32 %v247, 2147483648
  %v289 = vor.u32 1.1754944e-38, %v288
  %v290 = vsel %vm287, %v289, %v285
  %v291 = vmul.f32 1.0, %v290
  %v292 = vrcp.pop %v248
  %v293 = vmul.f32 %v248, %v292
  %v294 = vsub.f32 1.0, %v293
  %v295 = vmul.f32 %v292, %v294
  %v296 = vadd.f32 %v292, %v295
  %vm297 = vweird.f32 %v248
  %vm298 = vweird.f32 %v292
  %vm299 = vmor %vm297, %vm298
  %v300 = vsel %vm299, %v292, %v296
  %v301 = vand.u32 2147483647, %v248
  %vm302 = vcmp.eq.f32.partialorder %v301, 8.507059e+37
  %v303 = vand.u32 %v248, 2147483648
  %v304 = vor.u32 1.1754944e-38, %v303
  %v305 = vsel %vm302, %v304, %v300
  %v306 = vmul.f32 1.0, %v305
  %v307 = vrcp.pop %v249
  %v308 = vmul.f32 %v249, %v307
  %v309 = vsub.f32 1.0, %v308
  %v310 = vmul.f32 %v307, %v309
  %v311 = vadd.f32 %v307, %v310
  %vm312 = vweird.f32 %v249
  %vm313 = vweird.f32 %v307
  %vm314 = vmor %vm312, %vm313
  %v315 = vsel %vm314, %v307, %v311
  %v316 = vand.u32 2147483647, %v249
  %vm317 = vcmp.eq.f32.partialorder %v316, 8.507059e+37
  %v318 = vand.u32 %v249, 2147483648
  %v319 = vor.u32 1.1754944e-38, %v318
  %v320 = vsel %vm317, %v319, %v315
  %v321 = vmul.f32 1.0, %v320
  %v322 = vrcp.pop %v250
  %v323 = vmul.f32 %v250, %v322
  %v324 = vsub.f32 1.0, %v323
  %v325 = vmul.f32 %v322, %v324
  %v326 = vadd.f32 %v322, %v325
  %vm327 = vweird.f32 %v250
  %vm328 = vweird.f32 %v322
  %vm329 = vmor %vm327, %vm328
  %v330 = vsel %vm329, %v322, %v326
  %v331 = vand.u32 2147483647, %v250
  %vm332 = vcmp.eq.f32.partialorder %v331, 8.507059e+37
  %v333 = vand.u32 %v250, 2147483648
  %v334 = vor.u32 1.1754944e-38, %v333
  %v335 = vsel %vm332, %v334, %v330
  %v336 = vmul.f32 1.0, %v335
  %v337 = vrcp.pop %v251
  %v338 = vmul.f32 %v251, %v337
  %v339 = vsub.f32 1.0, %v338
  %v340 = vmul.f32 %v337, %v339
  %v341 = vadd.f32 %v337, %v340
  %vm342 = vweird.f32 %v251
  %vm343 = vweird.f32 %v337
  %vm344 = vmor %vm342, %vm343
  %v345 = vsel %vm344, %v337, %v341
  %v346 = vand.u32 2147483647, %v251
  %vm347 = vcmp.eq.f32.partialorder %v346, 8.507059e+37
  %v348 = vand.u32 %v251, 2147483648
  %v349 = vor.u32 1.1754944e-38, %v348
  %v350 = vsel %vm347, %v349, %v345
  %v351 = vmul.f32 1.0, %v350
  %v352 = vrcp.pop %v252
  %v353 = vmul.f32 %v252, %v352
  %v354 = vsub.f32 1.0, %v353
  %v355 = vmul.f32 %v352, %v354
  %v356 = vadd.f32 %v352, %v355
  %vm357 = vweird.f32 %v252
  %vm358 = vweird.f32 %v352
  %vm359 = vmor %vm357, %vm358
  %v360 = vsel %vm359, %v352, %v356
  %v361 = vand.u32 2147483647, %v252
  %vm362 = vcmp.eq.f32.partialorder %v361, 8.507059e+37
  %v363 = vand.u32 %v252, 2147483648
  %v364 = vor.u32 1.1754944e-38, %v363
  %v365 = vsel %vm362, %v364, %v360
  %v366 = vmul.f32 1.0, %v365
  %v367 = vrcp.pop %v253
  %v368 = vmul.f32 %v253, %v367
  %v369 = vsub.f32 1.0, %v368
  %v370 = vmul.f32 %v367, %v369
  %v371 = vadd.f32 %v367, %v370
  %vm372 = vweird.f32 %v253
  %vm373 = vweird.f32 %v367
  %vm374 = vmor %vm372, %vm373
  %v375 = vsel %vm374, %v367, %v371
  %v376 = vand.u32 2147483647, %v253
  %vm377 = vcmp.eq.f32.partialorder %v376, 8.507059e+37
  %v378 = vand.u32 %v253, 2147483648
  %v379 = vor.u32 1.1754944e-38, %v378
  %v380 = vsel %vm377, %v379, %v375
  %v381 = vmul.f32 1.0, %v380
  %v382 = vrcp.pop %v254
  %v383 = vmul.f32 %v254, %v382
  %v384 = vsub.f32 1.0, %v383
  %v385 = vmul.f32 %v382, %v384
  %v386 = vadd.f32 %v382, %v385
  %vm387 = vweird.f32 %v254
  %vm388 = vweird.f32 %v382
  %vm389 = vmor %vm387, %vm388
  %v390 = vsel %vm389, %v382, %v386
  %v391 = vand.u32 2147483647, %v254
  %vm392 = vcmp.eq.f32.partialorder %v391, 8.507059e+37
  %v393 = vand.u32 %v254, 2147483648
  %v394 = vor.u32 1.1754944e-38, %v393
  %v395 = vsel %vm392, %v394, %v390
  %v396 = vmul.f32 1.0, %v395
  %v397 = vrcp.pop %v255
  %v398 = vmul.f32 %v255, %v397
  %v399 = vsub.f32 1.0, %v398
  %v400 = vmul.f32 %v397, %v399
  %v401 = vadd.f32 %v397, %v400
  %vm402 = vweird.f32 %v255
  %vm403 = vweird.f32 %v397
  %vm404 = vmor %vm402, %vm403
  %v405 = vsel %vm404, %v397, %v401
  %v406 = vand.u32 2147483647, %v255
  %vm407 = vcmp.eq.f32.partialorder %v406, 8.507059e+37
  %v408 = vand.u32 %v255, 2147483648
  %v409 = vor.u32 1.1754944e-38, %v408
  %v410 = vsel %vm407, %v409, %v405
  %v411 = vmul.f32 1.0, %v410
  %v412 = vrcp.pop %v256
  %v413 = vmul.f32 %v256, %v412
  %v414 = vsub.f32 1.0, %v413
  %v415 = vmul.f32 %v412, %v414
  %v416 = vadd.f32 %v412, %v415
  %vm417 = vweird.f32 %v256
  %vm418 = vweird.f32 %v412
  %vm419 = vmor %vm417, %vm418
  %v420 = vsel %vm419, %v412, %v416
  %v421 = vand.u32 2147483647, %v256
  %vm422 = vcmp.eq.f32.partialorder %v421, 8.507059e+37
  %v423 = vand.u32 %v256, 2147483648
  %v424 = vor.u32 1.1754944e-38, %v423
  %v425 = vsel %vm422, %v424, %v420
  %v426 = vmul.f32 1.0, %v425
  %v427 = vrcp.pop %v257
  %v428 = vmul.f32 %v257, %v427
  %v429 = vsub.f32 1.0, %v428
  %v430 = vmul.f32 %v427, %v429
  %v431 = vadd.f32 %v427, %v430
  %vm432 = vweird.f32 %v257
  %vm433 = vweird.f32 %v427
  %vm434 = vmor %vm432, %vm433
  %v435 = vsel %vm434, %v427, %v431
  %v436 = vand.u32 2147483647, %v257
  %vm437 = vcmp.eq.f32.partialorder %v436, 8.507059e+37
  %v438 = vand.u32 %v257, 2147483648
  %v439 = vor.u32 1.1754944e-38, %v438
  %v440 = vsel %vm437, %v439, %v435
  %v441 = vmul.f32 1.0, %v440
  %v442 = vrcp.pop %v258
  %v443 = vmul.f32 %v258, %v442
  %v444 = vsub.f32 1.0, %v443
  %v445 = vmul.f32 %v442, %v444
  %v446 = vadd.f32 %v442, %v445
  %vm447 = vweird.f32 %v258
  %vm448 = vweird.f32 %v442
  %vm449 = vmor %vm447, %vm448
  %v450 = vsel %vm449, %v442, %v446
  %v451 = vand.u32 2147483647, %v258
  %vm452 = vcmp.eq.f32.partialorder %v451, 8.507059e+37
  %v453 = vand.u32 %v258, 2147483648
  %v454 = vor.u32 1.1754944e-38, %v453
  %v455 = vsel %vm452, %v454, %v450
  %v456 = vmul.f32 1.0, %v455
  %v457 = vrcp.pop %v259
  %v458 = vmul.f32 %v259, %v457
  %v459 = vsub.f32 1.0, %v458
  %v460 = vmul.f32 %v457, %v459
  %v461 = vadd.f32 %v457, %v460
  %vm462 = vweird.f32 %v259
  %vm463 = vweird.f32 %v457
  %vm464 = vmor %vm462, %vm463
  %v465 = vsel %vm464, %v457, %v461
  %v466 = vand.u32 2147483647, %v259
  %vm467 = vcmp.eq.f32.partialorder %v466, 8.507059e+37
  %v468 = vand.u32 %v259, 2147483648
  %v469 = vor.u32 1.1754944e-38, %v468
  %v470 = vsel %vm467, %v469, %v465
  %v471 = vmul.f32 1.0, %v470
  %v472 = vrcp.pop %v260
  %v473 = vmul.f32 %v260, %v472
  %v474 = vsub.f32 1.0, %v473
  %v475 = vmul.f32 %v472, %v474
  %v476 = vadd.f32 %v472, %v475
  %vm477 = vweird.f32 %v260
  %vm478 = vweird.f32 %v472
  %vm479 = vmor %vm477, %vm478
  %v480 = vsel %vm479, %v472, %v476
  %v481 = vand.u32 2147483647, %v260
  %vm482 = vcmp.eq.f32.partialorder %v481, 8.507059e+37
  %v483 = vand.u32 %v260, 2147483648
  %v484 = vor.u32 1.1754944e-38, %v483
  %v485 = vsel %vm482, %v484, %v480
  %v486 = vmul.f32 1.0, %v485
  %v487 = vrcp.pop %v261
  %v488 = vmul.f32 %v261, %v487
  %v489 = vsub.f32 1.0, %v488
  %v490 = vmul.f32 %v487, %v489
  %v491 = vadd.f32 %v487, %v490
  %vm492 = vweird.f32 %v261
  %vm493 = vweird.f32 %v487
  %vm494 = vmor %vm492, %vm493
  %v495 = vsel %vm494, %v487, %v491
  %v496 = vand.u32 2147483647, %v261
  %vm497 = vcmp.eq.f32.partialorder %v496, 8.507059e+37
  %v498 = vand.u32 %v261, 2147483648
  %v499 = vor.u32 1.1754944e-38, %v498
  %v500 = vsel %vm497, %v499, %v495
  %v501 = vmul.f32 1.0, %v500
  %v502 = vmul.f32 %v98, %v276
  %v503 = vmul.f32 %v100, %v291
  %v504 = vmul.f32 %v103, %v306
  %v505 = vmul.f32 %v105, %v321
  %v506 = vmul.f32 %v108, %v336
  %v507 = vmul.f32 %v110, %v351
  %v508 = vmul.f32 %v113, %v366
  %v509 = vmul.f32 %v115, %v381
  %v510 = vmul.f32 %v118, %v396
  %v511 = vmul.f32 %v120, %v411
  %v512 = vmul.f32 %v123, %v426
  %v513 = vmul.f32 %v125, %v441
  %v514 = vmul.f32 %v128, %v456
  %v515 = vmul.f32 %v130, %v471
  %v516 = vmul.f32 %v133, %v486
  %v517 = vmul.f32 %v135, %v501
  %v518 = vpack.c.bf16 %v503, %v502
  %v519 = vpack.c.bf16 %v505, %v504
  %v520 = vpack.c.bf16 %v507, %v506
  %v521 = vpack.c.bf16 %v509, %v508
  %v522 = vpack.c.bf16 %v511, %v510
  %v523 = vpack.c.bf16 %v513, %v512
  %v524 = vpack.c.bf16 %v515, %v514
  %v525 = vpack.c.bf16 %v517, %v516
  %v526 = vld [vmem:[%s5] sm:$0xf]
  %v527 = vld [vmem:[%s5 + $0x4] sm:$0xf]
  %v528 = vld [vmem:[%s5 + $0x8] sm:$0xf]
  %v529 = vld [vmem:[%s5 + $0xc] sm:$0xf]
  %v530 = vld [vmem:[%s6] sm:$0x1]
  %v532 = vperm.slane %v530, 0
  %v538 = vunpack.c.l.b16 %v526
  %v539 = vunpack.c.l.b16 %v527
  %v540 = vunpack.c.l.b16 %v528
  %v541 = vunpack.c.l.b16 %v529
  %v542 = vpack.c.b16 %v539, %v538
  %v543 = vpack.c.b16 %v541, %v540
  %vm546 = vcmask 261120
  %v548 = vsel %vm546, %v518, 0
  %v551 = vsel %vm546, %v519, 0
  %v554 = vsel %vm546, %v520, 0
  %v557 = vsel %vm546, %v521, 0
  %v560 = vsel %vm546, %v522, 0
  %v563 = vsel %vm546, %v523, 0
  %v566 = vsel %vm546, %v524, 0
  %v569 = vsel %vm546, %v525, 0
  %571 = vmatpush.bf16.msra.mxu0 0
  %572 = vmatpush.bf16.msra.mxu0 0
  %573 = vmatpush.bf16.msra.mxu0 0
  %574 = vmatpush.bf16.msra.mxu0 0
  %575 = vmatpush.bf16.msra.mxu0 0
  %576 = vmatpush.bf16.msra.mxu0 0
  %577 = vmatpush.bf16.msra.mxu0 %v543
  %578 = vmatpush.bf16.msra.mxu0 %v542
  %579 = vmatmul.bf16.gmra.mxu0 %v548
  %v580 = vpop.f32.mrf.mxu0
  %v581 = vadd.f32 %v532, %v580
  %v582 = vpop.f32.mrf.mxu0
  %v583 = vadd.f32 %v532, %v582
  %584 = vmatmul.bf16.gmra.mxu0 %v551
  %v585 = vpop.f32.mrf.mxu0
  %v586 = vadd.f32 %v532, %v585
  %v587 = vpop.f32.mrf.mxu0
  %v588 = vadd.f32 %v532, %v587
  %589 = vmatmul.bf16.gmra.mxu0 %v554
  %v590 = vpop.f32.mrf.mxu0
  %v591 = vadd.f32 %v532, %v590
  %v592 = vpop.f32.mrf.mxu0
  %v593 = vadd.f32 %v532, %v592
  %594 = vmatmul.bf16.gmra.mxu0 %v557
  %v595 = vpop.f32.mrf.mxu0
  %v596 = vadd.f32 %v532, %v595
  %v597 = vpop.f32.mrf.mxu0
  %v598 = vadd.f32 %v532, %v597
  %599 = vmatmul.bf16.gmra.mxu0 %v560
  %v600 = vpop.f32.mrf.mxu0
  %v601 = vadd.f32 %v532, %v600
  %v602 = vpop.f32.mrf.mxu0
  %v603 = vadd.f32 %v532, %v602
  %604 = vmatmul.bf16.gmra.mxu0 %v563
  %v605 = vpop.f32.mrf.mxu0
  %v606 = vadd.f32 %v532, %v605
  %v607 = vpop.f32.mrf.mxu0
  %v608 = vadd.f32 %v532, %v607
  %609 = vmatmul.bf16.gmra.mxu0 %v566
  %v610 = vpop.f32.mrf.mxu0
  %v611 = vadd.f32 %v532, %v610
  %v612 = vpop.f32.mrf.mxu0
  %v613 = vadd.f32 %v532, %v612
  %614 = vmatmul.bf16.gmra.mxu0 %v569
  %v615 = vpop.f32.mrf.mxu0
  %v616 = vadd.f32 %v532, %v615
  %v617 = vpop.f32.mrf.mxu0
  %v618 = vadd.f32 %v532, %v617
  %619 = vdwg.mxu0
  %620 = vst.msk [vmem:[%s7] sm:$0xff] %vm63, %v581
  %621 = vst.msk [vmem:[%s7 + $0x8] sm:$0xff] %vm63, %v583
  %622 = vst.msk [vmem:[%s7 + $0x10] sm:$0xff] %vm63, %v586
  %623 = vst.msk [vmem:[%s7 + $0x18] sm:$0xff] %vm63, %v588
  %624 = vst.msk [vmem:[%s7 + $0x20] sm:$0xff] %vm63, %v591
  %625 = vst.msk [vmem:[%s7 + $0x28] sm:$0xff] %vm63, %v593
  %626 = vst.msk [vmem:[%s7 + $0x30] sm:$0xff] %vm63, %v596
  %627 = vst.msk [vmem:[%s7 + $0x38] sm:$0xff] %vm63, %v598
  %628 = vst.msk [vmem:[%s7 + $0x40] sm:$0xff] %vm63, %v601
  %629 = vst.msk [vmem:[%s7 + $0x48] sm:$0xff] %vm63, %v603
  %630 = vst.msk [vmem:[%s7 + $0x50] sm:$0xff] %vm63, %v606
  %631 = vst.msk [vmem:[%s7 + $0x58] sm:$0xff] %vm63, %v608
  %632 = vst.msk [vmem:[%s7 + $0x60] sm:$0xff] %vm63, %v611
  %633 = vst.msk [vmem:[%s7 + $0x68] sm:$0xff] %vm63, %v613
  %634 = vst.msk [vmem:[%s7 + $0x70] sm:$0xff] %vm63, %v616
  %635 = vst.msk [vmem:[%s7 + $0x78] sm:$0xff] %vm63, %v618
  // Predicated region
  $region30: #{hunet_forward.21} parent=0 // pred_check
    _
  $region31: #{hunet_forward.21} parent=0 // pred_check_branch
    %637 = sbr.rel (0) target = $region33
  $region32: #{hunet_forward.21} parent=0 // pred_region
    _
  $region33: #{hunet_forward.21} parent=0 // pred_fallthru
    _
  // Predicated region
  $region34: #{hunet_forward.21} parent=0 // pred_check
    _
  $region35: #{hunet_forward.21} parent=0 // pred_check_branch
    %639 = sbr.rel (0) target = $region37
  $region36: #{hunet_forward.21} parent=0 // pred_region
    _
  $region37: #{hunet_forward.21} parent=0 // pred_fallthru
    _

// kernel: hunet_forward.27
$region0: #{hunet_forward.27}
  #allocation0 [shape = 'u32[]', space=smem, size = 0x4, offset = 0x4, fixed_abs, tag = 'smem constant byte address 0x4 - core index']
  #allocation1 [shape = 'u32[72,128]{1,0:T(1,128)}', space=vmem, size = 0x9000, scoped, tag = 'internal scratch']
  %s0 = inlined_call_operand.vmem [shape: f32[16,512], index: 0, kind: input, shape index: {}]
  %s1 = inlined_call_operand.vmem [shape: bf16[512,128], index: 1, kind: input, shape index: {}]
  %s2 = inlined_call_operand.vmem [shape: bf16[512,128], index: 2, kind: input, shape index: {}]
  %s3 = inlined_call_operand.vmem [shape: bf16[512,128], index: 3, kind: input, shape index: {}]
  %s4 = inlined_call_operand.vmem [shape: f32[1,128], index: 4, kind: input, shape index: {}]
  %s5 = inlined_call_operand.vmem [shape: f32[16,128], index: 5, kind: output, shape index: {}]
  %s6 = sld [smem:[#allocation0]]
  $region30: #{hunet_forward.27} parent=0
    _
  %s8 = ssub.s32 1, %s6
  %s9 = scalar_select 0, %s8, %s6
  // Predicated region
  $region2: #{hunet_forward.27} parent=0 // pred_check
    _
  $region3: #{hunet_forward.27} parent=0 // pred_check_branch
    %11 = sbr.rel (0) target = $region5
  $region4: #{hunet_forward.27} parent=0 // pred_region
    _
  $region5: #{hunet_forward.27} parent=0 // pred_fallthru
    _
  // Predicated region
  $region6: #{hunet_forward.27} parent=0 // pred_check
    _
  $region7: #{hunet_forward.27} parent=0 // pred_check_branch
    %13 = sbr.rel (0) target = $region9
  $region8: #{hunet_forward.27} parent=0 // pred_region
    _
  $region9: #{hunet_forward.27} parent=0 // pred_fallthru
    _
  // Predicated region
  $region10: #{hunet_forward.27} parent=0 // pred_check
    _
  $region11: #{hunet_forward.27} parent=0 // pred_check_branch
    %15 = sbr.rel (0) target = $region13
  $region12: #{hunet_forward.27} parent=0 // pred_region
    _
  $region13: #{hunet_forward.27} parent=0 // pred_fallthru
    _
  // Predicated region
  $region14: #{hunet_forward.27} parent=0 // pred_check
    _
  $region15: #{hunet_forward.27} parent=0 // pred_check_branch
    %17 = sbr.rel (0) target = $region17
  $region16: #{hunet_forward.27} parent=0 // pred_region
    _
  $region17: #{hunet_forward.27} parent=0 // pred_fallthru
    _
  // Predicated region
  $region18: #{hunet_forward.27} parent=0 // pred_check
    _
  $region19: #{hunet_forward.27} parent=0 // pred_check_branch
    %19 = sbr.rel (0) target = $region21
  $region20: #{hunet_forward.27} parent=0 // pred_region
    _
  $region21: #{hunet_forward.27} parent=0 // pred_fallthru
    _
  %v20 = vld [vmem:[%s0] sm:$0xff]
  %v21 = vld [vmem:[%s0 + $0x8] sm:$0xff]
  %v22 = vld [vmem:[%s0 + $0x10] sm:$0xff]
  %v23 = vld [vmem:[%s0 + $0x18] sm:$0xff]
  %v24 = vld [vmem:[%s0 + $0x20] sm:$0xff]
  %v25 = vld [vmem:[%s0 + $0x28] sm:$0xff]
  %v26 = vld [vmem:[%s0 + $0x30] sm:$0xff]
  %v27 = vld [vmem:[%s0 + $0x38] sm:$0xff]
  %v28 = vlaneseq
  %v29 = vshrl.u32 %v28, 7
  %v30 = vadd.s32 %v29, 8
  %v31 = vand.u32 %v29, 7
  %v32 = vand.u32 %v30, 7
  %vm33 = vcmp.gt.s32.totalorder %v31, 0
  %vm34 = vcmp.gt.s32.totalorder %v32, 0
  %v35 = vrot.slane %v20, 7
  %v36 = vrot.slane %v21, 7
  %v37 = vrot.slane %v22, 7
  %v38 = vrot.slane %v23, 7
  %v39 = vrot.slane %v24, 7
  %v40 = vrot.slane %v25, 7
  %v41 = vrot.slane %v26, 7
  %v42 = vrot.slane %v27, 7
  %vm43 = vcmp.lt.s32.totalorder %v29, 1
  %v44 = vsel %vm43, %v35, %v39
  %v45 = vsel %vm43, %v36, %v40
  %v46 = vsel %vm43, %v37, %v41
  %v47 = vsel %vm43, %v38, %v42
  %v48 = vsel %vm43, %v39, %v35
  %v49 = vsel %vm43, %v40, %v36
  %v50 = vsel %vm43, %v41, %v37
  %v51 = vsel %vm43, %v42, %v38
  %v52 = vsel %vm33, %v48, 0.0
  %v53 = vsel %vm33, %v49, 0.0
  %v54 = vsel %vm33, %v50, 0.0
  %v55 = vsel %vm33, %v51, 0.0
  %v56 = vsel %vm34, %v44, 0.0
  %v57 = vsel %vm34, %v45, 0.0
  %v58 = vsel %vm34, %v46, 0.0
  %v59 = vsel %vm34, %v47, 0.0
  %vm60 = vcmp.lt.s32.totalorder %v31, 7
  %vm61 = vcmp.lt.s32.totalorder %v32, 7
  %v62 = vrot.slane %v20, 1
  %v63 = vrot.slane %v21, 1
  %v64 = vrot.slane %v22, 1
  %v65 = vrot.slane %v23, 1
  %v66 = vrot.slane %v24, 1
  %v67 = vrot.slane %v25, 1
  %v68 = vrot.slane %v26, 1
  %v69 = vrot.slane %v27, 1
  %vm70 = vcmp.lt.s32.totalorder %v29, 7
  %v71 = vsel %vm70, %v62, %v66
  %v72 = vsel %vm70, %v63, %v67
  %v73 = vsel %vm70, %v64, %v68
  %v74 = vsel %vm70, %v65, %v69
  %v75 = vsel %vm70, %v66, %v62
  %v76 = vsel %vm70, %v67, %v63
  %v77 = vsel %vm70, %v68, %v64
  %v78 = vsel %vm70, %v69, %v65
  %v79 = vsel %vm60, %v71, 0.0
  %v80 = vsel %vm60, %v72, 0.0
  %v81 = vsel %vm60, %v73, 0.0
  %v82 = vsel %vm60, %v74, 0.0
  %v83 = vsel %vm61, %v75, 0.0
  %v84 = vsel %vm61, %v76, 0.0
  %v85 = vsel %vm61, %v77, 0.0
  %v86 = vsel %vm61, %v78, 0.0
  %v87 = vpack.c.bf16 %v24, %v20
  %v88 = vpack.c.bf16 %v25, %v21
  %v89 = vpack.c.bf16 %v26, %v22
  %v90 = vpack.c.bf16 %v27, %v23
  %v91 = vld [vmem:[%s2] sm:$0xf]
  %v92 = vld [vmem:[%s2 + $0x4] sm:$0xf]
  %v93 = vld [vmem:[%s2 + $0x8] sm:$0xf]
  %v94 = vld [vmem:[%s2 + $0xc] sm:$0xf]
  %v95 = vld [vmem:[%s2 + $0x10] sm:$0xf]
  %v96 = vld [vmem:[%s2 + $0x14] sm:$0xf]
  %v97 = vld [vmem:[%s2 + $0x18] sm:$0xf]
  %v98 = vld [vmem:[%s2 + $0x1c] sm:$0xf]
  %v99 = vld [vmem:[%s2 + $0x20] sm:$0xf]
  %v100 = vld [vmem:[%s2 + $0x24] sm:$0xf]
  %v101 = vld [vmem:[%s2 + $0x28] sm:$0xf]
  %v102 = vld [vmem:[%s2 + $0x2c] sm:$0xf]
  %v103 = vld [vmem:[%s2 + $0x30] sm:$0xf]
  %v104 = vld [vmem:[%s2 + $0x34] sm:$0xf]
  %v105 = vld [vmem:[%s2 + $0x38] sm:$0xf]
  %v106 = vld [vmem:[%s2 + $0x3c] sm:$0xf]
  %v107 = vld [vmem:[%s2 + $0x40] sm:$0xf]
  %v108 = vld [vmem:[%s2 + $0x44] sm:$0xf]
  %v109 = vld [vmem:[%s2 + $0x48] sm:$0xf]
  %v110 = vld [vmem:[%s2 + $0x4c] sm:$0xf]
  %v111 = vld [vmem:[%s2 + $0x50] sm:$0xf]
  %v112 = vld [vmem:[%s2 + $0x54] sm:$0xf]
  %v113 = vld [vmem:[%s2 + $0x58] sm:$0xf]
  %v114 = vld [vmem:[%s2 + $0x5c] sm:$0xf]
  %v115 = vld [vmem:[%s2 + $0x60] sm:$0xf]
  %v116 = vld [vmem:[%s2 + $0x64] sm:$0xf]
  %v117 = vld [vmem:[%s2 + $0x68] sm:$0xf]
  %v118 = vld [vmem:[%s2 + $0x6c] sm:$0xf]
  %v119 = vld [vmem:[%s2 + $0x70] sm:$0xf]
  %v120 = vld [vmem:[%s2 + $0x74] sm:$0xf]
  %v121 = vld [vmem:[%s2 + $0x78] sm:$0xf]
  %v122 = vld [vmem:[%s2 + $0x7c] sm:$0xf]
  %v123 = vld [vmem:[%s2 + $0x80] sm:$0xf]
  %v124 = vld [vmem:[%s2 + $0x84] sm:$0xf]
  %v125 = vld [vmem:[%s2 + $0x88] sm:$0xf]
  %v126 = vld [vmem:[%s2 + $0x8c] sm:$0xf]
  %v127 = vld [vmem:[%s2 + $0x90] sm:$0xf]
  %v128 = vld [vmem:[%s2 + $0x94] sm:$0xf]
  %v129 = vld [vmem:[%s2 + $0x98] sm:$0xf]
  %v130 = vld [vmem:[%s2 + $0x9c] sm:$0xf]
  %v131 = vld [vmem:[%s2 + $0xa0] sm:$0xf]
  %v132 = vld [vmem:[%s2 + $0xa4] sm:$0xf]
  %v133 = vld [vmem:[%s2 + $0xa8] sm:$0xf]
  %v134 = vld [vmem:[%s2 + $0xac] sm:$0xf]
  %v135 = vld [vmem:[%s2 + $0xb0] sm:$0xf]
  %v136 = vld [vmem:[%s2 + $0xb4] sm:$0xf]
  %v137 = vld [vmem:[%s2 + $0xb8] sm:$0xf]
  %v138 = vld [vmem:[%s2 + $0xbc] sm:$0xf]
  %v139 = vld [vmem:[%s2 + $0xc0] sm:$0xf]
  %v140 = vld [vmem:[%s2 + $0xc4] sm:$0xf]
  %v141 = vld [vmem:[%s2 + $0xc8] sm:$0xf]
  %v142 = vld [vmem:[%s2 + $0xcc] sm:$0xf]
  %v143 = vld [vmem:[%s2 + $0xd0] sm:$0xf]
  %v144 = vld [vmem:[%s2 + $0xd4] sm:$0xf]
  %v145 = vld [vmem:[%s2 + $0xd8] sm:$0xf]
  %v146 = vld [vmem:[%s2 + $0xdc] sm:$0xf]
  %v147 = vld [vmem:[%s2 + $0xe0] sm:$0xf]
  %v148 = vld [vmem:[%s2 + $0xe4] sm:$0xf]
  %v149 = vld [vmem:[%s2 + $0xe8] sm:$0xf]
  %v150 = vld [vmem:[%s2 + $0xec] sm:$0xf]
  %v151 = vld [vmem:[%s2 + $0xf0] sm:$0xf]
  %v152 = vld [vmem:[%s2 + $0xf4] sm:$0xf]
  %v153 = vld [vmem:[%s2 + $0xf8] sm:$0xf]
  %v154 = vld [vmem:[%s2 + $0xfc] sm:$0xf]
  %v155 = vpack.c.bf16 %v56, %v52
  %v156 = vpack.c.bf16 %v57, %v53
  %v157 = vpack.c.bf16 %v58, %v54
  %v158 = vpack.c.bf16 %v59, %v55
  %v159 = vld [vmem:[%s1] sm:$0xf]
  %v160 = vld [vmem:[%s1 + $0x4] sm:$0xf]
  %v161 = vld [vmem:[%s1 + $0x8] sm:$0xf]
  %v162 = vld [vmem:[%s1 + $0xc] sm:$0xf]
  %v163 = vld [vmem:[%s1 + $0x10] sm:$0xf]
  %v164 = vld [vmem:[%s1 + $0x14] sm:$0xf]
  %v165 = vld [vmem:[%s1 + $0x18] sm:$0xf]
  %v166 = vld [vmem:[%s1 + $0x1c] sm:$0xf]
  %v167 = vld [vmem:[%s1 + $0x20] sm:$0xf]
  %v168 = vld [vmem:[%s1 + $0x24] sm:$0xf]
  %v169 = vld [vmem:[%s1 + $0x28] sm:$0xf]
  %v170 = vld [vmem:[%s1 + $0x2c] sm:$0xf]
  %v171 = vld [vmem:[%s1 + $0x30] sm:$0xf]
  %v172 = vld [vmem:[%s1 + $0x34] sm:$0xf]
  %v173 = vld [vmem:[%s1 + $0x38] sm:$0xf]
  %v174 = vld [vmem:[%s1 + $0x3c] sm:$0xf]
  %v175 = vld [vmem:[%s1 + $0x40] sm:$0xf]
  %v176 = vld [vmem:[%s1 + $0x44] sm:$0xf]
  %v177 = vld [vmem:[%s1 + $0x48] sm:$0xf]
  %v178 = vld [vmem:[%s1 + $0x4c] sm:$0xf]
  %v179 = vld [vmem:[%s1 + $0x50] sm:$0xf]
  %v180 = vld [vmem:[%s1 + $0x54] sm:$0xf]
  %v181 = vld [vmem:[%s1 + $0x58] sm:$0xf]
  %v182 = vld [vmem:[%s1 + $0x5c] sm:$0xf]
  %v183 = vld [vmem:[%s1 + $0x60] sm:$0xf]
  %v184 = vld [vmem:[%s1 + $0x64] sm:$0xf]
  %v185 = vld [vmem:[%s1 + $0x68] sm:$0xf]
  %v186 = vld [vmem:[%s1 + $0x6c] sm:$0xf]
  %v187 = vld [vmem:[%s1 + $0x70] sm:$0xf]
  %v188 = vld [vmem:[%s1 + $0x74] sm:$0xf]
  %v189 = vld [vmem:[%s1 + $0x78] sm:$0xf]
  %v190 = vld [vmem:[%s1 + $0x7c] sm:$0xf]
  %v191 = vld [vmem:[%s1 + $0x80] sm:$0xf]
  %v192 = vld [vmem:[%s1 + $0x84] sm:$0xf]
  %v193 = vld [vmem:[%s1 + $0x88] sm:$0xf]
  %v194 = vld [vmem:[%s1 + $0x8c] sm:$0xf]
  %v195 = vld [vmem:[%s1 + $0x90] sm:$0xf]
  %v196 = vld [vmem:[%s1 + $0x94] sm:$0xf]
  %v197 = vld [vmem:[%s1 + $0x98] sm:$0xf]
  %v198 = vld [vmem:[%s1 + $0x9c] sm:$0xf]
  %v199 = vld [vmem:[%s1 + $0xa0] sm:$0xf]
  %v200 = vld [vmem:[%s1 + $0xa4] sm:$0xf]
  %v201 = vld [vmem:[%s1 + $0xa8] sm:$0xf]
  %v202 = vld [vmem:[%s1 + $0xac] sm:$0xf]
  %v203 = vld [vmem:[%s1 + $0xb0] sm:$0xf]
  %v204 = vld [vmem:[%s1 + $0xb4] sm:$0xf]
  %v205 = vld [vmem:[%s1 + $0xb8] sm:$0xf]
  %v206 = vld [vmem:[%s1 + $0xbc] sm:$0xf]
  %v207 = vld [vmem:[%s1 + $0xc0] sm:$0xf]
  %v208 = vld [vmem:[%s1 + $0xc4] sm:$0xf]
  %v209 = vld [vmem:[%s1 + $0xc8] sm:$0xf]
  %v210 = vld [vmem:[%s1 + $0xcc] sm:$0xf]
  %v211 = vld [vmem:[%s1 + $0xd0] sm:$0xf]
  %v212 = vld [vmem:[%s1 + $0xd4] sm:$0xf]
  %v213 = vld [vmem:[%s1 + $0xd8] sm:$0xf]
  %v214 = vld [vmem:[%s1 + $0xdc] sm:$0xf]
  %v215 = vld [vmem:[%s1 + $0xe0] sm:$0xf]
  %v216 = vld [vmem:[%s1 + $0xe4] sm:$0xf]
  %v217 = vld [vmem:[%s1 + $0xe8] sm:$0xf]
  %v218 = vld [vmem:[%s1 + $0xec] sm:$0xf]
  %v219 = vld [vmem:[%s1 + $0xf0] sm:$0xf]
  %v220 = vld [vmem:[%s1 + $0xf4] sm:$0xf]
  %v221 = vld [vmem:[%s1 + $0xf8] sm:$0xf]
  %v222 = vld [vmem:[%s1 + $0xfc] sm:$0xf]
  %v287 = vunpack.c.l.b16 %v159
  %v288 = vunpack.c.l.b16 %v160
  %v289 = vunpack.c.l.b16 %v161
  %v290 = vunpack.c.l.b16 %v162
  %v291 = vunpack.c.l.b16 %v163
  %v292 = vunpack.c.l.b16 %v164
  %v293 = vunpack.c.l.b16 %v165
  %v294 = vunpack.c.l.b16 %v166
  %v295 = vunpack.c.l.b16 %v167
  %v296 = vunpack.c.l.b16 %v168
  %v297 = vunpack.c.l.b16 %v169
  %v298 = vunpack.c.l.b16 %v170
  %v299 = vunpack.c.l.b16 %v171
  %v300 = vunpack.c.l.b16 %v172
  %v301 = vunpack.c.l.b16 %v173
  %v302 = vunpack.c.l.b16 %v174
  %v303 = vunpack.c.l.b16 %v175
  %v304 = vunpack.c.l.b16 %v176
  %v305 = vunpack.c.l.b16 %v177
  %v306 = vunpack.c.l.b16 %v178
  %v307 = vunpack.c.l.b16 %v179
  %v308 = vunpack.c.l.b16 %v180
  %v309 = vunpack.c.l.b16 %v181
  %v310 = vunpack.c.l.b16 %v182
  %v311 = vunpack.c.l.b16 %v183
  %v312 = vunpack.c.l.b16 %v184
  %v313 = vunpack.c.l.b16 %v185
  %v314 = vunpack.c.l.b16 %v186
  %v315 = vunpack.c.l.b16 %v187
  %v316 = vunpack.c.l.b16 %v188
  %v317 = vunpack.c.l.b16 %v189
  %v318 = vunpack.c.l.b16 %v190
  %v319 = vunpack.c.l.b16 %v191
  %v320 = vunpack.c.l.b16 %v192
  %v321 = vunpack.c.l.b16 %v193
  %v322 = vunpack.c.l.b16 %v194
  %v323 = vunpack.c.l.b16 %v195
  %v324 = vunpack.c.l.b16 %v196
  %v325 = vunpack.c.l.b16 %v197
  %v326 = vunpack.c.l.b16 %v198
  %v327 = vunpack.c.l.b16 %v199
  %v328 = vunpack.c.l.b16 %v200
  %v329 = vunpack.c.l.b16 %v201
  %v330 = vunpack.c.l.b16 %v202
  %v331 = vunpack.c.l.b16 %v203
  %v332 = vunpack.c.l.b16 %v204
  %v333 = vunpack.c.l.b16 %v205
  %v334 = vunpack.c.l.b16 %v206
  %v335 = vunpack.c.l.b16 %v207
  %v336 = vunpack.c.l.b16 %v208
  %v337 = vunpack.c.l.b16 %v209
  %v338 = vunpack.c.l.b16 %v210
  %v339 = vunpack.c.l.b16 %v211
  %v340 = vunpack.c.l.b16 %v212
  %v341 = vunpack.c.l.b16 %v213
  %v342 = vunpack.c.l.b16 %v214
  %v343 = vunpack.c.l.b16 %v215
  %v344 = vunpack.c.l.b16 %v216
  %v345 = vunpack.c.l.b16 %v217
  %v346 = vunpack.c.l.b16 %v218
  %v347 = vunpack.c.l.b16 %v219
  %v348 = vunpack.c.l.b16 %v220
  %v349 = vunpack.c.l.b16 %v221
  %v350 = vunpack.c.l.b16 %v222
  %v351 = vpack.c.b16 %v288, %v287
  %v352 = vpack.c.b16 %v290, %v289
  %v353 = vpack.c.b16 %v292, %v291
  %v354 = vpack.c.b16 %v294, %v293
  %v355 = vpack.c.b16 %v296, %v295
  %v356 = vpack.c.b16 %v298, %v297
  %v357 = vpack.c.b16 %v300, %v299
  %v358 = vpack.c.b16 %v302, %v301
  %v359 = vpack.c.b16 %v304, %v303
  %v360 = vpack.c.b16 %v306, %v305
  %v361 = vpack.c.b16 %v308, %v307
  %v362 = vpack.c.b16 %v310, %v309
  %v363 = vpack.c.b16 %v312, %v311
  %v364 = vpack.c.b16 %v314, %v313
  %v365 = vpack.c.b16 %v316, %v315
  %v366 = vpack.c.b16 %v318, %v317
  %v367 = vpack.c.b16 %v320, %v319
  %v368 = vpack.c.b16 %v322, %v321
  %v369 = vpack.c.b16 %v324, %v323
  %v370 = vpack.c.b16 %v326, %v325
  %v371 = vpack.c.b16 %v328, %v327
  %v372 = vpack.c.b16 %v330, %v329
  %v373 = vpack.c.b16 %v332, %v331
  %v374 = vpack.c.b16 %v334, %v333
  %v375 = vpack.c.b16 %v336, %v335
  %v376 = vpack.c.b16 %v338, %v337
  %v377 = vpack.c.b16 %v340, %v339
  %v378 = vpack.c.b16 %v342, %v341
  %v379 = vpack.c.b16 %v344, %v343
  %v380 = vpack.c.b16 %v346, %v345
  %v381 = vpack.c.b16 %v348, %v347
  %v382 = vpack.c.b16 %v350, %v349
  %415 = vmatpush.bf16.msra.mxu0 %v358
  %416 = vmatpush.bf16.msra.mxu0 %v357
  %417 = vmatpush.bf16.msra.mxu0 %v356
  %418 = vmatpush.bf16.msra.mxu0 %v355
  %419 = vmatpush.bf16.msra.mxu0 %v354
  %420 = vmatpush.bf16.msra.mxu0 %v353
  %421 = vmatpush.bf16.msra.mxu0 %v352
  %422 = vmatpush.bf16.msra.mxu0 %v351
  %423 = vmatmul.bf16.gmra.mxu0 %v155
  %v424 = vpop.f32.mrf.mxu0
  %v425 = vadd.f32 0.0, %v424
  %v426 = vpop.f32.mrf.mxu0
  %v427 = vadd.f32 0.0, %v426
  %428 = vdwg.mxu0
  %429 = vmatpush.bf16.msra.mxu0 %v366
  %430 = vmatpush.bf16.msra.mxu0 %v365
  %431 = vmatpush.bf16.msra.mxu0 %v364
  %432 = vmatpush.bf16.msra.mxu0 %v363
  %433 = vmatpush.bf16.msra.mxu0 %v362
  %434 = vmatpush.bf16.msra.mxu0 %v361
  %435 = vmatpush.bf16.msra.mxu0 %v360
  %436 = vmatpush.bf16.msra.mxu0 %v359
  %437 = vmatmul.bf16.gmra.mxu0 %v156
  %v438 = vpop.f32.mrf.mxu0
  %v439 = vadd.f32 %v425, %v438
  %v440 = vpop.f32.mrf.mxu0
  %v441 = vadd.f32 %v427, %v440
  %442 = vdwg.mxu0
  %443 = vmatpush.bf16.msra.mxu0 %v374
  %444 = vmatpush.bf16.msra.mxu0 %v373
  %445 = vmatpush.bf16.msra.mxu0 %v372
  %446 = vmatpush.bf16.msra.mxu0 %v371
  %447 = vmatpush.bf16.msra.mxu0 %v370
  %448 = vmatpush.bf16.msra.mxu0 %v369
  %449 = vmatpush.bf16.msra.mxu0 %v368
  %450 = vmatpush.bf16.msra.mxu0 %v367
  %451 = vmatmul.bf16.gmra.mxu0 %v157
  %v452 = vpop.f32.mrf.mxu0
  %v453 = vadd.f32 %v439, %v452
  %v454 = vpop.f32.mrf.mxu0
  %v455 = vadd.f32 %v441, %v454
  %456 = vdwg.mxu0
  %457 = vmatpush.bf16.msra.mxu0 %v382
  %458 = vmatpush.bf16.msra.mxu0 %v381
  %459 = vmatpush.bf16.msra.mxu0 %v380
  %460 = vmatpush.bf16.msra.mxu0 %v379
  %461 = vmatpush.bf16.msra.mxu0 %v378
  %462 = vmatpush.bf16.msra.mxu0 %v377
  %463 = vmatpush.bf16.msra.mxu0 %v376
  %464 = vmatpush.bf16.msra.mxu0 %v375
  %465 = vmatmul.bf16.gmra.mxu0 %v158
  %v466 = vpop.f32.mrf.mxu0
  %v467 = vadd.f32 %v453, %v466
  %v468 = vpop.f32.mrf.mxu0
  %v469 = vadd.f32 %v455, %v468
  %470 = vdwg.mxu0
  %v535 = vunpack.c.l.b16 %v91
  %v536 = vunpack.c.l.b16 %v92
  %v537 = vunpack.c.l.b16 %v93
  %v538 = vunpack.c.l.b16 %v94
  %v539 = vunpack.c.l.b16 %v95
  %v540 = vunpack.c.l.b16 %v96
  %v541 = vunpack.c.l.b16 %v97
  %v542 = vunpack.c.l.b16 %v98
  %v543 = vunpack.c.l.b16 %v99
  %v544 = vunpack.c.l.b16 %v100
  %v545 = vunpack.c.l.b16 %v101
  %v546 = vunpack.c.l.b16 %v102
  %v547 = vunpack.c.l.b16 %v103
  %v548 = vunpack.c.l.b16 %v104
  %v549 = vunpack.c.l.b16 %v105
  %v550 = vunpack.c.l.b16 %v106
  %v551 = vunpack.c.l.b16 %v107
  %v552 = vunpack.c.l.b16 %v108
  %v553 = vunpack.c.l.b16 %v109
  %v554 = vunpack.c.l.b16 %v110
  %v555 = vunpack.c.l.b16 %v111
  %v556 = vunpack.c.l.b16 %v112
  %v557 = vunpack.c.l.b16 %v113
  %v558 = vunpack.c.l.b16 %v114
  %v559 = vunpack.c.l.b16 %v115
  %v560 = vunpack.c.l.b16 %v116
  %v561 = vunpack.c.l.b16 %v117
  %v562 = vunpack.c.l.b16 %v118
  %v563 = vunpack.c.l.b16 %v119
  %v564 = vunpack.c.l.b16 %v120
  %v565 = vunpack.c.l.b16 %v121
  %v566 = vunpack.c.l.b16 %v122
  %v567 = vunpack.c.l.b16 %v123
  %v568 = vunpack.c.l.b16 %v124
  %v569 = vunpack.c.l.b16 %v125
  %v570 = vunpack.c.l.b16 %v126
  %v571 = vunpack.c.l.b16 %v127
  %v572 = vunpack.c.l.b16 %v128
  %v573 = vunpack.c.l.b16 %v129
  %v574 = vunpack.c.l.b16 %v130
  %v575 = vunpack.c.l.b16 %v131
  %v576 = vunpack.c.l.b16 %v132
  %v577 = vunpack.c.l.b16 %v133
  %v578 = vunpack.c.l.b16 %v134
  %v579 = vunpack.c.l.b16 %v135
  %v580 = vunpack.c.l.b16 %v136
  %v581 = vunpack.c.l.b16 %v137
  %v582 = vunpack.c.l.b16 %v138
  %v583 = vunpack.c.l.b16 %v139
  %v584 = vunpack.c.l.b16 %v140
  %v585 = vunpack.c.l.b16 %v141
  %v586 = vunpack.c.l.b16 %v142
  %v587 = vunpack.c.l.b16 %v143
  %v588 = vunpack.c.l.b16 %v144
  %v589 = vunpack.c.l.b16 %v145
  %v590 = vunpack.c.l.b16 %v146
  %v591 = vunpack.c.l.b16 %v147
  %v592 = vunpack.c.l.b16 %v148
  %v593 = vunpack.c.l.b16 %v149
  %v594 = vunpack.c.l.b16 %v150
  %v595 = vunpack.c.l.b16 %v151
  %v596 = vunpack.c.l.b16 %v152
  %v597 = vunpack.c.l.b16 %v153
  %v598 = vunpack.c.l.b16 %v154
  %v599 = vpack.c.b16 %v536, %v535
  %v600 = vpack.c.b16 %v538, %v537
  %v601 = vpack.c.b16 %v540, %v539
  %v602 = vpack.c.b16 %v542, %v541
  %v603 = vpack.c.b16 %v544, %v543
  %v604 = vpack.c.b16 %v546, %v545
  %v605 = vpack.c.b16 %v548, %v547
  %v606 = vpack.c.b16 %v550, %v549
  %v607 = vpack.c.b16 %v552, %v551
  %v608 = vpack.c.b16 %v554, %v553
  %v609 = vpack.c.b16 %v556, %v555
  %v610 = vpack.c.b16 %v558, %v557
  %v611 = vpack.c.b16 %v560, %v559
  %v612 = vpack.c.b16 %v562, %v561
  %v613 = vpack.c.b16 %v564, %v563
  %v614 = vpack.c.b16 %v566, %v565
  %v615 = vpack.c.b16 %v568, %v567
  %v616 = vpack.c.b16 %v570, %v569
  %v617 = vpack.c.b16 %v572, %v571
  %v618 = vpack.c.b16 %v574, %v573
  %v619 = vpack.c.b16 %v576, %v575
  %v620 = vpack.c.b16 %v578, %v577
  %v621 = vpack.c.b16 %v580, %v579
  %v622 = vpack.c.b16 %v582, %v581
  %v623 = vpack.c.b16 %v584, %v583
  %v624 = vpack.c.b16 %v586, %v585
  %v625 = vpack.c.b16 %v588, %v587
  %v626 = vpack.c.b16 %v590, %v589
  %v627 = vpack.c.b16 %v592, %v591
  %v628 = vpack.c.b16 %v594, %v593
  %v629 = vpack.c.b16 %v596, %v595
  %v630 = vpack.c.b16 %v598, %v597
  %663 = vmatpush.bf16.msra.mxu0 %v606
  %664 = vmatpush.bf16.msra.mxu0 %v605
  %665 = vmatpush.bf16.msra.mxu0 %v604
  %666 = vmatpush.bf16.msra.mxu0 %v603
  %667 = vmatpush.bf16.msra.mxu0 %v602
  %668 = vmatpush.bf16.msra.mxu0 %v601
  %669 = vmatpush.bf16.msra.mxu0 %v600
  %670 = vmatpush.bf16.msra.mxu0 %v599
  %671 = vmatmul.bf16.gmra.mxu0 %v87
  %v672 = vpop.f32.mrf.mxu0
  %v673 = vadd.f32 %v467, %v672
  %v674 = vpop.f32.mrf.mxu0
  %v675 = vadd.f32 %v469, %v674
  %676 = vdwg.mxu0
  %677 = vmatpush.bf16.msra.mxu0 %v614
  %678 = vmatpush.bf16.msra.mxu0 %v613
  %679 = vmatpush.bf16.msra.mxu0 %v612
  %680 = vmatpush.bf16.msra.mxu0 %v611
  %681 = vmatpush.bf16.msra.mxu0 %v610
  %682 = vmatpush.bf16.msra.mxu0 %v609
  %683 = vmatpush.bf16.msra.mxu0 %v608
  %684 = vmatpush.bf16.msra.mxu0 %v607
  %685 = vmatmul.bf16.gmra.mxu0 %v88
  %v686 = vpop.f32.mrf.mxu0
  %v687 = vadd.f32 %v673, %v686
  %v688 = vpop.f32.mrf.mxu0
  %v689 = vadd.f32 %v675, %v688
  %690 = vdwg.mxu0
  %691 = vmatpush.bf16.msra.mxu0 %v622
  %692 = vmatpush.bf16.msra.mxu0 %v621
  %693 = vmatpush.bf16.msra.mxu0 %v620
  %694 = vmatpush.bf16.msra.mxu0 %v619
  %695 = vmatpush.bf16.msra.mxu0 %v618
  %696 = vmatpush.bf16.msra.mxu0 %v617
  %697 = vmatpush.bf16.msra.mxu0 %v616
  %698 = vmatpush.bf16.msra.mxu0 %v615
  %699 = vmatmul.bf16.gmra.mxu0 %v89
  %v700 = vpop.f32.mrf.mxu0
  %v701 = vadd.f32 %v687, %v700
  %v702 = vpop.f32.mrf.mxu0
  %v703 = vadd.f32 %v689, %v702
  %704 = vdwg.mxu0
  %705 = vmatpush.bf16.msra.mxu0 %v630
  %706 = vmatpush.bf16.msra.mxu0 %v629
  %707 = vmatpush.bf16.msra.mxu0 %v628
  %708 = vmatpush.bf16.msra.mxu0 %v627
  %709 = vmatpush.bf16.msra.mxu0 %v626
  %710 = vmatpush.bf16.msra.mxu0 %v625
  %711 = vmatpush.bf16.msra.mxu0 %v624
  %712 = vmatpush.bf16.msra.mxu0 %v623
  %713 = vmatmul.bf16.gmra.mxu0 %v90
  %v714 = vpop.f32.mrf.mxu0
  %v715 = vadd.f32 %v701, %v714
  %v716 = vpop.f32.mrf.mxu0
  %v717 = vadd.f32 %v703, %v716
  %718 = vdwg.mxu0
  %v719 = vpack.c.bf16 %v83, %v79
  %v720 = vpack.c.bf16 %v84, %v80
  %v721 = vpack.c.bf16 %v85, %v81
  %v722 = vpack.c.bf16 %v86, %v82
  %v723 = vld [vmem:[%s3] sm:$0xf]
  %v724 = vld [vmem:[%s3 + $0x4] sm:$0xf]
  %v725 = vld [vmem:[%s3 + $0x8] sm:$0xf]
  %v726 = vld [vmem:[%s3 + $0xc] sm:$0xf]
  %v727 = vld [vmem:[%s3 + $0x10] sm:$0xf]
  %v728 = vld [vmem:[%s3 + $0x14] sm:$0xf]
  %v729 = vld [vmem:[%s3 + $0x18] sm:$0xf]
  %v730 = vld [vmem:[%s3 + $0x1c] sm:$0xf]
  %v731 = vld [vmem:[%s3 + $0x20] sm:$0xf]
  %v732 = vld [vmem:[%s3 + $0x24] sm:$0xf]
  %v733 = vld [vmem:[%s3 + $0x28] sm:$0xf]
  %v734 = vld [vmem:[%s3 + $0x2c] sm:$0xf]
  %v735 = vld [vmem:[%s3 + $0x30] sm:$0xf]
  %v736 = vld [vmem:[%s3 + $0x34] sm:$0xf]
  %v737 = vld [vmem:[%s3 + $0x38] sm:$0xf]
  %v738 = vld [vmem:[%s3 + $0x3c] sm:$0xf]
  %v739 = vld [vmem:[%s3 + $0x40] sm:$0xf]
  %v740 = vld [vmem:[%s3 + $0x44] sm:$0xf]
  %v741 = vld [vmem:[%s3 + $0x48] sm:$0xf]
  %v742 = vld [vmem:[%s3 + $0x4c] sm:$0xf]
  %v743 = vld [vmem:[%s3 + $0x50] sm:$0xf]
  %v744 = vld [vmem:[%s3 + $0x54] sm:$0xf]
  %v745 = vld [vmem:[%s3 + $0x58] sm:$0xf]
  %v746 = vld [vmem:[%s3 + $0x5c] sm:$0xf]
  %v747 = vld [vmem:[%s3 + $0x60] sm:$0xf]
  %v748 = vld [vmem:[%s3 + $0x64] sm:$0xf]
  %v749 = vld [vmem:[%s3 + $0x68] sm:$0xf]
  %v750 = vld [vmem:[%s3 + $0x6c] sm:$0xf]
  %v751 = vld [vmem:[%s3 + $0x70] sm:$0xf]
  %v752 = vld [vmem:[%s3 + $0x74] sm:$0xf]
  %v753 = vld [vmem:[%s3 + $0x78] sm:$0xf]
  %v754 = vld [vmem:[%s3 + $0x7c] sm:$0xf]
  %v755 = vld [vmem:[%s3 + $0x80] sm:$0xf]
  %v756 = vld [vmem:[%s3 + $0x84] sm:$0xf]
  %v757 = vld [vmem:[%s3 + $0x88] sm:$0xf]
  %v758 = vld [vmem:[%s3 + $0x8c] sm:$0xf]
  %v759 = vld [vmem:[%s3 + $0x90] sm:$0xf]
  %v760 = vld [vmem:[%s3 + $0x94] sm:$0xf]
  %v761 = vld [vmem:[%s3 + $0x98] sm:$0xf]
  %v762 = vld [vmem:[%s3 + $0x9c] sm:$0xf]
  %v763 = vld [vmem:[%s3 + $0xa0] sm:$0xf]
  %v764 = vld [vmem:[%s3 + $0xa4] sm:$0xf]
  %v765 = vld [vmem:[%s3 + $0xa8] sm:$0xf]
  %v766 = vld [vmem:[%s3 + $0xac] sm:$0xf]
  %v767 = vld [vmem:[%s3 + $0xb0] sm:$0xf]
  %v768 = vld [vmem:[%s3 + $0xb4] sm:$0xf]
  %v769 = vld [vmem:[%s3 + $0xb8] sm:$0xf]
  %v770 = vld [vmem:[%s3 + $0xbc] sm:$0xf]
  %v771 = vld [vmem:[%s3 + $0xc0] sm:$0xf]
  %v772 = vld [vmem:[%s3 + $0xc4] sm:$0xf]
  %v773 = vld [vmem:[%s3 + $0xc8] sm:$0xf]
  %v774 = vld [vmem:[%s3 + $0xcc] sm:$0xf]
  %v775 = vld [vmem:[%s3 + $0xd0] sm:$0xf]
  %v776 = vld [vmem:[%s3 + $0xd4] sm:$0xf]
  %v777 = vld [vmem:[%s3 + $0xd8] sm:$0xf]
  %v778 = vld [vmem:[%s3 + $0xdc] sm:$0xf]
  %v779 = vld [vmem:[%s3 + $0xe0] sm:$0xf]
  %v780 = vld [vmem:[%s3 + $0xe4] sm:$0xf]
  %v781 = vld [vmem:[%s3 + $0xe8] sm:$0xf]
  %v782 = vld [vmem:[%s3 + $0xec] sm:$0xf]
  %v783 = vld [vmem:[%s3 + $0xf0] sm:$0xf]
  %v784 = vld [vmem:[%s3 + $0xf4] sm:$0xf]
  %v785 = vld [vmem:[%s3 + $0xf8] sm:$0xf]
  %v786 = vld [vmem:[%s3 + $0xfc] sm:$0xf]
  %v851 = vunpack.c.l.b16 %v723
  %v852 = vunpack.c.l.b16 %v724
  %v853 = vunpack.c.l.b16 %v725
  %v854 = vunpack.c.l.b16 %v726
  %v855 = vunpack.c.l.b16 %v727
  %v856 = vunpack.c.l.b16 %v728
  %v857 = vunpack.c.l.b16 %v729
  %v858 = vunpack.c.l.b16 %v730
  %v859 = vunpack.c.l.b16 %v731
  %v860 = vunpack.c.l.b16 %v732
  %v861 = vunpack.c.l.b16 %v733
  %v862 = vunpack.c.l.b16 %v734
  %v863 = vunpack.c.l.b16 %v735
  %v864 = vunpack.c.l.b16 %v736
  %v865 = vunpack.c.l.b16 %v737
  %v866 = vunpack.c.l.b16 %v738
  %v867 = vunpack.c.l.b16 %v739
  %v868 = vunpack.c.l.b16 %v740
  %v869 = vunpack.c.l.b16 %v741
  %v870 = vunpack.c.l.b16 %v742
  %v871 = vunpack.c.l.b16 %v743
  %v872 = vunpack.c.l.b16 %v744
  %v873 = vunpack.c.l.b16 %v745
  %v874 = vunpack.c.l.b16 %v746
  %v875 = vunpack.c.l.b16 %v747
  %v876 = vunpack.c.l.b16 %v748
  %v877 = vunpack.c.l.b16 %v749
  %v878 = vunpack.c.l.b16 %v750
  %v879 = vunpack.c.l.b16 %v751
  %v880 = vunpack.c.l.b16 %v752
  %v881 = vunpack.c.l.b16 %v753
  %v882 = vunpack.c.l.b16 %v754
  %v883 = vunpack.c.l.b16 %v755
  %v884 = vunpack.c.l.b16 %v756
  %v885 = vunpack.c.l.b16 %v757
  %v886 = vunpack.c.l.b16 %v758
  %v887 = vunpack.c.l.b16 %v759
  %v888 = vunpack.c.l.b16 %v760
  %v889 = vunpack.c.l.b16 %v761
  %v890 = vunpack.c.l.b16 %v762
  %v891 = vunpack.c.l.b16 %v763
  %v892 = vunpack.c.l.b16 %v764
  %v893 = vunpack.c.l.b16 %v765
  %v894 = vunpack.c.l.b16 %v766
  %v895 = vunpack.c.l.b16 %v767
  %v896 = vunpack.c.l.b16 %v768
  %v897 = vunpack.c.l.b16 %v769
  %v898 = vunpack.c.l.b16 %v770
  %v899 = vunpack.c.l.b16 %v771
  %v900 = vunpack.c.l.b16 %v772
  %v901 = vunpack.c.l.b16 %v773
  %v902 = vunpack.c.l.b16 %v774
  %v903 = vunpack.c.l.b16 %v775
  %v904 = vunpack.c.l.b16 %v776
  %v905 = vunpack.c.l.b16 %v777
  %v906 = vunpack.c.l.b16 %v778
  %v907 = vunpack.c.l.b16 %v779
  %v908 = vunpack.c.l.b16 %v780
  %v909 = vunpack.c.l.b16 %v781
  %v910 = vunpack.c.l.b16 %v782
  %v911 = vunpack.c.l.b16 %v783
  %v912 = vunpack.c.l.b16 %v784
  %v913 = vunpack.c.l.b16 %v785
  %v914 = vunpack.c.l.b16 %v786
  %v915 = vpack.c.b16 %v852, %v851
  %v916 = vpack.c.b16 %v854, %v853
  %v917 = vpack.c.b16 %v856, %v855
  %v918 = vpack.c.b16 %v858, %v857
  %v919 = vpack.c.b16 %v860, %v859
  %v920 = vpack.c.b16 %v862, %v861
  %v921 = vpack.c.b16 %v864, %v863
  %v922 = vpack.c.b16 %v866, %v865
  %v923 = vpack.c.b16 %v868, %v867
  %v924 = vpack.c.b16 %v870, %v869
  %v925 = vpack.c.b16 %v872, %v871
  %v926 = vpack.c.b16 %v874, %v873
  %v927 = vpack.c.b16 %v876, %v875
  %v928 = vpack.c.b16 %v878, %v877
  %v929 = vpack.c.b16 %v880, %v879
  %v930 = vpack.c.b16 %v882, %v881
  %v931 = vpack.c.b16 %v884, %v883
  %v932 = vpack.c.b16 %v886, %v885
  %v933 = vpack.c.b16 %v888, %v887
  %v934 = vpack.c.b16 %v890, %v889
  %v935 = vpack.c.b16 %v892, %v891
  %v936 = vpack.c.b16 %v894, %v893
  %v937 = vpack.c.b16 %v896, %v895
  %v938 = vpack.c.b16 %v898, %v897
  %v939 = vpack.c.b16 %v900, %v899
  %v940 = vpack.c.b16 %v902, %v901
  %v941 = vpack.c.b16 %v904, %v903
  %v942 = vpack.c.b16 %v906, %v905
  %v943 = vpack.c.b16 %v908, %v907
  %v944 = vpack.c.b16 %v910, %v909
  %v945 = vpack.c.b16 %v912, %v911
  %v946 = vpack.c.b16 %v914, %v913
  %979 = vmatpush.bf16.msra.mxu0 %v922
  %980 = vmatpush.bf16.msra.mxu0 %v921
  %981 = vmatpush.bf16.msra.mxu0 %v920
  %982 = vmatpush.bf16.msra.mxu0 %v919
  %983 = vmatpush.bf16.msra.mxu0 %v918
  %984 = vmatpush.bf16.msra.mxu0 %v917
  %985 = vmatpush.bf16.msra.mxu0 %v916
  %986 = vmatpush.bf16.msra.mxu0 %v915
  %987 = vmatmul.bf16.gmra.mxu0 %v719
  %v988 = vpop.f32.mrf.mxu0
  %v989 = vadd.f32 0.0, %v988
  %v990 = vpop.f32.mrf.mxu0
  %v991 = vadd.f32 0.0, %v990
  %992 = vdwg.mxu0
  %993 = vmatpush.bf16.msra.mxu0 %v930
  %994 = vmatpush.bf16.msra.mxu0 %v929
  %995 = vmatpush.bf16.msra.mxu0 %v928
  %996 = vmatpush.bf16.msra.mxu0 %v927
  %997 = vmatpush.bf16.msra.mxu0 %v926
  %998 = vmatpush.bf16.msra.mxu0 %v925
  %999 = vmatpush.bf16.msra.mxu0 %v924
  %1000 = vmatpush.bf16.msra.mxu0 %v923
  %1001 = vmatmul.bf16.gmra.mxu0 %v720
  %v1002 = vpop.f32.mrf.mxu0
  %v1003 = vadd.f32 %v989, %v1002
  %v1004 = vpop.f32.mrf.mxu0
  %v1005 = vadd.f32 %v991, %v1004
  %1006 = vdwg.mxu0
  %1007 = vmatpush.bf16.msra.mxu0 %v938
  %1008 = vmatpush.bf16.msra.mxu0 %v937
  %1009 = vmatpush.bf16.msra.mxu0 %v936
  %1010 = vmatpush.bf16.msra.mxu0 %v935
  %1011 = vmatpush.bf16.msra.mxu0 %v934
  %1012 = vmatpush.bf16.msra.mxu0 %v933
  %1013 = vmatpush.bf16.msra.mxu0 %v932
  %1014 = vmatpush.bf16.msra.mxu0 %v931
  %1015 = vmatmul.bf16.gmra.mxu0 %v721
  %v1016 = vpop.f32.mrf.mxu0
  %v1017 = vadd.f32 %v1003, %v1016
  %v1018 = vpop.f32.mrf.mxu0
  %v1019 = vadd.f32 %v1005, %v1018
  %1020 = vdwg.mxu0
  %1021 = vmatpush.bf16.msra.mxu0 %v946
  %1022 = vmatpush.bf16.msra.mxu0 %v945
  %1023 = vmatpush.bf16.msra.mxu0 %v944
  %1024 = vmatpush.bf16.msra.mxu0 %v943
  %1025 = vmatpush.bf16.msra.mxu0 %v942
  %1026 = vmatpush.bf16.msra.mxu0 %v941
  %1027 = vmatpush.bf16.msra.mxu0 %v940
  %1028 = vmatpush.bf16.msra.mxu0 %v939
  %1029 = vmatmul.bf16.gmra.mxu0 %v722
  %v1030 = vpop.f32.mrf.mxu0
  %v1031 = vadd.f32 %v1017, %v1030
  %v1032 = vpop.f32.mrf.mxu0
  %v1033 = vadd.f32 %v1019, %v1032
  %1034 = vdwg.mxu0
  %v1035 = vadd.f32 %v715, %v1031
  %v1036 = vadd.f32 %v717, %v1033
  %v1037 = vld [vmem:[%s4] sm:$0x1]
  %v1039 = vperm.slane %v1037, 0
  %v1041 = vadd.f32 %v1035, %v1039
  %v1042 = vadd.f32 %v1036, %v1039
  %1043 = vst [vmem:[%s5] sm:$0xff] %v1041
  %1044 = vst [vmem:[%s5 + $0x8] sm:$0xff] %v1042
  // Predicated region
  $region22: #{hunet_forward.27} parent=0 // pred_check
    _
  $region23: #{hunet_forward.27} parent=0 // pred_check_branch
    %1046 = sbr.rel (0) target = $region25
  $region24: #{hunet_forward.27} parent=0 // pred_region
    _
  $region25: #{hunet_forward.27} parent=0 // pred_fallthru
    _
  // Predicated region
  $region26: #{hunet_forward.27} parent=0 // pred_check
    _
  $region27: #{hunet_forward.27} parent=0 // pred_check_branch
    %1048 = sbr.rel (0) target = $region29
  $region28: #{hunet_forward.27} parent=0 // pred_region
    _
  $region29: #{hunet_forward.27} parent=0 // pred_fallthru
    _

// kernel: hunet_forward.30
$region0: #{hunet_forward.30}
  #allocation0 [shape = 'u32[]', space=smem, size = 0x4, offset = 0x4, fixed_abs, tag = 'smem constant byte address 0x4 - core index']
  #allocation1 [shape = 'u32[72,128]{1,0:T(1,128)}', space=vmem, size = 0x9000, scoped, tag = 'internal scratch']
  %s0 = inlined_call_operand.vmem [shape: f32[32,512], index: 0, kind: input, shape index: {}]
  %s1 = inlined_call_operand.vmem [shape: bf16[512,128], index: 1, kind: input, shape index: {}]
  %s2 = inlined_call_operand.vmem [shape: bf16[512,128], index: 2, kind: input, shape index: {}]
  %s3 = inlined_call_operand.vmem [shape: bf16[512,128], index: 3, kind: input, shape index: {}]
  %s4 = inlined_call_operand.vmem [shape: f32[1,128], index: 4, kind: input, shape index: {}]
  %s5 = inlined_call_operand.vmem [shape: f32[32,128], index: 5, kind: output, shape index: {}]
  %s6 = sld [smem:[#allocation0]]
  $region30: #{hunet_forward.30} parent=0
    _
  %s8 = ssub.s32 1, %s6
  %s9 = scalar_select 0, %s8, %s6
  // Predicated region
  $region2: #{hunet_forward.30} parent=0 // pred_check
    _
  $region3: #{hunet_forward.30} parent=0 // pred_check_branch
    %11 = sbr.rel (0) target = $region5
  $region4: #{hunet_forward.30} parent=0 // pred_region
    _
  $region5: #{hunet_forward.30} parent=0 // pred_fallthru
    _
  // Predicated region
  $region6: #{hunet_forward.30} parent=0 // pred_check
    _
  $region7: #{hunet_forward.30} parent=0 // pred_check_branch
    %13 = sbr.rel (0) target = $region9
  $region8: #{hunet_forward.30} parent=0 // pred_region
    _
  $region9: #{hunet_forward.30} parent=0 // pred_fallthru
    _
  // Predicated region
  $region10: #{hunet_forward.30} parent=0 // pred_check
    _
  $region11: #{hunet_forward.30} parent=0 // pred_check_branch
    %15 = sbr.rel (0) target = $region13
  $region12: #{hunet_forward.30} parent=0 // pred_region
    _
  $region13: #{hunet_forward.30} parent=0 // pred_fallthru
    _
  // Predicated region
  $region14: #{hunet_forward.30} parent=0 // pred_check
    _
  $region15: #{hunet_forward.30} parent=0 // pred_check_branch
    %17 = sbr.rel (0) target = $region17
  $region16: #{hunet_forward.30} parent=0 // pred_region
    _
  $region17: #{hunet_forward.30} parent=0 // pred_fallthru
    _
  // Predicated region
  $region18: #{hunet_forward.30} parent=0 // pred_check
    _
  $region19: #{hunet_forward.30} parent=0 // pred_check_branch
    %19 = sbr.rel (0) target = $region21
  $region20: #{hunet_forward.30} parent=0 // pred_region
    _
  $region21: #{hunet_forward.30} parent=0 // pred_fallthru
    _
  %v20 = vld [vmem:[%s0] sm:$0xff]
  %v21 = vld [vmem:[%s0 + $0x8] sm:$0xff]
  %v22 = vld [vmem:[%s0 + $0x10] sm:$0xff]
  %v23 = vld [vmem:[%s0 + $0x18] sm:$0xff]
  %v24 = vld [vmem:[%s0 + $0x20] sm:$0xff]
  %v25 = vld [vmem:[%s0 + $0x28] sm:$0xff]
  %v26 = vld [vmem:[%s0 + $0x30] sm:$0xff]
  %v27 = vld [vmem:[%s0 + $0x38] sm:$0xff]
  %v28 = vld [vmem:[%s0 + $0x40] sm:$0xff]
  %v29 = vld [vmem:[%s0 + $0x48] sm:$0xff]
  %v30 = vld [vmem:[%s0 + $0x50] sm:$0xff]
  %v31 = vld [vmem:[%s0 + $0x58] sm:$0xff]
  %v32 = vld [vmem:[%s0 + $0x60] sm:$0xff]
  %v33 = vld [vmem:[%s0 + $0x68] sm:$0xff]
  %v34 = vld [vmem:[%s0 + $0x70] sm:$0xff]
  %v35 = vld [vmem:[%s0 + $0x78] sm:$0xff]
  %v36 = vlaneseq
  %v37 = vshrl.u32 %v36, 7
  %v38 = vadd.s32 %v37, 8
  %v39 = vadd.s32 %v37, 16
  %v40 = vadd.s32 %v37, 24
  %v41 = vand.u32 %v37, 15
  %v42 = vand.u32 %v38, 15
  %v43 = vand.u32 %v39, 15
  %v44 = vand.u32 %v40, 15
  %vm45 = vcmp.gt.s32.totalorder %v41, 0
  %vm46 = vcmp.gt.s32.totalorder %v42, 0
  %vm47 = vcmp.gt.s32.totalorder %v43, 0
  %vm48 = vcmp.gt.s32.totalorder %v44, 0
  %v49 = vrot.slane %v20, 7
  %v50 = vrot.slane %v21, 7
  %v51 = vrot.slane %v22, 7
  %v52 = vrot.slane %v23, 7
  %v53 = vrot.slane %v24, 7
  %v54 = vrot.slane %v25, 7
  %v55 = vrot.slane %v26, 7
  %v56 = vrot.slane %v27, 7
  %v57 = vrot.slane %v28, 7
  %v58 = vrot.slane %v29, 7
  %v59 = vrot.slane %v30, 7
  %v60 = vrot.slane %v31, 7
  %v61 = vrot.slane %v32, 7
  %v62 = vrot.slane %v33, 7
  %v63 = vrot.slane %v34, 7
  %v64 = vrot.slane %v35, 7
  %vm65 = vcmp.lt.s32.totalorder %v37, 1
  %v66 = vsel %vm65, %v57, %v61
  %v67 = vsel %vm65, %v58, %v62
  %v68 = vsel %vm65, %v59, %v63
  %v69 = vsel %vm65, %v60, %v64
  %v70 = vsel %vm65, %v53, %v57
  %v71 = vsel %vm65, %v54, %v58
  %v72 = vsel %vm65, %v55, %v59
  %v73 = vsel %vm65, %v56, %v60
  %v74 = vsel %vm65, %v49, %v53
  %v75 = vsel %vm65, %v50, %v54
  %v76 = vsel %vm65, %v51, %v55
  %v77 = vsel %vm65, %v52, %v56
  %v78 = vsel %vm65, %v61, %v49
  %v79 = vsel %vm65, %v62, %v50
  %v80 = vsel %vm65, %v63, %v51
  %v81 = vsel %vm65, %v64, %v52
  %v82 = vsel %vm45, %v78, 0.0
  %v83 = vsel %vm45, %v79, 0.0
  %v84 = vsel %vm45, %v80, 0.0
  %v85 = vsel %vm45, %v81, 0.0
  %v86 = vsel %vm46, %v74, 0.0
  %v87 = vsel %vm46, %v75, 0.0
  %v88 = vsel %vm46, %v76, 0.0
  %v89 = vsel %vm46, %v77, 0.0
  %v90 = vsel %vm47, %v70, 0.0
  %v91 = vsel %vm47, %v71, 0.0
  %v92 = vsel %vm47, %v72, 0.0
  %v93 = vsel %vm47, %v73, 0.0
  %v94 = vsel %vm48, %v66, 0.0
  %v95 = vsel %vm48, %v67, 0.0
  %v96 = vsel %vm48, %v68, 0.0
  %v97 = vsel %vm48, %v69, 0.0
  %vm98 = vcmp.lt.s32.totalorder %v41, 15
  %vm99 = vcmp.lt.s32.totalorder %v42, 15
  %vm100 = vcmp.lt.s32.totalorder %v43, 15
  %vm101 = vcmp.lt.s32.totalorder %v44, 15
  %v102 = vrot.slane %v20, 1
  %v103 = vrot.slane %v21, 1
  %v104 = vrot.slane %v22, 1
  %v105 = vrot.slane %v23, 1
  %v106 = vrot.slane %v24, 1
  %v107 = vrot.slane %v25, 1
  %v108 = vrot.slane %v26, 1
  %v109 = vrot.slane %v27, 1
  %v110 = vrot.slane %v28, 1
  %v111 = vrot.slane %v29, 1
  %v112 = vrot.slane %v30, 1
  %v113 = vrot.slane %v31, 1
  %v114 = vrot.slane %v32, 1
  %v115 = vrot.slane %v33, 1
  %v116 = vrot.slane %v34, 1
  %v117 = vrot.slane %v35, 1
  %vm118 = vcmp.lt.s32.totalorder %v37, 7
  %v119 = vsel %vm118, %v110, %v114
  %v120 = vsel %vm118, %v111, %v115
  %v121 = vsel %vm118, %v112, %v116
  %v122 = vsel %vm118, %v113, %v117
  %v123 = vsel %vm118, %v106, %v110
  %v124 = vsel %vm118, %v107, %v111
  %v125 = vsel %vm118, %v108, %v112
  %v126 = vsel %vm118, %v109, %v113
  %v127 = vsel %vm118, %v102, %v106
  %v128 = vsel %vm118, %v103, %v107
  %v129 = vsel %vm118, %v104, %v108
  %v130 = vsel %vm118, %v105, %v109
  %v131 = vsel %vm118, %v114, %v102
  %v132 = vsel %vm118, %v115, %v103
  %v133 = vsel %vm118, %v116, %v104
  %v134 = vsel %vm118, %v117, %v105
  %v135 = vsel %vm98, %v127, 0.0
  %v136 = vsel %vm98, %v128, 0.0
  %v137 = vsel %vm98, %v129, 0.0
  %v138 = vsel %vm98, %v130, 0.0
  %v139 = vsel %vm99, %v123, 0.0
  %v140 = vsel %vm99, %v124, 0.0
  %v141 = vsel %vm99, %v125, 0.0
  %v142 = vsel %vm99, %v126, 0.0
  %v143 = vsel %vm100, %v119, 0.0
  %v144 = vsel %vm100, %v120, 0.0
  %v145 = vsel %vm100, %v121, 0.0
  %v146 = vsel %vm100, %v122, 0.0
  %v147 = vsel %vm101, %v131, 0.0
  %v148 = vsel %vm101, %v132, 0.0
  %v149 = vsel %vm101, %v133, 0.0
  %v150 = vsel %vm101, %v134, 0.0
  %v151 = vpack.c.bf16 %v24, %v20
  %v152 = vpack.c.bf16 %v25, %v21
  %v153 = vpack.c.bf16 %v26, %v22
  %v154 = vpack.c.bf16 %v27, %v23
  %v155 = vpack.c.bf16 %v32, %v28
  %v156 = vpack.c.bf16 %v33, %v29
  %v157 = vpack.c.bf16 %v34, %v30
  %v158 = vpack.c.bf16 %v35, %v31
  %v159 = vld [vmem:[%s2] sm:$0xf]
  %v160 = vld [vmem:[%s2 + $0x4] sm:$0xf]
  %v161 = vld [vmem:[%s2 + $0x8] sm:$0xf]
  %v162 = vld [vmem:[%s2 + $0xc] sm:$0xf]
  %v163 = vld [vmem:[%s2 + $0x10] sm:$0xf]
  %v164 = vld [vmem:[%s2 + $0x14] sm:$0xf]
  %v165 = vld [vmem:[%s2 + $0x18] sm:$0xf]
  %v166 = vld [vmem:[%s2 + $0x1c] sm:$0xf]
  %v167 = vld [vmem:[%s2 + $0x20] sm:$0xf]
  %v168 = vld [vmem:[%s2 + $0x24] sm:$0xf]
  %v169 = vld [vmem:[%s2 + $0x28] sm:$0xf]
  %v170 = vld [vmem:[%s2 + $0x2c] sm:$0xf]
  %v171 = vld [vmem:[%s2 + $0x30] sm:$0xf]
  %v172 = vld [vmem:[%s2 + $0x34] sm:$0xf]
  %v173 = vld [vmem:[%s2 + $0x38] sm:$0xf]
  %v174 = vld [vmem:[%s2 + $0x3c] sm:$0xf]
  %v175 = vld [vmem:[%s2 + $0x40] sm:$0xf]
  %v176 = vld [vmem:[%s2 + $0x44] sm:$0xf]
  %v177 = vld [vmem:[%s2 + $0x48] sm:$0xf]
  %v178 = vld [vmem:[%s2 + $0x4c] sm:$0xf]
  %v179 = vld [vmem:[%s2 + $0x50] sm:$0xf]
  %v180 = vld [vmem:[%s2 + $0x54] sm:$0xf]
  %v181 = vld [vmem:[%s2 + $0x58] sm:$0xf]
  %v182 = vld [vmem:[%s2 + $0x5c] sm:$0xf]
  %v183 = vld [vmem:[%s2 + $0x60] sm:$0xf]
  %v184 = vld [vmem:[%s2 + $0x64] sm:$0xf]
  %v185 = vld [vmem:[%s2 + $0x68] sm:$0xf]
  %v186 = vld [vmem:[%s2 + $0x6c] sm:$0xf]
  %v187 = vld [vmem:[%s2 + $0x70] sm:$0xf]
  %v188 = vld [vmem:[%s2 + $0x74] sm:$0xf]
  %v189 = vld [vmem:[%s2 + $0x78] sm:$0xf]
  %v190 = vld [vmem:[%s2 + $0x7c] sm:$0xf]
  %v191 = vld [vmem:[%s2 + $0x80] sm:$0xf]
  %v192 = vld [vmem:[%s2 + $0x84] sm:$0xf]
  %v193 = vld [vmem:[%s2 + $0x88] sm:$0xf]
  %v194 = vld [vmem:[%s2 + $0x8c] sm:$0xf]
  %v195 = vld [vmem:[%s2 + $0x90] sm:$0xf]
  %v196 = vld [vmem:[%s2 + $0x94] sm:$0xf]
  %v197 = vld [vmem:[%s2 + $0x98] sm:$0xf]
  %v198 = vld [vmem:[%s2 + $0x9c] sm:$0xf]
  %v199 = vld [vmem:[%s2 + $0xa0] sm:$0xf]
  %v200 = vld [vmem:[%s2 + $0xa4] sm:$0xf]
  %v201 = vld [vmem:[%s2 + $0xa8] sm:$0xf]
  %v202 = vld [vmem:[%s2 + $0xac] sm:$0xf]
  %v203 = vld [vmem:[%s2 + $0xb0] sm:$0xf]
  %v204 = vld [vmem:[%s2 + $0xb4] sm:$0xf]
  %v205 = vld [vmem:[%s2 + $0xb8] sm:$0xf]
  %v206 = vld [vmem:[%s2 + $0xbc] sm:$0xf]
  %v207 = vld [vmem:[%s2 + $0xc0] sm:$0xf]
  %v208 = vld [vmem:[%s2 + $0xc4] sm:$0xf]
  %v209 = vld [vmem:[%s2 + $0xc8] sm:$0xf]
  %v210 = vld [vmem:[%s2 + $0xcc] sm:$0xf]
  %v211 = vld [vmem:[%s2 + $0xd0] sm:$0xf]
  %v212 = vld [vmem:[%s2 + $0xd4] sm:$0xf]
  %v213 = vld [vmem:[%s2 + $0xd8] sm:$0xf]
  %v214 = vld [vmem:[%s2 + $0xdc] sm:$0xf]
  %v215 = vld [vmem:[%s2 + $0xe0] sm:$0xf]
  %v216 = vld [vmem:[%s2 + $0xe4] sm:$0xf]
  %v217 = vld [vmem:[%s2 + $0xe8] sm:$0xf]
  %v218 = vld [vmem:[%s2 + $0xec] sm:$0xf]
  %v219 = vld [vmem:[%s2 + $0xf0] sm:$0xf]
  %v220 = vld [vmem:[%s2 + $0xf4] sm:$0xf]
  %v221 = vld [vmem:[%s2 + $0xf8] sm:$0xf]
  %v222 = vld [vmem:[%s2 + $0xfc] sm:$0xf]
  %v223 = vpack.c.bf16 %v86, %v82
  %v224 = vpack.c.bf16 %v87, %v83
  %v225 = vpack.c.bf16 %v88, %v84
  %v226 = vpack.c.bf16 %v89, %v85
  %v227 = vpack.c.bf16 %v94, %v90
  %v228 = vpack.c.bf16 %v95, %v91
  %v229 = vpack.c.bf16 %v96, %v92
  %v230 = vpack.c.bf16 %v97, %v93
  %v231 = vld [vmem:[%s1] sm:$0xf]
  %v232 = vld [vmem:[%s1 + $0x4] sm:$0xf]
  %v233 = vld [vmem:[%s1 + $0x8] sm:$0xf]
  %v234 = vld [vmem:[%s1 + $0xc] sm:$0xf]
  %v235 = vld [vmem:[%s1 + $0x10] sm:$0xf]
  %v236 = vld [vmem:[%s1 + $0x14] sm:$0xf]
  %v237 = vld [vmem:[%s1 + $0x18] sm:$0xf]
  %v238 = vld [vmem:[%s1 + $0x1c] sm:$0xf]
  %v239 = vld [vmem:[%s1 + $0x20] sm:$0xf]
  %v240 = vld [vmem:[%s1 + $0x24] sm:$0xf]
  %v241 = vld [vmem:[%s1 + $0x28] sm:$0xf]
  %v242 = vld [vmem:[%s1 + $0x2c] sm:$0xf]
  %v243 = vld [vmem:[%s1 + $0x30] sm:$0xf]
  %v244 = vld [vmem:[%s1 + $0x34] sm:$0xf]
  %v245 = vld [vmem:[%s1 + $0x38] sm:$0xf]
  %v246 = vld [vmem:[%s1 + $0x3c] sm:$0xf]
  %v247 = vld [vmem:[%s1 + $0x40] sm:$0xf]
  %v248 = vld [vmem:[%s1 + $0x44] sm:$0xf]
  %v249 = vld [vmem:[%s1 + $0x48] sm:$0xf]
  %v250 = vld [vmem:[%s1 + $0x4c] sm:$0xf]
  %v251 = vld [vmem:[%s1 + $0x50] sm:$0xf]
  %v252 = vld [vmem:[%s1 + $0x54] sm:$0xf]
  %v253 = vld [vmem:[%s1 + $0x58] sm:$0xf]
  %v254 = vld [vmem:[%s1 + $0x5c] sm:$0xf]
  %v255 = vld [vmem:[%s1 + $0x60] sm:$0xf]
  %v256 = vld [vmem:[%s1 + $0x64] sm:$0xf]
  %v257 = vld [vmem:[%s1 + $0x68] sm:$0xf]
  %v258 = vld [vmem:[%s1 + $0x6c] sm:$0xf]
  %v259 = vld [vmem:[%s1 + $0x70] sm:$0xf]
  %v260 = vld [vmem:[%s1 + $0x74] sm:$0xf]
  %v261 = vld [vmem:[%s1 + $0x78] sm:$0xf]
  %v262 = vld [vmem:[%s1 + $0x7c] sm:$0xf]
  %v263 = vld [vmem:[%s1 + $0x80] sm:$0xf]
  %v264 = vld [vmem:[%s1 + $0x84] sm:$0xf]
  %v265 = vld [vmem:[%s1 + $0x88] sm:$0xf]
  %v266 = vld [vmem:[%s1 + $0x8c] sm:$0xf]
  %v267 = vld [vmem:[%s1 + $0x90] sm:$0xf]
  %v268 = vld [vmem:[%s1 + $0x94] sm:$0xf]
  %v269 = vld [vmem:[%s1 + $0x98] sm:$0xf]
  %v270 = vld [vmem:[%s1 + $0x9c] sm:$0xf]
  %v271 = vld [vmem:[%s1 + $0xa0] sm:$0xf]
  %v272 = vld [vmem:[%s1 + $0xa4] sm:$0xf]
  %v273 = vld [vmem:[%s1 + $0xa8] sm:$0xf]
  %v274 = vld [vmem:[%s1 + $0xac] sm:$0xf]
  %v275 = vld [vmem:[%s1 + $0xb0] sm:$0xf]
  %v276 = vld [vmem:[%s1 + $0xb4] sm:$0xf]
  %v277 = vld [vmem:[%s1 + $0xb8] sm:$0xf]
  %v278 = vld [vmem:[%s1 + $0xbc] sm:$0xf]
  %v279 = vld [vmem:[%s1 + $0xc0] sm:$0xf]
  %v280 = vld [vmem:[%s1 + $0xc4] sm:$0xf]
  %v281 = vld [vmem:[%s1 + $0xc8] sm:$0xf]
  %v282 = vld [vmem:[%s1 + $0xcc] sm:$0xf]
  %v283 = vld [vmem:[%s1 + $0xd0] sm:$0xf]
  %v284 = vld [vmem:[%s1 + $0xd4] sm:$0xf]
  %v285 = vld [vmem:[%s1 + $0xd8] sm:$0xf]
  %v286 = vld [vmem:[%s1 + $0xdc] sm:$0xf]
  %v287 = vld [vmem:[%s1 + $0xe0] sm:$0xf]
  %v288 = vld [vmem:[%s1 + $0xe4] sm:$0xf]
  %v289 = vld [vmem:[%s1 + $0xe8] sm:$0xf]
  %v290 = vld [vmem:[%s1 + $0xec] sm:$0xf]
  %v291 = vld [vmem:[%s1 + $0xf0] sm:$0xf]
  %v292 = vld [vmem:[%s1 + $0xf4] sm:$0xf]
  %v293 = vld [vmem:[%s1 + $0xf8] sm:$0xf]
  %v294 = vld [vmem:[%s1 + $0xfc] sm:$0xf]
  %v359 = vunpack.c.l.b16 %v231
  %v360 = vunpack.c.l.b16 %v232
  %v361 = vunpack.c.l.b16 %v233
  %v362 = vunpack.c.l.b16 %v234
  %v363 = vunpack.c.l.b16 %v235
  %v364 = vunpack.c.l.b16 %v236
  %v365 = vunpack.c.l.b16 %v237
  %v366 = vunpack.c.l.b16 %v238
  %v367 = vunpack.c.l.b16 %v239
  %v368 = vunpack.c.l.b16 %v240
  %v369 = vunpack.c.l.b16 %v241
  %v370 = vunpack.c.l.b16 %v242
  %v371 = vunpack.c.l.b16 %v243
  %v372 = vunpack.c.l.b16 %v244
  %v373 = vunpack.c.l.b16 %v245
  %v374 = vunpack.c.l.b16 %v246
  %v375 = vunpack.c.l.b16 %v247
  %v376 = vunpack.c.l.b16 %v248
  %v377 = vunpack.c.l.b16 %v249
  %v378 = vunpack.c.l.b16 %v250
  %v379 = vunpack.c.l.b16 %v251
  %v380 = vunpack.c.l.b16 %v252
  %v381 = vunpack.c.l.b16 %v253
  %v382 = vunpack.c.l.b16 %v254
  %v383 = vunpack.c.l.b16 %v255
  %v384 = vunpack.c.l.b16 %v256
  %v385 = vunpack.c.l.b16 %v257
  %v386 = vunpack.c.l.b16 %v258
  %v387 = vunpack.c.l.b16 %v259
  %v388 = vunpack.c.l.b16 %v260
  %v389 = vunpack.c.l.b16 %v261
  %v390 = vunpack.c.l.b16 %v262
  %v391 = vunpack.c.l.b16 %v263
  %v392 = vunpack.c.l.b16 %v264
  %v393 = vunpack.c.l.b16 %v265
  %v394 = vunpack.c.l.b16 %v266
  %v395 = vunpack.c.l.b16 %v267
  %v396 = vunpack.c.l.b16 %v268
  %v397 = vunpack.c.l.b16 %v269
  %v398 = vunpack.c.l.b16 %v270
  %v399 = vunpack.c.l.b16 %v271
  %v400 = vunpack.c.l.b16 %v272
  %v401 = vunpack.c.l.b16 %v273
  %v402 = vunpack.c.l.b16 %v274
  %v403 = vunpack.c.l.b16 %v275
  %v404 = vunpack.c.l.b16 %v276
  %v405 = vunpack.c.l.b16 %v277
  %v406 = vunpack.c.l.b16 %v278
  %v407 = vunpack.c.l.b16 %v279
  %v408 = vunpack.c.l.b16 %v280
  %v409 = vunpack.c.l.b16 %v281
  %v410 = vunpack.c.l.b16 %v282
  %v411 = vunpack.c.l.b16 %v283
  %v412 = vunpack.c.l.b16 %v284
  %v413 = vunpack.c.l.b16 %v285
  %v414 = vunpack.c.l.b16 %v286
  %v415 = vunpack.c.l.b16 %v287
  %v416 = vunpack.c.l.b16 %v288
  %v417 = vunpack.c.l.b16 %v289
  %v418 = vunpack.c.l.b16 %v290
  %v419 = vunpack.c.l.b16 %v291
  %v420 = vunpack.c.l.b16 %v292
  %v421 = vunpack.c.l.b16 %v293
  %v422 = vunpack.c.l.b16 %v294
  %v423 = vpack.c.b16 %v360, %v359
  %v424 = vpack.c.b16 %v362, %v361
  %v425 = vpack.c.b16 %v364, %v363
  %v426 = vpack.c.b16 %v366, %v365
  %v427 = vpack.c.b16 %v368, %v367
  %v428 = vpack.c.b16 %v370, %v369
  %v429 = vpack.c.b16 %v372, %v371
  %v430 = vpack.c.b16 %v374, %v373
  %v431 = vpack.c.b16 %v376, %v375
  %v432 = vpack.c.b16 %v378, %v377
  %v433 = vpack.c.b16 %v380, %v379
  %v434 = vpack.c.b16 %v382, %v381
  %v435 = vpack.c.b16 %v384, %v383
  %v436 = vpack.c.b16 %v386, %v385
  %v437 = vpack.c.b16 %v388, %v387
  %v438 = vpack.c.b16 %v390, %v389
  %v439 = vpack.c.b16 %v392, %v391
  %v440 = vpack.c.b16 %v394, %v393
  %v441 = vpack.c.b16 %v396, %v395
  %v442 = vpack.c.b16 %v398, %v397
  %v443 = vpack.c.b16 %v400, %v399
  %v444 = vpack.c.b16 %v402, %v401
  %v445 = vpack.c.b16 %v404, %v403
  %v446 = vpack.c.b16 %v406, %v405
  %v447 = vpack.c.b16 %v408, %v407
  %v448 = vpack.c.b16 %v410, %v409
  %v449 = vpack.c.b16 %v412, %v411
  %v450 = vpack.c.b16 %v414, %v413
  %v451 = vpack.c.b16 %v416, %v415
  %v452 = vpack.c.b16 %v418, %v417
  %v453 = vpack.c.b16 %v420, %v419
  %v454 = vpack.c.b16 %v422, %v421
  %487 = vmatpush.bf16.msra.mxu0 %v430
  %488 = vmatpush.bf16.msra.mxu0 %v429
  %489 = vmatpush.bf16.msra.mxu0 %v428
  %490 = vmatpush.bf16.msra.mxu0 %v427
  %491 = vmatpush.bf16.msra.mxu0 %v426
  %492 = vmatpush.bf16.msra.mxu0 %v425
  %493 = vmatpush.bf16.msra.mxu0 %v424
  %494 = vmatpush.bf16.msra.mxu0 %v423
  %495 = vmatmul.bf16.gmra.mxu0 %v223
  %v496 = vpop.f32.mrf.mxu0
  %v497 = vadd.f32 0.0, %v496
  %v498 = vpop.f32.mrf.mxu0
  %v499 = vadd.f32 0.0, %v498
  %500 = vmatmul.bf16.gmra.mxu0 %v227
  %v501 = vpop.f32.mrf.mxu0
  %v502 = vadd.f32 0.0, %v501
  %v503 = vpop.f32.mrf.mxu0
  %v504 = vadd.f32 0.0, %v503
  %505 = vdwg.mxu0
  %506 = vmatpush.bf16.msra.mxu0 %v438
  %507 = vmatpush.bf16.msra.mxu0 %v437
  %508 = vmatpush.bf16.msra.mxu0 %v436
  %509 = vmatpush.bf16.msra.mxu0 %v435
  %510 = vmatpush.bf16.msra.mxu0 %v434
  %511 = vmatpush.bf16.msra.mxu0 %v433
  %512 = vmatpush.bf16.msra.mxu0 %v432
  %513 = vmatpush.bf16.msra.mxu0 %v431
  %514 = vmatmul.bf16.gmra.mxu0 %v224
  %v515 = vpop.f32.mrf.mxu0
  %v516 = vadd.f32 %v497, %v515
  %v517 = vpop.f32.mrf.mxu0
  %v518 = vadd.f32 %v499, %v517
  %519 = vmatmul.bf16.gmra.mxu0 %v228
  %v520 = vpop.f32.mrf.mxu0
  %v521 = vadd.f32 %v502, %v520
  %v522 = vpop.f32.mrf.mxu0
  %v523 = vadd.f32 %v504, %v522
  %524 = vdwg.mxu0
  %525 = vmatpush.bf16.msra.mxu0 %v446
  %526 = vmatpush.bf16.msra.mxu0 %v445
  %527 = vmatpush.bf16.msra.mxu0 %v444
  %528 = vmatpush.bf16.msra.mxu0 %v443
  %529 = vmatpush.bf16.msra.mxu0 %v442
  %530 = vmatpush.bf16.msra.mxu0 %v441
  %531 = vmatpush.bf16.msra.mxu0 %v440
  %532 = vmatpush.bf16.msra.mxu0 %v439
  %533 = vmatmul.bf16.gmra.mxu0 %v225
  %v534 = vpop.f32.mrf.mxu0
  %v535 = vadd.f32 %v516, %v534
  %v536 = vpop.f32.mrf.mxu0
  %v537 = vadd.f32 %v518, %v536
  %538 = vmatmul.bf16.gmra.mxu0 %v229
  %v539 = vpop.f32.mrf.mxu0
  %v540 = vadd.f32 %v521, %v539
  %v541 = vpop.f32.mrf.mxu0
  %v542 = vadd.f32 %v523, %v541
  %543 = vdwg.mxu0
  %544 = vmatpush.bf16.msra.mxu0 %v454
  %545 = vmatpush.bf16.msra.mxu0 %v453
  %546 = vmatpush.bf16.msra.mxu0 %v452
  %547 = vmatpush.bf16.msra.mxu0 %v451
  %548 = vmatpush.bf16.msra.mxu0 %v450
  %549 = vmatpush.bf16.msra.mxu0 %v449
  %550 = vmatpush.bf16.msra.mxu0 %v448
  %551 = vmatpush.bf16.msra.mxu0 %v447
  %552 = vmatmul.bf16.gmra.mxu0 %v226
  %v553 = vpop.f32.mrf.mxu0
  %v554 = vadd.f32 %v535, %v553
  %v555 = vpop.f32.mrf.mxu0
  %v556 = vadd.f32 %v537, %v555
  %557 = vmatmul.bf16.gmra.mxu0 %v230
  %v558 = vpop.f32.mrf.mxu0
  %v559 = vadd.f32 %v540, %v558
  %v560 = vpop.f32.mrf.mxu0
  %v561 = vadd.f32 %v542, %v560
  %562 = vdwg.mxu0
  %v627 = vunpack.c.l.b16 %v159
  %v628 = vunpack.c.l.b16 %v160
  %v629 = vunpack.c.l.b16 %v161
  %v630 = vunpack.c.l.b16 %v162
  %v631 = vunpack.c.l.b16 %v163
  %v632 = vunpack.c.l.b16 %v164
  %v633 = vunpack.c.l.b16 %v165
  %v634 = vunpack.c.l.b16 %v166
  %v635 = vunpack.c.l.b16 %v167
  %v636 = vunpack.c.l.b16 %v168
  %v637 = vunpack.c.l.b16 %v169
  %v638 = vunpack.c.l.b16 %v170
  %v639 = vunpack.c.l.b16 %v171
  %v640 = vunpack.c.l.b16 %v172
  %v641 = vunpack.c.l.b16 %v173
  %v642 = vunpack.c.l.b16 %v174
  %v643 = vunpack.c.l.b16 %v175
  %v644 = vunpack.c.l.b16 %v176
  %v645 = vunpack.c.l.b16 %v177
  %v646 = vunpack.c.l.b16 %v178
  %v647 = vunpack.c.l.b16 %v179
  %v648 = vunpack.c.l.b16 %v180
  %v649 = vunpack.c.l.b16 %v181
  %v650 = vunpack.c.l.b16 %v182
  %v651 = vunpack.c.l.b16 %v183
  %v652 = vunpack.c.l.b16 %v184
  %v653 = vunpack.c.l.b16 %v185
  %v654 = vunpack.c.l.b16 %v186
  %v655 = vunpack.c.l.b16 %v187
  %v656 = vunpack.c.l.b16 %v188
  %v657 = vunpack.c.l.b16 %v189
  %v658 = vunpack.c.l.b16 %v190
  %v659 = vunpack.c.l.b16 %v191
  %v660 = vunpack.c.l.b16 %v192
  %v661 = vunpack.c.l.b16 %v193
  %v662 = vunpack.c.l.b16 %v194
  %v663 = vunpack.c.l.b16 %v195
  %v664 = vunpack.c.l.b16 %v196
  %v665 = vunpack.c.l.b16 %v197
  %v666 = vunpack.c.l.b16 %v198
  %v667 = vunpack.c.l.b16 %v199
  %v668 = vunpack.c.l.b16 %v200
  %v669 = vunpack.c.l.b16 %v201
  %v670 = vunpack.c.l.b16 %v202
  %v671 = vunpack.c.l.b16 %v203
  %v672 = vunpack.c.l.b16 %v204
  %v673 = vunpack.c.l.b16 %v205
  %v674 = vunpack.c.l.b16 %v206
  %v675 = vunpack.c.l.b16 %v207
  %v676 = vunpack.c.l.b16 %v208
  %v677 = vunpack.c.l.b16 %v209
  %v678 = vunpack.c.l.b16 %v210
  %v679 = vunpack.c.l.b16 %v211
  %v680 = vunpack.c.l.b16 %v212
  %v681 = vunpack.c.l.b16 %v213
  %v682 = vunpack.c.l.b16 %v214
  %v683 = vunpack.c.l.b16 %v215
  %v684 = vunpack.c.l.b16 %v216
  %v685 = vunpack.c.l.b16 %v217
  %v686 = vunpack.c.l.b16 %v218
  %v687 = vunpack.c.l.b16 %v219
  %v688 = vunpack.c.l.b16 %v220
  %v689 = vunpack.c.l.b16 %v221
  %v690 = vunpack.c.l.b16 %v222
  %v691 = vpack.c.b16 %v628, %v627
  %v692 = vpack.c.b16 %v630, %v629
  %v693 = vpack.c.b16 %v632, %v631
  %v694 = vpack.c.b16 %v634, %v633
  %v695 = vpack.c.b16 %v636, %v635
  %v696 = vpack.c.b16 %v638, %v637
  %v697 = vpack.c.b16 %v640, %v639
  %v698 = vpack.c.b16 %v642, %v641
  %v699 = vpack.c.b16 %v644, %v643
  %v700 = vpack.c.b16 %v646, %v645
  %v701 = vpack.c.b16 %v648, %v647
  %v702 = vpack.c.b16 %v650, %v649
  %v703 = vpack.c.b16 %v652, %v651
  %v704 = vpack.c.b16 %v654, %v653
  %v705 = vpack.c.b16 %v656, %v655
  %v706 = vpack.c.b16 %v658, %v657
  %v707 = vpack.c.b16 %v660, %v659
  %v708 = vpack.c.b16 %v662, %v661
  %v709 = vpack.c.b16 %v664, %v663
  %v710 = vpack.c.b16 %v666, %v665
  %v711 = vpack.c.b16 %v668, %v667
  %v712 = vpack.c.b16 %v670, %v669
  %v713 = vpack.c.b16 %v672, %v671
  %v714 = vpack.c.b16 %v674, %v673
  %v715 = vpack.c.b16 %v676, %v675
  %v716 = vpack.c.b16 %v678, %v677
  %v717 = vpack.c.b16 %v680, %v679
  %v718 = vpack.c.b16 %v682, %v681
  %v719 = vpack.c.b16 %v684, %v683
  %v720 = vpack.c.b16 %v686, %v685
  %v721 = vpack.c.b16 %v688, %v687
  %v722 = vpack.c.b16 %v690, %v689
  %755 = vmatpush.bf16.msra.mxu0 %v698
  %756 = vmatpush.bf16.msra.mxu0 %v697
  %757 = vmatpush.bf16.msra.mxu0 %v696
  %758 = vmatpush.bf16.msra.mxu0 %v695
  %759 = vmatpush.bf16.msra.mxu0 %v694
  %760 = vmatpush.bf16.msra.mxu0 %v693
  %761 = vmatpush.bf16.msra.mxu0 %v692
  %762 = vmatpush.bf16.msra.mxu0 %v691
  %763 = vmatmul.bf16.gmra.mxu0 %v151
  %v764 = vpop.f32.mrf.mxu0
  %v765 = vadd.f32 %v554, %v764
  %v766 = vpop.f32.mrf.mxu0
  %v767 = vadd.f32 %v556, %v766
  %768 = vmatmul.bf16.gmra.mxu0 %v155
  %v769 = vpop.f32.mrf.mxu0
  %v770 = vadd.f32 %v559, %v769
  %v771 = vpop.f32.mrf.mxu0
  %v772 = vadd.f32 %v561, %v771
  %773 = vdwg.mxu0
  %774 = vmatpush.bf16.msra.mxu0 %v706
  %775 = vmatpush.bf16.msra.mxu0 %v705
  %776 = vmatpush.bf16.msra.mxu0 %v704
  %777 = vmatpush.bf16.msra.mxu0 %v703
  %778 = vmatpush.bf16.msra.mxu0 %v702
  %779 = vmatpush.bf16.msra.mxu0 %v701
  %780 = vmatpush.bf16.msra.mxu0 %v700
  %781 = vmatpush.bf16.msra.mxu0 %v699
  %782 = vmatmul.bf16.gmra.mxu0 %v152
  %v783 = vpop.f32.mrf.mxu0
  %v784 = vadd.f32 %v765, %v783
  %v785 = vpop.f32.mrf.mxu0
  %v786 = vadd.f32 %v767, %v785
  %787 = vmatmul.bf16.gmra.mxu0 %v156
  %v788 = vpop.f32.mrf.mxu0
  %v789 = vadd.f32 %v770, %v788
  %v790 = vpop.f32.mrf.mxu0
  %v791 = vadd.f32 %v772, %v790
  %792 = vdwg.mxu0
  %793 = vmatpush.bf16.msra.mxu0 %v714
  %794 = vmatpush.bf16.msra.mxu0 %v713
  %795 = vmatpush.bf16.msra.mxu0 %v712
  %796 = vmatpush.bf16.msra.mxu0 %v711
  %797 = vmatpush.bf16.msra.mxu0 %v710
  %798 = vmatpush.bf16.msra.mxu0 %v709
  %799 = vmatpush.bf16.msra.mxu0 %v708
  %800 = vmatpush.bf16.msra.mxu0 %v707
  %801 = vmatmul.bf16.gmra.mxu0 %v153
  %v802 = vpop.f32.mrf.mxu0
  %v803 = vadd.f32 %v784, %v802
  %v804 = vpop.f32.mrf.mxu0
  %v805 = vadd.f32 %v786, %v804
  %806 = vmatmul.bf16.gmra.mxu0 %v157
  %v807 = vpop.f32.mrf.mxu0
  %v808 = vadd.f32 %v789, %v807
  %v809 = vpop.f32.mrf.mxu0
  %v810 = vadd.f32 %v791, %v809
  %811 = vdwg.mxu0
  %812 = vmatpush.bf16.msra.mxu0 %v722
  %813 = vmatpush.bf16.msra.mxu0 %v721
  %814 = vmatpush.bf16.msra.mxu0 %v720
  %815 = vmatpush.bf16.msra.mxu0 %v719
  %816 = vmatpush.bf16.msra.mxu0 %v718
  %817 = vmatpush.bf16.msra.mxu0 %v717
  %818 = vmatpush.bf16.msra.mxu0 %v716
  %819 = vmatpush.bf16.msra.mxu0 %v715
  %820 = vmatmul.bf16.gmra.mxu0 %v154
  %v821 = vpop.f32.mrf.mxu0
  %v822 = vadd.f32 %v803, %v821
  %v823 = vpop.f32.mrf.mxu0
  %v824 = vadd.f32 %v805, %v823
  %825 = vmatmul.bf16.gmra.mxu0 %v158
  %v826 = vpop.f32.mrf.mxu0
  %v827 = vadd.f32 %v808, %v826
  %v828 = vpop.f32.mrf.mxu0
  %v829 = vadd.f32 %v810, %v828
  %830 = vdwg.mxu0
  %v831 = vpack.c.bf16 %v139, %v135
  %v832 = vpack.c.bf16 %v140, %v136
  %v833 = vpack.c.bf16 %v141, %v137
  %v834 = vpack.c.bf16 %v142, %v138
  %v835 = vpack.c.bf16 %v147, %v143
  %v836 = vpack.c.bf16 %v148, %v144
  %v837 = vpack.c.bf16 %v149, %v145
  %v838 = vpack.c.bf16 %v150, %v146
  %v839 = vld [vmem:[%s3] sm:$0xf]
  %v840 = vld [vmem:[%s3 + $0x4] sm:$0xf]
  %v841 = vld [vmem:[%s3 + $0x8] sm:$0xf]
  %v842 = vld [vmem:[%s3 + $0xc] sm:$0xf]
  %v843 = vld [vmem:[%s3 + $0x10] sm:$0xf]
  %v844 = vld [vmem:[%s3 + $0x14] sm:$0xf]
  %v845 = vld [vmem:[%s3 + $0x18] sm:$0xf]
  %v846 = vld [vmem:[%s3 + $0x1c] sm:$0xf]
  %v847 = vld [vmem:[%s3 + $0x20] sm:$0xf]
  %v848 = vld [vmem:[%s3 + $0x24] sm:$0xf]
  %v849 = vld [vmem:[%s3 + $0x28] sm:$0xf]
  %v850 = vld [vmem:[%s3 + $0x2c] sm:$0xf]
  %v851 = vld [vmem:[%s3 + $0x30] sm:$0xf]
  %v852 = vld [vmem:[%s3 + $0x34] sm:$0xf]
  %v853 = vld [vmem:[%s3 + $0x38] sm:$0xf]
  %v854 = vld [vmem:[%s3 + $0x3c] sm:$0xf]
  %v855 = vld [vmem:[%s3 + $0x40] sm:$0xf]
  %v856 = vld [vmem:[%s3 + $0x44] sm:$0xf]
  %v857 = vld [vmem:[%s3 + $0x48] sm:$0xf]
  %v858 = vld [vmem:[%s3 + $0x4c] sm:$0xf]
  %v859 = vld [vmem:[%s3 + $0x50] sm:$0xf]
  %v860 = vld [vmem:[%s3 + $0x54] sm:$0xf]
  %v861 = vld [vmem:[%s3 + $0x58] sm:$0xf]
  %v862 = vld [vmem:[%s3 + $0x5c] sm:$0xf]
  %v863 = vld [vmem:[%s3 + $0x60] sm:$0xf]
  %v864 = vld [vmem:[%s3 + $0x64] sm:$0xf]
  %v865 = vld [vmem:[%s3 + $0x68] sm:$0xf]
  %v866 = vld [vmem:[%s3 + $0x6c] sm:$0xf]
  %v867 = vld [vmem:[%s3 + $0x70] sm:$0xf]
  %v868 = vld [vmem:[%s3 + $0x74] sm:$0xf]
  %v869 = vld [vmem:[%s3 + $0x78] sm:$0xf]
  %v870 = vld [vmem:[%s3 + $0x7c] sm:$0xf]
  %v871 = vld [vmem:[%s3 + $0x80] sm:$0xf]
  %v872 = vld [vmem:[%s3 + $0x84] sm:$0xf]
  %v873 = vld [vmem:[%s3 + $0x88] sm:$0xf]
  %v874 = vld [vmem:[%s3 + $0x8c] sm:$0xf]
  %v875 = vld [vmem:[%s3 + $0x90] sm:$0xf]
  %v876 = vld [vmem:[%s3 + $0x94] sm:$0xf]
  %v877 = vld [vmem:[%s3 + $0x98] sm:$0xf]
  %v878 = vld [vmem:[%s3 + $0x9c] sm:$0xf]
  %v879 = vld [vmem:[%s3 + $0xa0] sm:$0xf]
  %v880 = vld [vmem:[%s3 + $0xa4] sm:$0xf]
  %v881 = vld [vmem:[%s3 + $0xa8] sm:$0xf]
  %v882 = vld [vmem:[%s3 + $0xac] sm:$0xf]
  %v883 = vld [vmem:[%s3 + $0xb0] sm:$0xf]
  %v884 = vld [vmem:[%s3 + $0xb4] sm:$0xf]
  %v885 = vld [vmem:[%s3 + $0xb8] sm:$0xf]
  %v886 = vld [vmem:[%s3 + $0xbc] sm:$0xf]
  %v887 = vld [vmem:[%s3 + $0xc0] sm:$0xf]
  %v888 = vld [vmem:[%s3 + $0xc4] sm:$0xf]
  %v889 = vld [vmem:[%s3 + $0xc8] sm:$0xf]
  %v890 = vld [vmem:[%s3 + $0xcc] sm:$0xf]
  %v891 = vld [vmem:[%s3 + $0xd0] sm:$0xf]
  %v892 = vld [vmem:[%s3 + $0xd4] sm:$0xf]
  %v893 = vld [vmem:[%s3 + $0xd8] sm:$0xf]
  %v894 = vld [vmem:[%s3 + $0xdc] sm:$0xf]
  %v895 = vld [vmem:[%s3 + $0xe0] sm:$0xf]
  %v896 = vld [vmem:[%s3 + $0xe4] sm:$0xf]
  %v897 = vld [vmem:[%s3 + $0xe8] sm:$0xf]
  %v898 = vld [vmem:[%s3 + $0xec] sm:$0xf]
  %v899 = vld [vmem:[%s3 + $0xf0] sm:$0xf]
  %v900 = vld [vmem:[%s3 + $0xf4] sm:$0xf]
  %v901 = vld [vmem:[%s3 + $0xf8] sm:$0xf]
  %v902 = vld [vmem:[%s3 + $0xfc] sm:$0xf]
  %v967 = vunpack.c.l.b16 %v839
  %v968 = vunpack.c.l.b16 %v840
  %v969 = vunpack.c.l.b16 %v841
  %v970 = vunpack.c.l.b16 %v842
  %v971 = vunpack.c.l.b16 %v843
  %v972 = vunpack.c.l.b16 %v844
  %v973 = vunpack.c.l.b16 %v845
  %v974 = vunpack.c.l.b16 %v846
  %v975 = vunpack.c.l.b16 %v847
  %v976 = vunpack.c.l.b16 %v848
  %v977 = vunpack.c.l.b16 %v849
  %v978 = vunpack.c.l.b16 %v850
  %v979 = vunpack.c.l.b16 %v851
  %v980 = vunpack.c.l.b16 %v852
  %v981 = vunpack.c.l.b16 %v853
  %v982 = vunpack.c.l.b16 %v854
  %v983 = vunpack.c.l.b16 %v855
  %v984 = vunpack.c.l.b16 %v856
  %v985 = vunpack.c.l.b16 %v857
  %v986 = vunpack.c.l.b16 %v858
  %v987 = vunpack.c.l.b16 %v859
  %v988 = vunpack.c.l.b16 %v860
  %v989 = vunpack.c.l.b16 %v861
  %v990 = vunpack.c.l.b16 %v862
  %v991 = vunpack.c.l.b16 %v863
  %v992 = vunpack.c.l.b16 %v864
  %v993 = vunpack.c.l.b16 %v865
  %v994 = vunpack.c.l.b16 %v866
  %v995 = vunpack.c.l.b16 %v867
  %v996 = vunpack.c.l.b16 %v868
  %v997 = vunpack.c.l.b16 %v869
  %v998 = vunpack.c.l.b16 %v870
  %v999 = vunpack.c.l.b16 %v871
  %v1000 = vunpack.c.l.b16 %v872
  %v1001 = vunpack.c.l.b16 %v873
  %v1002 = vunpack.c.l.b16 %v874
  %v1003 = vunpack.c.l.b16 %v875
  %v1004 = vunpack.c.l.b16 %v876
  %v1005 = vunpack.c.l.b16 %v877
  %v1006 = vunpack.c.l.b16 %v878
  %v1007 = vunpack.c.l.b16 %v879
  %v1008 = vunpack.c.l.b16 %v880
  %v1009 = vunpack.c.l.b16 %v881
  %v1010 = vunpack.c.l.b16 %v882
  %v1011 = vunpack.c.l.b16 %v883
  %v1012 = vunpack.c.l.b16 %v884
  %v1013 = vunpack.c.l.b16 %v885
  %v1014 = vunpack.c.l.b16 %v886
  %v1015 = vunpack.c.l.b16 %v887
  %v1016 = vunpack.c.l.b16 %v888
  %v1017 = vunpack.c.l.b16 %v889
  %v1018 = vunpack.c.l.b16 %v890
  %v1019 = vunpack.c.l.b16 %v891
  %v1020 = vunpack.c.l.b16 %v892
  %v1021 = vunpack.c.l.b16 %v893
  %v1022 = vunpack.c.l.b16 %v894
  %v1023 = vunpack.c.l.b16 %v895
  %v1024 = vunpack.c.l.b16 %v896
  %v1025 = vunpack.c.l.b16 %v897
  %v1026 = vunpack.c.l.b16 %v898
  %v1027 = vunpack.c.l.b16 %v899
  %v1028 = vunpack.c.l.b16 %v900
  %v1029 = vunpack.c.l.b16 %v901
  %v1030 = vunpack.c.l.b16 %v902
  %v1031 = vpack.c.b16 %v968, %v967
  %v1032 = vpack.c.b16 %v970, %v969
  %v1033 = vpack.c.b16 %v972, %v971
  %v1034 = vpack.c.b16 %v974, %v973
  %v1035 = vpack.c.b16 %v976, %v975
  %v1036 = vpack.c.b16 %v978, %v977
  %v1037 = vpack.c.b16 %v980, %v979
  %v1038 = vpack.c.b16 %v982, %v981
  %v1039 = vpack.c.b16 %v984, %v983
  %v1040 = vpack.c.b16 %v986, %v985
  %v1041 = vpack.c.b16 %v988, %v987
  %v1042 = vpack.c.b16 %v990, %v989
  %v1043 = vpack.c.b16 %v992, %v991
  %v1044 = vpack.c.b16 %v994, %v993
  %v1045 = vpack.c.b16 %v996, %v995
  %v1046 = vpack.c.b16 %v998, %v997
  %v1047 = vpack.c.b16 %v1000, %v999
  %v1048 = vpack.c.b16 %v1002, %v1001
  %v1049 = vpack.c.b16 %v1004, %v1003
  %v1050 = vpack.c.b16 %v1006, %v1005
  %v1051 = vpack.c.b16 %v1008, %v1007
  %v1052 = vpack.c.b16 %v1010, %v1009
  %v1053 = vpack.c.b16 %v1012, %v1011
  %v1054 = vpack.c.b16 %v1014, %v1013
  %v1055 = vpack.c.b16 %v1016, %v1015
  %v1056 = vpack.c.b16 %v1018, %v1017
  %v1057 = vpack.c.b16 %v1020, %v1019
  %v1058 = vpack.c.b16 %v1022, %v1021
  %v1059 = vpack.c.b16 %v1024, %v1023
  %v1060 = vpack.c.b16 %v1026, %v1025
  %v1061 = vpack.c.b16 %v1028, %v1027
  %v1062 = vpack.c.b16 %v1030, %v1029
  %1095 = vmatpush.bf16.msra.mxu0 %v1038
  %1096 = vmatpush.bf16.msra.mxu0 %v1037
  %1097 = vmatpush.bf16.msra.mxu0 %v1036
  %1098 = vmatpush.bf16.msra.mxu0 %v1035
  %1099 = vmatpush.bf16.msra.mxu0 %v1034
  %1100 = vmatpush.bf16.msra.mxu0 %v1033
  %1101 = vmatpush.bf16.msra.mxu0 %v1032
  %1102 = vmatpush.bf16.msra.mxu0 %v1031
  %1103 = vmatmul.bf16.gmra.mxu0 %v831
  %v1104 = vpop.f32.mrf.mxu0
  %v1105 = vadd.f32 0.0, %v1104
  %v1106 = vpop.f32.mrf.mxu0
  %v1107 = vadd.f32 0.0, %v1106
  %1108 = vmatmul.bf16.gmra.mxu0 %v835
  %v1109 = vpop.f32.mrf.mxu0
  %v1110 = vadd.f32 0.0, %v1109
  %v1111 = vpop.f32.mrf.mxu0
  %v1112 = vadd.f32 0.0, %v1111
  %1113 = vdwg.mxu0
  %1114 = vmatpush.bf16.msra.mxu0 %v1046
  %1115 = vmatpush.bf16.msra.mxu0 %v1045
  %1116 = vmatpush.bf16.msra.mxu0 %v1044
  %1117 = vmatpush.bf16.msra.mxu0 %v1043
  %1118 = vmatpush.bf16.msra.mxu0 %v1042
  %1119 = vmatpush.bf16.msra.mxu0 %v1041
  %1120 = vmatpush.bf16.msra.mxu0 %v1040
  %1121 = vmatpush.bf16.msra.mxu0 %v1039
  %1122 = vmatmul.bf16.gmra.mxu0 %v832
  %v1123 = vpop.f32.mrf.mxu0
  %v1124 = vadd.f32 %v1105, %v1123
  %v1125 = vpop.f32.mrf.mxu0
  %v1126 = vadd.f32 %v1107, %v1125
  %1127 = vmatmul.bf16.gmra.mxu0 %v836
  %v1128 = vpop.f32.mrf.mxu0
  %v1129 = vadd.f32 %v1110, %v1128
  %v1130 = vpop.f32.mrf.mxu0
  %v1131 = vadd.f32 %v1112, %v1130
  %1132 = vdwg.mxu0
  %1133 = vmatpush.bf16.msra.mxu0 %v1054
  %1134 = vmatpush.bf16.msra.mxu0 %v1053
  %1135 = vmatpush.bf16.msra.mxu0 %v1052
  %1136 = vmatpush.bf16.msra.mxu0 %v1051
  %1137 = vmatpush.bf16.msra.mxu0 %v1050
  %1138 = vmatpush.bf16.msra.mxu0 %v1049
  %1139 = vmatpush.bf16.msra.mxu0 %v1048
  %1140 = vmatpush.bf16.msra.mxu0 %v1047
  %1141 = vmatmul.bf16.gmra.mxu0 %v833
  %v1142 = vpop.f32.mrf.mxu0
  %v1143 = vadd.f32 %v1124, %v1142
  %v1144 = vpop.f32.mrf.mxu0
  %v1145 = vadd.f32 %v1126, %v1144
  %1146 = vmatmul.bf16.gmra.mxu0 %v837
  %v1147 = vpop.f32.mrf.mxu0
  %v1148 = vadd.f32 %v1129, %v1147
  %v1149 = vpop.f32.mrf.mxu0
  %v1150 = vadd.f32 %v1131, %v1149
  %1151 = vdwg.mxu0
  %1152 = vmatpush.bf16.msra.mxu0 %v1062
  %1153 = vmatpush.bf16.msra.mxu0 %v1061
  %1154 = vmatpush.bf16.msra.mxu0 %v1060
  %1155 = vmatpush.bf16.msra.mxu0 %v1059
  %1156 = vmatpush.bf16.msra.mxu0 %v1058
  %1157 = vmatpush.bf16.msra.mxu0 %v1057
  %1158 = vmatpush.bf16.msra.mxu0 %v1056
  %1159 = vmatpush.bf16.msra.mxu0 %v1055
  %1160 = vmatmul.bf16.gmra.mxu0 %v834
  %v1161 = vpop.f32.mrf.mxu0
  %v1162 = vadd.f32 %v1143, %v1161
  %v1163 = vpop.f32.mrf.mxu0
  %v1164 = vadd.f32 %v1145, %v1163
  %1165 = vmatmul.bf16.gmra.mxu0 %v838
  %v1166 = vpop.f32.mrf.mxu0
  %v1167 = vadd.f32 %v1148, %v1166
  %v1168 = vpop.f32.mrf.mxu0
  %v1169 = vadd.f32 %v1150, %v1168
  %1170 = vdwg.mxu0
  %v1171 = vadd.f32 %v822, %v1162
  %v1172 = vadd.f32 %v824, %v1164
  %v1173 = vadd.f32 %v827, %v1167
  %v1174 = vadd.f32 %v829, %v1169
  %v1175 = vld [vmem:[%s4] sm:$0x1]
  %v1177 = vperm.slane %v1175, 0
  %v1179 = vadd.f32 %v1171, %v1177
  %v1180 = vadd.f32 %v1172, %v1177
  %v1181 = vadd.f32 %v1173, %v1177
  %v1182 = vadd.f32 %v1174, %v1177
  %1183 = vst [vmem:[%s5] sm:$0xff] %v1179
  %1184 = vst [vmem:[%s5 + $0x8] sm:$0xff] %v1180
  %1185 = vst [vmem:[%s5 + $0x10] sm:$0xff] %v1181
  %1186 = vst [vmem:[%s5 + $0x18] sm:$0xff] %v1182
  // Predicated region
  $region22: #{hunet_forward.30} parent=0 // pred_check
    _
  $region23: #{hunet_forward.30} parent=0 // pred_check_branch
    %1188 = sbr.rel (0) target = $region25
  $region24: #{hunet_forward.30} parent=0 // pred_region
    _
  $region25: #{hunet_forward.30} parent=0 // pred_fallthru
    _
  // Predicated region
  $region26: #{hunet_forward.30} parent=0 // pred_check
    _
  $region27: #{hunet_forward.30} parent=0 // pred_check_branch
    %1190 = sbr.rel (0) target = $region29
  $region28: #{hunet_forward.30} parent=0 // pred_region
    _
  $region29: #{hunet_forward.30} parent=0 // pred_fallthru
    _

// kernel: hunet_forward.32
$region0: #{hunet_forward.32}
  #allocation0 [shape = 'u32[]', space=smem, size = 0x4, offset = 0x4, fixed_abs, tag = 'smem constant byte address 0x4 - core index']
  #allocation1 [shape = 'u32[72,128]{1,0:T(1,128)}', space=vmem, size = 0x9000, scoped, tag = 'internal scratch']
  %s0 = inlined_call_operand.vmem [shape: f32[32,128], index: 0, kind: input, shape index: {}]
  %s1 = inlined_call_operand.vmem [shape: bf16[128,128], index: 1, kind: input, shape index: {}]
  %s2 = inlined_call_operand.vmem [shape: bf16[128,128], index: 2, kind: input, shape index: {}]
  %s3 = inlined_call_operand.vmem [shape: bf16[128,128], index: 3, kind: input, shape index: {}]
  %s4 = inlined_call_operand.vmem [shape: f32[1,128], index: 4, kind: input, shape index: {}]
  %s5 = inlined_call_operand.vmem [shape: bf16[128,128], index: 5, kind: input, shape index: {}]
  %s6 = inlined_call_operand.vmem [shape: bf16[128,128], index: 6, kind: input, shape index: {}]
  %s7 = inlined_call_operand.vmem [shape: bf16[128,128], index: 7, kind: input, shape index: {}]
  %s8 = inlined_call_operand.vmem [shape: f32[1,128], index: 8, kind: input, shape index: {}]
  %s9 = inlined_call_operand.vmem [shape: f32[32,128], index: 9, kind: output, shape index: {}]
  %s10 = sld [smem:[#allocation0]]
  $region46: #{hunet_forward.32} parent=0
    _
  %s12 = ssub.s32 1, %s10
  %s13 = scalar_select 0, %s12, %s10
  // Predicated region
  $region2: #{hunet_forward.32} parent=0 // pred_check
    _
  $region3: #{hunet_forward.32} parent=0 // pred_check_branch
    %15 = sbr.rel (0) target = $region5
  $region4: #{hunet_forward.32} parent=0 // pred_region
    _
  $region5: #{hunet_forward.32} parent=0 // pred_fallthru
    _
  // Predicated region
  $region6: #{hunet_forward.32} parent=0 // pred_check
    _
  $region7: #{hunet_forward.32} parent=0 // pred_check_branch
    %17 = sbr.rel (0) target = $region9
  $region8: #{hunet_forward.32} parent=0 // pred_region
    _
  $region9: #{hunet_forward.32} parent=0 // pred_fallthru
    _
  // Predicated region
  $region10: #{hunet_forward.32} parent=0 // pred_check
    _
  $region11: #{hunet_forward.32} parent=0 // pred_check_branch
    %19 = sbr.rel (0) target = $region13
  $region12: #{hunet_forward.32} parent=0 // pred_region
    _
  $region13: #{hunet_forward.32} parent=0 // pred_fallthru
    _
  // Predicated region
  $region14: #{hunet_forward.32} parent=0 // pred_check
    _
  $region15: #{hunet_forward.32} parent=0 // pred_check_branch
    %21 = sbr.rel (0) target = $region17
  $region16: #{hunet_forward.32} parent=0 // pred_region
    _
  $region17: #{hunet_forward.32} parent=0 // pred_fallthru
    _
  // Predicated region
  $region18: #{hunet_forward.32} parent=0 // pred_check
    _
  $region19: #{hunet_forward.32} parent=0 // pred_check_branch
    %23 = sbr.rel (0) target = $region21
  $region20: #{hunet_forward.32} parent=0 // pred_region
    _
  $region21: #{hunet_forward.32} parent=0 // pred_fallthru
    _
  // Predicated region
  $region22: #{hunet_forward.32} parent=0 // pred_check
    _
  $region23: #{hunet_forward.32} parent=0 // pred_check_branch
    %25 = sbr.rel (0) target = $region25
  $region24: #{hunet_forward.32} parent=0 // pred_region
    _
  $region25: #{hunet_forward.32} parent=0 // pred_fallthru
    _
  // Predicated region
  $region26: #{hunet_forward.32} parent=0 // pred_check
    _
  $region27: #{hunet_forward.32} parent=0 // pred_check_branch
    %27 = sbr.rel (0) target = $region29
  $region28: #{hunet_forward.32} parent=0 // pred_region
    _
  $region29: #{hunet_forward.32} parent=0 // pred_fallthru
    _
  // Predicated region
  $region30: #{hunet_forward.32} parent=0 // pred_check
    _
  $region31: #{hunet_forward.32} parent=0 // pred_check_branch
    %29 = sbr.rel (0) target = $region33
  $region32: #{hunet_forward.32} parent=0 // pred_region
    _
  $region33: #{hunet_forward.32} parent=0 // pred_fallthru
    _
  // Predicated region
  $region34: #{hunet_forward.32} parent=0 // pred_check
    _
  $region35: #{hunet_forward.32} parent=0 // pred_check_branch
    %31 = sbr.rel (0) target = $region37
  $region36: #{hunet_forward.32} parent=0 // pred_region
    _
  $region37: #{hunet_forward.32} parent=0 // pred_fallthru
    _
  %v32 = vld [vmem:[%s0] sm:$0xff]
  %v33 = vld [vmem:[%s0 + $0x8] sm:$0xff]
  %v34 = vld [vmem:[%s0 + $0x10] sm:$0xff]
  %v35 = vld [vmem:[%s0 + $0x18] sm:$0xff]
  %v36 = vlaneseq
  %v37 = vshrl.u32 %v36, 7
  %v38 = vadd.s32 %v37, 8
  %v39 = vadd.s32 %v37, 16
  %v40 = vadd.s32 %v37, 24
  %v41 = vand.u32 %v37, 15
  %v42 = vand.u32 %v38, 15
  %v43 = vand.u32 %v39, 15
  %v44 = vand.u32 %v40, 15
  %vm45 = vcmp.gt.s32.totalorder %v41, 0
  %vm46 = vcmp.gt.s32.totalorder %v42, 0
  %vm47 = vcmp.gt.s32.totalorder %v43, 0
  %vm48 = vcmp.gt.s32.totalorder %v44, 0
  %v49 = vrot.slane %v32, 7
  %v50 = vrot.slane %v33, 7
  %v51 = vrot.slane %v34, 7
  %v52 = vrot.slane %v35, 7
  %vm53 = vcmp.lt.s32.totalorder %v37, 1
  %v54 = vsel %vm53, %v51, %v52
  %v55 = vsel %vm53, %v50, %v51
  %v56 = vsel %vm53, %v49, %v50
  %v57 = vsel %vm53, %v52, %v49
  %v58 = vsel %vm45, %v57, 0.0
  %v59 = vsel %vm46, %v56, 0.0
  %v60 = vsel %vm47, %v55, 0.0
  %v61 = vsel %vm48, %v54, 0.0
  %vm62 = vcmp.lt.s32.totalorder %v41, 15
  %vm63 = vcmp.lt.s32.totalorder %v42, 15
  %vm64 = vcmp.lt.s32.totalorder %v43, 15
  %vm65 = vcmp.lt.s32.totalorder %v44, 15
  %v66 = vrot.slane %v32, 1
  %v67 = vrot.slane %v33, 1
  %v68 = vrot.slane %v34, 1
  %v69 = vrot.slane %v35, 1
  %vm70 = vcmp.lt.s32.totalorder %v37, 7
  %v71 = vsel %vm70, %v68, %v69
  %v72 = vsel %vm70, %v67, %v68
  %v73 = vsel %vm70, %v66, %v67
  %v74 = vsel %vm70, %v69, %v66
  %v75 = vsel %vm62, %v73, 0.0
  %v76 = vsel %vm63, %v72, 0.0
  %v77 = vsel %vm64, %v71, 0.0
  %v78 = vsel %vm65, %v74, 0.0
  %v79 = vpack.c.bf16 %v33, %v32
  %v80 = vpack.c.bf16 %v35, %v34
  %v81 = vld [vmem:[%s2] sm:$0xf]
  %v82 = vld [vmem:[%s2 + $0x4] sm:$0xf]
  %v83 = vld [vmem:[%s2 + $0x8] sm:$0xf]
  %v84 = vld [vmem:[%s2 + $0xc] sm:$0xf]
  %v85 = vld [vmem:[%s2 + $0x10] sm:$0xf]
  %v86 = vld [vmem:[%s2 + $0x14] sm:$0xf]
  %v87 = vld [vmem:[%s2 + $0x18] sm:$0xf]
  %v88 = vld [vmem:[%s2 + $0x1c] sm:$0xf]
  %v89 = vld [vmem:[%s2 + $0x20] sm:$0xf]
  %v90 = vld [vmem:[%s2 + $0x24] sm:$0xf]
  %v91 = vld [vmem:[%s2 + $0x28] sm:$0xf]
  %v92 = vld [vmem:[%s2 + $0x2c] sm:$0xf]
  %v93 = vld [vmem:[%s2 + $0x30] sm:$0xf]
  %v94 = vld [vmem:[%s2 + $0x34] sm:$0xf]
  %v95 = vld [vmem:[%s2 + $0x38] sm:$0xf]
  %v96 = vld [vmem:[%s2 + $0x3c] sm:$0xf]
  %v97 = vpack.c.bf16 %v59, %v58
  %v98 = vpack.c.bf16 %v61, %v60
  %v99 = vld [vmem:[%s1] sm:$0xf]
  %v100 = vld [vmem:[%s1 + $0x4] sm:$0xf]
  %v101 = vld [vmem:[%s1 + $0x8] sm:$0xf]
  %v102 = vld [vmem:[%s1 + $0xc] sm:$0xf]
  %v103 = vld [vmem:[%s1 + $0x10] sm:$0xf]
  %v104 = vld [vmem:[%s1 + $0x14] sm:$0xf]
  %v105 = vld [vmem:[%s1 + $0x18] sm:$0xf]
  %v106 = vld [vmem:[%s1 + $0x1c] sm:$0xf]
  %v107 = vld [vmem:[%s1 + $0x20] sm:$0xf]
  %v108 = vld [vmem:[%s1 + $0x24] sm:$0xf]
  %v109 = vld [vmem:[%s1 + $0x28] sm:$0xf]
  %v110 = vld [vmem:[%s1 + $0x2c] sm:$0xf]
  %v111 = vld [vmem:[%s1 + $0x30] sm:$0xf]
  %v112 = vld [vmem:[%s1 + $0x34] sm:$0xf]
  %v113 = vld [vmem:[%s1 + $0x38] sm:$0xf]
  %v114 = vld [vmem:[%s1 + $0x3c] sm:$0xf]
  %v131 = vunpack.c.l.b16 %v99
  %v132 = vunpack.c.l.b16 %v100
  %v133 = vunpack.c.l.b16 %v101
  %v134 = vunpack.c.l.b16 %v102
  %v135 = vunpack.c.l.b16 %v103
  %v136 = vunpack.c.l.b16 %v104
  %v137 = vunpack.c.l.b16 %v105
  %v138 = vunpack.c.l.b16 %v106
  %v139 = vunpack.c.l.b16 %v107
  %v140 = vunpack.c.l.b16 %v108
  %v141 = vunpack.c.l.b16 %v109
  %v142 = vunpack.c.l.b16 %v110
  %v143 = vunpack.c.l.b16 %v111
  %v144 = vunpack.c.l.b16 %v112
  %v145 = vunpack.c.l.b16 %v113
  %v146 = vunpack.c.l.b16 %v114
  %v147 = vpack.c.b16 %v132, %v131
  %v148 = vpack.c.b16 %v134, %v133
  %v149 = vpack.c.b16 %v136, %v135
  %v150 = vpack.c.b16 %v138, %v137
  %v151 = vpack.c.b16 %v140, %v139
  %v152 = vpack.c.b16 %v142, %v141
  %v153 = vpack.c.b16 %v144, %v143
  %v154 = vpack.c.b16 %v146, %v145
  %163 = vmatpush.bf16.msra.mxu0 %v154
  %164 = vmatpush.bf16.msra.mxu0 %v153
  %165 = vmatpush.bf16.msra.mxu0 %v152
  %166 = vmatpush.bf16.msra.mxu0 %v151
  %167 = vmatpush.bf16.msra.mxu0 %v150
  %168 = vmatpush.bf16.msra.mxu0 %v149
  %169 = vmatpush.bf16.msra.mxu0 %v148
  %170 = vmatpush.bf16.msra.mxu0 %v147
  %171 = vmatmul.bf16.gmra.mxu0 %v97
  %v172 = vpop.f32.mrf.mxu0
  %v173 = vadd.f32 0.0, %v172
  %v174 = vpop.f32.mrf.mxu0
  %v175 = vadd.f32 0.0, %v174
  %176 = vmatmul.bf16.gmra.mxu0 %v98
  %v177 = vpop.f32.mrf.mxu0
  %v178 = vadd.f32 0.0, %v177
  %v179 = vpop.f32.mrf.mxu0
  %v180 = vadd.f32 0.0, %v179
  %181 = vdwg.mxu0
  %v198 = vunpack.c.l.b16 %v81
  %v199 = vunpack.c.l.b16 %v82
  %v200 = vunpack.c.l.b16 %v83
  %v201 = vunpack.c.l.b16 %v84
  %v202 = vunpack.c.l.b16 %v85
  %v203 = vunpack.c.l.b16 %v86
  %v204 = vunpack.c.l.b16 %v87
  %v205 = vunpack.c.l.b16 %v88
  %v206 = vunpack.c.l.b16 %v89
  %v207 = vunpack.c.l.b16 %v90
  %v208 = vunpack.c.l.b16 %v91
  %v209 = vunpack.c.l.b16 %v92
  %v210 = vunpack.c.l.b16 %v93
  %v211 = vunpack.c.l.b16 %v94
  %v212 = vunpack.c.l.b16 %v95
  %v213 = vunpack.c.l.b16 %v96
  %v214 = vpack.c.b16 %v199, %v198
  %v215 = vpack.c.b16 %v201, %v200
  %v216 = vpack.c.b16 %v203, %v202
  %v217 = vpack.c.b16 %v205, %v204
  %v218 = vpack.c.b16 %v207, %v206
  %v219 = vpack.c.b16 %v209, %v208
  %v220 = vpack.c.b16 %v211, %v210
  %v221 = vpack.c.b16 %v213, %v212
  %230 = vmatpush.bf16.msra.mxu0 %v221
  %231 = vmatpush.bf16.msra.mxu0 %v220
  %232 = vmatpush.bf16.msra.mxu0 %v219
  %233 = vmatpush.bf16.msra.mxu0 %v218
  %234 = vmatpush.bf16.msra.mxu0 %v217
  %235 = vmatpush.bf16.msra.mxu0 %v216
  %236 = vmatpush.bf16.msra.mxu0 %v215
  %237 = vmatpush.bf16.msra.mxu0 %v214
  %238 = vmatmul.bf16.gmra.mxu0 %v79
  %v239 = vpop.f32.mrf.mxu0
  %v240 = vadd.f32 %v173, %v239
  %v241 = vpop.f32.mrf.mxu0
  %v242 = vadd.f32 %v175, %v241
  %243 = vmatmul.bf16.gmra.mxu0 %v80
  %v244 = vpop.f32.mrf.mxu0
  %v245 = vadd.f32 %v178, %v244
  %v246 = vpop.f32.mrf.mxu0
  %v247 = vadd.f32 %v180, %v246
  %248 = vdwg.mxu0
  %v249 = vpack.c.bf16 %v76, %v75
  %v250 = vpack.c.bf16 %v78, %v77
  %v251 = vld [vmem:[%s3] sm:$0xf]
  %v252 = vld [vmem:[%s3 + $0x4] sm:$0xf]
  %v253 = vld [vmem:[%s3 + $0x8] sm:$0xf]
  %v254 = vld [vmem:[%s3 + $0xc] sm:$0xf]
  %v255 = vld [vmem:[%s3 + $0x10] sm:$0xf]
  %v256 = vld [vmem:[%s3 + $0x14] sm:$0xf]
  %v257 = vld [vmem:[%s3 + $0x18] sm:$0xf]
  %v258 = vld [vmem:[%s3 + $0x1c] sm:$0xf]
  %v259 = vld [vmem:[%s3 + $0x20] sm:$0xf]
  %v260 = vld [vmem:[%s3 + $0x24] sm:$0xf]
  %v261 = vld [vmem:[%s3 + $0x28] sm:$0xf]
  %v262 = vld [vmem:[%s3 + $0x2c] sm:$0xf]
  %v263 = vld [vmem:[%s3 + $0x30] sm:$0xf]
  %v264 = vld [vmem:[%s3 + $0x34] sm:$0xf]
  %v265 = vld [vmem:[%s3 + $0x38] sm:$0xf]
  %v266 = vld [vmem:[%s3 + $0x3c] sm:$0xf]
  %v283 = vunpack.c.l.b16 %v251
  %v284 = vunpack.c.l.b16 %v252
  %v285 = vunpack.c.l.b16 %v253
  %v286 = vunpack.c.l.b16 %v254
  %v287 = vunpack.c.l.b16 %v255
  %v288 = vunpack.c.l.b16 %v256
  %v289 = vunpack.c.l.b16 %v257
  %v290 = vunpack.c.l.b16 %v258
  %v291 = vunpack.c.l.b16 %v259
  %v292 = vunpack.c.l.b16 %v260
  %v293 = vunpack.c.l.b16 %v261
  %v294 = vunpack.c.l.b16 %v262
  %v295 = vunpack.c.l.b16 %v263
  %v296 = vunpack.c.l.b16 %v264
  %v297 = vunpack.c.l.b16 %v265
  %v298 = vunpack.c.l.b16 %v266
  %v299 = vpack.c.b16 %v284, %v283
  %v300 = vpack.c.b16 %v286, %v285
  %v301 = vpack.c.b16 %v288, %v287
  %v302 = vpack.c.b16 %v290, %v289
  %v303 = vpack.c.b16 %v292, %v291
  %v304 = vpack.c.b16 %v294, %v293
  %v305 = vpack.c.b16 %v296, %v295
  %v306 = vpack.c.b16 %v298, %v297
  %315 = vmatpush.bf16.msra.mxu0 %v306
  %316 = vmatpush.bf16.msra.mxu0 %v305
  %317 = vmatpush.bf16.msra.mxu0 %v304
  %318 = vmatpush.bf16.msra.mxu0 %v303
  %319 = vmatpush.bf16.msra.mxu0 %v302
  %320 = vmatpush.bf16.msra.mxu0 %v301
  %321 = vmatpush.bf16.msra.mxu0 %v300
  %322 = vmatpush.bf16.msra.mxu0 %v299
  %323 = vmatmul.bf16.gmra.mxu0 %v249
  %v324 = vpop.f32.mrf.mxu0
  %v325 = vadd.f32 0.0, %v324
  %v326 = vpop.f32.mrf.mxu0
  %v327 = vadd.f32 0.0, %v326
  %328 = vmatmul.bf16.gmra.mxu0 %v250
  %v329 = vpop.f32.mrf.mxu0
  %v330 = vadd.f32 0.0, %v329
  %v331 = vpop.f32.mrf.mxu0
  %v332 = vadd.f32 0.0, %v331
  %333 = vdwg.mxu0
  %v334 = vadd.f32 %v240, %v325
  %v335 = vadd.f32 %v242, %v327
  %v336 = vadd.f32 %v245, %v330
  %v337 = vadd.f32 %v247, %v332
  %v338 = vld [vmem:[%s4] sm:$0x1]
  %v340 = vperm.slane %v338, 0
  %v342 = vadd.f32 %v334, %v340
  %v343 = vadd.f32 %v335, %v340
  %v344 = vadd.f32 %v336, %v340
  %v345 = vadd.f32 %v337, %v340
  %v346 = vmax.f32 %v342, 0.0
  %v347 = vmax.f32 %v343, 0.0
  %v348 = vmax.f32 %v344, 0.0
  %v349 = vmax.f32 %v345, 0.0
  %v350 = vrot.slane %v346, 7
  %v351 = vrot.slane %v347, 7
  %v352 = vrot.slane %v348, 7
  %v353 = vrot.slane %v349, 7
  %v354 = vsel %vm53, %v352, %v353
  %v355 = vsel %vm53, %v351, %v352
  %v356 = vsel %vm53, %v350, %v351
  %v357 = vsel %vm53, %v353, %v350
  %v358 = vsel %vm45, %v357, 0.0
  %v359 = vsel %vm46, %v356, 0.0
  %v360 = vsel %vm47, %v355, 0.0
  %v361 = vsel %vm48, %v354, 0.0
  %v362 = vrot.slane %v346, 1
  %v363 = vrot.slane %v347, 1
  %v364 = vrot.slane %v348, 1
  %v365 = vrot.slane %v349, 1
  %v366 = vsel %vm70, %v364, %v365
  %v367 = vsel %vm70, %v363, %v364
  %v368 = vsel %vm70, %v362, %v363
  %v369 = vsel %vm70, %v365, %v362
  %v370 = vsel %vm62, %v368, 0.0
  %v371 = vsel %vm63, %v367, 0.0
  %v372 = vsel %vm64, %v366, 0.0
  %v373 = vsel %vm65, %v369, 0.0
  %v374 = vpack.c.bf16 %v347, %v346
  %v375 = vpack.c.bf16 %v349, %v348
  %v376 = vld [vmem:[%s6] sm:$0xf]
  %v377 = vld [vmem:[%s6 + $0x4] sm:$0xf]
  %v378 = vld [vmem:[%s6 + $0x8] sm:$0xf]
  %v379 = vld [vmem:[%s6 + $0xc] sm:$0xf]
  %v380 = vld [vmem:[%s6 + $0x10] sm:$0xf]
  %v381 = vld [vmem:[%s6 + $0x14] sm:$0xf]
  %v382 = vld [vmem:[%s6 + $0x18] sm:$0xf]
  %v383 = vld [vmem:[%s6 + $0x1c] sm:$0xf]
  %v384 = vld [vmem:[%s6 + $0x20] sm:$0xf]
  %v385 = vld [vmem:[%s6 + $0x24] sm:$0xf]
  %v386 = vld [vmem:[%s6 + $0x28] sm:$0xf]
  %v387 = vld [vmem:[%s6 + $0x2c] sm:$0xf]
  %v388 = vld [vmem:[%s6 + $0x30] sm:$0xf]
  %v389 = vld [vmem:[%s6 + $0x34] sm:$0xf]
  %v390 = vld [vmem:[%s6 + $0x38] sm:$0xf]
  %v391 = vld [vmem:[%s6 + $0x3c] sm:$0xf]
  %v392 = vpack.c.bf16 %v359, %v358
  %v393 = vpack.c.bf16 %v361, %v360
  %v394 = vld [vmem:[%s5] sm:$0xf]
  %v395 = vld [vmem:[%s5 + $0x4] sm:$0xf]
  %v396 = vld [vmem:[%s5 + $0x8] sm:$0xf]
  %v397 = vld [vmem:[%s5 + $0xc] sm:$0xf]
  %v398 = vld [vmem:[%s5 + $0x10] sm:$0xf]
  %v399 = vld [vmem:[%s5 + $0x14] sm:$0xf]
  %v400 = vld [vmem:[%s5 + $0x18] sm:$0xf]
  %v401 = vld [vmem:[%s5 + $0x1c] sm:$0xf]
  %v402 = vld [vmem:[%s5 + $0x20] sm:$0xf]
  %v403 = vld [vmem:[%s5 + $0x24] sm:$0xf]
  %v404 = vld [vmem:[%s5 + $0x28] sm:$0xf]
  %v405 = vld [vmem:[%s5 + $0x2c] sm:$0xf]
  %v406 = vld [vmem:[%s5 + $0x30] sm:$0xf]
  %v407 = vld [vmem:[%s5 + $0x34] sm:$0xf]
  %v408 = vld [vmem:[%s5 + $0x38] sm:$0xf]
  %v409 = vld [vmem:[%s5 + $0x3c] sm:$0xf]
  %v426 = vunpack.c.l.b16 %v394
  %v427 = vunpack.c.l.b16 %v395
  %v428 = vunpack.c.l.b16 %v396
  %v429 = vunpack.c.l.b16 %v397
  %v430 = vunpack.c.l.b16 %v398
  %v431 = vunpack.c.l.b16 %v399
  %v432 = vunpack.c.l.b16 %v400
  %v433 = vunpack.c.l.b16 %v401
  %v434 = vunpack.c.l.b16 %v402
  %v435 = vunpack.c.l.b16 %v403
  %v436 = vunpack.c.l.b16 %v404
  %v437 = vunpack.c.l.b16 %v405
  %v438 = vunpack.c.l.b16 %v406
  %v439 = vunpack.c.l.b16 %v407
  %v440 = vunpack.c.l.b16 %v408
  %v441 = vunpack.c.l.b16 %v409
  %v442 = vpack.c.b16 %v427, %v426
  %v443 = vpack.c.b16 %v429, %v428
  %v444 = vpack.c.b16 %v431, %v430
  %v445 = vpack.c.b16 %v433, %v432
  %v446 = vpack.c.b16 %v435, %v434
  %v447 = vpack.c.b16 %v437, %v436
  %v448 = vpack.c.b16 %v439, %v438
  %v449 = vpack.c.b16 %v441, %v440
  %458 = vmatpush.bf16.msra.mxu0 %v449
  %459 = vmatpush.bf16.msra.mxu0 %v448
  %460 = vmatpush.bf16.msra.mxu0 %v447
  %461 = vmatpush.bf16.msra.mxu0 %v446
  %462 = vmatpush.bf16.msra.mxu0 %v445
  %463 = vmatpush.bf16.msra.mxu0 %v444
  %464 = vmatpush.bf16.msra.mxu0 %v443
  %465 = vmatpush.bf16.msra.mxu0 %v442
  %466 = vmatmul.bf16.gmra.mxu0 %v392
  %v467 = vpop.f32.mrf.mxu0
  %v468 = vadd.f32 0.0, %v467
  %v469 = vpop.f32.mrf.mxu0
  %v470 = vadd.f32 0.0, %v469
  %471 = vmatmul.bf16.gmra.mxu0 %v393
  %v472 = vpop.f32.mrf.mxu0
  %v473 = vadd.f32 0.0, %v472
  %v474 = vpop.f32.mrf.mxu0
  %v475 = vadd.f32 0.0, %v474
  %476 = vdwg.mxu0
  %v493 = vunpack.c.l.b16 %v376
  %v494 = vunpack.c.l.b16 %v377
  %v495 = vunpack.c.l.b16 %v378
  %v496 = vunpack.c.l.b16 %v379
  %v497 = vunpack.c.l.b16 %v380
  %v498 = vunpack.c.l.b16 %v381
  %v499 = vunpack.c.l.b16 %v382
  %v500 = vunpack.c.l.b16 %v383
  %v501 = vunpack.c.l.b16 %v384
  %v502 = vunpack.c.l.b16 %v385
  %v503 = vunpack.c.l.b16 %v386
  %v504 = vunpack.c.l.b16 %v387
  %v505 = vunpack.c.l.b16 %v388
  %v506 = vunpack.c.l.b16 %v389
  %v507 = vunpack.c.l.b16 %v390
  %v508 = vunpack.c.l.b16 %v391
  %v509 = vpack.c.b16 %v494, %v493
  %v510 = vpack.c.b16 %v496, %v495
  %v511 = vpack.c.b16 %v498, %v497
  %v512 = vpack.c.b16 %v500, %v499
  %v513 = vpack.c.b16 %v502, %v501
  %v514 = vpack.c.b16 %v504, %v503
  %v515 = vpack.c.b16 %v506, %v505
  %v516 = vpack.c.b16 %v508, %v507
  %525 = vmatpush.bf16.msra.mxu0 %v516
  %526 = vmatpush.bf16.msra.mxu0 %v515
  %527 = vmatpush.bf16.msra.mxu0 %v514
  %528 = vmatpush.bf16.msra.mxu0 %v513
  %529 = vmatpush.bf16.msra.mxu0 %v512
  %530 = vmatpush.bf16.msra.mxu0 %v511
  %531 = vmatpush.bf16.msra.mxu0 %v510
  %532 = vmatpush.bf16.msra.mxu0 %v509
  %533 = vmatmul.bf16.gmra.mxu0 %v374
  %v534 = vpop.f32.mrf.mxu0
  %v535 = vadd.f32 %v468, %v534
  %v536 = vpop.f32.mrf.mxu0
  %v537 = vadd.f32 %v470, %v536
  %538 = vmatmul.bf16.gmra.mxu0 %v375
  %v539 = vpop.f32.mrf.mxu0
  %v540 = vadd.f32 %v473, %v539
  %v541 = vpop.f32.mrf.mxu0
  %v542 = vadd.f32 %v475, %v541
  %543 = vdwg.mxu0
  %v544 = vpack.c.bf16 %v371, %v370
  %v545 = vpack.c.bf16 %v373, %v372
  %v546 = vld [vmem:[%s7] sm:$0xf]
  %v547 = vld [vmem:[%s7 + $0x4] sm:$0xf]
  %v548 = vld [vmem:[%s7 + $0x8] sm:$0xf]
  %v549 = vld [vmem:[%s7 + $0xc] sm:$0xf]
  %v550 = vld [vmem:[%s7 + $0x10] sm:$0xf]
  %v551 = vld [vmem:[%s7 + $0x14] sm:$0xf]
  %v552 = vld [vmem:[%s7 + $0x18] sm:$0xf]
  %v553 = vld [vmem:[%s7 + $0x1c] sm:$0xf]
  %v554 = vld [vmem:[%s7 + $0x20] sm:$0xf]
  %v555 = vld [vmem:[%s7 + $0x24] sm:$0xf]
  %v556 = vld [vmem:[%s7 + $0x28] sm:$0xf]
  %v557 = vld [vmem:[%s7 + $0x2c] sm:$0xf]
  %v558 = vld [vmem:[%s7 + $0x30] sm:$0xf]
  %v559 = vld [vmem:[%s7 + $0x34] sm:$0xf]
  %v560 = vld [vmem:[%s7 + $0x38] sm:$0xf]
  %v561 = vld [vmem:[%s7 + $0x3c] sm:$0xf]
  %v578 = vunpack.c.l.b16 %v546
  %v579 = vunpack.c.l.b16 %v547
  %v580 = vunpack.c.l.b16 %v548
  %v581 = vunpack.c.l.b16 %v549
  %v582 = vunpack.c.l.b16 %v550
  %v583 = vunpack.c.l.b16 %v551
  %v584 = vunpack.c.l.b16 %v552
  %v585 = vunpack.c.l.b16 %v553
  %v586 = vunpack.c.l.b16 %v554
  %v587 = vunpack.c.l.b16 %v555
  %v588 = vunpack.c.l.b16 %v556
  %v589 = vunpack.c.l.b16 %v557
  %v590 = vunpack.c.l.b16 %v558
  %v591 = vunpack.c.l.b16 %v559
  %v592 = vunpack.c.l.b16 %v560
  %v593 = vunpack.c.l.b16 %v561
  %v594 = vpack.c.b16 %v579, %v578
  %v595 = vpack.c.b16 %v581, %v580
  %v596 = vpack.c.b16 %v583, %v582
  %v597 = vpack.c.b16 %v585, %v584
  %v598 = vpack.c.b16 %v587, %v586
  %v599 = vpack.c.b16 %v589, %v588
  %v600 = vpack.c.b16 %v591, %v590
  %v601 = vpack.c.b16 %v593, %v592
  %610 = vmatpush.bf16.msra.mxu0 %v601
  %611 = vmatpush.bf16.msra.mxu0 %v600
  %612 = vmatpush.bf16.msra.mxu0 %v599
  %613 = vmatpush.bf16.msra.mxu0 %v598
  %614 = vmatpush.bf16.msra.mxu0 %v597
  %615 = vmatpush.bf16.msra.mxu0 %v596
  %616 = vmatpush.bf16.msra.mxu0 %v595
  %617 = vmatpush.bf16.msra.mxu0 %v594
  %618 = vmatmul.bf16.gmra.mxu0 %v544
  %v619 = vpop.f32.mrf.mxu0
  %v620 = vadd.f32 0.0, %v619
  %v621 = vpop.f32.mrf.mxu0
  %v622 = vadd.f32 0.0, %v621
  %623 = vmatmul.bf16.gmra.mxu0 %v545
  %v624 = vpop.f32.mrf.mxu0
  %v625 = vadd.f32 0.0, %v624
  %v626 = vpop.f32.mrf.mxu0
  %v627 = vadd.f32 0.0, %v626
  %628 = vdwg.mxu0
  %v629 = vadd.f32 %v535, %v620
  %v630 = vadd.f32 %v537, %v622
  %v631 = vadd.f32 %v540, %v625
  %v632 = vadd.f32 %v542, %v627
  %v633 = vld [vmem:[%s8] sm:$0x1]
  %v635 = vperm.slane %v633, 0
  %v637 = vadd.f32 %v629, %v635
  %v638 = vadd.f32 %v630, %v635
  %v639 = vadd.f32 %v631, %v635
  %v640 = vadd.f32 %v632, %v635
  %v641 = vadd.f32 %v32, %v637
  %v642 = vadd.f32 %v33, %v638
  %v643 = vadd.f32 %v34, %v639
  %v644 = vadd.f32 %v35, %v640
  %645 = vst [vmem:[%s9] sm:$0xff] %v641
  %646 = vst [vmem:[%s9 + $0x8] sm:$0xff] %v642
  %647 = vst [vmem:[%s9 + $0x10] sm:$0xff] %v643
  %648 = vst [vmem:[%s9 + $0x18] sm:$0xff] %v644
  // Predicated region
  $region38: #{hunet_forward.32} parent=0 // pred_check
    _
  $region39: #{hunet_forward.32} parent=0 // pred_check_branch
    %650 = sbr.rel (0) target = $region41
  $region40: #{hunet_forward.32} parent=0 // pred_region
    _
  $region41: #{hunet_forward.32} parent=0 // pred_fallthru
    _
  // Predicated region
  $region42: #{hunet_forward.32} parent=0 // pred_check
    _
  $region43: #{hunet_forward.32} parent=0 // pred_check_branch
    %652 = sbr.rel (0) target = $region45
  $region44: #{hunet_forward.32} parent=0 // pred_region
    _
  $region45: #{hunet_forward.32} parent=0 // pred_fallthru
    _

// kernel: hunet_forward.33
$region0: #{hunet_forward.33}
  #allocation0 [shape = 'u32[]', space=smem, size = 0x4, offset = 0x4, fixed_abs, tag = 'smem constant byte address 0x4 - core index']
  #allocation1 [shape = 'u32[72,128]{1,0:T(1,128)}', space=vmem, size = 0x9000, scoped, tag = 'internal scratch']
  %s0 = inlined_call_operand.vmem [shape: f32[32,128], index: 0, kind: input, shape index: {}]
  %s1 = inlined_call_operand.vmem [shape: bf16[128,128], index: 1, kind: input, shape index: {}]
  %s2 = inlined_call_operand.vmem [shape: bf16[128,128], index: 2, kind: input, shape index: {}]
  %s3 = inlined_call_operand.vmem [shape: bf16[128,128], index: 3, kind: input, shape index: {}]
  %s4 = inlined_call_operand.vmem [shape: f32[1,128], index: 4, kind: input, shape index: {}]
  %s5 = inlined_call_operand.vmem [shape: f32[32,128], index: 5, kind: output, shape index: {}]
  %s6 = sld [smem:[#allocation0]]
  $region30: #{hunet_forward.33} parent=0
    _
  %s8 = ssub.s32 1, %s6
  %s9 = scalar_select 0, %s8, %s6
  // Predicated region
  $region2: #{hunet_forward.33} parent=0 // pred_check
    _
  $region3: #{hunet_forward.33} parent=0 // pred_check_branch
    %11 = sbr.rel (0) target = $region5
  $region4: #{hunet_forward.33} parent=0 // pred_region
    _
  $region5: #{hunet_forward.33} parent=0 // pred_fallthru
    _
  // Predicated region
  $region6: #{hunet_forward.33} parent=0 // pred_check
    _
  $region7: #{hunet_forward.33} parent=0 // pred_check_branch
    %13 = sbr.rel (0) target = $region9
  $region8: #{hunet_forward.33} parent=0 // pred_region
    _
  $region9: #{hunet_forward.33} parent=0 // pred_fallthru
    _
  // Predicated region
  $region10: #{hunet_forward.33} parent=0 // pred_check
    _
  $region11: #{hunet_forward.33} parent=0 // pred_check_branch
    %15 = sbr.rel (0) target = $region13
  $region12: #{hunet_forward.33} parent=0 // pred_region
    _
  $region13: #{hunet_forward.33} parent=0 // pred_fallthru
    _
  // Predicated region
  $region14: #{hunet_forward.33} parent=0 // pred_check
    _
  $region15: #{hunet_forward.33} parent=0 // pred_check_branch
    %17 = sbr.rel (0) target = $region17
  $region16: #{hunet_forward.33} parent=0 // pred_region
    _
  $region17: #{hunet_forward.33} parent=0 // pred_fallthru
    _
  // Predicated region
  $region18: #{hunet_forward.33} parent=0 // pred_check
    _
  $region19: #{hunet_forward.33} parent=0 // pred_check_branch
    %19 = sbr.rel (0) target = $region21
  $region20: #{hunet_forward.33} parent=0 // pred_region
    _
  $region21: #{hunet_forward.33} parent=0 // pred_fallthru
    _
  %v20 = vld [vmem:[%s0] sm:$0xff]
  %v21 = vld [vmem:[%s0 + $0x8] sm:$0xff]
  %v22 = vld [vmem:[%s0 + $0x10] sm:$0xff]
  %v23 = vld [vmem:[%s0 + $0x18] sm:$0xff]
  %v24 = vlaneseq
  %v25 = vshrl.u32 %v24, 7
  %v26 = vadd.s32 %v25, 8
  %v27 = vadd.s32 %v25, 16
  %v28 = vadd.s32 %v25, 24
  %v29 = vand.u32 %v25, 15
  %v30 = vand.u32 %v26, 15
  %v31 = vand.u32 %v27, 15
  %v32 = vand.u32 %v28, 15
  %vm33 = vcmp.gt.s32.totalorder %v29, 0
  %vm34 = vcmp.gt.s32.totalorder %v30, 0
  %vm35 = vcmp.gt.s32.totalorder %v31, 0
  %vm36 = vcmp.gt.s32.totalorder %v32, 0
  %v37 = vrot.slane %v20, 7
  %v38 = vrot.slane %v21, 7
  %v39 = vrot.slane %v22, 7
  %v40 = vrot.slane %v23, 7
  %vm41 = vcmp.lt.s32.totalorder %v25, 1
  %v42 = vsel %vm41, %v39, %v40
  %v43 = vsel %vm41, %v38, %v39
  %v44 = vsel %vm41, %v37, %v38
  %v45 = vsel %vm41, %v40, %v37
  %v46 = vsel %vm33, %v45, 0.0
  %v47 = vsel %vm34, %v44, 0.0
  %v48 = vsel %vm35, %v43, 0.0
  %v49 = vsel %vm36, %v42, 0.0
  %vm50 = vcmp.lt.s32.totalorder %v29, 15
  %vm51 = vcmp.lt.s32.totalorder %v30, 15
  %vm52 = vcmp.lt.s32.totalorder %v31, 15
  %vm53 = vcmp.lt.s32.totalorder %v32, 15
  %v54 = vrot.slane %v20, 1
  %v55 = vrot.slane %v21, 1
  %v56 = vrot.slane %v22, 1
  %v57 = vrot.slane %v23, 1
  %vm58 = vcmp.lt.s32.totalorder %v25, 7
  %v59 = vsel %vm58, %v56, %v57
  %v60 = vsel %vm58, %v55, %v56
  %v61 = vsel %vm58, %v54, %v55
  %v62 = vsel %vm58, %v57, %v54
  %v63 = vsel %vm50, %v61, 0.0
  %v64 = vsel %vm51, %v60, 0.0
  %v65 = vsel %vm52, %v59, 0.0
  %v66 = vsel %vm53, %v62, 0.0
  %v67 = vpack.c.bf16 %v21, %v20
  %v68 = vpack.c.bf16 %v23, %v22
  %v69 = vld [vmem:[%s2] sm:$0xf]
  %v70 = vld [vmem:[%s2 + $0x4] sm:$0xf]
  %v71 = vld [vmem:[%s2 + $0x8] sm:$0xf]
  %v72 = vld [vmem:[%s2 + $0xc] sm:$0xf]
  %v73 = vld [vmem:[%s2 + $0x10] sm:$0xf]
  %v74 = vld [vmem:[%s2 + $0x14] sm:$0xf]
  %v75 = vld [vmem:[%s2 + $0x18] sm:$0xf]
  %v76 = vld [vmem:[%s2 + $0x1c] sm:$0xf]
  %v77 = vld [vmem:[%s2 + $0x20] sm:$0xf]
  %v78 = vld [vmem:[%s2 + $0x24] sm:$0xf]
  %v79 = vld [vmem:[%s2 + $0x28] sm:$0xf]
  %v80 = vld [vmem:[%s2 + $0x2c] sm:$0xf]
  %v81 = vld [vmem:[%s2 + $0x30] sm:$0xf]
  %v82 = vld [vmem:[%s2 + $0x34] sm:$0xf]
  %v83 = vld [vmem:[%s2 + $0x38] sm:$0xf]
  %v84 = vld [vmem:[%s2 + $0x3c] sm:$0xf]
  %v85 = vpack.c.bf16 %v47, %v46
  %v86 = vpack.c.bf16 %v49, %v48
  %v87 = vld [vmem:[%s1] sm:$0xf]
  %v88 = vld [vmem:[%s1 + $0x4] sm:$0xf]
  %v89 = vld [vmem:[%s1 + $0x8] sm:$0xf]
  %v90 = vld [vmem:[%s1 + $0xc] sm:$0xf]
  %v91 = vld [vmem:[%s1 + $0x10] sm:$0xf]
  %v92 = vld [vmem:[%s1 + $0x14] sm:$0xf]
  %v93 = vld [vmem:[%s1 + $0x18] sm:$0xf]
  %v94 = vld [vmem:[%s1 + $0x1c] sm:$0xf]
  %v95 = vld [vmem:[%s1 + $0x20] sm:$0xf]
  %v96 = vld [vmem:[%s1 + $0x24] sm:$0xf]
  %v97 = vld [vmem:[%s1 + $0x28] sm:$0xf]
  %v98 = vld [vmem:[%s1 + $0x2c] sm:$0xf]
  %v99 = vld [vmem:[%s1 + $0x30] sm:$0xf]
  %v100 = vld [vmem:[%s1 + $0x34] sm:$0xf]
  %v101 = vld [vmem:[%s1 + $0x38] sm:$0xf]
  %v102 = vld [vmem:[%s1 + $0x3c] sm:$0xf]
  %v119 = vunpack.c.l.b16 %v87
  %v120 = vunpack.c.l.b16 %v88
  %v121 = vunpack.c.l.b16 %v89
  %v122 = vunpack.c.l.b16 %v90
  %v123 = vunpack.c.l.b16 %v91
  %v124 = vunpack.c.l.b16 %v92
  %v125 = vunpack.c.l.b16 %v93
  %v126 = vunpack.c.l.b16 %v94
  %v127 = vunpack.c.l.b16 %v95
  %v128 = vunpack.c.l.b16 %v96
  %v129 = vunpack.c.l.b16 %v97
  %v130 = vunpack.c.l.b16 %v98
  %v131 = vunpack.c.l.b16 %v99
  %v132 = vunpack.c.l.b16 %v100
  %v133 = vunpack.c.l.b16 %v101
  %v134 = vunpack.c.l.b16 %v102
  %v135 = vpack.c.b16 %v120, %v119
  %v136 = vpack.c.b16 %v122, %v121
  %v137 = vpack.c.b16 %v124, %v123
  %v138 = vpack.c.b16 %v126, %v125
  %v139 = vpack.c.b16 %v128, %v127
  %v140 = vpack.c.b16 %v130, %v129
  %v141 = vpack.c.b16 %v132, %v131
  %v142 = vpack.c.b16 %v134, %v133
  %151 = vmatpush.bf16.msra.mxu0 %v142
  %152 = vmatpush.bf16.msra.mxu0 %v141
  %153 = vmatpush.bf16.msra.mxu0 %v140
  %154 = vmatpush.bf16.msra.mxu0 %v139
  %155 = vmatpush.bf16.msra.mxu0 %v138
  %156 = vmatpush.bf16.msra.mxu0 %v137
  %157 = vmatpush.bf16.msra.mxu0 %v136
  %158 = vmatpush.bf16.msra.mxu0 %v135
  %159 = vmatmul.bf16.gmra.mxu0 %v85
  %v160 = vpop.f32.mrf.mxu0
  %v161 = vadd.f32 0.0, %v160
  %v162 = vpop.f32.mrf.mxu0
  %v163 = vadd.f32 0.0, %v162
  %164 = vmatmul.bf16.gmra.mxu0 %v86
  %v165 = vpop.f32.mrf.mxu0
  %v166 = vadd.f32 0.0, %v165
  %v167 = vpop.f32.mrf.mxu0
  %v168 = vadd.f32 0.0, %v167
  %169 = vdwg.mxu0
  %v186 = vunpack.c.l.b16 %v69
  %v187 = vunpack.c.l.b16 %v70
  %v188 = vunpack.c.l.b16 %v71
  %v189 = vunpack.c.l.b16 %v72
  %v190 = vunpack.c.l.b16 %v73
  %v191 = vunpack.c.l.b16 %v74
  %v192 = vunpack.c.l.b16 %v75
  %v193 = vunpack.c.l.b16 %v76
  %v194 = vunpack.c.l.b16 %v77
  %v195 = vunpack.c.l.b16 %v78
  %v196 = vunpack.c.l.b16 %v79
  %v197 = vunpack.c.l.b16 %v80
  %v198 = vunpack.c.l.b16 %v81
  %v199 = vunpack.c.l.b16 %v82
  %v200 = vunpack.c.l.b16 %v83
  %v201 = vunpack.c.l.b16 %v84
  %v202 = vpack.c.b16 %v187, %v186
  %v203 = vpack.c.b16 %v189, %v188
  %v204 = vpack.c.b16 %v191, %v190
  %v205 = vpack.c.b16 %v193, %v192
  %v206 = vpack.c.b16 %v195, %v194
  %v207 = vpack.c.b16 %v197, %v196
  %v208 = vpack.c.b16 %v199, %v198
  %v209 = vpack.c.b16 %v201, %v200
  %218 = vmatpush.bf16.msra.mxu0 %v209
  %219 = vmatpush.bf16.msra.mxu0 %v208
  %220 = vmatpush.bf16.msra.mxu0 %v207
  %221 = vmatpush.bf16.msra.mxu0 %v206
  %222 = vmatpush.bf16.msra.mxu0 %v205
  %223 = vmatpush.bf16.msra.mxu0 %v204
  %224 = vmatpush.bf16.msra.mxu0 %v203
  %225 = vmatpush.bf16.msra.mxu0 %v202
  %226 = vmatmul.bf16.gmra.mxu0 %v67
  %v227 = vpop.f32.mrf.mxu0
  %v228 = vadd.f32 %v161, %v227
  %v229 = vpop.f32.mrf.mxu0
  %v230 = vadd.f32 %v163, %v229
  %231 = vmatmul.bf16.gmra.mxu0 %v68
  %v232 = vpop.f32.mrf.mxu0
  %v233 = vadd.f32 %v166, %v232
  %v234 = vpop.f32.mrf.mxu0
  %v235 = vadd.f32 %v168, %v234
  %236 = vdwg.mxu0
  %v237 = vpack.c.bf16 %v64, %v63
  %v238 = vpack.c.bf16 %v66, %v65
  %v239 = vld [vmem:[%s3] sm:$0xf]
  %v240 = vld [vmem:[%s3 + $0x4] sm:$0xf]
  %v241 = vld [vmem:[%s3 + $0x8] sm:$0xf]
  %v242 = vld [vmem:[%s3 + $0xc] sm:$0xf]
  %v243 = vld [vmem:[%s3 + $0x10] sm:$0xf]
  %v244 = vld [vmem:[%s3 + $0x14] sm:$0xf]
  %v245 = vld [vmem:[%s3 + $0x18] sm:$0xf]
  %v246 = vld [vmem:[%s3 + $0x1c] sm:$0xf]
  %v247 = vld [vmem:[%s3 + $0x20] sm:$0xf]
  %v248 = vld [vmem:[%s3 + $0x24] sm:$0xf]
  %v249 = vld [vmem:[%s3 + $0x28] sm:$0xf]
  %v250 = vld [vmem:[%s3 + $0x2c] sm:$0xf]
  %v251 = vld [vmem:[%s3 + $0x30] sm:$0xf]
  %v252 = vld [vmem:[%s3 + $0x34] sm:$0xf]
  %v253 = vld [vmem:[%s3 + $0x38] sm:$0xf]
  %v254 = vld [vmem:[%s3 + $0x3c] sm:$0xf]
  %v271 = vunpack.c.l.b16 %v239
  %v272 = vunpack.c.l.b16 %v240
  %v273 = vunpack.c.l.b16 %v241
  %v274 = vunpack.c.l.b16 %v242
  %v275 = vunpack.c.l.b16 %v243
  %v276 = vunpack.c.l.b16 %v244
  %v277 = vunpack.c.l.b16 %v245
  %v278 = vunpack.c.l.b16 %v246
  %v279 = vunpack.c.l.b16 %v247
  %v280 = vunpack.c.l.b16 %v248
  %v281 = vunpack.c.l.b16 %v249
  %v282 = vunpack.c.l.b16 %v250
  %v283 = vunpack.c.l.b16 %v251
  %v284 = vunpack.c.l.b16 %v252
  %v285 = vunpack.c.l.b16 %v253
  %v286 = vunpack.c.l.b16 %v254
  %v287 = vpack.c.b16 %v272, %v271
  %v288 = vpack.c.b16 %v274, %v273
  %v289 = vpack.c.b16 %v276, %v275
  %v290 = vpack.c.b16 %v278, %v277
  %v291 = vpack.c.b16 %v280, %v279
  %v292 = vpack.c.b16 %v282, %v281
  %v293 = vpack.c.b16 %v284, %v283
  %v294 = vpack.c.b16 %v286, %v285
  %303 = vmatpush.bf16.msra.mxu0 %v294
  %304 = vmatpush.bf16.msra.mxu0 %v293
  %305 = vmatpush.bf16.msra.mxu0 %v292
  %306 = vmatpush.bf16.msra.mxu0 %v291
  %307 = vmatpush.bf16.msra.mxu0 %v290
  %308 = vmatpush.bf16.msra.mxu0 %v289
  %309 = vmatpush.bf16.msra.mxu0 %v288
  %310 = vmatpush.bf16.msra.mxu0 %v287
  %311 = vmatmul.bf16.gmra.mxu0 %v237
  %v312 = vpop.f32.mrf.mxu0
  %v313 = vadd.f32 0.0, %v312
  %v314 = vpop.f32.mrf.mxu0
  %v315 = vadd.f32 0.0, %v314
  %316 = vmatmul.bf16.gmra.mxu0 %v238
  %v317 = vpop.f32.mrf.mxu0
  %v318 = vadd.f32 0.0, %v317
  %v319 = vpop.f32.mrf.mxu0
  %v320 = vadd.f32 0.0, %v319
  %321 = vdwg.mxu0
  %v322 = vadd.f32 %v228, %v313
  %v323 = vadd.f32 %v230, %v315
  %v324 = vadd.f32 %v233, %v318
  %v325 = vadd.f32 %v235, %v320
  %v326 = vld [vmem:[%s4] sm:$0x1]
  %v328 = vperm.slane %v326, 0
  %v330 = vadd.f32 %v322, %v328
  %v331 = vadd.f32 %v323, %v328
  %v332 = vadd.f32 %v324, %v328
  %v333 = vadd.f32 %v325, %v328
  %v334 = vmax.f32 %v330, 0.0
  %v335 = vmax.f32 %v331, 0.0
  %v336 = vmax.f32 %v332, 0.0
  %v337 = vmax.f32 %v333, 0.0
  %v338 = vmin.f32 %v334, 6.0
  %v339 = vmin.f32 %v335, 6.0
  %v340 = vmin.f32 %v336, 6.0
  %v341 = vmin.f32 %v337, 6.0
  %v342 = vmul.f32 %v338, 0.16666667
  %v343 = vmul.f32 %v339, 0.16666667
  %v344 = vmul.f32 %v340, 0.16666667
  %v345 = vmul.f32 %v341, 0.16666667
  %346 = vst [vmem:[%s5] sm:$0xff] %v342
  %347 = vst [vmem:[%s5 + $0x8] sm:$0xff] %v343
  %348 = vst [vmem:[%s5 + $0x10] sm:$0xff] %v344
  %349 = vst [vmem:[%s5 + $0x18] sm:$0xff] %v345
  // Predicated region
  $region22: #{hunet_forward.33} parent=0 // pred_check
    _
  $region23: #{hunet_forward.33} parent=0 // pred_check_branch
    %351 = sbr.rel (0) target = $region25
  $region24: #{hunet_forward.33} parent=0 // pred_region
    _
  $region25: #{hunet_forward.33} parent=0 // pred_fallthru
    _
  // Predicated region
  $region26: #{hunet_forward.33} parent=0 // pred_check
    _
  $region27: #{hunet_forward.33} parent=0 // pred_check_branch
    %353 = sbr.rel (0) target = $region29
  $region28: #{hunet_forward.33} parent=0 // pred_region
    _
  $region29: #{hunet_forward.33} parent=0 // pred_fallthru
    _

// kernel: hunet_forward.31
$region0: #{hunet_forward.31}
  #allocation0 [shape = 'u32[]', space=smem, size = 0x4, offset = 0x4, fixed_abs, tag = 'smem constant byte address 0x4 - core index']
  #allocation1 [shape = 'u32[72,128]{1,0:T(1,128)}', space=vmem, size = 0x9000, scoped, tag = 'internal scratch']
  %s0 = inlined_call_operand.vmem [shape: f32[2,256,8], index: 0, kind: input, shape index: {}]
  %s1 = inlined_call_operand.vmem [shape: f32[8,2], index: 1, kind: input, shape index: {}]
  %s2 = inlined_call_operand.vmem [shape: f32[1,2], index: 2, kind: input, shape index: {}]
  %s3 = inlined_call_operand.vmem [shape: f32[2,8], index: 3, kind: input, shape index: {}]
  %s4 = inlined_call_operand.vmem [shape: f32[1,8], index: 4, kind: input, shape index: {}]
  %s5 = inlined_call_operand.vmem [shape: bf16[512,256], index: 5, kind: input, shape index: {}]
  %s6 = inlined_call_operand.vmem [shape: f32[2,256,8], index: 6, kind: output, shape index: {}]
  %s7 = sld [smem:[#allocation0]]
  $region34: #{hunet_forward.31} parent=0
    _
  %s9 = ssub.s32 1, %s7
  %s10 = scalar_select 0, %s9, %s7
  // Predicated region
  $region2: #{hunet_forward.31} parent=0 // pred_check
    _
  $region3: #{hunet_forward.31} parent=0 // pred_check_branch
    %12 = sbr.rel (0) target = $region5
  $region4: #{hunet_forward.31} parent=0 // pred_region
    _
  $region5: #{hunet_forward.31} parent=0 // pred_fallthru
    _
  // Predicated region
  $region6: #{hunet_forward.31} parent=0 // pred_check
    _
  $region7: #{hunet_forward.31} parent=0 // pred_check_branch
    %14 = sbr.rel (0) target = $region9
  $region8: #{hunet_forward.31} parent=0 // pred_region
    _
  $region9: #{hunet_forward.31} parent=0 // pred_fallthru
    _
  // Predicated region
  $region10: #{hunet_forward.31} parent=0 // pred_check
    _
  $region11: #{hunet_forward.31} parent=0 // pred_check_branch
    %16 = sbr.rel (0) target = $region13
  $region12: #{hunet_forward.31} parent=0 // pred_region
    _
  $region13: #{hunet_forward.31} parent=0 // pred_fallthru
    _
  // Predicated region
  $region14: #{hunet_forward.31} parent=0 // pred_check
    _
  $region15: #{hunet_forward.31} parent=0 // pred_check_branch
    %18 = sbr.rel (0) target = $region17
  $region16: #{hunet_forward.31} parent=0 // pred_region
    _
  $region17: #{hunet_forward.31} parent=0 // pred_fallthru
    _
  // Predicated region
  $region18: #{hunet_forward.31} parent=0 // pred_check
    _
  $region19: #{hunet_forward.31} parent=0 // pred_check_branch
    %20 = sbr.rel (0) target = $region21
  $region20: #{hunet_forward.31} parent=0 // pred_region
    _
  $region21: #{hunet_forward.31} parent=0 // pred_fallthru
    _
  // Predicated region
  $region22: #{hunet_forward.31} parent=0 // pred_check
    _
  $region23: #{hunet_forward.31} parent=0 // pred_check_branch
    %22 = sbr.rel (0) target = $region25
  $region24: #{hunet_forward.31} parent=0 // pred_region
    _
  $region25: #{hunet_forward.31} parent=0 // pred_fallthru
    _
  %v23 = vld [vmem:[%s0] sm:$0xff]
  %v24 = vld [vmem:[%s0 + $0x8] sm:$0xff]
  %v25 = vld [vmem:[%s0 + $0x10] sm:$0xff]
  %v26 = vld [vmem:[%s0 + $0x18] sm:$0xff]
  %v27 = vld [vmem:[%s0 + $0x20] sm:$0xff]
  %v28 = vld [vmem:[%s0 + $0x28] sm:$0xff]
  %v29 = vld [vmem:[%s0 + $0x30] sm:$0xff]
  %v30 = vld [vmem:[%s0 + $0x38] sm:$0xff]
  %v31 = vld [vmem:[%s0 + $0x40] sm:$0xff]
  %v32 = vld [vmem:[%s0 + $0x48] sm:$0xff]
  %v33 = vld [vmem:[%s0 + $0x50] sm:$0xff]
  %v34 = vld [vmem:[%s0 + $0x58] sm:$0xff]
  %v35 = vld [vmem:[%s0 + $0x60] sm:$0xff]
  %v36 = vld [vmem:[%s0 + $0x68] sm:$0xff]
  %v37 = vld [vmem:[%s0 + $0x70] sm:$0xff]
  %v38 = vld [vmem:[%s0 + $0x78] sm:$0xff]
  %v39 = vld [vmem:[%s0 + $0x80] sm:$0xff]
  %v40 = vld [vmem:[%s0 + $0x88] sm:$0xff]
  %v41 = vld [vmem:[%s0 + $0x90] sm:$0xff]
  %v42 = vld [vmem:[%s0 + $0x98] sm:$0xff]
  %v43 = vld [vmem:[%s0 + $0xa0] sm:$0xff]
  %v44 = vld [vmem:[%s0 + $0xa8] sm:$0xff]
  %v45 = vld [vmem:[%s0 + $0xb0] sm:$0xff]
  %v46 = vld [vmem:[%s0 + $0xb8] sm:$0xff]
  %v47 = vld [vmem:[%s0 + $0xc0] sm:$0xff]
  %v48 = vld [vmem:[%s0 + $0xc8] sm:$0xff]
  %v49 = vld [vmem:[%s0 + $0xd0] sm:$0xff]
  %v50 = vld [vmem:[%s0 + $0xd8] sm:$0xff]
  %v51 = vld [vmem:[%s0 + $0xe0] sm:$0xff]
  %v52 = vld [vmem:[%s0 + $0xe8] sm:$0xff]
  %v53 = vld [vmem:[%s0 + $0xf0] sm:$0xff]
  %v54 = vld [vmem:[%s0 + $0xf8] sm:$0xff]
  %v55 = vld [vmem:[%s0 + $0x100] sm:$0xff]
  %v56 = vld [vmem:[%s0 + $0x108] sm:$0xff]
  %v57 = vld [vmem:[%s0 + $0x110] sm:$0xff]
  %v58 = vld [vmem:[%s0 + $0x118] sm:$0xff]
  %v59 = vld [vmem:[%s0 + $0x120] sm:$0xff]
  %v60 = vld [vmem:[%s0 + $0x128] sm:$0xff]
  %v61 = vld [vmem:[%s0 + $0x130] sm:$0xff]
  %v62 = vld [vmem:[%s0 + $0x138] sm:$0xff]
  %v63 = vld [vmem:[%s0 + $0x140] sm:$0xff]
  %v64 = vld [vmem:[%s0 + $0x148] sm:$0xff]
  %v65 = vld [vmem:[%s0 + $0x150] sm:$0xff]
  %v66 = vld [vmem:[%s0 + $0x158] sm:$0xff]
  %v67 = vld [vmem:[%s0 + $0x160] sm:$0xff]
  %v68 = vld [vmem:[%s0 + $0x168] sm:$0xff]
  %v69 = vld [vmem:[%s0 + $0x170] sm:$0xff]
  %v70 = vld [vmem:[%s0 + $0x178] sm:$0xff]
  %v71 = vld [vmem:[%s0 + $0x180] sm:$0xff]
  %v72 = vld [vmem:[%s0 + $0x188] sm:$0xff]
  %v73 = vld [vmem:[%s0 + $0x190] sm:$0xff]
  %v74 = vld [vmem:[%s0 + $0x198] sm:$0xff]
  %v75 = vld [vmem:[%s0 + $0x1a0] sm:$0xff]
  %v76 = vld [vmem:[%s0 + $0x1a8] sm:$0xff]
  %v77 = vld [vmem:[%s0 + $0x1b0] sm:$0xff]
  %v78 = vld [vmem:[%s0 + $0x1b8] sm:$0xff]
  %v79 = vld [vmem:[%s0 + $0x1c0] sm:$0xff]
  %v80 = vld [vmem:[%s0 + $0x1c8] sm:$0xff]
  %v81 = vld [vmem:[%s0 + $0x1d0] sm:$0xff]
  %v82 = vld [vmem:[%s0 + $0x1d8] sm:$0xff]
  %v83 = vld [vmem:[%s0 + $0x1e0] sm:$0xff]
  %v84 = vld [vmem:[%s0 + $0x1e8] sm:$0xff]
  %v85 = vld [vmem:[%s0 + $0x1f0] sm:$0xff]
  %v86 = vld [vmem:[%s0 + $0x1f8] sm:$0xff]
  %vm87 = vcmask 64512
  %v88 = vsel %vm87, %v23, 0.0
  %v89 = vsel %vm87, %v24, 0.0
  %v90 = vadd.f32 %v88, %v89
  %v91 = vsel %vm87, %v25, 0.0
  %v92 = vadd.f32 %v90, %v91
  %v93 = vsel %vm87, %v26, 0.0
  %v94 = vadd.f32 %v92, %v93
  %v95 = vsel %vm87, %v27, 0.0
  %v96 = vadd.f32 %v94, %v95
  %v97 = vsel %vm87, %v28, 0.0
  %v98 = vadd.f32 %v96, %v97
  %v99 = vsel %vm87, %v29, 0.0
  %v100 = vadd.f32 %v98, %v99
  %v101 = vsel %vm87, %v30, 0.0
  %v102 = vadd.f32 %v100, %v101
  %v103 = vsel %vm87, %v31, 0.0
  %v104 = vadd.f32 %v102, %v103
  %v105 = vsel %vm87, %v32, 0.0
  %v106 = vadd.f32 %v104, %v105
  %v107 = vsel %vm87, %v33, 0.0
  %v108 = vadd.f32 %v106, %v107
  %v109 = vsel %vm87, %v34, 0.0
  %v110 = vadd.f32 %v108, %v109
  %v111 = vsel %vm87, %v35, 0.0
  %v112 = vadd.f32 %v110, %v111
  %v113 = vsel %vm87, %v36, 0.0
  %v114 = vadd.f32 %v112, %v113
  %v115 = vsel %vm87, %v37, 0.0
  %v116 = vadd.f32 %v114, %v115
  %v117 = vsel %vm87, %v38, 0.0
  %v118 = vadd.f32 %v116, %v117
  %v119 = vsel %vm87, %v39, 0.0
  %v120 = vadd.f32 %v118, %v119
  %v121 = vsel %vm87, %v40, 0.0
  %v122 = vadd.f32 %v120, %v121
  %v123 = vsel %vm87, %v41, 0.0
  %v124 = vadd.f32 %v122, %v123
  %v125 = vsel %vm87, %v42, 0.0
  %v126 = vadd.f32 %v124, %v125
  %v127 = vsel %vm87, %v43, 0.0
  %v128 = vadd.f32 %v126, %v127
  %v129 = vsel %vm87, %v44, 0.0
  %v130 = vadd.f32 %v128, %v129
  %v131 = vsel %vm87, %v45, 0.0
  %v132 = vadd.f32 %v130, %v131
  %v133 = vsel %vm87, %v46, 0.0
  %v134 = vadd.f32 %v132, %v133
  %v135 = vsel %vm87, %v47, 0.0
  %v136 = vadd.f32 %v134, %v135
  %v137 = vsel %vm87, %v48, 0.0
  %v138 = vadd.f32 %v136, %v137
  %v139 = vsel %vm87, %v49, 0.0
  %v140 = vadd.f32 %v138, %v139
  %v141 = vsel %vm87, %v50, 0.0
  %v142 = vadd.f32 %v140, %v141
  %v143 = vsel %vm87, %v51, 0.0
  %v144 = vadd.f32 %v142, %v143
  %v145 = vsel %vm87, %v52, 0.0
  %v146 = vadd.f32 %v144, %v145
  %v147 = vsel %vm87, %v53, 0.0
  %v148 = vadd.f32 %v146, %v147
  %v149 = vsel %vm87, %v54, 0.0
  %v150 = vadd.f32 %v148, %v149
  %v151 = vrot.slane %v150, 4
  %v152 = vadd.f32 %v150, %v151
  %v153 = vrot.slane %v152, 2
  %v154 = vadd.f32 %v152, %v153
  %v155 = vrot.slane %v154, 1
  %v156 = vadd.f32 %v154, %v155
  %v157 = vsel %vm87, %v55, 0.0
  %v158 = vsel %vm87, %v56, 0.0
  %v159 = vadd.f32 %v157, %v158
  %v160 = vsel %vm87, %v57, 0.0
  %v161 = vadd.f32 %v159, %v160
  %v162 = vsel %vm87, %v58, 0.0
  %v163 = vadd.f32 %v161, %v162
  %v164 = vsel %vm87, %v59, 0.0
  %v165 = vadd.f32 %v163, %v164
  %v166 = vsel %vm87, %v60, 0.0
  %v167 = vadd.f32 %v165, %v166
  %v168 = vsel %vm87, %v61, 0.0
  %v169 = vadd.f32 %v167, %v168
  %v170 = vsel %vm87, %v62, 0.0
  %v171 = vadd.f32 %v169, %v170
  %v172 = vsel %vm87, %v63, 0.0
  %v173 = vadd.f32 %v171, %v172
  %v174 = vsel %vm87, %v64, 0.0
  %v175 = vadd.f32 %v173, %v174
  %v176 = vsel %vm87, %v65, 0.0
  %v177 = vadd.f32 %v175, %v176
  %v178 = vsel %vm87, %v66, 0.0
  %v179 = vadd.f32 %v177, %v178
  %v180 = vsel %vm87, %v67, 0.0
  %v181 = vadd.f32 %v179, %v180
  %v182 = vsel %vm87, %v68, 0.0
  %v183 = vadd.f32 %v181, %v182
  %v184 = vsel %vm87, %v69, 0.0
  %v185 = vadd.f32 %v183, %v184
  %v186 = vsel %vm87, %v70, 0.0
  %v187 = vadd.f32 %v185, %v186
  %v188 = vsel %vm87, %v71, 0.0
  %v189 = vadd.f32 %v187, %v188
  %v190 = vsel %vm87, %v72, 0.0
  %v191 = vadd.f32 %v189, %v190
  %v192 = vsel %vm87, %v73, 0.0
  %v193 = vadd.f32 %v191, %v192
  %v194 = vsel %vm87, %v74, 0.0
  %v195 = vadd.f32 %v193, %v194
  %v196 = vsel %vm87, %v75, 0.0
  %v197 = vadd.f32 %v195, %v196
  %v198 = vsel %vm87, %v76, 0.0
  %v199 = vadd.f32 %v197, %v198
  %v200 = vsel %vm87, %v77, 0.0
  %v201 = vadd.f32 %v199, %v200
  %v202 = vsel %vm87, %v78, 0.0
  %v203 = vadd.f32 %v201, %v202
  %v204 = vsel %vm87, %v79, 0.0
  %v205 = vadd.f32 %v203, %v204
  %v206 = vsel %vm87, %v80, 0.0
  %v207 = vadd.f32 %v205, %v206
  %v208 = vsel %vm87, %v81, 0.0
  %v209 = vadd.f32 %v207, %v208
  %v210 = vsel %vm87, %v82, 0.0
  %v211 = vadd.f32 %v209, %v210
  %v212 = vsel %vm87, %v83, 0.0
  %v213 = vadd.f32 %v211, %v212
  %v214 = vsel %vm87, %v84, 0.0
  %v215 = vadd.f32 %v213, %v214
  %v216 = vsel %vm87, %v85, 0.0
  %v217 = vadd.f32 %v215, %v216
  %v218 = vsel %vm87, %v86, 0.0
  %v219 = vadd.f32 %v217, %v218
  %v220 = vrot.slane %v219, 4
  %v221 = vadd.f32 %v219, %v220
  %v222 = vrot.slane %v221, 2
  %v223 = vadd.f32 %v221, %v222
  %v224 = vrot.slane %v223, 1
  %v225 = vadd.f32 %v223, %v224
  %v226 = vrcp.pop 256.0
  %v227 = vmul.f32 256.0, %v226
  %v228 = vsub.f32 1.0, %v227
  %v229 = vmul.f32 %v226, %v228
  %v230 = vadd.f32 %v226, %v229
  %vm231 = vweird.f32 %v226
  %v232 = vsel %vm231, %v226, %v230
  %v233 = vmul.f32 %v156, %v232
  %v234 = vmul.f32 %v225, %v232
  %v235 = vsel %vm87, %v233, 0.0
  %v236 = vsel %vm87, %v234, 0.0
  %v237 = vadd.f32 %v235, %v236
  %v238 = vrcp.pop 2.0
  %v239 = vmul.f32 2.0, %v238
  %v240 = vsub.f32 1.0, %v239
  %v241 = vmul.f32 %v238, %v240
  %v242 = vadd.f32 %v238, %v241
  %vm243 = vweird.f32 %v238
  %v244 = vsel %vm243, %v238, %v242
  %v245 = vmul.f32 %v237, %v244
  %v246 = vsub.f32 %v23, %v245
  %v247 = vsub.f32 %v24, %v245
  %v248 = vsub.f32 %v25, %v245
  %v249 = vsub.f32 %v26, %v245
  %v250 = vsub.f32 %v27, %v245
  %v251 = vsub.f32 %v28, %v245
  %v252 = vsub.f32 %v29, %v245
  %v253 = vsub.f32 %v30, %v245
  %v254 = vsub.f32 %v31, %v245
  %v255 = vsub.f32 %v32, %v245
  %v256 = vsub.f32 %v33, %v245
  %v257 = vsub.f32 %v34, %v245
  %v258 = vsub.f32 %v35, %v245
  %v259 = vsub.f32 %v36, %v245
  %v260 = vsub.f32 %v37, %v245
  %v261 = vsub.f32 %v38, %v245
  %v262 = vsub.f32 %v39, %v245
  %v263 = vsub.f32 %v40, %v245
  %v264 = vsub.f32 %v41, %v245
  %v265 = vsub.f32 %v42, %v245
  %v266 = vsub.f32 %v43, %v245
  %v267 = vsub.f32 %v44, %v245
  %v268 = vsub.f32 %v45, %v245
  %v269 = vsub.f32 %v46, %v245
  %v270 = vsub.f32 %v47, %v245
  %v271 = vsub.f32 %v48, %v245
  %v272 = vsub.f32 %v49, %v245
  %v273 = vsub.f32 %v50, %v245
  %v274 = vsub.f32 %v51, %v245
  %v275 = vsub.f32 %v52, %v245
  %v276 = vsub.f32 %v53, %v245
  %v277 = vsub.f32 %v54, %v245
  %v278 = vsub.f32 %v55, %v245
  %v279 = vsub.f32 %v56, %v245
  %v280 = vsub.f32 %v57, %v245
  %v281 = vsub.f32 %v58, %v245
  %v282 = vsub.f32 %v59, %v245
  %v283 = vsub.f32 %v60, %v245
  %v284 = vsub.f32 %v61, %v245
  %v285 = vsub.f32 %v62, %v245
  %v286 = vsub.f32 %v63, %v245
  %v287 = vsub.f32 %v64, %v245
  %v288 = vsub.f32 %v65, %v245
  %v289 = vsub.f32 %v66, %v245
  %v290 = vsub.f32 %v67, %v245
  %v291 = vsub.f32 %v68, %v245
  %v292 = vsub.f32 %v69, %v245
  %v293 = vsub.f32 %v70, %v245
  %v294 = vsub.f32 %v71, %v245
  %v295 = vsub.f32 %v72, %v245
  %v296 = vsub.f32 %v73, %v245
  %v297 = vsub.f32 %v74, %v245
  %v298 = vsub.f32 %v75, %v245
  %v299 = vsub.f32 %v76, %v245
  %v300 = vsub.f32 %v77, %v245
  %v301 = vsub.f32 %v78, %v245
  %v302 = vsub.f32 %v79, %v245
  %v303 = vsub.f32 %v80, %v245
  %v304 = vsub.f32 %v81, %v245
  %v305 = vsub.f32 %v82, %v245
  %v306 = vsub.f32 %v83, %v245
  %v307 = vsub.f32 %v84, %v245
  %v308 = vsub.f32 %v85, %v245
  %v309 = vsub.f32 %v86, %v245
  %v310 = vmul.f32 %v246, %v246
  %v311 = vmul.f32 %v247, %v247
  %v312 = vmul.f32 %v248, %v248
  %v313 = vmul.f32 %v249, %v249
  %v314 = vmul.f32 %v250, %v250
  %v315 = vmul.f32 %v251, %v251
  %v316 = vmul.f32 %v252, %v252
  %v317 = vmul.f32 %v253, %v253
  %v318 = vmul.f32 %v254, %v254
  %v319 = vmul.f32 %v255, %v255
  %v320 = vmul.f32 %v256, %v256
  %v321 = vmul.f32 %v257, %v257
  %v322 = vmul.f32 %v258, %v258
  %v323 = vmul.f32 %v259, %v259
  %v324 = vmul.f32 %v260, %v260
  %v325 = vmul.f32 %v261, %v261
  %v326 = vmul.f32 %v262, %v262
  %v327 = vmul.f32 %v263, %v263
  %v328 = vmul.f32 %v264, %v264
  %v329 = vmul.f32 %v265, %v265
  %v330 = vmul.f32 %v266, %v266
  %v331 = vmul.f32 %v267, %v267
  %v332 = vmul.f32 %v268, %v268
  %v333 = vmul.f32 %v269, %v269
  %v334 = vmul.f32 %v270, %v270
  %v335 = vmul.f32 %v271, %v271
  %v336 = vmul.f32 %v272, %v272
  %v337 = vmul.f32 %v273, %v273
  %v338 = vmul.f32 %v274, %v274
  %v339 = vmul.f32 %v275, %v275
  %v340 = vmul.f32 %v276, %v276
  %v341 = vmul.f32 %v277, %v277
  %v342 = vmul.f32 %v278, %v278
  %v343 = vmul.f32 %v279, %v279
  %v344 = vmul.f32 %v280, %v280
  %v345 = vmul.f32 %v281, %v281
  %v346 = vmul.f32 %v282, %v282
  %v347 = vmul.f32 %v283, %v283
  %v348 = vmul.f32 %v284, %v284
  %v349 = vmul.f32 %v285, %v285
  %v350 = vmul.f32 %v286, %v286
  %v351 = vmul.f32 %v287, %v287
  %v352 = vmul.f32 %v288, %v288
  %v353 = vmul.f32 %v289, %v289
  %v354 = vmul.f32 %v290, %v290
  %v355 = vmul.f32 %v291, %v291
  %v356 = vmul.f32 %v292, %v292
  %v357 = vmul.f32 %v293, %v293
  %v358 = vmul.f32 %v294, %v294
  %v359 = vmul.f32 %v295, %v295
  %v360 = vmul.f32 %v296, %v296
  %v361 = vmul.f32 %v297, %v297
  %v362 = vmul.f32 %v298, %v298
  %v363 = vmul.f32 %v299, %v299
  %v364 = vmul.f32 %v300, %v300
  %v365 = vmul.f32 %v301, %v301
  %v366 = vmul.f32 %v302, %v302
  %v367 = vmul.f32 %v303, %v303
  %v368 = vmul.f32 %v304, %v304
  %v369 = vmul.f32 %v305, %v305
  %v370 = vmul.f32 %v306, %v306
  %v371 = vmul.f32 %v307, %v307
  %v372 = vmul.f32 %v308, %v308
  %v373 = vmul.f32 %v309, %v309
  %v374 = vsel %vm87, %v310, 0.0
  %v375 = vsel %vm87, %v311, 0.0
  %v376 = vadd.f32 %v374, %v375
  %v377 = vsel %vm87, %v312, 0.0
  %v378 = vadd.f32 %v376, %v377
  %v379 = vsel %vm87, %v313, 0.0
  %v380 = vadd.f32 %v378, %v379
  %v381 = vsel %vm87, %v314, 0.0
  %v382 = vadd.f32 %v380, %v381
  %v383 = vsel %vm87, %v315, 0.0
  %v384 = vadd.f32 %v382, %v383
  %v385 = vsel %vm87, %v316, 0.0
  %v386 = vadd.f32 %v384, %v385
  %v387 = vsel %vm87, %v317, 0.0
  %v388 = vadd.f32 %v386, %v387
  %v389 = vsel %vm87, %v318, 0.0
  %v390 = vadd.f32 %v388, %v389
  %v391 = vsel %vm87, %v319, 0.0
  %v392 = vadd.f32 %v390, %v391
  %v393 = vsel %vm87, %v320, 0.0
  %v394 = vadd.f32 %v392, %v393
  %v395 = vsel %vm87, %v321, 0.0
  %v396 = vadd.f32 %v394, %v395
  %v397 = vsel %vm87, %v322, 0.0
  %v398 = vadd.f32 %v396, %v397
  %v399 = vsel %vm87, %v323, 0.0
  %v400 = vadd.f32 %v398, %v399
  %v401 = vsel %vm87, %v324, 0.0
  %v402 = vadd.f32 %v400, %v401
  %v403 = vsel %vm87, %v325, 0.0
  %v404 = vadd.f32 %v402, %v403
  %v405 = vsel %vm87, %v326, 0.0
  %v406 = vadd.f32 %v404, %v405
  %v407 = vsel %vm87, %v327, 0.0
  %v408 = vadd.f32 %v406, %v407
  %v409 = vsel %vm87, %v328, 0.0
  %v410 = vadd.f32 %v408, %v409
  %v411 = vsel %vm87, %v329, 0.0
  %v412 = vadd.f32 %v410, %v411
  %v413 = vsel %vm87, %v330, 0.0
  %v414 = vadd.f32 %v412, %v413
  %v415 = vsel %vm87, %v331, 0.0
  %v416 = vadd.f32 %v414, %v415
  %v417 = vsel %vm87, %v332, 0.0
  %v418 = vadd.f32 %v416, %v417
  %v419 = vsel %vm87, %v333, 0.0
  %v420 = vadd.f32 %v418, %v419
  %v421 = vsel %vm87, %v334, 0.0
  %v422 = vadd.f32 %v420, %v421
  %v423 = vsel %vm87, %v335, 0.0
  %v424 = vadd.f32 %v422, %v423
  %v425 = vsel %vm87, %v336, 0.0
  %v426 = vadd.f32 %v424, %v425
  %v427 = vsel %vm87, %v337, 0.0
  %v428 = vadd.f32 %v426, %v427
  %v429 = vsel %vm87, %v338, 0.0
  %v430 = vadd.f32 %v428, %v429
  %v431 = vsel %vm87, %v339, 0.0
  %v432 = vadd.f32 %v430, %v431
  %v433 = vsel %vm87, %v340, 0.0
  %v434 = vadd.f32 %v432, %v433
  %v435 = vsel %vm87, %v341, 0.0
  %v436 = vadd.f32 %v434, %v435
  %v437 = vrot.slane %v436, 4
  %v438 = vadd.f32 %v436, %v437
  %v439 = vrot.slane %v438, 2
  %v440 = vadd.f32 %v438, %v439
  %v441 = vrot.slane %v440, 1
  %v442 = vadd.f32 %v440, %v441
  %v443 = vsel %vm87, %v342, 0.0
  %v444 = vsel %vm87, %v343, 0.0
  %v445 = vadd.f32 %v443, %v444
  %v446 = vsel %vm87, %v344, 0.0
  %v447 = vadd.f32 %v445, %v446
  %v448 = vsel %vm87, %v345, 0.0
  %v449 = vadd.f32 %v447, %v448
  %v450 = vsel %vm87, %v346, 0.0
  %v451 = vadd.f32 %v449, %v450
  %v452 = vsel %vm87, %v347, 0.0
  %v453 = vadd.f32 %v451, %v452
  %v454 = vsel %vm87, %v348, 0.0
  %v455 = vadd.f32 %v453, %v454
  %v456 = vsel %vm87, %v349, 0.0
  %v457 = vadd.f32 %v455, %v456
  %v458 = vsel %vm87, %v350, 0.0
  %v459 = vadd.f32 %v457, %v458
  %v460 = vsel %vm87, %v351, 0.0
  %v461 = vadd.f32 %v459, %v460
  %v462 = vsel %vm87, %v352, 0.0
  %v463 = vadd.f32 %v461, %v462
  %v464 = vsel %vm87, %v353, 0.0
  %v465 = vadd.f32 %v463, %v464
  %v466 = vsel %vm87, %v354, 0.0
  %v467 = vadd.f32 %v465, %v466
  %v468 = vsel %vm87, %v355, 0.0
  %v469 = vadd.f32 %v467, %v468
  %v470 = vsel %vm87, %v356, 0.0
  %v471 = vadd.f32 %v469, %v470
  %v472 = vsel %vm87, %v357, 0.0
  %v473 = vadd.f32 %v471, %v472
  %v474 = vsel %vm87, %v358, 0.0
  %v475 = vadd.f32 %v473, %v474
  %v476 = vsel %vm87, %v359, 0.0
  %v477 = vadd.f32 %v475, %v476
  %v478 = vsel %vm87, %v360, 0.0
  %v479 = vadd.f32 %v477, %v478
  %v480 = vsel %vm87, %v361, 0.0
  %v481 = vadd.f32 %v479, %v480
  %v482 = vsel %vm87, %v362, 0.0
  %v483 = vadd.f32 %v481, %v482
  %v484 = vsel %vm87, %v363, 0.0
  %v485 = vadd.f32 %v483, %v484
  %v486 = vsel %vm87, %v364, 0.0
  %v487 = vadd.f32 %v485, %v486
  %v488 = vsel %vm87, %v365, 0.0
  %v489 = vadd.f32 %v487, %v488
  %v490 = vsel %vm87, %v366, 0.0
  %v491 = vadd.f32 %v489, %v490
  %v492 = vsel %vm87, %v367, 0.0
  %v493 = vadd.f32 %v491, %v492
  %v494 = vsel %vm87, %v368, 0.0
  %v495 = vadd.f32 %v493, %v494
  %v496 = vsel %vm87, %v369, 0.0
  %v497 = vadd.f32 %v495, %v496
  %v498 = vsel %vm87, %v370, 0.0
  %v499 = vadd.f32 %v497, %v498
  %v500 = vsel %vm87, %v371, 0.0
  %v501 = vadd.f32 %v499, %v500
  %v502 = vsel %vm87, %v372, 0.0
  %v503 = vadd.f32 %v501, %v502
  %v504 = vsel %vm87, %v373, 0.0
  %v505 = vadd.f32 %v503, %v504
  %v506 = vrot.slane %v505, 4
  %v507 = vadd.f32 %v505, %v506
  %v508 = vrot.slane %v507, 2
  %v509 = vadd.f32 %v507, %v508
  %v510 = vrot.slane %v509, 1
  %v511 = vadd.f32 %v509, %v510
  %v512 = vmul.f32 %v442, %v232
  %v513 = vmul.f32 %v511, %v232
  %v514 = vsel %vm87, %v512, 0.0
  %v515 = vsel %vm87, %v513, 0.0
  %v516 = vadd.f32 %v514, %v515
  %v517 = vmul.f32 %v516, %v244
  %v518 = vadd.f32 %v517, 1e-05
  %v519 = vrsqrt.pop %v518
  %v520 = vmul.f32 %v519, %v518
  %v521 = vmul.f32 %v520, %v519
  %v522 = vmul.f32 0.5, %v521
  %v523 = vsub.f32 1.5, %v522
  %v524 = vmul.f32 %v519, %v523
  %vm525 = vweird.f32 %v518
  %vm526 = vweird.f32 %v519
  %vm527 = vmor %vm525, %vm526
  %v528 = vsel %vm527, %v519, %v524
  %v529 = vmul.f32 %v246, %v528
  %v530 = vmul.f32 %v247, %v528
  %v531 = vmul.f32 %v248, %v528
  %v532 = vmul.f32 %v249, %v528
  %v533 = vmul.f32 %v250, %v528
  %v534 = vmul.f32 %v251, %v528
  %v535 = vmul.f32 %v252, %v528
  %v536 = vmul.f32 %v253, %v528
  %v537 = vmul.f32 %v254, %v528
  %v538 = vmul.f32 %v255, %v528
  %v539 = vmul.f32 %v256, %v528
  %v540 = vmul.f32 %v257, %v528
  %v541 = vmul.f32 %v258, %v528
  %v542 = vmul.f32 %v259, %v528
  %v543 = vmul.f32 %v260, %v528
  %v544 = vmul.f32 %v261, %v528
  %v545 = vmul.f32 %v262, %v528
  %v546 = vmul.f32 %v263, %v528
  %v547 = vmul.f32 %v264, %v528
  %v548 = vmul.f32 %v265, %v528
  %v549 = vmul.f32 %v266, %v528
  %v550 = vmul.f32 %v267, %v528
  %v551 = vmul.f32 %v268, %v528
  %v552 = vmul.f32 %v269, %v528
  %v553 = vmul.f32 %v270, %v528
  %v554 = vmul.f32 %v271, %v528
  %v555 = vmul.f32 %v272, %v528
  %v556 = vmul.f32 %v273, %v528
  %v557 = vmul.f32 %v274, %v528
  %v558 = vmul.f32 %v275, %v528
  %v559 = vmul.f32 %v276, %v528
  %v560 = vmul.f32 %v277, %v528
  %v561 = vmul.f32 %v278, %v528
  %v562 = vmul.f32 %v279, %v528
  %v563 = vmul.f32 %v280, %v528
  %v564 = vmul.f32 %v281, %v528
  %v565 = vmul.f32 %v282, %v528
  %v566 = vmul.f32 %v283, %v528
  %v567 = vmul.f32 %v284, %v528
  %v568 = vmul.f32 %v285, %v528
  %v569 = vmul.f32 %v286, %v528
  %v570 = vmul.f32 %v287, %v528
  %v571 = vmul.f32 %v288, %v528
  %v572 = vmul.f32 %v289, %v528
  %v573 = vmul.f32 %v290, %v528
  %v574 = vmul.f32 %v291, %v528
  %v575 = vmul.f32 %v292, %v528
  %v576 = vmul.f32 %v293, %v528
  %v577 = vmul.f32 %v294, %v528
  %v578 = vmul.f32 %v295, %v528
  %v579 = vmul.f32 %v296, %v528
  %v580 = vmul.f32 %v297, %v528
  %v581 = vmul.f32 %v298, %v528
  %v582 = vmul.f32 %v299, %v528
  %v583 = vmul.f32 %v300, %v528
  %v584 = vmul.f32 %v301, %v528
  %v585 = vmul.f32 %v302, %v528
  %v586 = vmul.f32 %v303, %v528
  %v587 = vmul.f32 %v304, %v528
  %v588 = vmul.f32 %v305, %v528
  %v589 = vmul.f32 %v306, %v528
  %v590 = vmul.f32 %v307, %v528
  %v591 = vmul.f32 %v308, %v528
  %v592 = vmul.f32 %v309, %v528
  %v593 = vsel %vm87, %v529, 0.0
  %v594 = vsel %vm87, %v530, 0.0
  %v595 = vadd.f32 %v593, %v594
  %v596 = vsel %vm87, %v531, 0.0
  %v597 = vadd.f32 %v595, %v596
  %v598 = vsel %vm87, %v532, 0.0
  %v599 = vadd.f32 %v597, %v598
  %v600 = vsel %vm87, %v533, 0.0
  %v601 = vadd.f32 %v599, %v600
  %v602 = vsel %vm87, %v534, 0.0
  %v603 = vadd.f32 %v601, %v602
  %v604 = vsel %vm87, %v535, 0.0
  %v605 = vadd.f32 %v603, %v604
  %v606 = vsel %vm87, %v536, 0.0
  %v607 = vadd.f32 %v605, %v606
  %v608 = vsel %vm87, %v537, 0.0
  %v609 = vadd.f32 %v607, %v608
  %v610 = vsel %vm87, %v538, 0.0
  %v611 = vadd.f32 %v609, %v610
  %v612 = vsel %vm87, %v539, 0.0
  %v613 = vadd.f32 %v611, %v612
  %v614 = vsel %vm87, %v540, 0.0
  %v615 = vadd.f32 %v613, %v614
  %v616 = vsel %vm87, %v541, 0.0
  %v617 = vadd.f32 %v615, %v616
  %v618 = vsel %vm87, %v542, 0.0
  %v619 = vadd.f32 %v617, %v618
  %v620 = vsel %vm87, %v543, 0.0
  %v621 = vadd.f32 %v619, %v620
  %v622 = vsel %vm87, %v544, 0.0
  %v623 = vadd.f32 %v621, %v622
  %v624 = vsel %vm87, %v545, 0.0
  %v625 = vadd.f32 %v623, %v624
  %v626 = vsel %vm87, %v546, 0.0
  %v627 = vadd.f32 %v625, %v626
  %v628 = vsel %vm87, %v547, 0.0
  %v629 = vadd.f32 %v627, %v628
  %v630 = vsel %vm87, %v548, 0.0
  %v631 = vadd.f32 %v629, %v630
  %v632 = vsel %vm87, %v549, 0.0
  %v633 = vadd.f32 %v631, %v632
  %v634 = vsel %vm87, %v550, 0.0
  %v635 = vadd.f32 %v633, %v634
  %v636 = vsel %vm87, %v551, 0.0
  %v637 = vadd.f32 %v635, %v636
  %v638 = vsel %vm87, %v552, 0.0
  %v639 = vadd.f32 %v637, %v638
  %v640 = vsel %vm87, %v553, 0.0
  %v641 = vadd.f32 %v639, %v640
  %v642 = vsel %vm87, %v554, 0.0
  %v643 = vadd.f32 %v641, %v642
  %v644 = vsel %vm87, %v555, 0.0
  %v645 = vadd.f32 %v643, %v644
  %v646 = vsel %vm87, %v556, 0.0
  %v647 = vadd.f32 %v645, %v646
  %v648 = vsel %vm87, %v557, 0.0
  %v649 = vadd.f32 %v647, %v648
  %v650 = vsel %vm87, %v558, 0.0
  %v651 = vadd.f32 %v649, %v650
  %v652 = vsel %vm87, %v559, 0.0
  %v653 = vadd.f32 %v651, %v652
  %v654 = vsel %vm87, %v560, 0.0
  %v655 = vadd.f32 %v653, %v654
  %v656 = vrot.slane %v655, 4
  %v657 = vadd.f32 %v655, %v656
  %v658 = vrot.slane %v657, 2
  %v659 = vadd.f32 %v657, %v658
  %v660 = vrot.slane %v659, 1
  %v661 = vadd.f32 %v659, %v660
  %v662 = vsel %vm87, %v561, 0.0
  %v663 = vsel %vm87, %v562, 0.0
  %v664 = vadd.f32 %v662, %v663
  %v665 = vsel %vm87, %v563, 0.0
  %v666 = vadd.f32 %v664, %v665
  %v667 = vsel %vm87, %v564, 0.0
  %v668 = vadd.f32 %v666, %v667
  %v669 = vsel %vm87, %v565, 0.0
  %v670 = vadd.f32 %v668, %v669
  %v671 = vsel %vm87, %v566, 0.0
  %v672 = vadd.f32 %v670, %v671
  %v673 = vsel %vm87, %v567, 0.0
  %v674 = vadd.f32 %v672, %v673
  %v675 = vsel %vm87, %v568, 0.0
  %v676 = vadd.f32 %v674, %v675
  %v677 = vsel %vm87, %v569, 0.0
  %v678 = vadd.f32 %v676, %v677
  %v679 = vsel %vm87, %v570, 0.0
  %v680 = vadd.f32 %v678, %v679
  %v681 = vsel %vm87, %v571, 0.0
  %v682 = vadd.f32 %v680, %v681
  %v683 = vsel %vm87, %v572, 0.0
  %v684 = vadd.f32 %v682, %v683
  %v685 = vsel %vm87, %v573, 0.0
  %v686 = vadd.f32 %v684, %v685
  %v687 = vsel %vm87, %v574, 0.0
  %v688 = vadd.f32 %v686, %v687
  %v689 = vsel %vm87, %v575, 0.0
  %v690 = vadd.f32 %v688, %v689
  %v691 = vsel %vm87, %v576, 0.0
  %v692 = vadd.f32 %v690, %v691
  %v693 = vsel %vm87, %v577, 0.0
  %v694 = vadd.f32 %v692, %v693
  %v695 = vsel %vm87, %v578, 0.0
  %v696 = vadd.f32 %v694, %v695
  %v697 = vsel %vm87, %v579, 0.0
  %v698 = vadd.f32 %v696, %v697
  %v699 = vsel %vm87, %v580, 0.0
  %v700 = vadd.f32 %v698, %v699
  %v701 = vsel %vm87, %v581, 0.0
  %v702 = vadd.f32 %v700, %v701
  %v703 = vsel %vm87, %v582, 0.0
  %v704 = vadd.f32 %v702, %v703
  %v705 = vsel %vm87, %v583, 0.0
  %v706 = vadd.f32 %v704, %v705
  %v707 = vsel %vm87, %v584, 0.0
  %v708 = vadd.f32 %v706, %v707
  %v709 = vsel %vm87, %v585, 0.0
  %v710 = vadd.f32 %v708, %v709
  %v711 = vsel %vm87, %v586, 0.0
  %v712 = vadd.f32 %v710, %v711
  %v713 = vsel %vm87, %v587, 0.0
  %v714 = vadd.f32 %v712, %v713
  %v715 = vsel %vm87, %v588, 0.0
  %v716 = vadd.f32 %v714, %v715
  %v717 = vsel %vm87, %v589, 0.0
  %v718 = vadd.f32 %v716, %v717
  %v719 = vsel %vm87, %v590, 0.0
  %v720 = vadd.f32 %v718, %v719
  %v721 = vsel %vm87, %v591, 0.0
  %v722 = vadd.f32 %v720, %v721
  %v723 = vsel %vm87, %v592, 0.0
  %v724 = vadd.f32 %v722, %v723
  %v725 = vrot.slane %v724, 4
  %v726 = vadd.f32 %v724, %v725
  %v727 = vrot.slane %v726, 2
  %v728 = vadd.f32 %v726, %v727
  %v729 = vrot.slane %v728, 1
  %v730 = vadd.f32 %v728, %v729
  %v731 = vmul.f32 %v661, %v232
  %v732 = vmul.f32 %v730, %v232
  %v733 = vsel %vm87, %v529, -inf
  %v734 = vsel %vm87, %v530, -inf
  %v735 = vsel %vm87, %v531, -inf
  %v736 = vmax.f32 %v733, %v735
  %v737 = vsel %vm87, %v532, -inf
  %v738 = vmax.f32 %v734, %v737
  %v739 = vsel %vm87, %v533, -inf
  %v740 = vmax.f32 %v736, %v739
  %v741 = vsel %vm87, %v534, -inf
  %v742 = vmax.f32 %v738, %v741
  %v743 = vsel %vm87, %v535, -inf
  %v744 = vmax.f32 %v740, %v743
  %v745 = vsel %vm87, %v536, -inf
  %v746 = vmax.f32 %v742, %v745
  %v747 = vsel %vm87, %v537, -inf
  %v748 = vmax.f32 %v744, %v747
  %v749 = vsel %vm87, %v538, -inf
  %v750 = vmax.f32 %v746, %v749
  %v751 = vsel %vm87, %v539, -inf
  %v752 = vmax.f32 %v748, %v751
  %v753 = vsel %vm87, %v540, -inf
  %v754 = vmax.f32 %v750, %v753
  %v755 = vsel %vm87, %v541, -inf
  %v756 = vmax.f32 %v752, %v755
  %v757 = vsel %vm87, %v542, -inf
  %v758 = vmax.f32 %v754, %v757
  %v759 = vsel %vm87, %v543, -inf
  %v760 = vmax.f32 %v756, %v759
  %v761 = vsel %vm87, %v544, -inf
  %v762 = vmax.f32 %v758, %v761
  %v763 = vsel %vm87, %v545, -inf
  %v764 = vmax.f32 %v760, %v763
  %v765 = vsel %vm87, %v546, -inf
  %v766 = vmax.f32 %v762, %v765
  %v767 = vsel %vm87, %v547, -inf
  %v768 = vmax.f32 %v764, %v767
  %v769 = vsel %vm87, %v548, -inf
  %v770 = vmax.f32 %v766, %v769
  %v771 = vsel %vm87, %v549, -inf
  %v772 = vmax.f32 %v768, %v771
  %v773 = vsel %vm87, %v550, -inf
  %v774 = vmax.f32 %v770, %v773
  %v775 = vsel %vm87, %v551, -inf
  %v776 = vmax.f32 %v772, %v775
  %v777 = vsel %vm87, %v552, -inf
  %v778 = vmax.f32 %v774, %v777
  %v779 = vsel %vm87, %v553, -inf
  %v780 = vmax.f32 %v776, %v779
  %v781 = vsel %vm87, %v554, -inf
  %v782 = vmax.f32 %v778, %v781
  %v783 = vsel %vm87, %v555, -inf
  %v784 = vmax.f32 %v780, %v783
  %v785 = vsel %vm87, %v556, -inf
  %v786 = vmax.f32 %v782, %v785
  %v787 = vsel %vm87, %v557, -inf
  %v788 = vmax.f32 %v784, %v787
  %v789 = vsel %vm87, %v558, -inf
  %v790 = vmax.f32 %v786, %v789
  %v791 = vsel %vm87, %v559, -inf
  %v792 = vmax.f32 %v788, %v791
  %v793 = vsel %vm87, %v560, -inf
  %v794 = vmax.f32 %v790, %v793
  %v795 = vmax.f32 %v792, %v794
  %v796 = vrot.slane %v795, 4
  %v797 = vmax.f32 %v795, %v796
  %v798 = vrot.slane %v797, 2
  %v799 = vmax.f32 %v797, %v798
  %v800 = vrot.slane %v799, 1
  %v801 = vmax.f32 %v799, %v800
  %v802 = vsel %vm87, %v561, -inf
  %v803 = vsel %vm87, %v562, -inf
  %v804 = vsel %vm87, %v563, -inf
  %v805 = vmax.f32 %v802, %v804
  %v806 = vsel %vm87, %v564, -inf
  %v807 = vmax.f32 %v803, %v806
  %v808 = vsel %vm87, %v565, -inf
  %v809 = vmax.f32 %v805, %v808
  %v810 = vsel %vm87, %v566, -inf
  %v811 = vmax.f32 %v807, %v810
  %v812 = vsel %vm87, %v567, -inf
  %v813 = vmax.f32 %v809, %v812
  %v814 = vsel %vm87, %v568, -inf
  %v815 = vmax.f32 %v811, %v814
  %v816 = vsel %vm87, %v569, -inf
  %v817 = vmax.f32 %v813, %v816
  %v818 = vsel %vm87, %v570, -inf
  %v819 = vmax.f32 %v815, %v818
  %v820 = vsel %vm87, %v571, -inf
  %v821 = vmax.f32 %v817, %v820
  %v822 = vsel %vm87, %v572, -inf
  %v823 = vmax.f32 %v819, %v822
  %v824 = vsel %vm87, %v573, -inf
  %v825 = vmax.f32 %v821, %v824
  %v826 = vsel %vm87, %v574, -inf
  %v827 = vmax.f32 %v823, %v826
  %v828 = vsel %vm87, %v575, -inf
  %v829 = vmax.f32 %v825, %v828
  %v830 = vsel %vm87, %v576, -inf
  %v831 = vmax.f32 %v827, %v830
  %v832 = vsel %vm87, %v577, -inf
  %v833 = vmax.f32 %v829, %v832
  %v834 = vsel %vm87, %v578, -inf
  %v835 = vmax.f32 %v831, %v834
  %v836 = vsel %vm87, %v579, -inf
  %v837 = vmax.f32 %v833, %v836
  %v838 = vsel %vm87, %v580, -inf
  %v839 = vmax.f32 %v835, %v838
  %v840 = vsel %vm87, %v581, -inf
  %v841 = vmax.f32 %v837, %v840
  %v842 = vsel %vm87, %v582, -inf
  %v843 = vmax.f32 %v839, %v842
  %v844 = vsel %vm87, %v583, -inf
  %v845 = vmax.f32 %v841, %v844
  %v846 = vsel %vm87, %v584, -inf
  %v847 = vmax.f32 %v843, %v846
  %v848 = vsel %vm87, %v585, -inf
  %v849 = vmax.f32 %v845, %v848
  %v850 = vsel %vm87, %v586, -inf
  %v851 = vmax.f32 %v847, %v850
  %v852 = vsel %vm87, %v587, -inf
  %v853 = vmax.f32 %v849, %v852
  %v854 = vsel %vm87, %v588, -inf
  %v855 = vmax.f32 %v851, %v854
  %v856 = vsel %vm87, %v589, -inf
  %v857 = vmax.f32 %v853, %v856
  %v858 = vsel %vm87, %v590, -inf
  %v859 = vmax.f32 %v855, %v858
  %v860 = vsel %vm87, %v591, -inf
  %v861 = vmax.f32 %v857, %v860
  %v862 = vsel %vm87, %v592, -inf
  %v863 = vmax.f32 %v859, %v862
  %v864 = vmax.f32 %v861, %v863
  %v865 = vrot.slane %v864, 4
  %v866 = vmax.f32 %v864, %v865
  %v867 = vrot.slane %v866, 2
  %v868 = vmax.f32 %v866, %v867
  %v869 = vrot.slane %v868, 1
  %v870 = vmax.f32 %v868, %v869
  %vm873 = vcmask 1041409
  %v874 = vsel %vm873, %v732, %v731
  %vm878 = vcmask 1043459
  %v879 = vsel %vm878, %v870, %v801
  %vm881 = vcmask 1041408
  %v882 = vsel %vm881, %v874, %v879
  %v883 = vld [vmem:[%s1] sm:$0xff]
  %v884 = vld [vmem:[%s2] sm:$0x1]
  %v886 = vperm.slane %v884, 0
  %v889 = vsel %vm87, %v882, 0
  %891 = vmatpush.msra.mxu0 0.0
  %892 = vmatpush.msra.mxu0 0.0
  %893 = vmatpush.msra.mxu0 0.0
  %894 = vmatpush.msra.mxu0 0.0
  %895 = vmatpush.msra.mxu0 0.0
  %896 = vmatpush.msra.mxu0 0.0
  %897 = vmatpush.msra.mxu0 0.0
  %898 = vmatpush.msra.mxu0 0.0
  %899 = vmatpush.msra.mxu0 0.0
  %900 = vmatpush.msra.mxu0 0.0
  %901 = vmatpush.msra.mxu0 0.0
  %902 = vmatpush.msra.mxu0 0.0
  %903 = vmatpush.msra.mxu0 0.0
  %904 = vmatpush.msra.mxu0 0.0
  %905 = vmatpush.msra.mxu0 0.0
  %906 = vmatpush.msra.mxu0 %v883
  %907 = vmatmul.f32.gmra.mxu0 %v889
  %v908 = vpop.f32.mrf.mxu0
  %v909 = vadd.f32 %v886, %v908
  %910 = vdwg.mxu0
  %v911 = vmax.f32 %v909, 0.0
  %v912 = vld [vmem:[%s3] sm:$0x3]
  %v913 = vld [vmem:[%s4] sm:$0x1]
  %v915 = vperm.slane %v913, 0
  %vm917 = vcmask 15360
  %v919 = vsel %vm917, %v911, 0
  %v922 = vsel %vm881, %v912, 0
  %924 = vmatpush.msra.mxu0 0.0
  %925 = vmatpush.msra.mxu0 0.0
  %926 = vmatpush.msra.mxu0 0.0
  %927 = vmatpush.msra.mxu0 0.0
  %928 = vmatpush.msra.mxu0 0.0
  %929 = vmatpush.msra.mxu0 0.0
  %930 = vmatpush.msra.mxu0 0.0
  %931 = vmatpush.msra.mxu0 0.0
  %932 = vmatpush.msra.mxu0 0.0
  %933 = vmatpush.msra.mxu0 0.0
  %934 = vmatpush.msra.mxu0 0.0
  %935 = vmatpush.msra.mxu0 0.0
  %936 = vmatpush.msra.mxu0 0.0
  %937 = vmatpush.msra.mxu0 0.0
  %938 = vmatpush.msra.mxu0 0.0
  %939 = vmatpush.msra.mxu0 %v922
  %940 = vmatmul.f32.gmra.mxu0 %v919
  %v941 = vpop.f32.mrf.mxu0
  %v942 = vadd.f32 %v915, %v941
  %943 = vdwg.mxu0
  %v945 = vrot.slane %v942, 2
  %v947 = vadd.f32 %v942, %v945
  %v948 = vsub.f32 0.0, %v947
  %v949 = vmul.f32 %v948, 1.442695
  %v950 = vpow.pop %v949
  %v951 = vadd.f32 %v950, 1.0
  %v952 = vrcp.pop %v951
  %v953 = vmul.f32 %v951, %v952
  %v954 = vsub.f32 1.0, %v953
  %v955 = vmul.f32 %v952, %v954
  %v956 = vadd.f32 %v952, %v955
  %vm957 = vweird.f32 %v951
  %vm958 = vweird.f32 %v952
  %vm959 = vmor %vm957, %vm958
  %v960 = vsel %vm959, %v952, %v956
  %v961 = vand.u32 2147483647, %v951
  %vm962 = vcmp.eq.f32.partialorder %v961, 8.507059e+37
  %v963 = vand.u32 %v951, 2147483648
  %v964 = vor.u32 1.1754944e-38, %v963
  %v965 = vsel %vm962, %v964, %v960
  %v966 = vmul.f32 1.0, %v965
  %v968 = vrot.slane %v966, 1
  %v969 = vperm.slane %v966, 0
  %v970 = vperm.slane %v968, 0
  %v973 = vmul.f32 %v529, %v969
  %v974 = vmul.f32 %v530, %v969
  %v975 = vmul.f32 %v531, %v969
  %v976 = vmul.f32 %v532, %v969
  %v977 = vmul.f32 %v533, %v969
  %v978 = vmul.f32 %v534, %v969
  %v979 = vmul.f32 %v535, %v969
  %v980 = vmul.f32 %v536, %v969
  %v981 = vmul.f32 %v537, %v969
  %v982 = vmul.f32 %v538, %v969
  %v983 = vmul.f32 %v539, %v969
  %v984 = vmul.f32 %v540, %v969
  %v985 = vmul.f32 %v541, %v969
  %v986 = vmul.f32 %v542, %v969
  %v987 = vmul.f32 %v543, %v969
  %v988 = vmul.f32 %v544, %v969
  %v989 = vmul.f32 %v545, %v969
  %v990 = vmul.f32 %v546, %v969
  %v991 = vmul.f32 %v547, %v969
  %v992 = vmul.f32 %v548, %v969
  %v993 = vmul.f32 %v549, %v969
  %v994 = vmul.f32 %v550, %v969
  %v995 = vmul.f32 %v551, %v969
  %v996 = vmul.f32 %v552, %v969
  %v997 = vmul.f32 %v553, %v969
  %v998 = vmul.f32 %v554, %v969
  %v999 = vmul.f32 %v555, %v969
  %v1000 = vmul.f32 %v556, %v969
  %v1001 = vmul.f32 %v557, %v969
  %v1002 = vmul.f32 %v558, %v969
  %v1003 = vmul.f32 %v559, %v969
  %v1004 = vmul.f32 %v560, %v969
  %v1005 = vmul.f32 %v561, %v970
  %v1006 = vmul.f32 %v562, %v970
  %v1007 = vmul.f32 %v563, %v970
  %v1008 = vmul.f32 %v564, %v970
  %v1009 = vmul.f32 %v565, %v970
  %v1010 = vmul.f32 %v566, %v970
  %v1011 = vmul.f32 %v567, %v970
  %v1012 = vmul.f32 %v568, %v970
  %v1013 = vmul.f32 %v569, %v970
  %v1014 = vmul.f32 %v570, %v970
  %v1015 = vmul.f32 %v571, %v970
  %v1016 = vmul.f32 %v572, %v970
  %v1017 = vmul.f32 %v573, %v970
  %v1018 = vmul.f32 %v574, %v970
  %v1019 = vmul.f32 %v575, %v970
  %v1020 = vmul.f32 %v576, %v970
  %v1021 = vmul.f32 %v577, %v970
  %v1022 = vmul.f32 %v578, %v970
  %v1023 = vmul.f32 %v579, %v970
  %v1024 = vmul.f32 %v580, %v970
  %v1025 = vmul.f32 %v581, %v970
  %v1026 = vmul.f32 %v582, %v970
  %v1027 = vmul.f32 %v583, %v970
  %v1028 = vmul.f32 %v584, %v970
  %v1029 = vmul.f32 %v585, %v970
  %v1030 = vmul.f32 %v586, %v970
  %v1031 = vmul.f32 %v587, %v970
  %v1032 = vmul.f32 %v588, %v970
  %v1033 = vmul.f32 %v589, %v970
  %v1034 = vmul.f32 %v590, %v970
  %v1035 = vmul.f32 %v591, %v970
  %v1036 = vmul.f32 %v592, %v970
  %v1037 = vsel %vm87, %v973, 0.0
  %1038 = vadd.xlane.f32.xlu0 %v1037
  %v1039 = vpop.xlane.xlu0 %1038
  %v1040 = vsel %vm87, %v974, 0.0
  %1041 = vadd.xlane.f32.xlu0 %v1040
  %v1042 = vpop.xlane.xlu0 %1041
  %v1043 = vsel %vm87, %v975, 0.0
  %1044 = vadd.xlane.f32.xlu0 %v1043
  %v1045 = vpop.xlane.xlu0 %1044
  %v1046 = vsel %vm87, %v976, 0.0
  %1047 = vadd.xlane.f32.xlu0 %v1046
  %v1048 = vpop.xlane.xlu0 %1047
  %v1049 = vsel %vm87, %v977, 0.0
  %1050 = vadd.xlane.f32.xlu0 %v1049
  %v1051 = vpop.xlane.xlu0 %1050
  %v1052 = vsel %vm87, %v978, 0.0
  %1053 = vadd.xlane.f32.xlu0 %v1052
  %v1054 = vpop.xlane.xlu0 %1053
  %v1055 = vsel %vm87, %v979, 0.0
  %1056 = vadd.xlane.f32.xlu0 %v1055
  %v1057 = vpop.xlane.xlu0 %1056
  %v1058 = vsel %vm87, %v980, 0.0
  %1059 = vadd.xlane.f32.xlu0 %v1058
  %v1060 = vpop.xlane.xlu0 %1059
  %v1061 = vsel %vm87, %v981, 0.0
  %1062 = vadd.xlane.f32.xlu0 %v1061
  %v1063 = vpop.xlane.xlu0 %1062
  %v1064 = vsel %vm87, %v982, 0.0
  %1065 = vadd.xlane.f32.xlu0 %v1064
  %v1066 = vpop.xlane.xlu0 %1065
  %v1067 = vsel %vm87, %v983, 0.0
  %1068 = vadd.xlane.f32.xlu0 %v1067
  %v1069 = vpop.xlane.xlu0 %1068
  %v1070 = vsel %vm87, %v984, 0.0
  %1071 = vadd.xlane.f32.xlu0 %v1070
  %v1072 = vpop.xlane.xlu0 %1071
  %v1073 = vsel %vm87, %v985, 0.0
  %1074 = vadd.xlane.f32.xlu0 %v1073
  %v1075 = vpop.xlane.xlu0 %1074
  %v1076 = vsel %vm87, %v986, 0.0
  %1077 = vadd.xlane.f32.xlu0 %v1076
  %v1078 = vpop.xlane.xlu0 %1077
  %v1079 = vsel %vm87, %v987, 0.0
  %1080 = vadd.xlane.f32.xlu0 %v1079
  %v1081 = vpop.xlane.xlu0 %1080
  %v1082 = vsel %vm87, %v988, 0.0
  %1083 = vadd.xlane.f32.xlu0 %v1082
  %v1084 = vpop.xlane.xlu0 %1083
  %v1085 = vsel %vm87, %v989, 0.0
  %1086 = vadd.xlane.f32.xlu0 %v1085
  %v1087 = vpop.xlane.xlu0 %1086
  %v1088 = vsel %vm87, %v990, 0.0
  %1089 = vadd.xlane.f32.xlu0 %v1088
  %v1090 = vpop.xlane.xlu0 %1089
  %v1091 = vsel %vm87, %v991, 0.0
  %1092 = vadd.xlane.f32.xlu0 %v1091
  %v1093 = vpop.xlane.xlu0 %1092
  %v1094 = vsel %vm87, %v992, 0.0
  %1095 = vadd.xlane.f32.xlu0 %v1094
  %v1096 = vpop.xlane.xlu0 %1095
  %v1097 = vsel %vm87, %v993, 0.0
  %1098 = vadd.xlane.f32.xlu0 %v1097
  %v1099 = vpop.xlane.xlu0 %1098
  %v1100 = vsel %vm87, %v994, 0.0
  %1101 = vadd.xlane.f32.xlu0 %v1100
  %v1102 = vpop.xlane.xlu0 %1101
  %v1103 = vsel %vm87, %v995, 0.0
  %1104 = vadd.xlane.f32.xlu0 %v1103
  %v1105 = vpop.xlane.xlu0 %1104
  %v1106 = vsel %vm87, %v996, 0.0
  %1107 = vadd.xlane.f32.xlu0 %v1106
  %v1108 = vpop.xlane.xlu0 %1107
  %v1109 = vsel %vm87, %v997, 0.0
  %1110 = vadd.xlane.f32.xlu0 %v1109
  %v1111 = vpop.xlane.xlu0 %1110
  %v1112 = vsel %vm87, %v998, 0.0
  %1113 = vadd.xlane.f32.xlu0 %v1112
  %v1114 = vpop.xlane.xlu0 %1113
  %v1115 = vsel %vm87, %v999, 0.0
  %1116 = vadd.xlane.f32.xlu0 %v1115
  %v1117 = vpop.xlane.xlu0 %1116
  %v1118 = vsel %vm87, %v1000, 0.0
  %1119 = vadd.xlane.f32.xlu0 %v1118
  %v1120 = vpop.xlane.xlu0 %1119
  %v1121 = vsel %vm87, %v1001, 0.0
  %1122 = vadd.xlane.f32.xlu0 %v1121
  %v1123 = vpop.xlane.xlu0 %1122
  %v1124 = vsel %vm87, %v1002, 0.0
  %1125 = vadd.xlane.f32.xlu0 %v1124
  %v1126 = vpop.xlane.xlu0 %1125
  %v1127 = vsel %vm87, %v1003, 0.0
  %1128 = vadd.xlane.f32.xlu0 %v1127
  %v1129 = vpop.xlane.xlu0 %1128
  %v1130 = vsel %vm87, %v1004, 0.0
  %1131 = vadd.xlane.f32.xlu0 %v1130
  %v1132 = vpop.xlane.xlu0 %1131
  %v1133 = vsel %vm87, %v1005, 0.0
  %1134 = vadd.xlane.f32.xlu0 %v1133
  %v1135 = vpop.xlane.xlu0 %1134
  %v1136 = vsel %vm87, %v1006, 0.0
  %1137 = vadd.xlane.f32.xlu0 %v1136
  %v1138 = vpop.xlane.xlu0 %1137
  %v1139 = vsel %vm87, %v1007, 0.0
  %1140 = vadd.xlane.f32.xlu0 %v1139
  %v1141 = vpop.xlane.xlu0 %1140
  %v1142 = vsel %vm87, %v1008, 0.0
  %1143 = vadd.xlane.f32.xlu0 %v1142
  %v1144 = vpop.xlane.xlu0 %1143
  %v1145 = vsel %vm87, %v1009, 0.0
  %1146 = vadd.xlane.f32.xlu0 %v1145
  %v1147 = vpop.xlane.xlu0 %1146
  %v1148 = vsel %vm87, %v1010, 0.0
  %1149 = vadd.xlane.f32.xlu0 %v1148
  %v1150 = vpop.xlane.xlu0 %1149
  %v1151 = vsel %vm87, %v1011, 0.0
  %1152 = vadd.xlane.f32.xlu0 %v1151
  %v1153 = vpop.xlane.xlu0 %1152
  %v1154 = vsel %vm87, %v1012, 0.0
  %1155 = vadd.xlane.f32.xlu0 %v1154
  %v1156 = vpop.xlane.xlu0 %1155
  %v1157 = vsel %vm87, %v1013, 0.0
  %1158 = vadd.xlane.f32.xlu0 %v1157
  %v1159 = vpop.xlane.xlu0 %1158
  %v1160 = vsel %vm87, %v1014, 0.0
  %1161 = vadd.xlane.f32.xlu0 %v1160
  %v1162 = vpop.xlane.xlu0 %1161
  %v1163 = vsel %vm87, %v1015, 0.0
  %1164 = vadd.xlane.f32.xlu0 %v1163
  %v1165 = vpop.xlane.xlu0 %1164
  %v1166 = vsel %vm87, %v1016, 0.0
  %1167 = vadd.xlane.f32.xlu0 %v1166
  %v1168 = vpop.xlane.xlu0 %1167
  %v1169 = vsel %vm87, %v1017, 0.0
  %1170 = vadd.xlane.f32.xlu0 %v1169
  %v1171 = vpop.xlane.xlu0 %1170
  %v1172 = vsel %vm87, %v1018, 0.0
  %1173 = vadd.xlane.f32.xlu0 %v1172
  %v1174 = vpop.xlane.xlu0 %1173
  %v1175 = vsel %vm87, %v1019, 0.0
  %1176 = vadd.xlane.f32.xlu0 %v1175
  %v1177 = vpop.xlane.xlu0 %1176
  %v1178 = vsel %vm87, %v1020, 0.0
  %1179 = vadd.xlane.f32.xlu0 %v1178
  %v1180 = vpop.xlane.xlu0 %1179
  %v1181 = vsel %vm87, %v1021, 0.0
  %1182 = vadd.xlane.f32.xlu0 %v1181
  %v1183 = vpop.xlane.xlu0 %1182
  %v1184 = vsel %vm87, %v1022, 0.0
  %1185 = vadd.xlane.f32.xlu0 %v1184
  %v1186 = vpop.xlane.xlu0 %1185
  %v1187 = vsel %vm87, %v1023, 0.0
  %1188 = vadd.xlane.f32.xlu0 %v1187
  %v1189 = vpop.xlane.xlu0 %1188
  %v1190 = vsel %vm87, %v1024, 0.0
  %1191 = vadd.xlane.f32.xlu0 %v1190
  %v1192 = vpop.xlane.xlu0 %1191
  %v1193 = vsel %vm87, %v1025, 0.0
  %1194 = vadd.xlane.f32.xlu0 %v1193
  %v1195 = vpop.xlane.xlu0 %1194
  %v1196 = vsel %vm87, %v1026, 0.0
  %1197 = vadd.xlane.f32.xlu0 %v1196
  %v1198 = vpop.xlane.xlu0 %1197
  %v1199 = vsel %vm87, %v1027, 0.0
  %1200 = vadd.xlane.f32.xlu0 %v1199
  %v1201 = vpop.xlane.xlu0 %1200
  %v1202 = vsel %vm87, %v1028, 0.0
  %1203 = vadd.xlane.f32.xlu0 %v1202
  %v1204 = vpop.xlane.xlu0 %1203
  %v1205 = vsel %vm87, %v1029, 0.0
  %1206 = vadd.xlane.f32.xlu0 %v1205
  %v1207 = vpop.xlane.xlu0 %1206
  %v1208 = vsel %vm87, %v1030, 0.0
  %1209 = vadd.xlane.f32.xlu0 %v1208
  %v1210 = vpop.xlane.xlu0 %1209
  %v1211 = vsel %vm87, %v1031, 0.0
  %1212 = vadd.xlane.f32.xlu0 %v1211
  %v1213 = vpop.xlane.xlu0 %1212
  %v1214 = vsel %vm87, %v1032, 0.0
  %1215 = vadd.xlane.f32.xlu0 %v1214
  %v1216 = vpop.xlane.xlu0 %1215
  %v1217 = vsel %vm87, %v1033, 0.0
  %1218 = vadd.xlane.f32.xlu0 %v1217
  %v1219 = vpop.xlane.xlu0 %1218
  %v1220 = vsel %vm87, %v1034, 0.0
  %1221 = vadd.xlane.f32.xlu0 %v1220
  %v1222 = vpop.xlane.xlu0 %1221
  %v1223 = vsel %vm87, %v1035, 0.0
  %1224 = vadd.xlane.f32.xlu0 %v1223
  %v1225 = vpop.xlane.xlu0 %1224
  %v1226 = vsel %vm87, %v1036, 0.0
  %1227 = vadd.xlane.f32.xlu0 %v1226
  %v1228 = vpop.xlane.xlu0 %1227
  %v1229 = vrcp.pop 8.0
  %v1230 = vmul.f32 8.0, %v1229
  %v1231 = vsub.f32 1.0, %v1230
  %v1232 = vmul.f32 %v1229, %v1231
  %v1233 = vadd.f32 %v1229, %v1232
  %vm1234 = vweird.f32 %v1229
  %v1235 = vsel %vm1234, %v1229, %v1233
  %v1236 = vmul.f32 %v1039, %v1235
  %v1237 = vmul.f32 %v1042, %v1235
  %v1238 = vmul.f32 %v1045, %v1235
  %v1239 = vmul.f32 %v1048, %v1235
  %v1240 = vmul.f32 %v1051, %v1235
  %v1241 = vmul.f32 %v1054, %v1235
  %v1242 = vmul.f32 %v1057, %v1235
  %v1243 = vmul.f32 %v1060, %v1235
  %v1244 = vmul.f32 %v1063, %v1235
  %v1245 = vmul.f32 %v1066, %v1235
  %v1246 = vmul.f32 %v1069, %v1235
  %v1247 = vmul.f32 %v1072, %v1235
  %v1248 = vmul.f32 %v1075, %v1235
  %v1249 = vmul.f32 %v1078, %v1235
  %v1250 = vmul.f32 %v1081, %v1235
  %v1251 = vmul.f32 %v1084, %v1235
  %v1252 = vmul.f32 %v1087, %v1235
  %v1253 = vmul.f32 %v1090, %v1235
  %v1254 = vmul.f32 %v1093, %v1235
  %v1255 = vmul.f32 %v1096, %v1235
  %v1256 = vmul.f32 %v1099, %v1235
  %v1257 = vmul.f32 %v1102, %v1235
  %v1258 = vmul.f32 %v1105, %v1235
  %v1259 = vmul.f32 %v1108, %v1235
  %v1260 = vmul.f32 %v1111, %v1235
  %v1261 = vmul.f32 %v1114, %v1235
  %v1262 = vmul.f32 %v1117, %v1235
  %v1263 = vmul.f32 %v1120, %v1235
  %v1264 = vmul.f32 %v1123, %v1235
  %v1265 = vmul.f32 %v1126, %v1235
  %v1266 = vmul.f32 %v1129, %v1235
  %v1267 = vmul.f32 %v1132, %v1235
  %v1268 = vmul.f32 %v1135, %v1235
  %v1269 = vmul.f32 %v1138, %v1235
  %v1270 = vmul.f32 %v1141, %v1235
  %v1271 = vmul.f32 %v1144, %v1235
  %v1272 = vmul.f32 %v1147, %v1235
  %v1273 = vmul.f32 %v1150, %v1235
  %v1274 = vmul.f32 %v1153, %v1235
  %v1275 = vmul.f32 %v1156, %v1235
  %v1276 = vmul.f32 %v1159, %v1235
  %v1277 = vmul.f32 %v1162, %v1235
  %v1278 = vmul.f32 %v1165, %v1235
  %v1279 = vmul.f32 %v1168, %v1235
  %v1280 = vmul.f32 %v1171, %v1235
  %v1281 = vmul.f32 %v1174, %v1235
  %v1282 = vmul.f32 %v1177, %v1235
  %v1283 = vmul.f32 %v1180, %v1235
  %v1284 = vmul.f32 %v1183, %v1235
  %v1285 = vmul.f32 %v1186, %v1235
  %v1286 = vmul.f32 %v1189, %v1235
  %v1287 = vmul.f32 %v1192, %v1235
  %v1288 = vmul.f32 %v1195, %v1235
  %v1289 = vmul.f32 %v1198, %v1235
  %v1290 = vmul.f32 %v1201, %v1235
  %v1291 = vmul.f32 %v1204, %v1235
  %v1292 = vmul.f32 %v1207, %v1235
  %v1293 = vmul.f32 %v1210, %v1235
  %v1294 = vmul.f32 %v1213, %v1235
  %v1295 = vmul.f32 %v1216, %v1235
  %v1296 = vmul.f32 %v1219, %v1235
  %v1297 = vmul.f32 %v1222, %v1235
  %v1298 = vmul.f32 %v1225, %v1235
  %v1299 = vmul.f32 %v1228, %v1235
  %v1300 = vsel %vm87, %v973, -inf
  %1301 = vmax.xlane.f32.xlu0 %v1300
  %v1302 = vpop.xlane.xlu0 %1301
  %v1303 = vsel %vm87, %v974, -inf
  %1304 = vmax.xlane.f32.xlu0 %v1303
  %v1305 = vpop.xlane.xlu0 %1304
  %v1306 = vsel %vm87, %v975, -inf
  %1307 = vmax.xlane.f32.xlu0 %v1306
  %v1308 = vpop.xlane.xlu0 %1307
  %v1309 = vsel %vm87, %v976, -inf
  %1310 = vmax.xlane.f32.xlu0 %v1309
  %v1311 = vpop.xlane.xlu0 %1310
  %v1312 = vsel %vm87, %v977, -inf
  %1313 = vmax.xlane.f32.xlu0 %v1312
  %v1314 = vpop.xlane.xlu0 %1313
  %v1315 = vsel %vm87, %v978, -inf
  %1316 = vmax.xlane.f32.xlu0 %v1315
  %v1317 = vpop.xlane.xlu0 %1316
  %v1318 = vsel %vm87, %v979, -inf
  %1319 = vmax.xlane.f32.xlu0 %v1318
  %v1320 = vpop.xlane.xlu0 %1319
  %v1321 = vsel %vm87, %v980, -inf
  %1322 = vmax.xlane.f32.xlu0 %v1321
  %v1323 = vpop.xlane.xlu0 %1322
  %v1324 = vsel %vm87, %v981, -inf
  %1325 = vmax.xlane.f32.xlu0 %v1324
  %v1326 = vpop.xlane.xlu0 %1325
  %v1327 = vsel %vm87, %v982, -inf
  %1328 = vmax.xlane.f32.xlu0 %v1327
  %v1329 = vpop.xlane.xlu0 %1328
  %v1330 = vsel %vm87, %v983, -inf
  %1331 = vmax.xlane.f32.xlu0 %v1330
  %v1332 = vpop.xlane.xlu0 %1331
  %v1333 = vsel %vm87, %v984, -inf
  %1334 = vmax.xlane.f32.xlu0 %v1333
  %v1335 = vpop.xlane.xlu0 %1334
  %v1336 = vsel %vm87, %v985, -inf
  %1337 = vmax.xlane.f32.xlu0 %v1336
  %v1338 = vpop.xlane.xlu0 %1337
  %v1339 = vsel %vm87, %v986, -inf
  %1340 = vmax.xlane.f32.xlu0 %v1339
  %v1341 = vpop.xlane.xlu0 %1340
  %v1342 = vsel %vm87, %v987, -inf
  %1343 = vmax.xlane.f32.xlu0 %v1342
  %v1344 = vpop.xlane.xlu0 %1343
  %v1345 = vsel %vm87, %v988, -inf
  %1346 = vmax.xlane.f32.xlu0 %v1345
  %v1347 = vpop.xlane.xlu0 %1346
  %v1348 = vsel %vm87, %v989, -inf
  %1349 = vmax.xlane.f32.xlu0 %v1348
  %v1350 = vpop.xlane.xlu0 %1349
  %v1351 = vsel %vm87, %v990, -inf
  %1352 = vmax.xlane.f32.xlu0 %v1351
  %v1353 = vpop.xlane.xlu0 %1352
  %v1354 = vsel %vm87, %v991, -inf
  %1355 = vmax.xlane.f32.xlu0 %v1354
  %v1356 = vpop.xlane.xlu0 %1355
  %v1357 = vsel %vm87, %v992, -inf
  %1358 = vmax.xlane.f32.xlu0 %v1357
  %v1359 = vpop.xlane.xlu0 %1358
  %v1360 = vsel %vm87, %v993, -inf
  %1361 = vmax.xlane.f32.xlu0 %v1360
  %v1362 = vpop.xlane.xlu0 %1361
  %v1363 = vsel %vm87, %v994, -inf
  %1364 = vmax.xlane.f32.xlu0 %v1363
  %v1365 = vpop.xlane.xlu0 %1364
  %v1366 = vsel %vm87, %v995, -inf
  %1367 = vmax.xlane.f32.xlu0 %v1366
  %v1368 = vpop.xlane.xlu0 %1367
  %v1369 = vsel %vm87, %v996, -inf
  %1370 = vmax.xlane.f32.xlu0 %v1369
  %v1371 = vpop.xlane.xlu0 %1370
  %v1372 = vsel %vm87, %v997, -inf
  %1373 = vmax.xlane.f32.xlu0 %v1372
  %v1374 = vpop.xlane.xlu0 %1373
  %v1375 = vsel %vm87, %v998, -inf
  %1376 = vmax.xlane.f32.xlu0 %v1375
  %v1377 = vpop.xlane.xlu0 %1376
  %v1378 = vsel %vm87, %v999, -inf
  %1379 = vmax.xlane.f32.xlu0 %v1378
  %v1380 = vpop.xlane.xlu0 %1379
  %v1381 = vsel %vm87, %v1000, -inf
  %1382 = vmax.xlane.f32.xlu0 %v1381
  %v1383 = vpop.xlane.xlu0 %1382
  %v1384 = vsel %vm87, %v1001, -inf
  %1385 = vmax.xlane.f32.xlu0 %v1384
  %v1386 = vpop.xlane.xlu0 %1385
  %v1387 = vsel %vm87, %v1002, -inf
  %1388 = vmax.xlane.f32.xlu0 %v1387
  %v1389 = vpop.xlane.xlu0 %1388
  %v1390 = vsel %vm87, %v1003, -inf
  %1391 = vmax.xlane.f32.xlu0 %v1390
  %v1392 = vpop.xlane.xlu0 %1391
  %v1393 = vsel %vm87, %v1004, -inf
  %1394 = vmax.xlane.f32.xlu0 %v1393
  %v1395 = vpop.xlane.xlu0 %1394
  %v1396 = vsel %vm87, %v1005, -inf
  %1397 = vmax.xlane.f32.xlu0 %v1396
  %v1398 = vpop.xlane.xlu0 %1397
  %v1399 = vsel %vm87, %v1006, -inf
  %1400 = vmax.xlane.f32.xlu0 %v1399
  %v1401 = vpop.xlane.xlu0 %1400
  %v1402 = vsel %vm87, %v1007, -inf
  %1403 = vmax.xlane.f32.xlu0 %v1402
  %v1404 = vpop.xlane.xlu0 %1403
  %v1405 = vsel %vm87, %v1008, -inf
  %1406 = vmax.xlane.f32.xlu0 %v1405
  %v1407 = vpop.xlane.xlu0 %1406
  %v1408 = vsel %vm87, %v1009, -inf
  %1409 = vmax.xlane.f32.xlu0 %v1408
  %v1410 = vpop.xlane.xlu0 %1409
  %v1411 = vsel %vm87, %v1010, -inf
  %1412 = vmax.xlane.f32.xlu0 %v1411
  %v1413 = vpop.xlane.xlu0 %1412
  %v1414 = vsel %vm87, %v1011, -inf
  %1415 = vmax.xlane.f32.xlu0 %v1414
  %v1416 = vpop.xlane.xlu0 %1415
  %v1417 = vsel %vm87, %v1012, -inf
  %1418 = vmax.xlane.f32.xlu0 %v1417
  %v1419 = vpop.xlane.xlu0 %1418
  %v1420 = vsel %vm87, %v1013, -inf
  %1421 = vmax.xlane.f32.xlu0 %v1420
  %v1422 = vpop.xlane.xlu0 %1421
  %v1423 = vsel %vm87, %v1014, -inf
  %1424 = vmax.xlane.f32.xlu0 %v1423
  %v1425 = vpop.xlane.xlu0 %1424
  %v1426 = vsel %vm87, %v1015, -inf
  %1427 = vmax.xlane.f32.xlu0 %v1426
  %v1428 = vpop.xlane.xlu0 %1427
  %v1429 = vsel %vm87, %v1016, -inf
  %1430 = vmax.xlane.f32.xlu0 %v1429
  %v1431 = vpop.xlane.xlu0 %1430
  %v1432 = vsel %vm87, %v1017, -inf
  %1433 = vmax.xlane.f32.xlu0 %v1432
  %v1434 = vpop.xlane.xlu0 %1433
  %v1435 = vsel %vm87, %v1018, -inf
  %1436 = vmax.xlane.f32.xlu0 %v1435
  %v1437 = vpop.xlane.xlu0 %1436
  %v1438 = vsel %vm87, %v1019, -inf
  %1439 = vmax.xlane.f32.xlu0 %v1438
  %v1440 = vpop.xlane.xlu0 %1439
  %v1441 = vsel %vm87, %v1020, -inf
  %1442 = vmax.xlane.f32.xlu0 %v1441
  %v1443 = vpop.xlane.xlu0 %1442
  %v1444 = vsel %vm87, %v1021, -inf
  %1445 = vmax.xlane.f32.xlu0 %v1444
  %v1446 = vpop.xlane.xlu0 %1445
  %v1447 = vsel %vm87, %v1022, -inf
  %1448 = vmax.xlane.f32.xlu0 %v1447
  %v1449 = vpop.xlane.xlu0 %1448
  %v1450 = vsel %vm87, %v1023, -inf
  %1451 = vmax.xlane.f32.xlu0 %v1450
  %v1452 = vpop.xlane.xlu0 %1451
  %v1453 = vsel %vm87, %v1024, -inf
  %1454 = vmax.xlane.f32.xlu0 %v1453
  %v1455 = vpop.xlane.xlu0 %1454
  %v1456 = vsel %vm87, %v1025, -inf
  %1457 = vmax.xlane.f32.xlu0 %v1456
  %v1458 = vpop.xlane.xlu0 %1457
  %v1459 = vsel %vm87, %v1026, -inf
  %1460 = vmax.xlane.f32.xlu0 %v1459
  %v1461 = vpop.xlane.xlu0 %1460
  %v1462 = vsel %vm87, %v1027, -inf
  %1463 = vmax.xlane.f32.xlu0 %v1462
  %v1464 = vpop.xlane.xlu0 %1463
  %v1465 = vsel %vm87, %v1028, -inf
  %1466 = vmax.xlane.f32.xlu0 %v1465
  %v1467 = vpop.xlane.xlu0 %1466
  %v1468 = vsel %vm87, %v1029, -inf
  %1469 = vmax.xlane.f32.xlu0 %v1468
  %v1470 = vpop.xlane.xlu0 %1469
  %v1471 = vsel %vm87, %v1030, -inf
  %1472 = vmax.xlane.f32.xlu0 %v1471
  %v1473 = vpop.xlane.xlu0 %1472
  %v1474 = vsel %vm87, %v1031, -inf
  %1475 = vmax.xlane.f32.xlu0 %v1474
  %v1476 = vpop.xlane.xlu0 %1475
  %v1477 = vsel %vm87, %v1032, -inf
  %1478 = vmax.xlane.f32.xlu0 %v1477
  %v1479 = vpop.xlane.xlu0 %1478
  %v1480 = vsel %vm87, %v1033, -inf
  %1481 = vmax.xlane.f32.xlu0 %v1480
  %v1482 = vpop.xlane.xlu0 %1481
  %v1483 = vsel %vm87, %v1034, -inf
  %1484 = vmax.xlane.f32.xlu0 %v1483
  %v1485 = vpop.xlane.xlu0 %1484
  %v1486 = vsel %vm87, %v1035, -inf
  %1487 = vmax.xlane.f32.xlu0 %v1486
  %v1488 = vpop.xlane.xlu0 %1487
  %v1489 = vsel %vm87, %v1036, -inf
  %1490 = vmax.xlane.f32.xlu0 %v1489
  %v1491 = vpop.xlane.xlu0 %1490
  %v1556 = vlaneseq
  %v1557 = vand.u32 %v1556, 127
  %v1558 = vperm.slane %v1236, %v1557
  %v1559 = vadd.s32 %v1557, 4294967288
  %v1560 = vperm.slane %v1237, %v1559
  %vm1561 = vcmask 130112
  %v1562 = vsel %vm1561, %v1560, %v1558
  %v1563 = vadd.s32 %v1557, 4294967280
  %v1564 = vperm.slane %v1238, %v1563
  %vm1565 = vcmask 195712
  %v1566 = vsel %vm1565, %v1564, %v1562
  %v1567 = vadd.s32 %v1557, 4294967272
  %v1568 = vperm.slane %v1239, %v1567
  %vm1569 = vcmask 261312
  %v1570 = vsel %vm1569, %v1568, %v1566
  %v1571 = vadd.s32 %v1557, 4294967264
  %v1572 = vperm.slane %v1240, %v1571
  %vm1573 = vcmask 326912
  %v1574 = vsel %vm1573, %v1572, %v1570
  %v1575 = vadd.s32 %v1557, 4294967256
  %v1576 = vperm.slane %v1241, %v1575
  %vm1577 = vcmask 392512
  %v1578 = vsel %vm1577, %v1576, %v1574
  %v1579 = vadd.s32 %v1557, 4294967248
  %v1580 = vperm.slane %v1242, %v1579
  %vm1581 = vcmask 458112
  %v1582 = vsel %vm1581, %v1580, %v1578
  %v1583 = vadd.s32 %v1557, 4294967240
  %v1584 = vperm.slane %v1243, %v1583
  %vm1585 = vcmask 523712
  %v1586 = vsel %vm1585, %v1584, %v1582
  %v1587 = vadd.s32 %v1557, 4294967232
  %v1588 = vperm.slane %v1244, %v1587
  %vm1589 = vcmask 589312
  %v1590 = vsel %vm1589, %v1588, %v1586
  %v1591 = vadd.s32 %v1557, 4294967224
  %v1592 = vperm.slane %v1245, %v1591
  %vm1593 = vcmask 654912
  %v1594 = vsel %vm1593, %v1592, %v1590
  %v1595 = vadd.s32 %v1557, 4294967216
  %v1596 = vperm.slane %v1246, %v1595
  %vm1597 = vcmask 720512
  %v1598 = vsel %vm1597, %v1596, %v1594
  %v1599 = vadd.s32 %v1557, 4294967208
  %v1600 = vperm.slane %v1247, %v1599
  %vm1601 = vcmask 786112
  %v1602 = vsel %vm1601, %v1600, %v1598
  %v1603 = vadd.s32 %v1557, 4294967200
  %v1604 = vperm.slane %v1248, %v1603
  %vm1605 = vcmask 851712
  %v1606 = vsel %vm1605, %v1604, %v1602
  %v1607 = vadd.s32 %v1557, 4294967192
  %v1608 = vperm.slane %v1249, %v1607
  %vm1609 = vcmask 917312
  %v1610 = vsel %vm1609, %v1608, %v1606
  %v1611 = vadd.s32 %v1557, 4294967184
  %v1612 = vperm.slane %v1250, %v1611
  %vm1613 = vcmask 982912
  %v1614 = vsel %vm1613, %v1612, %v1610
  %v1615 = vadd.s32 %v1557, 4294967176
  %v1616 = vperm.slane %v1251, %v1615
  %vm1617 = vcmask 1048512
  %v1618 = vsel %vm1617, %v1616, %v1614
  %v1619 = vperm.slane %v1252, %v1557
  %v1620 = vperm.slane %v1253, %v1559
  %v1621 = vsel %vm1561, %v1620, %v1619
  %v1622 = vperm.slane %v1254, %v1563
  %v1623 = vsel %vm1565, %v1622, %v1621
  %v1624 = vperm.slane %v1255, %v1567
  %v1625 = vsel %vm1569, %v1624, %v1623
  %v1626 = vperm.slane %v1256, %v1571
  %v1627 = vsel %vm1573, %v1626, %v1625
  %v1628 = vperm.slane %v1257, %v1575
  %v1629 = vsel %vm1577, %v1628, %v1627
  %v1630 = vperm.slane %v1258, %v1579
  %v1631 = vsel %vm1581, %v1630, %v1629
  %v1632 = vperm.slane %v1259, %v1583
  %v1633 = vsel %vm1585, %v1632, %v1631
  %v1634 = vperm.slane %v1260, %v1587
  %v1635 = vsel %vm1589, %v1634, %v1633
  %v1636 = vperm.slane %v1261, %v1591
  %v1637 = vsel %vm1593, %v1636, %v1635
  %v1638 = vperm.slane %v1262, %v1595
  %v1639 = vsel %vm1597, %v1638, %v1637
  %v1640 = vperm.slane %v1263, %v1599
  %v1641 = vsel %vm1601, %v1640, %v1639
  %v1642 = vperm.slane %v1264, %v1603
  %v1643 = vsel %vm1605, %v1642, %v1641
  %v1644 = vperm.slane %v1265, %v1607
  %v1645 = vsel %vm1609, %v1644, %v1643
  %v1646 = vperm.slane %v1266, %v1611
  %v1647 = vsel %vm1613, %v1646, %v1645
  %v1648 = vperm.slane %v1267, %v1615
  %v1649 = vsel %vm1617, %v1648, %v1647
  %v1650 = vperm.slane %v1268, %v1557
  %v1651 = vperm.slane %v1269, %v1559
  %v1652 = vsel %vm1561, %v1651, %v1650
  %v1653 = vperm.slane %v1270, %v1563
  %v1654 = vsel %vm1565, %v1653, %v1652
  %v1655 = vperm.slane %v1271, %v1567
  %v1656 = vsel %vm1569, %v1655, %v1654
  %v1657 = vperm.slane %v1272, %v1571
  %v1658 = vsel %vm1573, %v1657, %v1656
  %v1659 = vperm.slane %v1273, %v1575
  %v1660 = vsel %vm1577, %v1659, %v1658
  %v1661 = vperm.slane %v1274, %v1579
  %v1662 = vsel %vm1581, %v1661, %v1660
  %v1663 = vperm.slane %v1275, %v1583
  %v1664 = vsel %vm1585, %v1663, %v1662
  %v1665 = vperm.slane %v1276, %v1587
  %v1666 = vsel %vm1589, %v1665, %v1664
  %v1667 = vperm.slane %v1277, %v1591
  %v1668 = vsel %vm1593, %v1667, %v1666
  %v1669 = vperm.slane %v1278, %v1595
  %v1670 = vsel %vm1597, %v1669, %v1668
  %v1671 = vperm.slane %v1279, %v1599
  %v1672 = vsel %vm1601, %v1671, %v1670
  %v1673 = vperm.slane %v1280, %v1603
  %v1674 = vsel %vm1605, %v1673, %v1672
  %v1675 = vperm.slane %v1281, %v1607
  %v1676 = vsel %vm1609, %v1675, %v1674
  %v1677 = vperm.slane %v1282, %v1611
  %v1678 = vsel %vm1613, %v1677, %v1676
  %v1679 = vperm.slane %v1283, %v1615
  %v1680 = vsel %vm1617, %v1679, %v1678
  %v1681 = vperm.slane %v1284, %v1557
  %v1682 = vperm.slane %v1285, %v1559
  %v1683 = vsel %vm1561, %v1682, %v1681
  %v1684 = vperm.slane %v1286, %v1563
  %v1685 = vsel %vm1565, %v1684, %v1683
  %v1686 = vperm.slane %v1287, %v1567
  %v1687 = vsel %vm1569, %v1686, %v1685
  %v1688 = vperm.slane %v1288, %v1571
  %v1689 = vsel %vm1573, %v1688, %v1687
  %v1690 = vperm.slane %v1289, %v1575
  %v1691 = vsel %vm1577, %v1690, %v1689
  %v1692 = vperm.slane %v1290, %v1579
  %v1693 = vsel %vm1581, %v1692, %v1691
  %v1694 = vperm.slane %v1291, %v1583
  %v1695 = vsel %vm1585, %v1694, %v1693
  %v1696 = vperm.slane %v1292, %v1587
  %v1697 = vsel %vm1589, %v1696, %v1695
  %v1698 = vperm.slane %v1293, %v1591
  %v1699 = vsel %vm1593, %v1698, %v1697
  %v1700 = vperm.slane %v1294, %v1595
  %v1701 = vsel %vm1597, %v1700, %v1699
  %v1702 = vperm.slane %v1295, %v1599
  %v1703 = vsel %vm1601, %v1702, %v1701
  %v1704 = vperm.slane %v1296, %v1603
  %v1705 = vsel %vm1605, %v1704, %v1703
  %v1706 = vperm.slane %v1297, %v1607
  %v1707 = vsel %vm1609, %v1706, %v1705
  %v1708 = vperm.slane %v1298, %v1611
  %v1709 = vsel %vm1613, %v1708, %v1707
  %v1710 = vperm.slane %v1299, %v1615
  %v1711 = vsel %vm1617, %v1710, %v1709
  %v1712 = vsel %vm873, %v1680, %v1618
  %v1713 = vsel %vm873, %v1711, %v1649
  %v1780 = vperm.slane %v1302, %v1557
  %v1781 = vperm.slane %v1305, %v1559
  %v1782 = vsel %vm1561, %v1781, %v1780
  %v1783 = vperm.slane %v1308, %v1563
  %v1784 = vsel %vm1565, %v1783, %v1782
  %v1785 = vperm.slane %v1311, %v1567
  %v1786 = vsel %vm1569, %v1785, %v1784
  %v1787 = vperm.slane %v1314, %v1571
  %v1788 = vsel %vm1573, %v1787, %v1786
  %v1789 = vperm.slane %v1317, %v1575
  %v1790 = vsel %vm1577, %v1789, %v1788
  %v1791 = vperm.slane %v1320, %v1579
  %v1792 = vsel %vm1581, %v1791, %v1790
  %v1793 = vperm.slane %v1323, %v1583
  %v1794 = vsel %vm1585, %v1793, %v1792
  %v1795 = vperm.slane %v1326, %v1587
  %v1796 = vsel %vm1589, %v1795, %v1794
  %v1797 = vperm.slane %v1329, %v1591
  %v1798 = vsel %vm1593, %v1797, %v1796
  %v1799 = vperm.slane %v1332, %v1595
  %v1800 = vsel %vm1597, %v1799, %v1798
  %v1801 = vperm.slane %v1335, %v1599
  %v1802 = vsel %vm1601, %v1801, %v1800
  %v1803 = vperm.slane %v1338, %v1603
  %v1804 = vsel %vm1605, %v1803, %v1802
  %v1805 = vperm.slane %v1341, %v1607
  %v1806 = vsel %vm1609, %v1805, %v1804
  %v1807 = vperm.slane %v1344, %v1611
  %v1808 = vsel %vm1613, %v1807, %v1806
  %v1809 = vperm.slane %v1347, %v1615
  %v1810 = vsel %vm1617, %v1809, %v1808
  %v1811 = vperm.slane %v1350, %v1557
  %v1812 = vperm.slane %v1353, %v1559
  %v1813 = vsel %vm1561, %v1812, %v1811
  %v1814 = vperm.slane %v1356, %v1563
  %v1815 = vsel %vm1565, %v1814, %v1813
  %v1816 = vperm.slane %v1359, %v1567
  %v1817 = vsel %vm1569, %v1816, %v1815
  %v1818 = vperm.slane %v1362, %v1571
  %v1819 = vsel %vm1573, %v1818, %v1817
  %v1820 = vperm.slane %v1365, %v1575
  %v1821 = vsel %vm1577, %v1820, %v1819
  %v1822 = vperm.slane %v1368, %v1579
  %v1823 = vsel %vm1581, %v1822, %v1821
  %v1824 = vperm.slane %v1371, %v1583
  %v1825 = vsel %vm1585, %v1824, %v1823
  %v1826 = vperm.slane %v1374, %v1587
  %v1827 = vsel %vm1589, %v1826, %v1825
  %v1828 = vperm.slane %v1377, %v1591
  %v1829 = vsel %vm1593, %v1828, %v1827
  %v1830 = vperm.slane %v1380, %v1595
  %v1831 = vsel %vm1597, %v1830, %v1829
  %v1832 = vperm.slane %v1383, %v1599
  %v1833 = vsel %vm1601, %v1832, %v1831
  %v1834 = vperm.slane %v1386, %v1603
  %v1835 = vsel %vm1605, %v1834, %v1833
  %v1836 = vperm.slane %v1389, %v1607
  %v1837 = vsel %vm1609, %v1836, %v1835
  %v1838 = vperm.slane %v1392, %v1611
  %v1839 = vsel %vm1613, %v1838, %v1837
  %v1840 = vperm.slane %v1395, %v1615
  %v1841 = vsel %vm1617, %v1840, %v1839
  %v1842 = vperm.slane %v1398, %v1557
  %v1843 = vperm.slane %v1401, %v1559
  %v1844 = vsel %vm1561, %v1843, %v1842
  %v1845 = vperm.slane %v1404, %v1563
  %v1846 = vsel %vm1565, %v1845, %v1844
  %v1847 = vperm.slane %v1407, %v1567
  %v1848 = vsel %vm1569, %v1847, %v1846
  %v1849 = vperm.slane %v1410, %v1571
  %v1850 = vsel %vm1573, %v1849, %v1848
  %v1851 = vperm.slane %v1413, %v1575
  %v1852 = vsel %vm1577, %v1851, %v1850
  %v1853 = vperm.slane %v1416, %v1579
  %v1854 = vsel %vm1581, %v1853, %v1852
  %v1855 = vperm.slane %v1419, %v1583
  %v1856 = vsel %vm1585, %v1855, %v1854
  %v1857 = vperm.slane %v1422, %v1587
  %v1858 = vsel %vm1589, %v1857, %v1856
  %v1859 = vperm.slane %v1425, %v1591
  %v1860 = vsel %vm1593, %v1859, %v1858
  %v1861 = vperm.slane %v1428, %v1595
  %v1862 = vsel %vm1597, %v1861, %v1860
  %v1863 = vperm.slane %v1431, %v1599
  %v1864 = vsel %vm1601, %v1863, %v1862
  %v1865 = vperm.slane %v1434, %v1603
  %v1866 = vsel %vm1605, %v1865, %v1864
  %v1867 = vperm.slane %v1437, %v1607
  %v1868 = vsel %vm1609, %v1867, %v1866
  %v1869 = vperm.slane %v1440, %v1611
  %v1870 = vsel %vm1613, %v1869, %v1868
  %v1871 = vperm.slane %v1443, %v1615
  %v1872 = vsel %vm1617, %v1871, %v1870
  %v1873 = vperm.slane %v1446, %v1557
  %v1874 = vperm.slane %v1449, %v1559
  %v1875 = vsel %vm1561, %v1874, %v1873
  %v1876 = vperm.slane %v1452, %v1563
  %v1877 = vsel %vm1565, %v1876, %v1875
  %v1878 = vperm.slane %v1455, %v1567
  %v1879 = vsel %vm1569, %v1878, %v1877
  %v1880 = vperm.slane %v1458, %v1571
  %v1881 = vsel %vm1573, %v1880, %v1879
  %v1882 = vperm.slane %v1461, %v1575
  %v1883 = vsel %vm1577, %v1882, %v1881
  %v1884 = vperm.slane %v1464, %v1579
  %v1885 = vsel %vm1581, %v1884, %v1883
  %v1886 = vperm.slane %v1467, %v1583
  %v1887 = vsel %vm1585, %v1886, %v1885
  %v1888 = vperm.slane %v1470, %v1587
  %v1889 = vsel %vm1589, %v1888, %v1887
  %v1890 = vperm.slane %v1473, %v1591
  %v1891 = vsel %vm1593, %v1890, %v1889
  %v1892 = vperm.slane %v1476, %v1595
  %v1893 = vsel %vm1597, %v1892, %v1891
  %v1894 = vperm.slane %v1479, %v1599
  %v1895 = vsel %vm1601, %v1894, %v1893
  %v1896 = vperm.slane %v1482, %v1603
  %v1897 = vsel %vm1605, %v1896, %v1895
  %v1898 = vperm.slane %v1485, %v1607
  %v1899 = vsel %vm1609, %v1898, %v1897
  %v1900 = vperm.slane %v1488, %v1611
  %v1901 = vsel %vm1613, %v1900, %v1899
  %v1902 = vperm.slane %v1491, %v1615
  %v1903 = vsel %vm1617, %v1902, %v1901
  %v1904 = vsel %vm873, %v1872, %v1810
  %v1905 = vsel %vm873, %v1903, %v1841
  %v1908 = vpack.c.bf16 %v1712, %v1712
  %v1909 = vpack.c.bf16 %v1713, %v1713
  %v1910 = vpack.c.bf16 %v1904, %v1904
  %v1911 = vpack.c.bf16 %v1905, %v1905
  %v1912 = vld [vmem:[%s5] sm:$0xff]
  %v1913 = vld [vmem:[%s5 + $0x8] sm:$0xff]
  %v1914 = vld [vmem:[%s5 + $0x10] sm:$0xff]
  %v1915 = vld [vmem:[%s5 + $0x18] sm:$0xff]
  %v1916 = vld [vmem:[%s5 + $0x20] sm:$0xff]
  %v1917 = vld [vmem:[%s5 + $0x28] sm:$0xff]
  %v1918 = vld [vmem:[%s5 + $0x30] sm:$0xff]
  %v1919 = vld [vmem:[%s5 + $0x38] sm:$0xff]
  %v1920 = vld [vmem:[%s5 + $0x40] sm:$0xff]
  %v1921 = vld [vmem:[%s5 + $0x48] sm:$0xff]
  %v1922 = vld [vmem:[%s5 + $0x50] sm:$0xff]
  %v1923 = vld [vmem:[%s5 + $0x58] sm:$0xff]
  %v1924 = vld [vmem:[%s5 + $0x60] sm:$0xff]
  %v1925 = vld [vmem:[%s5 + $0x68] sm:$0xff]
  %v1926 = vld [vmem:[%s5 + $0x70] sm:$0xff]
  %v1927 = vld [vmem:[%s5 + $0x78] sm:$0xff]
  %v1928 = vld [vmem:[%s5 + $0x80] sm:$0xff]
  %v1929 = vld [vmem:[%s5 + $0x88] sm:$0xff]
  %v1930 = vld [vmem:[%s5 + $0x90] sm:$0xff]
  %v1931 = vld [vmem:[%s5 + $0x98] sm:$0xff]
  %v1932 = vld [vmem:[%s5 + $0xa0] sm:$0xff]
  %v1933 = vld [vmem:[%s5 + $0xa8] sm:$0xff]
  %v1934 = vld [vmem:[%s5 + $0xb0] sm:$0xff]
  %v1935 = vld [vmem:[%s5 + $0xb8] sm:$0xff]
  %v1936 = vld [vmem:[%s5 + $0xc0] sm:$0xff]
  %v1937 = vld [vmem:[%s5 + $0xc8] sm:$0xff]
  %v1938 = vld [vmem:[%s5 + $0xd0] sm:$0xff]
  %v1939 = vld [vmem:[%s5 + $0xd8] sm:$0xff]
  %v1940 = vld [vmem:[%s5 + $0xe0] sm:$0xff]
  %v1941 = vld [vmem:[%s5 + $0xe8] sm:$0xff]
  %v1942 = vld [vmem:[%s5 + $0xf0] sm:$0xff]
  %v1943 = vld [vmem:[%s5 + $0xf8] sm:$0xff]
  %v1944 = vld [vmem:[%s5 + $0x100] sm:$0xff]
  %v1945 = vld [vmem:[%s5 + $0x108] sm:$0xff]
  %v1946 = vld [vmem:[%s5 + $0x110] sm:$0xff]
  %v1947 = vld [vmem:[%s5 + $0x118] sm:$0xff]
  %v1948 = vld [vmem:[%s5 + $0x120] sm:$0xff]
  %v1949 = vld [vmem:[%s5 + $0x128] sm:$0xff]
  %v1950 = vld [vmem:[%s5 + $0x130] sm:$0xff]
  %v1951 = vld [vmem:[%s5 + $0x138] sm:$0xff]
  %v1952 = vld [vmem:[%s5 + $0x140] sm:$0xff]
  %v1953 = vld [vmem:[%s5 + $0x148] sm:$0xff]
  %v1954 = vld [vmem:[%s5 + $0x150] sm:$0xff]
  %v1955 = vld [vmem:[%s5 + $0x158] sm:$0xff]
  %v1956 = vld [vmem:[%s5 + $0x160] sm:$0xff]
  %v1957 = vld [vmem:[%s5 + $0x168] sm:$0xff]
  %v1958 = vld [vmem:[%s5 + $0x170] sm:$0xff]
  %v1959 = vld [vmem:[%s5 + $0x178] sm:$0xff]
  %v1960 = vld [vmem:[%s5 + $0x180] sm:$0xff]
  %v1961 = vld [vmem:[%s5 + $0x188] sm:$0xff]
  %v1962 = vld [vmem:[%s5 + $0x190] sm:$0xff]
  %v1963 = vld [vmem:[%s5 + $0x198] sm:$0xff]
  %v1964 = vld [vmem:[%s5 + $0x1a0] sm:$0xff]
  %v1965 = vld [vmem:[%s5 + $0x1a8] sm:$0xff]
  %v1966 = vld [vmem:[%s5 + $0x1b0] sm:$0xff]
  %v1967 = vld [vmem:[%s5 + $0x1b8] sm:$0xff]
  %v1968 = vld [vmem:[%s5 + $0x1c0] sm:$0xff]
  %v1969 = vld [vmem:[%s5 + $0x1c8] sm:$0xff]
  %v1970 = vld [vmem:[%s5 + $0x1d0] sm:$0xff]
  %v1971 = vld [vmem:[%s5 + $0x1d8] sm:$0xff]
  %v1972 = vld [vmem:[%s5 + $0x1e0] sm:$0xff]
  %v1973 = vld [vmem:[%s5 + $0x1e8] sm:$0xff]
  %v1974 = vld [vmem:[%s5 + $0x1f0] sm:$0xff]
  %v1975 = vld [vmem:[%s5 + $0x1f8] sm:$0xff]
  %v2040 = vunpack.c.l.b16 %v1912
  %v2041 = vunpack.c.h.b16 %v1912
  %v2042 = vunpack.c.l.b16 %v1913
  %v2043 = vunpack.c.h.b16 %v1913
  %v2044 = vunpack.c.l.b16 %v1914
  %v2045 = vunpack.c.h.b16 %v1914
  %v2046 = vunpack.c.l.b16 %v1915
  %v2047 = vunpack.c.h.b16 %v1915
  %v2048 = vunpack.c.l.b16 %v1916
  %v2049 = vunpack.c.h.b16 %v1916
  %v2050 = vunpack.c.l.b16 %v1917
  %v2051 = vunpack.c.h.b16 %v1917
  %v2052 = vunpack.c.l.b16 %v1918
  %v2053 = vunpack.c.h.b16 %v1918
  %v2054 = vunpack.c.l.b16 %v1919
  %v2055 = vunpack.c.h.b16 %v1919
  %v2056 = vunpack.c.l.b16 %v1920
  %v2057 = vunpack.c.h.b16 %v1920
  %v2058 = vunpack.c.l.b16 %v1921
  %v2059 = vunpack.c.h.b16 %v1921
  %v2060 = vunpack.c.l.b16 %v1922
  %v2061 = vunpack.c.h.b16 %v1922
  %v2062 = vunpack.c.l.b16 %v1923
  %v2063 = vunpack.c.h.b16 %v1923
  %v2064 = vunpack.c.l.b16 %v1924
  %v2065 = vunpack.c.h.b16 %v1924
  %v2066 = vunpack.c.l.b16 %v1925
  %v2067 = vunpack.c.h.b16 %v1925
  %v2068 = vunpack.c.l.b16 %v1926
  %v2069 = vunpack.c.h.b16 %v1926
  %v2070 = vunpack.c.l.b16 %v1927
  %v2071 = vunpack.c.h.b16 %v1927
  %v2072 = vunpack.c.l.b16 %v1928
  %v2073 = vunpack.c.h.b16 %v1928
  %v2074 = vunpack.c.l.b16 %v1929
  %v2075 = vunpack.c.h.b16 %v1929
  %v2076 = vunpack.c.l.b16 %v1930
  %v2077 = vunpack.c.h.b16 %v1930
  %v2078 = vunpack.c.l.b16 %v1931
  %v2079 = vunpack.c.h.b16 %v1931
  %v2080 = vunpack.c.l.b16 %v1932
  %v2081 = vunpack.c.h.b16 %v1932
  %v2082 = vunpack.c.l.b16 %v1933
  %v2083 = vunpack.c.h.b16 %v1933
  %v2084 = vunpack.c.l.b16 %v1934
  %v2085 = vunpack.c.h.b16 %v1934
  %v2086 = vunpack.c.l.b16 %v1935
  %v2087 = vunpack.c.h.b16 %v1935
  %v2088 = vunpack.c.l.b16 %v1936
  %v2089 = vunpack.c.h.b16 %v1936
  %v2090 = vunpack.c.l.b16 %v1937
  %v2091 = vunpack.c.h.b16 %v1937
  %v2092 = vunpack.c.l.b16 %v1938
  %v2093 = vunpack.c.h.b16 %v1938
  %v2094 = vunpack.c.l.b16 %v1939
  %v2095 = vunpack.c.h.b16 %v1939
  %v2096 = vunpack.c.l.b16 %v1940
  %v2097 = vunpack.c.h.b16 %v1940
  %v2098 = vunpack.c.l.b16 %v1941
  %v2099 = vunpack.c.h.b16 %v1941
  %v2100 = vunpack.c.l.b16 %v1942
  %v2101 = vunpack.c.h.b16 %v1942
  %v2102 = vunpack.c.l.b16 %v1943
  %v2103 = vunpack.c.h.b16 %v1943
  %v2104 = vunpack.c.l.b16 %v1944
  %v2105 = vunpack.c.h.b16 %v1944
  %v2106 = vunpack.c.l.b16 %v1945
  %v2107 = vunpack.c.h.b16 %v1945
  %v2108 = vunpack.c.l.b16 %v1946
  %v2109 = vunpack.c.h.b16 %v1946
  %v2110 = vunpack.c.l.b16 %v1947
  %v2111 = vunpack.c.h.b16 %v1947
  %v2112 = vunpack.c.l.b16 %v1948
  %v2113 = vunpack.c.h.b16 %v1948
  %v2114 = vunpack.c.l.b16 %v1949
  %v2115 = vunpack.c.h.b16 %v1949
  %v2116 = vunpack.c.l.b16 %v1950
  %v2117 = vunpack.c.h.b16 %v1950
  %v2118 = vunpack.c.l.b16 %v1951
  %v2119 = vunpack.c.h.b16 %v1951
  %v2120 = vunpack.c.l.b16 %v1952
  %v2121 = vunpack.c.h.b16 %v1952
  %v2122 = vunpack.c.l.b16 %v1953
  %v2123 = vunpack.c.h.b16 %v1953
  %v2124 = vunpack.c.l.b16 %v1954
  %v2125 = vunpack.c.h.b16 %v1954
  %v2126 = vunpack.c.l.b16 %v1955
  %v2127 = vunpack.c.h.b16 %v1955
  %v2128 = vunpack.c.l.b16 %v1956
  %v2129 = vunpack.c.h.b16 %v1956
  %v2130 = vunpack.c.l.b16 %v1957
  %v2131 = vunpack.c.h.b16 %v1957
  %v2132 = vunpack.c.l.b16 %v1958
  %v2133 = vunpack.c.h.b16 %v1958
  %v2134 = vunpack.c.l.b16 %v1959
  %v2135 = vunpack.c.h.b16 %v1959
  %v2136 = vunpack.c.l.b16 %v1960
  %v2137 = vunpack.c.h.b16 %v1960
  %v2138 = vunpack.c.l.b16 %v1961
  %v2139 = vunpack.c.h.b16 %v1961
  %v2140 = vunpack.c.l.b16 %v1962
  %v2141 = vunpack.c.h.b16 %v1962
  %v2142 = vunpack.c.l.b16 %v1963
  %v2143 = vunpack.c.h.b16 %v1963
  %v2144 = vunpack.c.l.b16 %v1964
  %v2145 = vunpack.c.h.b16 %v1964
  %v2146 = vunpack.c.l.b16 %v1965
  %v2147 = vunpack.c.h.b16 %v1965
  %v2148 = vunpack.c.l.b16 %v1966
  %v2149 = vunpack.c.h.b16 %v1966
  %v2150 = vunpack.c.l.b16 %v1967
  %v2151 = vunpack.c.h.b16 %v1967
  %v2152 = vunpack.c.l.b16 %v1968
  %v2153 = vunpack.c.h.b16 %v1968
  %v2154 = vunpack.c.l.b16 %v1969
  %v2155 = vunpack.c.h.b16 %v1969
  %v2156 = vunpack.c.l.b16 %v1970
  %v2157 = vunpack.c.h.b16 %v1970
  %v2158 = vunpack.c.l.b16 %v1971
  %v2159 = vunpack.c.h.b16 %v1971
  %v2160 = vunpack.c.l.b16 %v1972
  %v2161 = vunpack.c.h.b16 %v1972
  %v2162 = vunpack.c.l.b16 %v1973
  %v2163 = vunpack.c.h.b16 %v1973
  %v2164 = vunpack.c.l.b16 %v1974
  %v2165 = vunpack.c.h.b16 %v1974
  %v2166 = vunpack.c.l.b16 %v1975
  %v2167 = vunpack.c.h.b16 %v1975
  %v2168 = vpack.c.b16 %v2042, %v2040
  %v2169 = vpack.c.b16 %v2043, %v2041
  %v2170 = vpack.c.b16 %v2046, %v2044
  %v2171 = vpack.c.b16 %v2047, %v2045
  %v2172 = vpack.c.b16 %v2050, %v2048
  %v2173 = vpack.c.b16 %v2051, %v2049
  %v2174 = vpack.c.b16 %v2054, %v2052
  %v2175 = vpack.c.b16 %v2055, %v2053
  %v2176 = vpack.c.b16 %v2058, %v2056
  %v2177 = vpack.c.b16 %v2059, %v2057
  %v2178 = vpack.c.b16 %v2062, %v2060
  %v2179 = vpack.c.b16 %v2063, %v2061
  %v2180 = vpack.c.b16 %v2066, %v2064
  %v2181 = vpack.c.b16 %v2067, %v2065
  %v2182 = vpack.c.b16 %v2070, %v2068
  %v2183 = vpack.c.b16 %v2071, %v2069
  %v2184 = vpack.c.b16 %v2074, %v2072
  %v2185 = vpack.c.b16 %v2075, %v2073
  %v2186 = vpack.c.b16 %v2078, %v2076
  %v2187 = vpack.c.b16 %v2079, %v2077
  %v2188 = vpack.c.b16 %v2082, %v2080
  %v2189 = vpack.c.b16 %v2083, %v2081
  %v2190 = vpack.c.b16 %v2086, %v2084
  %v2191 = vpack.c.b16 %v2087, %v2085
  %v2192 = vpack.c.b16 %v2090, %v2088
  %v2193 = vpack.c.b16 %v2091, %v2089
  %v2194 = vpack.c.b16 %v2094, %v2092
  %v2195 = vpack.c.b16 %v2095, %v2093
  %v2196 = vpack.c.b16 %v2098, %v2096
  %v2197 = vpack.c.b16 %v2099, %v2097
  %v2198 = vpack.c.b16 %v2102, %v2100
  %v2199 = vpack.c.b16 %v2103, %v2101
  %v2200 = vpack.c.b16 %v2106, %v2104
  %v2201 = vpack.c.b16 %v2107, %v2105
  %v2202 = vpack.c.b16 %v2110, %v2108
  %v2203 = vpack.c.b16 %v2111, %v2109
  %v2204 = vpack.c.b16 %v2114, %v2112
  %v2205 = vpack.c.b16 %v2115, %v2113
  %v2206 = vpack.c.b16 %v2118, %v2116
  %v2207 = vpack.c.b16 %v2119, %v2117
  %v2208 = vpack.c.b16 %v2122, %v2120
  %v2209 = vpack.c.b16 %v2123, %v2121
  %v2210 = vpack.c.b16 %v2126, %v2124
  %v2211 = vpack.c.b16 %v2127, %v2125
  %v2212 = vpack.c.b16 %v2130, %v2128
  %v2213 = vpack.c.b16 %v2131, %v2129
  %v2214 = vpack.c.b16 %v2134, %v2132
  %v2215 = vpack.c.b16 %v2135, %v2133
  %v2216 = vpack.c.b16 %v2138, %v2136
  %v2217 = vpack.c.b16 %v2139, %v2137
  %v2218 = vpack.c.b16 %v2142, %v2140
  %v2219 = vpack.c.b16 %v2143, %v2141
  %v2220 = vpack.c.b16 %v2146, %v2144
  %v2221 = vpack.c.b16 %v2147, %v2145
  %v2222 = vpack.c.b16 %v2150, %v2148
  %v2223 = vpack.c.b16 %v2151, %v2149
  %v2224 = vpack.c.b16 %v2154, %v2152
  %v2225 = vpack.c.b16 %v2155, %v2153
  %v2226 = vpack.c.b16 %v2158, %v2156
  %v2227 = vpack.c.b16 %v2159, %v2157
  %v2228 = vpack.c.b16 %v2162, %v2160
  %v2229 = vpack.c.b16 %v2163, %v2161
  %v2230 = vpack.c.b16 %v2166, %v2164
  %v2231 = vpack.c.b16 %v2167, %v2165
  %2296 = vmatpush.bf16.msra.mxu0 %v2182
  %2297 = vmatpush.bf16.msra.mxu0 %v2180
  %2298 = vmatpush.bf16.msra.mxu0 %v2178
  %2299 = vmatpush.bf16.msra.mxu0 %v2176
  %2300 = vmatpush.bf16.msra.mxu0 %v2174
  %2301 = vmatpush.bf16.msra.mxu0 %v2172
  %2302 = vmatpush.bf16.msra.mxu0 %v2170
  %2303 = vmatpush.bf16.msra.mxu0 %v2168
  %2304 = vmatmul.bf16.gmra.mxu0 %v1908
  %v2305 = vpop.f32.mrf.mxu0
  %v2306 = vadd.f32 0.0, %v2305
  %v2307 = vpop.f32.mrf.mxu0
  %2308 = vdwg.mxu0
  %2309 = vmatpush.bf16.msra.mxu0 %v2198
  %2310 = vmatpush.bf16.msra.mxu0 %v2196
  %2311 = vmatpush.bf16.msra.mxu0 %v2194
  %2312 = vmatpush.bf16.msra.mxu0 %v2192
  %2313 = vmatpush.bf16.msra.mxu0 %v2190
  %2314 = vmatpush.bf16.msra.mxu0 %v2188
  %2315 = vmatpush.bf16.msra.mxu0 %v2186
  %2316 = vmatpush.bf16.msra.mxu0 %v2184
  %2317 = vmatmul.bf16.gmra.mxu0 %v1909
  %v2318 = vpop.f32.mrf.mxu0
  %v2319 = vadd.f32 %v2306, %v2318
  %v2320 = vpop.f32.mrf.mxu0
  %2321 = vdwg.mxu0
  %2322 = vmatpush.bf16.msra.mxu0 %v2214
  %2323 = vmatpush.bf16.msra.mxu0 %v2212
  %2324 = vmatpush.bf16.msra.mxu0 %v2210
  %2325 = vmatpush.bf16.msra.mxu0 %v2208
  %2326 = vmatpush.bf16.msra.mxu0 %v2206
  %2327 = vmatpush.bf16.msra.mxu0 %v2204
  %2328 = vmatpush.bf16.msra.mxu0 %v2202
  %2329 = vmatpush.bf16.msra.mxu0 %v2200
  %2330 = vmatmul.bf16.gmra.mxu0 %v1910
  %v2331 = vpop.f32.mrf.mxu0
  %v2332 = vadd.f32 %v2319, %v2331
  %v2333 = vpop.f32.mrf.mxu0
  %2334 = vdwg.mxu0
  %2335 = vmatpush.bf16.msra.mxu0 %v2230
  %2336 = vmatpush.bf16.msra.mxu0 %v2228
  %2337 = vmatpush.bf16.msra.mxu0 %v2226
  %2338 = vmatpush.bf16.msra.mxu0 %v2224
  %2339 = vmatpush.bf16.msra.mxu0 %v2222
  %2340 = vmatpush.bf16.msra.mxu0 %v2220
  %2341 = vmatpush.bf16.msra.mxu0 %v2218
  %2342 = vmatpush.bf16.msra.mxu0 %v2216
  %2343 = vmatmul.bf16.gmra.mxu0 %v1911
  %v2344 = vpop.f32.mrf.mxu0
  %v2345 = vadd.f32 %v2332, %v2344
  %v2346 = vpop.f32.mrf.mxu0
  %2347 = vdwg.mxu0
  %2348 = vmatpush.bf16.msra.mxu0 %v2183
  %2349 = vmatpush.bf16.msra.mxu0 %v2181
  %2350 = vmatpush.bf16.msra.mxu0 %v2179
  %2351 = vmatpush.bf16.msra.mxu0 %v2177
  %2352 = vmatpush.bf16.msra.mxu0 %v2175
  %2353 = vmatpush.bf16.msra.mxu0 %v2173
  %2354 = vmatpush.bf16.msra.mxu0 %v2171
  %2355 = vmatpush.bf16.msra.mxu0 %v2169
  %2356 = vmatmul.bf16.gmra.mxu0 %v1908
  %v2357 = vpop.f32.mrf.mxu0
  %v2358 = vadd.f32 0.0, %v2357
  %v2359 = vpop.f32.mrf.mxu0
  %2360 = vdwg.mxu0
  %2361 = vmatpush.bf16.msra.mxu0 %v2199
  %2362 = vmatpush.bf16.msra.mxu0 %v2197
  %2363 = vmatpush.bf16.msra.mxu0 %v2195
  %2364 = vmatpush.bf16.msra.mxu0 %v2193
  %2365 = vmatpush.bf16.msra.mxu0 %v2191
  %2366 = vmatpush.bf16.msra.mxu0 %v2189
  %2367 = vmatpush.bf16.msra.mxu0 %v2187
  %2368 = vmatpush.bf16.msra.mxu0 %v2185
  %2369 = vmatmul.bf16.gmra.mxu0 %v1909
  %v2370 = vpop.f32.mrf.mxu0
  %v2371 = vadd.f32 %v2358, %v2370
  %v2372 = vpop.f32.mrf.mxu0
  %2373 = vdwg.mxu0
  %2374 = vmatpush.bf16.msra.mxu0 %v2215
  %2375 = vmatpush.bf16.msra.mxu0 %v2213
  %2376 = vmatpush.bf16.msra.mxu0 %v2211
  %2377 = vmatpush.bf16.msra.mxu0 %v2209
  %2378 = vmatpush.bf16.msra.mxu0 %v2207
  %2379 = vmatpush.bf16.msra.mxu0 %v2205
  %2380 = vmatpush.bf16.msra.mxu0 %v2203
  %2381 = vmatpush.bf16.msra.mxu0 %v2201
  %2382 = vmatmul.bf16.gmra.mxu0 %v1910
  %v2383 = vpop.f32.mrf.mxu0
  %v2384 = vadd.f32 %v2371, %v2383
  %v2385 = vpop.f32.mrf.mxu0
  %2386 = vdwg.mxu0
  %2387 = vmatpush.bf16.msra.mxu0 %v2231
  %2388 = vmatpush.bf16.msra.mxu0 %v2229
  %2389 = vmatpush.bf16.msra.mxu0 %v2227
  %2390 = vmatpush.bf16.msra.mxu0 %v2225
  %2391 = vmatpush.bf16.msra.mxu0 %v2223
  %2392 = vmatpush.bf16.msra.mxu0 %v2221
  %2393 = vmatpush.bf16.msra.mxu0 %v2219
  %2394 = vmatpush.bf16.msra.mxu0 %v2217
  %2395 = vmatmul.bf16.gmra.mxu0 %v1911
  %v2396 = vpop.f32.mrf.mxu0
  %v2397 = vadd.f32 %v2384, %v2396
  %v2398 = vpop.f32.mrf.mxu0
  %2399 = vdwg.mxu0
  %v2400 = vsub.f32 0.0, %v2345
  %v2401 = vsub.f32 0.0, %v2397
  %v2402 = vmul.f32 %v2400, 1.442695
  %v2403 = vpow.pop %v2402
  %v2404 = vmul.f32 %v2401, 1.442695
  %v2405 = vpow.pop %v2404
  %v2406 = vadd.f32 %v2403, 1.0
  %v2407 = vadd.f32 %v2405, 1.0
  %v2408 = vrcp.pop %v2406
  %v2409 = vmul.f32 %v2406, %v2408
  %v2410 = vsub.f32 1.0, %v2409
  %v2411 = vmul.f32 %v2408, %v2410
  %v2412 = vadd.f32 %v2408, %v2411
  %vm2413 = vweird.f32 %v2406
  %vm2414 = vweird.f32 %v2408
  %vm2415 = vmor %vm2413, %vm2414
  %v2416 = vsel %vm2415, %v2408, %v2412
  %v2417 = vand.u32 2147483647, %v2406
  %vm2418 = vcmp.eq.f32.partialorder %v2417, 8.507059e+37
  %v2419 = vand.u32 %v2406, 2147483648
  %v2420 = vor.u32 1.1754944e-38, %v2419
  %v2421 = vsel %vm2418, %v2420, %v2416
  %v2422 = vmul.f32 1.0, %v2421
  %v2423 = vrcp.pop %v2407
  %v2424 = vmul.f32 %v2407, %v2423
  %v2425 = vsub.f32 1.0, %v2424
  %v2426 = vmul.f32 %v2423, %v2425
  %v2427 = vadd.f32 %v2423, %v2426
  %vm2428 = vweird.f32 %v2407
  %vm2429 = vweird.f32 %v2423
  %vm2430 = vmor %vm2428, %vm2429
  %v2431 = vsel %vm2430, %v2423, %v2427
  %v2432 = vand.u32 2147483647, %v2407
  %vm2433 = vcmp.eq.f32.partialorder %v2432, 8.507059e+37
  %v2434 = vand.u32 %v2407, 2147483648
  %v2435 = vor.u32 1.1754944e-38, %v2434
  %v2436 = vsel %vm2433, %v2435, %v2431
  %v2437 = vmul.f32 1.0, %v2436
  %v2438 = vperm.slane %v2422, 0
  %v2439 = vlaneseq
  %v2440 = vshrl.u32 %v2439, 7
  %2442 = vset.pattern.permute.xlu0 %v2440
  %2443 = vperm.xlu0 %2442, %v2438
  %v2444 = vpop.permute.xlu0 %2443
  %v2445 = vlaneseq
  %v2446 = vshrl.u32 %v2445, 7
  %v2447 = vadd.s32 %v2446, 8
  %2448 = vset.pattern.permute.xlu0 %v2447
  %2449 = vperm.xlu0 %2448, %v2438
  %v2450 = vpop.permute.xlu0 %2449
  %v2451 = vlaneseq
  %v2452 = vshrl.u32 %v2451, 7
  %v2453 = vadd.s32 %v2452, 16
  %2454 = vset.pattern.permute.xlu0 %v2453
  %2455 = vperm.xlu0 %2454, %v2438
  %v2456 = vpop.permute.xlu0 %2455
  %v2457 = vlaneseq
  %v2458 = vshrl.u32 %v2457, 7
  %v2459 = vadd.s32 %v2458, 24
  %2460 = vset.pattern.permute.xlu0 %v2459
  %2461 = vperm.xlu0 %2460, %v2438
  %v2462 = vpop.permute.xlu0 %2461
  %v2463 = vlaneseq
  %v2464 = vshrl.u32 %v2463, 7
  %v2465 = vadd.s32 %v2464, 32
  %2466 = vset.pattern.permute.xlu0 %v2465
  %2467 = vperm.xlu0 %2466, %v2438
  %v2468 = vpop.permute.xlu0 %2467
  %v2469 = vlaneseq
  %v2470 = vshrl.u32 %v2469, 7
  %v2471 = vadd.s32 %v2470, 40
  %2472 = vset.pattern.permute.xlu0 %v2471
  %2473 = vperm.xlu0 %2472, %v2438
  %v2474 = vpop.permute.xlu0 %2473
  %v2475 = vlaneseq
  %v2476 = vshrl.u32 %v2475, 7
  %v2477 = vadd.s32 %v2476, 48
  %2478 = vset.pattern.permute.xlu0 %v2477
  %2479 = vperm.xlu0 %2478, %v2438
  %v2480 = vpop.permute.xlu0 %2479
  %v2481 = vlaneseq
  %v2482 = vshrl.u32 %v2481, 7
  %v2483 = vadd.s32 %v2482, 56
  %2484 = vset.pattern.permute.xlu0 %v2483
  %2485 = vperm.xlu0 %2484, %v2438
  %v2486 = vpop.permute.xlu0 %2485
  %v2487 = vlaneseq
  %v2488 = vshrl.u32 %v2487, 7
  %v2489 = vadd.s32 %v2488, 64
  %2490 = vset.pattern.permute.xlu0 %v2489
  %2491 = vperm.xlu0 %2490, %v2438
  %v2492 = vpop.permute.xlu0 %2491
  %v2493 = vlaneseq
  %v2494 = vshrl.u32 %v2493, 7
  %v2495 = vadd.s32 %v2494, 72
  %2496 = vset.pattern.permute.xlu0 %v2495
  %2497 = vperm.xlu0 %2496, %v2438
  %v2498 = vpop.permute.xlu0 %2497
  %v2499 = vlaneseq
  %v2500 = vshrl.u32 %v2499, 7
  %v2501 = vadd.s32 %v2500, 80
  %2502 = vset.pattern.permute.xlu0 %v2501
  %2503 = vperm.xlu0 %2502, %v2438
  %v2504 = vpop.permute.xlu0 %2503
  %v2505 = vlaneseq
  %v2506 = vshrl.u32 %v2505, 7
  %v2507 = vadd.s32 %v2506, 88
  %2508 = vset.pattern.permute.xlu0 %v2507
  %2509 = vperm.xlu0 %2508, %v2438
  %v2510 = vpop.permute.xlu0 %2509
  %v2511 = vlaneseq
  %v2512 = vshrl.u32 %v2511, 7
  %v2513 = vadd.s32 %v2512, 96
  %2514 = vset.pattern.permute.xlu0 %v2513
  %2515 = vperm.xlu0 %2514, %v2438
  %v2516 = vpop.permute.xlu0 %2515
  %v2517 = vlaneseq
  %v2518 = vshrl.u32 %v2517, 7
  %v2519 = vadd.s32 %v2518, 104
  %2520 = vset.pattern.permute.xlu0 %v2519
  %2521 = vperm.xlu0 %2520, %v2438
  %v2522 = vpop.permute.xlu0 %2521
  %v2523 = vlaneseq
  %v2524 = vshrl.u32 %v2523, 7
  %v2525 = vadd.s32 %v2524, 112
  %2526 = vset.pattern.permute.xlu0 %v2525
  %2527 = vperm.xlu0 %2526, %v2438
  %v2528 = vpop.permute.xlu0 %2527
  %v2529 = vlaneseq
  %v2530 = vshrl.u32 %v2529, 7
  %v2531 = vadd.s32 %v2530, 120
  %2532 = vset.pattern.permute.xlu0 %v2531
  %2533 = vperm.xlu0 %2532, %v2438
  %v2534 = vpop.permute.xlu0 %2533
  %v2535 = vperm.slane %v2437, 0
  %v2536 = vlaneseq
  %v2537 = vshrl.u32 %v2536, 7
  %2539 = vset.pattern.permute.xlu0 %v2537
  %2540 = vperm.xlu0 %2539, %v2535
  %v2541 = vpop.permute.xlu0 %2540
  %v2542 = vlaneseq
  %v2543 = vshrl.u32 %v2542, 7
  %v2544 = vadd.s32 %v2543, 8
  %2545 = vset.pattern.permute.xlu0 %v2544
  %2546 = vperm.xlu0 %2545, %v2535
  %v2547 = vpop.permute.xlu0 %2546
  %v2548 = vlaneseq
  %v2549 = vshrl.u32 %v2548, 7
  %v2550 = vadd.s32 %v2549, 16
  %2551 = vset.pattern.permute.xlu0 %v2550
  %2552 = vperm.xlu0 %2551, %v2535
  %v2553 = vpop.permute.xlu0 %2552
  %v2554 = vlaneseq
  %v2555 = vshrl.u32 %v2554, 7
  %v2556 = vadd.s32 %v2555, 24
  %2557 = vset.pattern.permute.xlu0 %v2556
  %2558 = vperm.xlu0 %2557, %v2535
  %v2559 = vpop.permute.xlu0 %2558
  %v2560 = vlaneseq
  %v2561 = vshrl.u32 %v2560, 7
  %v2562 = vadd.s32 %v2561, 32
  %2563 = vset.pattern.permute.xlu0 %v2562
  %2564 = vperm.xlu0 %2563, %v2535
  %v2565 = vpop.permute.xlu0 %2564
  %v2566 = vlaneseq
  %v2567 = vshrl.u32 %v2566, 7
  %v2568 = vadd.s32 %v2567, 40
  %2569 = vset.pattern.permute.xlu0 %v2568
  %2570 = vperm.xlu0 %2569, %v2535
  %v2571 = vpop.permute.xlu0 %2570
  %v2572 = vlaneseq
  %v2573 = vshrl.u32 %v2572, 7
  %v2574 = vadd.s32 %v2573, 48
  %2575 = vset.pattern.permute.xlu0 %v2574
  %2576 = vperm.xlu0 %2575, %v2535
  %v2577 = vpop.permute.xlu0 %2576
  %v2578 = vlaneseq
  %v2579 = vshrl.u32 %v2578, 7
  %v2580 = vadd.s32 %v2579, 56
  %2581 = vset.pattern.permute.xlu0 %v2580
  %2582 = vperm.xlu0 %2581, %v2535
  %v2583 = vpop.permute.xlu0 %2582
  %v2584 = vlaneseq
  %v2585 = vshrl.u32 %v2584, 7
  %v2586 = vadd.s32 %v2585, 64
  %2587 = vset.pattern.permute.xlu0 %v2586
  %2588 = vperm.xlu0 %2587, %v2535
  %v2589 = vpop.permute.xlu0 %2588
  %v2590 = vlaneseq
  %v2591 = vshrl.u32 %v2590, 7
  %v2592 = vadd.s32 %v2591, 72
  %2593 = vset.pattern.permute.xlu0 %v2592
  %2594 = vperm.xlu0 %2593, %v2535
  %v2595 = vpop.permute.xlu0 %2594
  %v2596 = vlaneseq
  %v2597 = vshrl.u32 %v2596, 7
  %v2598 = vadd.s32 %v2597, 80
  %2599 = vset.pattern.permute.xlu0 %v2598
  %2600 = vperm.xlu0 %2599, %v2535
  %v2601 = vpop.permute.xlu0 %2600
  %v2602 = vlaneseq
  %v2603 = vshrl.u32 %v2602, 7
  %v2604 = vadd.s32 %v2603, 88
  %2605 = vset.pattern.permute.xlu0 %v2604
  %2606 = vperm.xlu0 %2605, %v2535
  %v2607 = vpop.permute.xlu0 %2606
  %v2608 = vlaneseq
  %v2609 = vshrl.u32 %v2608, 7
  %v2610 = vadd.s32 %v2609, 96
  %2611 = vset.pattern.permute.xlu0 %v2610
  %2612 = vperm.xlu0 %2611, %v2535
  %v2613 = vpop.permute.xlu0 %2612
  %v2614 = vlaneseq
  %v2615 = vshrl.u32 %v2614, 7
  %v2616 = vadd.s32 %v2615, 104
  %2617 = vset.pattern.permute.xlu0 %v2616
  %2618 = vperm.xlu0 %2617, %v2535
  %v2619 = vpop.permute.xlu0 %2618
  %v2620 = vlaneseq
  %v2621 = vshrl.u32 %v2620, 7
  %v2622 = vadd.s32 %v2621, 112
  %2623 = vset.pattern.permute.xlu0 %v2622
  %2624 = vperm.xlu0 %2623, %v2535
  %v2625 = vpop.permute.xlu0 %2624
  %v2626 = vlaneseq
  %v2627 = vshrl.u32 %v2626, 7
  %v2628 = vadd.s32 %v2627, 120
  %2629 = vset.pattern.permute.xlu0 %v2628
  %2630 = vperm.xlu0 %2629, %v2535
  %v2631 = vpop.permute.xlu0 %2630
  %v2632 = vperm.slane %v2422, 1
  %v2633 = vlaneseq
  %v2634 = vshrl.u32 %v2633, 7
  %2636 = vset.pattern.permute.xlu0 %v2634
  %2637 = vperm.xlu0 %2636, %v2632
  %v2638 = vpop.permute.xlu0 %2637
  %v2639 = vlaneseq
  %v2640 = vshrl.u32 %v2639, 7
  %v2641 = vadd.s32 %v2640, 8
  %2642 = vset.pattern.permute.xlu0 %v2641
  %2643 = vperm.xlu0 %2642, %v2632
  %v2644 = vpop.permute.xlu0 %2643
  %v2645 = vlaneseq
  %v2646 = vshrl.u32 %v2645, 7
  %v2647 = vadd.s32 %v2646, 16
  %2648 = vset.pattern.permute.xlu0 %v2647
  %2649 = vperm.xlu0 %2648, %v2632
  %v2650 = vpop.permute.xlu0 %2649
  %v2651 = vlaneseq
  %v2652 = vshrl.u32 %v2651, 7
  %v2653 = vadd.s32 %v2652, 24
  %2654 = vset.pattern.permute.xlu0 %v2653
  %2655 = vperm.xlu0 %2654, %v2632
  %v2656 = vpop.permute.xlu0 %2655
  %v2657 = vlaneseq
  %v2658 = vshrl.u32 %v2657, 7
  %v2659 = vadd.s32 %v2658, 32
  %2660 = vset.pattern.permute.xlu0 %v2659
  %2661 = vperm.xlu0 %2660, %v2632
  %v2662 = vpop.permute.xlu0 %2661
  %v2663 = vlaneseq
  %v2664 = vshrl.u32 %v2663, 7
  %v2665 = vadd.s32 %v2664, 40
  %2666 = vset.pattern.permute.xlu0 %v2665
  %2667 = vperm.xlu0 %2666, %v2632
  %v2668 = vpop.permute.xlu0 %2667
  %v2669 = vlaneseq
  %v2670 = vshrl.u32 %v2669, 7
  %v2671 = vadd.s32 %v2670, 48
  %2672 = vset.pattern.permute.xlu0 %v2671
  %2673 = vperm.xlu0 %2672, %v2632
  %v2674 = vpop.permute.xlu0 %2673
  %v2675 = vlaneseq
  %v2676 = vshrl.u32 %v2675, 7
  %v2677 = vadd.s32 %v2676, 56
  %2678 = vset.pattern.permute.xlu0 %v2677
  %2679 = vperm.xlu0 %2678, %v2632
  %v2680 = vpop.permute.xlu0 %2679
  %v2681 = vlaneseq
  %v2682 = vshrl.u32 %v2681, 7
  %v2683 = vadd.s32 %v2682, 64
  %2684 = vset.pattern.permute.xlu0 %v2683
  %2685 = vperm.xlu0 %2684, %v2632
  %v2686 = vpop.permute.xlu0 %2685
  %v2687 = vlaneseq
  %v2688 = vshrl.u32 %v2687, 7
  %v2689 = vadd.s32 %v2688, 72
  %2690 = vset.pattern.permute.xlu0 %v2689
  %2691 = vperm.xlu0 %2690, %v2632
  %v2692 = vpop.permute.xlu0 %2691
  %v2693 = vlaneseq
  %v2694 = vshrl.u32 %v2693, 7
  %v2695 = vadd.s32 %v2694, 80
  %2696 = vset.pattern.permute.xlu0 %v2695
  %2697 = vperm.xlu0 %2696, %v2632
  %v2698 = vpop.permute.xlu0 %2697
  %v2699 = vlaneseq
  %v2700 = vshrl.u32 %v2699, 7
  %v2701 = vadd.s32 %v2700, 88
  %2702 = vset.pattern.permute.xlu0 %v2701
  %2703 = vperm.xlu0 %2702, %v2632
  %v2704 = vpop.permute.xlu0 %2703
  %v2705 = vlaneseq
  %v2706 = vshrl.u32 %v2705, 7
  %v2707 = vadd.s32 %v2706, 96
  %2708 = vset.pattern.permute.xlu0 %v2707
  %2709 = vperm.xlu0 %2708, %v2632
  %v2710 = vpop.permute.xlu0 %2709
  %v2711 = vlaneseq
  %v2712 = vshrl.u32 %v2711, 7
  %v2713 = vadd.s32 %v2712, 104
  %2714 = vset.pattern.permute.xlu0 %v2713
  %2715 = vperm.xlu0 %2714, %v2632
  %v2716 = vpop.permute.xlu0 %2715
  %v2717 = vlaneseq
  %v2718 = vshrl.u32 %v2717, 7
  %v2719 = vadd.s32 %v2718, 112
  %2720 = vset.pattern.permute.xlu0 %v2719
  %2721 = vperm.xlu0 %2720, %v2632
  %v2722 = vpop.permute.xlu0 %2721
  %v2723 = vlaneseq
  %v2724 = vshrl.u32 %v2723, 7
  %v2725 = vadd.s32 %v2724, 120
  %2726 = vset.pattern.permute.xlu0 %v2725
  %2727 = vperm.xlu0 %2726, %v2632
  %v2728 = vpop.permute.xlu0 %2727
  %v2729 = vperm.slane %v2437, 1
  %v2730 = vlaneseq
  %v2731 = vshrl.u32 %v2730, 7
  %2733 = vset.pattern.permute.xlu0 %v2731
  %2734 = vperm.xlu0 %2733, %v2729
  %v2735 = vpop.permute.xlu0 %2734
  %v2736 = vlaneseq
  %v2737 = vshrl.u32 %v2736, 7
  %v2738 = vadd.s32 %v2737, 8
  %2739 = vset.pattern.permute.xlu0 %v2738
  %2740 = vperm.xlu0 %2739, %v2729
  %v2741 = vpop.permute.xlu0 %2740
  %v2742 = vlaneseq
  %v2743 = vshrl.u32 %v2742, 7
  %v2744 = vadd.s32 %v2743, 16
  %2745 = vset.pattern.permute.xlu0 %v2744
  %2746 = vperm.xlu0 %2745, %v2729
  %v2747 = vpop.permute.xlu0 %2746
  %v2748 = vlaneseq
  %v2749 = vshrl.u32 %v2748, 7
  %v2750 = vadd.s32 %v2749, 24
  %2751 = vset.pattern.permute.xlu0 %v2750
  %2752 = vperm.xlu0 %2751, %v2729
  %v2753 = vpop.permute.xlu0 %2752
  %v2754 = vlaneseq
  %v2755 = vshrl.u32 %v2754, 7
  %v2756 = vadd.s32 %v2755, 32
  %2757 = vset.pattern.permute.xlu0 %v2756
  %2758 = vperm.xlu0 %2757, %v2729
  %v2759 = vpop.permute.xlu0 %2758
  %v2760 = vlaneseq
  %v2761 = vshrl.u32 %v2760, 7
  %v2762 = vadd.s32 %v2761, 40
  %2763 = vset.pattern.permute.xlu0 %v2762
  %2764 = vperm.xlu0 %2763, %v2729
  %v2765 = vpop.permute.xlu0 %2764
  %v2766 = vlaneseq
  %v2767 = vshrl.u32 %v2766, 7
  %v2768 = vadd.s32 %v2767, 48
  %2769 = vset.pattern.permute.xlu0 %v2768
  %2770 = vperm.xlu0 %2769, %v2729
  %v2771 = vpop.permute.xlu0 %2770
  %v2772 = vlaneseq
  %v2773 = vshrl.u32 %v2772, 7
  %v2774 = vadd.s32 %v2773, 56
  %2775 = vset.pattern.permute.xlu0 %v2774
  %2776 = vperm.xlu0 %2775, %v2729
  %v2777 = vpop.permute.xlu0 %2776
  %v2778 = vlaneseq
  %v2779 = vshrl.u32 %v2778, 7
  %v2780 = vadd.s32 %v2779, 64
  %2781 = vset.pattern.permute.xlu0 %v2780
  %2782 = vperm.xlu0 %2781, %v2729
  %v2783 = vpop.permute.xlu0 %2782
  %v2784 = vlaneseq
  %v2785 = vshrl.u32 %v2784, 7
  %v2786 = vadd.s32 %v2785, 72
  %2787 = vset.pattern.permute.xlu0 %v2786
  %2788 = vperm.xlu0 %2787, %v2729
  %v2789 = vpop.permute.xlu0 %2788
  %v2790 = vlaneseq
  %v2791 = vshrl.u32 %v2790, 7
  %v2792 = vadd.s32 %v2791, 80
  %2793 = vset.pattern.permute.xlu0 %v2792
  %2794 = vperm.xlu0 %2793, %v2729
  %v2795 = vpop.permute.xlu0 %2794
  %v2796 = vlaneseq
  %v2797 = vshrl.u32 %v2796, 7
  %v2798 = vadd.s32 %v2797, 88
  %2799 = vset.pattern.permute.xlu0 %v2798
  %2800 = vperm.xlu0 %2799, %v2729
  %v2801 = vpop.permute.xlu0 %2800
  %v2802 = vlaneseq
  %v2803 = vshrl.u32 %v2802, 7
  %v2804 = vadd.s32 %v2803, 96
  %2805 = vset.pattern.permute.xlu0 %v2804
  %2806 = vperm.xlu0 %2805, %v2729
  %v2807 = vpop.permute.xlu0 %2806
  %v2808 = vlaneseq
  %v2809 = vshrl.u32 %v2808, 7
  %v2810 = vadd.s32 %v2809, 104
  %2811 = vset.pattern.permute.xlu0 %v2810
  %2812 = vperm.xlu0 %2811, %v2729
  %v2813 = vpop.permute.xlu0 %2812
  %v2814 = vlaneseq
  %v2815 = vshrl.u32 %v2814, 7
  %v2816 = vadd.s32 %v2815, 112
  %2817 = vset.pattern.permute.xlu0 %v2816
  %2818 = vperm.xlu0 %2817, %v2729
  %v2819 = vpop.permute.xlu0 %2818
  %v2820 = vlaneseq
  %v2821 = vshrl.u32 %v2820, 7
  %v2822 = vadd.s32 %v2821, 120
  %2823 = vset.pattern.permute.xlu0 %v2822
  %2824 = vperm.xlu0 %2823, %v2729
  %v2825 = vpop.permute.xlu0 %2824
  %v2826 = vmul.f32 %v973, %v2444
  %v2827 = vmul.f32 %v974, %v2450
  %v2828 = vmul.f32 %v975, %v2456
  %v2829 = vmul.f32 %v976, %v2462
  %v2830 = vmul.f32 %v977, %v2468
  %v2831 = vmul.f32 %v978, %v2474
  %v2832 = vmul.f32 %v979, %v2480
  %v2833 = vmul.f32 %v980, %v2486
  %v2834 = vmul.f32 %v981, %v2492
  %v2835 = vmul.f32 %v982, %v2498
  %v2836 = vmul.f32 %v983, %v2504
  %v2837 = vmul.f32 %v984, %v2510
  %v2838 = vmul.f32 %v985, %v2516
  %v2839 = vmul.f32 %v986, %v2522
  %v2840 = vmul.f32 %v987, %v2528
  %v2841 = vmul.f32 %v988, %v2534
  %v2842 = vmul.f32 %v989, %v2541
  %v2843 = vmul.f32 %v990, %v2547
  %v2844 = vmul.f32 %v991, %v2553
  %v2845 = vmul.f32 %v992, %v2559
  %v2846 = vmul.f32 %v993, %v2565
  %v2847 = vmul.f32 %v994, %v2571
  %v2848 = vmul.f32 %v995, %v2577
  %v2849 = vmul.f32 %v996, %v2583
  %v2850 = vmul.f32 %v997, %v2589
  %v2851 = vmul.f32 %v998, %v2595
  %v2852 = vmul.f32 %v999, %v2601
  %v2853 = vmul.f32 %v1000, %v2607
  %v2854 = vmul.f32 %v1001, %v2613
  %v2855 = vmul.f32 %v1002, %v2619
  %v2856 = vmul.f32 %v1003, %v2625
  %v2857 = vmul.f32 %v1004, %v2631
  %v2858 = vmul.f32 %v1005, %v2638
  %v2859 = vmul.f32 %v1006, %v2644
  %v2860 = vmul.f32 %v1007, %v2650
  %v2861 = vmul.f32 %v1008, %v2656
  %v2862 = vmul.f32 %v1009, %v2662
  %v2863 = vmul.f32 %v1010, %v2668
  %v2864 = vmul.f32 %v1011, %v2674
  %v2865 = vmul.f32 %v1012, %v2680
  %v2866 = vmul.f32 %v1013, %v2686
  %v2867 = vmul.f32 %v1014, %v2692
  %v2868 = vmul.f32 %v1015, %v2698
  %v2869 = vmul.f32 %v1016, %v2704
  %v2870 = vmul.f32 %v1017, %v2710
  %v2871 = vmul.f32 %v1018, %v2716
  %v2872 = vmul.f32 %v1019, %v2722
  %v2873 = vmul.f32 %v1020, %v2728
  %v2874 = vmul.f32 %v1021, %v2735
  %v2875 = vmul.f32 %v1022, %v2741
  %v2876 = vmul.f32 %v1023, %v2747
  %v2877 = vmul.f32 %v1024, %v2753
  %v2878 = vmul.f32 %v1025, %v2759
  %v2879 = vmul.f32 %v1026, %v2765
  %v2880 = vmul.f32 %v1027, %v2771
  %v2881 = vmul.f32 %v1028, %v2777
  %v2882 = vmul.f32 %v1029, %v2783
  %v2883 = vmul.f32 %v1030, %v2789
  %v2884 = vmul.f32 %v1031, %v2795
  %v2885 = vmul.f32 %v1032, %v2801
  %v2886 = vmul.f32 %v1033, %v2807
  %v2887 = vmul.f32 %v1034, %v2813
  %v2888 = vmul.f32 %v1035, %v2819
  %v2889 = vmul.f32 %v1036, %v2825
  %2890 = vst.msk [vmem:[%s6] sm:$0xff] %vm87, %v2826
  %2891 = vst.msk [vmem:[%s6 + $0x8] sm:$0xff] %vm87, %v2827
  %2892 = vst.msk [vmem:[%s6 + $0x10] sm:$0xff] %vm87, %v2828
  %2893 = vst.msk [vmem:[%s6 + $0x18] sm:$0xff] %vm87, %v2829
  %2894 = vst.msk [vmem:[%s6 + $0x20] sm:$0xff] %vm87, %v2830
  %2895 = vst.msk [vmem:[%s6 + $0x28] sm:$0xff] %vm87, %v2831
  %2896 = vst.msk [vmem:[%s6 + $0x30] sm:$0xff] %vm87, %v2832
  %2897 = vst.msk [vmem:[%s6 + $0x38] sm:$0xff] %vm87, %v2833
  %2898 = vst.msk [vmem:[%s6 + $0x40] sm:$0xff] %vm87, %v2834
  %2899 = vst.msk [vmem:[%s6 + $0x48] sm:$0xff] %vm87, %v2835
  %2900 = vst.msk [vmem:[%s6 + $0x50] sm:$0xff] %vm87, %v2836
  %2901 = vst.msk [vmem:[%s6 + $0x58] sm:$0xff] %vm87, %v2837
  %2902 = vst.msk [vmem:[%s6 + $0x60] sm:$0xff] %vm87, %v2838
  %2903 = vst.msk [vmem:[%s6 + $0x68] sm:$0xff] %vm87, %v2839
  %2904 = vst.msk [vmem:[%s6 + $0x70] sm:$0xff] %vm87, %v2840
  %2905 = vst.msk [vmem:[%s6 + $0x78] sm:$0xff] %vm87, %v2841
  %2906 = vst.msk [vmem:[%s6 + $0x80] sm:$0xff] %vm87, %v2842
  %2907 = vst.msk [vmem:[%s6 + $0x88] sm:$0xff] %vm87, %v2843
  %2908 = vst.msk [vmem:[%s6 + $0x90] sm:$0xff] %vm87, %v2844
  %2909 = vst.msk [vmem:[%s6 + $0x98] sm:$0xff] %vm87, %v2845
  %2910 = vst.msk [vmem:[%s6 + $0xa0] sm:$0xff] %vm87, %v2846
  %2911 = vst.msk [vmem:[%s6 + $0xa8] sm:$0xff] %vm87, %v2847
  %2912 = vst.msk [vmem:[%s6 + $0xb0] sm:$0xff] %vm87, %v2848
  %2913 = vst.msk [vmem:[%s6 + $0xb8] sm:$0xff] %vm87, %v2849
  %2914 = vst.msk [vmem:[%s6 + $0xc0] sm:$0xff] %vm87, %v2850
  %2915 = vst.msk [vmem:[%s6 + $0xc8] sm:$0xff] %vm87, %v2851
  %2916 = vst.msk [vmem:[%s6 + $0xd0] sm:$0xff] %vm87, %v2852
  %2917 = vst.msk [vmem:[%s6 + $0xd8] sm:$0xff] %vm87, %v2853
  %2918 = vst.msk [vmem:[%s6 + $0xe0] sm:$0xff] %vm87, %v2854
  %2919 = vst.msk [vmem:[%s6 + $0xe8] sm:$0xff] %vm87, %v2855
  %2920 = vst.msk [vmem:[%s6 + $0xf0] sm:$0xff] %vm87, %v2856
  %2921 = vst.msk [vmem:[%s6 + $0xf8] sm:$0xff] %vm87, %v2857
  %2922 = vst.msk [vmem:[%s6 + $0x100] sm:$0xff] %vm87, %v2858
  %2923 = vst.msk [vmem:[%s6 + $0x108] sm:$0xff] %vm87, %v2859
  %2924 = vst.msk [vmem:[%s6 + $0x110] sm:$0xff] %vm87, %v2860
  %2925 = vst.msk [vmem:[%s6 + $0x118] sm:$0xff] %vm87, %v2861
  %2926 = vst.msk [vmem:[%s6 + $0x120] sm:$0xff] %vm87, %v2862
  %2927 = vst.msk [vmem:[%s6 + $0x128] sm:$0xff] %vm87, %v2863
  %2928 = vst.msk [vmem:[%s6 + $0x130] sm:$0xff] %vm87, %v2864
  %2929 = vst.msk [vmem:[%s6 + $0x138] sm:$0xff] %vm87, %v2865
  %2930 = vst.msk [vmem:[%s6 + $0x140] sm:$0xff] %vm87, %v2866
  %2931 = vst.msk [vmem:[%s6 + $0x148] sm:$0xff] %vm87, %v2867
  %2932 = vst.msk [vmem:[%s6 + $0x150] sm:$0xff] %vm87, %v2868
  %2933 = vst.msk [vmem:[%s6 + $0x158] sm:$0xff] %vm87, %v2869
  %2934 = vst.msk [vmem:[%s6 + $0x160] sm:$0xff] %vm87, %v2870
  %2935 = vst.msk [vmem:[%s6 + $0x168] sm:$0xff] %vm87, %v2871
  %2936 = vst.msk [vmem:[%s6 + $0x170] sm:$0xff] %vm87, %v2872
  %2937 = vst.msk [vmem:[%s6 + $0x178] sm:$0xff] %vm87, %v2873
  %2938 = vst.msk [vmem:[%s6 + $0x180] sm:$0xff] %vm87, %v2874
  %2939 = vst.msk [vmem:[%s6 + $0x188] sm:$0xff] %vm87, %v2875
  %2940 = vst.msk [vmem:[%s6 + $0x190] sm:$0xff] %vm87, %v2876
  %2941 = vst.msk [vmem:[%s6 + $0x198] sm:$0xff] %vm87, %v2877
  %2942 = vst.msk [vmem:[%s6 + $0x1a0] sm:$0xff] %vm87, %v2878
  %2943 = vst.msk [vmem:[%s6 + $0x1a8] sm:$0xff] %vm87, %v2879
  %2944 = vst.msk [vmem:[%s6 + $0x1b0] sm:$0xff] %vm87, %v2880
  %2945 = vst.msk [vmem:[%s6 + $0x1b8] sm:$0xff] %vm87, %v2881
  %2946 = vst.msk [vmem:[%s6 + $0x1c0] sm:$0xff] %vm87, %v2882
  %2947 = vst.msk [vmem:[%s6 + $0x1c8] sm:$0xff] %vm87, %v2883
  %2948 = vst.msk [vmem:[%s6 + $0x1d0] sm:$0xff] %vm87, %v2884
  %2949 = vst.msk [vmem:[%s6 + $0x1d8] sm:$0xff] %vm87, %v2885
  %2950 = vst.msk [vmem:[%s6 + $0x1e0] sm:$0xff] %vm87, %v2886
  %2951 = vst.msk [vmem:[%s6 + $0x1e8] sm:$0xff] %vm87, %v2887
  %2952 = vst.msk [vmem:[%s6 + $0x1f0] sm:$0xff] %vm87, %v2888
  %2953 = vst.msk [vmem:[%s6 + $0x1f8] sm:$0xff] %vm87, %v2889
  // Predicated region
  $region26: #{hunet_forward.31} parent=0 // pred_check
    _
  $region27: #{hunet_forward.31} parent=0 // pred_check_branch
    %2955 = sbr.rel (0) target = $region29
  $region28: #{hunet_forward.31} parent=0 // pred_region
    _
  $region29: #{hunet_forward.31} parent=0 // pred_fallthru
    _
  // Predicated region
  $region30: #{hunet_forward.31} parent=0 // pred_check
    _
  $region31: #{hunet_forward.31} parent=0 // pred_check_branch
    %2957 = sbr.rel (0) target = $region33
  $region32: #{hunet_forward.31} parent=0 // pred_region
    _
  $region33: #{hunet_forward.31} parent=0 // pred_fallthru
    _

</llo_original>
